<compile_context>
chip_gen: v6e
topology: v6e:2x2x1
jax: 0.10.0
libtpu: 0.0.40
codegen_flags: <defaults>
</compile_context>

<pallas_src>
import jax
import jax.numpy as jnp
import numpy as np
from jax.experimental import pallas as pl
from jax.experimental.pallas import tpu as pltpu


def _round_up(x, m):
    return (x + m - 1) // m * m


# --------------------------------------------------------------------------
# Pallas kernel: fused conv-GEMM (4 pool taps) + 2x2 max-pool + bias + ReLU
# --------------------------------------------------------------------------
def _conv_pool_kernel(a_ref, w_ref, b_ref, o_ref):
    # a_ref: (tile, Kp) pooling-window patches
    # w_ref: (4, Kp, Cout) -- one zero-padded weight matrix per pool tap
    # b_ref: (1, Cout), o_ref: (tile, Cout)
    a = a_ref[...]
    p = jnp.dot(a, w_ref[0], preferred_element_type=jnp.float32)
    for j in range(1, 4):
        p = jnp.maximum(
            p, jnp.dot(a, w_ref[j], preferred_element_type=jnp.float32))
    # Per-channel bias and monotone ReLU commute with the spatial max, so
    # they are applied on the 4x smaller pooled tile.
    o_ref[...] = jnp.maximum(p + b_ref[...], 0.0).astype(o_ref.dtype)


def conv_relu_pool(x_nhwc, w4, bias, *, k, pad, row_tile):
    """Fused 'same' conv(k, stride 1) + bias + ReLU + 2x2/2 max-pool.

    x_nhwc : (B, H, W, Cin) f32, H and W even.
    w4     : (4, Kp, Cout) pool-tap weight matrices (see prepare_params),
             Kp = round_up((k+1)^2 * Cin, 128), row order (u, v, ci).
    bias   : (1, Cout)
    returns (B, H//2, W//2, Cout) f32 in NHWC.
    """
    B, H, W, Cin = x_nhwc.shape
    Ho, Wo = H // 2, W // 2
    _, Kp, Cout = w4.shape
    Kraw = (k + 1) * (k + 1) * Cin
    assert Kp == _round_up(Kraw, 128)

    # -- pooling-window patch extraction (XLA glue: one fused pad+gather) ---
    # P[b, ho, wo, (u, v, ci)] = x_pad[b, 2*ho + u, 2*wo + v, ci]
    xp = jnp.pad(x_nhwc, ((0, 0), (pad, pad), (pad, pad), (0, 0)))
    cols = []
    for u in range(k + 1):
        for v in range(k + 1):
            cols.append(xp[:, u:u + 2 * Ho:2, v:v + 2 * Wo:2, :])
    patches = jnp.concatenate(cols, axis=-1)          # (B, Ho, Wo, Kraw)
    patches = patches.reshape(B * Ho * Wo, Kraw)
    if Kp != Kraw:                                    # lane-align K
        patches = jnp.pad(patches, ((0, 0), (0, Kp - Kraw)))

    M = B * Ho * Wo
    assert row_tile % 8 == 0 and M % row_tile == 0
    grid = (M // row_tile,)

    out = pl.pallas_call(
        _conv_pool_kernel,
        out_shape=jax.ShapeDtypeStruct((M, Cout), jnp.float32),
        grid_spec=pltpu.PrefetchScalarGridSpec(
            num_scalar_prefetch=0,
            grid=grid,
            in_specs=[
                pl.BlockSpec((row_tile, Kp), lambda i: (i, 0)),
                pl.BlockSpec((4, Kp, Cout), lambda i: (0, 0, 0)),
                pl.BlockSpec((1, Cout), lambda i: (0, 0)),
            ],
            out_specs=pl.BlockSpec((row_tile, Cout), lambda i: (i, 0)),
        ),
        compiler_params=pltpu.CompilerParams(
            dimension_semantics=("parallel",)),
    )(patches, w4, bias)
    return out.reshape(B, Ho, Wo, Cout)


# --------------------------------------------------------------------------
# Pallas kernel: fused fc1 (+bias+ReLU) -> fc2 (+bias)
# --------------------------------------------------------------------------
def _mlp_kernel(x_ref, w1_ref, b1_ref, w2_ref, b2_ref, o_ref):
    h = jnp.dot(x_ref[...], w1_ref[...], preferred_element_type=jnp.float32)
    h = jnp.maximum(h + b1_ref[...], 0.0)
    o = jnp.dot(h, w2_ref[...], preferred_element_type=jnp.float32)
    o_ref[...] = (o + b2_ref[...]).astype(o_ref.dtype)


def mlp_head(x, w1, b1, w2, b2):
    """x: (B, K) f32 -> (B, N) f32, both FC layers in one kernel."""
    B, K = x.shape
    H = w1.shape[1]
    N = w2.shape[1]
    return pl.pallas_call(
        _mlp_kernel,
        out_shape=jax.ShapeDtypeStruct((B, N), jnp.float32),
        grid_spec=pltpu.PrefetchScalarGridSpec(
            num_scalar_prefetch=0,
            grid=(1,),
            in_specs=[
                pl.BlockSpec((B, K), lambda i: (0, 0)),
                pl.BlockSpec((K, H), lambda i: (0, 0)),
                pl.BlockSpec((1, H), lambda i: (0, 0)),
                pl.BlockSpec((H, N), lambda i: (0, 0)),
                pl.BlockSpec((1, N), lambda i: (0, 0)),
            ],
            out_specs=pl.BlockSpec((B, N), lambda i: (0, 0)),
        ),
        compiler_params=pltpu.CompilerParams(
            dimension_semantics=("arbitrary",)),
    )(x, w1, b1, w2, b2)


# --------------------------------------------------------------------------
# Parameters: PyTorch layout -> kernel layout (one-time conversion)
# --------------------------------------------------------------------------
def init_params(key):
    """Random parameters in PyTorch layout (Conv2d: (Cout,Cin,kh,kw), Linear: (out,in))."""
    ks = jax.random.split(key, 10)
    s = 0.05
    return {
        "conv1_w": jax.random.normal(ks[0], (16, 3, 5, 5), jnp.float32) * s,
        "conv1_b": jax.random.normal(ks[1], (16,), jnp.float32) * s,
        "conv2_w": jax.random.normal(ks[2], (32, 16, 3, 3), jnp.float32) * s,
        "conv2_b": jax.random.normal(ks[3], (32,), jnp.float32) * s,
        "conv3_w": jax.random.normal(ks[4], (64, 32, 3, 3), jnp.float32) * s,
        "conv3_b": jax.random.normal(ks[5], (64,), jnp.float32) * s,
        "fc1_w": jax.random.normal(ks[6], (128, 64 * 8 * 8), jnp.float32) * s,
        "fc1_b": jax.random.normal(ks[7], (128,), jnp.float32) * s,
        "fc2_w": jax.random.normal(ks[8], (2, 128), jnp.float32) * s,
        "fc2_b": jax.random.normal(ks[9], (2,), jnp.float32) * s,
    }


def _expand_pool_conv_weight(w_pt):
    """PyTorch (Cout, Cin, k, k) -> (4, Kp, Cout).

    For pool tap (j1, j2) in {0,1}^2 and window index (u, v) in [0, k+1)^2:
        W2_j[(u, v, ci), co] = w[u - j1, v - j2, ci, co]  (0 where out of range)
    so that  conv_out[2ho+j1, 2wo+j2, co] = patches[ho, wo, :] @ W2_j[:, co].
    """
    Cout, Cin, k, _ = w_pt.shape
    w_hwio = jnp.transpose(w_pt, (2, 3, 1, 0))        # (kh, kw, Cin, Cout)
    K = (k + 1) * (k + 1) * Cin
    Kp = _round_up(K, 128)
    mats = []
    for j1 in (0, 1):
        for j2 in (0, 1):
            wj = jnp.pad(w_hwio, ((j1, 1 - j1), (j2, 1 - j2), (0, 0), (0, 0)))
            mats.append(wj.reshape(K, Cout))          # rows ordered (u, v, ci)
    w4 = jnp.stack(mats, axis=0)                      # (4, K, Cout)
    return jnp.pad(w4, ((0, 0), (0, Kp - K), (0, 0)))


def prepare_params(pt):
    """One-time conversion from PyTorch layout to the kernel layout."""
    # fc1: (out, in) -> (in, out); reorder rows from PyTorch's NCHW flatten
    # order (c, h, w) to this pipeline's NHWC flatten order (h, w, c) so the
    # pre-fc transpose disappears from the forward pass.
    fc1 = pt["fc1_w"].T                               # (4096, 128), rows (c,h,w)
    fc1 = fc1.reshape(64, 8, 8, 128).transpose(1, 2, 0, 3).reshape(4096, 128)
    return {
        "w1": _expand_pool_conv_weight(pt["conv1_w"]),
        "b1": pt["conv1_b"].reshape(1, -1),
        "w2": _expand_pool_conv_weight(pt["conv2_w"]),
        "b2": pt["conv2_b"].reshape(1, -1),
        "w3": _expand_pool_conv_weight(pt["conv3_w"]),
        "b3": pt["conv3_b"].reshape(1, -1),
        "wfc1": fc1,
        "bfc1": pt["fc1_b"].reshape(1, -1),
        "wfc2": pt["fc2_w"].T,                        # (128, 2)
        "bfc2": pt["fc2_b"].reshape(1, -1),
    }


# --------------------------------------------------------------------------
# Forward pass (3 fused conv kernels + 1 fused MLP kernel)
# --------------------------------------------------------------------------
@jax.jit
def solarnet_forward(params, x_nchw):
    x = jnp.transpose(x_nchw, (0, 2, 3, 1))           # NCHW -> NHWC (input only)
    x = conv_relu_pool(x, params["w1"], params["b1"], k=5, pad=2, row_tile=512)
    x = conv_relu_pool(x, params["w2"], params["b2"], k=3, pad=1, row_tile=128)
    x = conv_relu_pool(x, params["w3"], params["b3"], k=3, pad=1, row_tile=64)
    B = x.shape[0]
    x = x.reshape(B, 8 * 8 * 64)                      # free reshape, (h,w,c) order
    return mlp_head(x, params["wfc1"], params["bfc1"],
                    params["wfc2"], params["bfc2"])


# --------------------------------------------------------------------------
# Pure-JAX reference (matches the PyTorch module) for a correctness check
# --------------------------------------------------------------------------
@jax.jit
def solarnet_reference(pt, x_nchw):
    def conv(x, w, b, pad):
        y = jax.lax.conv_general_dilated(
            x, w, window_strides=(1, 1), padding=[(pad, pad), (pad, pad)],
            dimension_numbers=("NCHW", "OIHW", "NCHW"))
        return y + b.reshape(1, -1, 1, 1)

    def pool(x):
        return jax.lax.reduce_window(x, -jnp.inf, jax.lax.max,
                                     (1, 1, 2, 2), (1, 1, 2, 2), "VALID")

    x = pool(jax.nn.relu(conv(x_nchw, pt["conv1_w"], pt["conv1_b"], 2)))
    x = pool(jax.nn.relu(conv(x, pt["conv2_w"], pt["conv2_b"], 1)))
    x = pool(jax.nn.relu(conv(x, pt["conv3_w"], pt["conv3_b"], 1)))
    x = x.reshape(x.shape[0], -1)                     # NCHW flatten (c,h,w)
    x = jax.nn.relu(x @ pt["fc1_w"].T + pt["fc1_b"])
    return x @ pt["fc2_w"].T + pt["fc2_b"]


if __name__ == "__main__":
    key = jax.random.PRNGKey(0)
    pkey, xkey = jax.random.split(key)
    pt_params = init_params(pkey)
    params = prepare_params(pt_params)
    # Input spatial size must be 64x64: three 2x2 pools -> 8x8, matching
    # fc1's 64*8*8 input dimension implied by the module's view().
    x = jax.random.normal(xkey, (2, 3, 64, 64), jnp.float32)  # NCHW like PyTorch
    out = jax.block_until_ready(solarnet_forward(params, x))
    assert out.shape == (2, 2) and out.dtype == jnp.float32
    ref = jax.block_until_ready(solarnet_reference(pt_params, x))
    np.testing.assert_allclose(np.asarray(out), np.asarray(ref),
                               rtol=5e-2, atol=5e-2)
    print("KERNEL_OK")
</pallas_src>

<mosaic_0001>
module attributes {stable_mosaic.version = 11 : i64} {
  func.func @_conv_pool_kernel(%arg0: i32, %arg1: memref<512x128xf32, #tpu.memory_space<vmem>>, %arg2: memref<4x128x16xf32, #tpu.memory_space<vmem>>, %arg3: memref<1x16xf32, #tpu.memory_space<vmem>>, %arg4: memref<512x16xf32, #tpu.memory_space<vmem>>) attributes {dimension_semantics = [#tpu.dimension_semantics<parallel>], iteration_bounds = array<i64: 4>, scalar_prefetch = 0 : i64, scratch_operands = 0 : i64, tpu.core_type = #tpu.core_type<tc>, window_params = [{transform_indices = @transform_0, window_bounds = array<i64: 512, 128>}, {pipeline_mode = #tpu.pipeline_mode<synchronous>, transform_indices = @transform_1, window_bounds = array<i64: 4, 128, 16>}, {pipeline_mode = #tpu.pipeline_mode<synchronous>, transform_indices = @transform_2, window_bounds = array<i64: 1, 16>}, {transform_indices = @transform_3, window_bounds = array<i64: 512, 16>}]} {
    %c0 = arith.constant 0 : index
    %c0_0 = arith.constant 0 : index
    %0 = vector.load %arg1[%c0, %c0_0] : memref<512x128xf32, #tpu.memory_space<vmem>>, vector<512x128xf32>
    %c0_1 = arith.constant 0 : index
    %c0_2 = arith.constant 0 : index
    %c0_3 = arith.constant 0 : index
    %1 = vector.load %arg2[%c0_1, %c0_2, %c0_3] : memref<4x128x16xf32, #tpu.memory_space<vmem>>, vector<1x128x16xf32>
    %2 = vector.shape_cast %1 : vector<1x128x16xf32> to vector<128x16xf32>
    %cst = arith.constant dense<0.000000e+00> : vector<512x16xf32>
    %3 = tpu.matmul %0, %2, %cst {dimension_numbers = #tpu.dot_dimension_numbers<[1], [0], [0], [1], [0, 0, 1, 1], [], []>} : vector<512x128xf32>, vector<128x16xf32>, vector<512x16xf32> -> vector<512x16xf32>
    %c1 = arith.constant 1 : index
    %c0_4 = arith.constant 0 : index
    %c0_5 = arith.constant 0 : index
    %4 = vector.load %arg2[%c1, %c0_4, %c0_5] : memref<4x128x16xf32, #tpu.memory_space<vmem>>, vector<1x128x16xf32>
    %5 = vector.shape_cast %4 : vector<1x128x16xf32> to vector<128x16xf32>
    %cst_6 = arith.constant dense<0.000000e+00> : vector<512x16xf32>
    %6 = tpu.matmul %0, %5, %cst_6 {dimension_numbers = #tpu.dot_dimension_numbers<[1], [0], [0], [1], [0, 0, 1, 1], [], []>} : vector<512x128xf32>, vector<128x16xf32>, vector<512x16xf32> -> vector<512x16xf32>
    %7 = arith.maximumf %3, %6 : vector<512x16xf32>
    %c2 = arith.constant 2 : index
    %c0_7 = arith.constant 0 : index
    %c0_8 = arith.constant 0 : index
    %8 = vector.load %arg2[%c2, %c0_7, %c0_8] : memref<4x128x16xf32, #tpu.memory_space<vmem>>, vector<1x128x16xf32>
    %9 = vector.shape_cast %8 : vector<1x128x16xf32> to vector<128x16xf32>
    %cst_9 = arith.constant dense<0.000000e+00> : vector<512x16xf32>
    %10 = tpu.matmul %0, %9, %cst_9 {dimension_numbers = #tpu.dot_dimension_numbers<[1], [0], [0], [1], [0, 0, 1, 1], [], []>} : vector<512x128xf32>, vector<128x16xf32>, vector<512x16xf32> -> vector<512x16xf32>
    %11 = arith.maximumf %7, %10 : vector<512x16xf32>
    %c3 = arith.constant 3 : index
    %c0_10 = arith.constant 0 : index
    %c0_11 = arith.constant 0 : index
    %12 = vector.load %arg2[%c3, %c0_10, %c0_11] : memref<4x128x16xf32, #tpu.memory_space<vmem>>, vector<1x128x16xf32>
    %13 = vector.shape_cast %12 : vector<1x128x16xf32> to vector<128x16xf32>
    %cst_12 = arith.constant dense<0.000000e+00> : vector<512x16xf32>
    %14 = tpu.matmul %0, %13, %cst_12 {dimension_numbers = #tpu.dot_dimension_numbers<[1], [0], [0], [1], [0, 0, 1, 1], [], []>} : vector<512x128xf32>, vector<128x16xf32>, vector<512x16xf32> -> vector<512x16xf32>
    %15 = arith.maximumf %11, %14 : vector<512x16xf32>
    %c0_13 = arith.constant 0 : index
    %c0_14 = arith.constant 0 : index
    %16 = vector.load %arg3[%c0_13, %c0_14] : memref<1x16xf32, #tpu.memory_space<vmem>>, vector<1x16xf32>
    %17 = vector.broadcast %16 : vector<1x16xf32> to vector<512x16xf32>
    %18 = arith.addf %15, %17 : vector<512x16xf32>
    %cst_15 = arith.constant 0.000000e+00 : f32
    %19 = vector.broadcast %cst_15 : f32 to vector<512x16xf32>
    %20 = arith.maximumf %18, %19 : vector<512x16xf32>
    %c0_16 = arith.constant 0 : index
    %c0_17 = arith.constant 0 : index
    %21 = vector.load %arg4[%c0_16, %c0_17] : memref<512x16xf32, #tpu.memory_space<vmem>>, vector<512x16xf32>
    tpu.vector_store %arg4[%c0_16, %c0_17], %20 {strides = array<i32>} : memref<512x16xf32, #tpu.memory_space<vmem>>, vector<512x16xf32>,
    return
  }
  func.func @transform_0(%arg0: i32) -> (i32, i32) {
    %c0_i32 = arith.constant 0 : i32
    %c0_i32_0 = arith.constant 0 : i32
    return %arg0, %c0_i32 : i32, i32
  }
  func.func @transform_1(%arg0: i32) -> (i32, i32, i32) {
    %c0_i32 = arith.constant 0 : i32
    %c0_i32_0 = arith.constant 0 : i32
    %c0_i32_1 = arith.constant 0 : i32
    %c0_i32_2 = arith.constant 0 : i32
    return %c0_i32, %c0_i32_0, %c0_i32_1 : i32, i32, i32
  }
  func.func @transform_2(%arg0: i32) -> (i32, i32) {
    %c0_i32 = arith.constant 0 : i32
    %c0_i32_0 = arith.constant 0 : i32
    %c0_i32_1 = arith.constant 0 : i32
    return %c0_i32, %c0_i32_0 : i32, i32
  }
  func.func @transform_3(%arg0: i32) -> (i32, i32) {
    %c0_i32 = arith.constant 0 : i32
    %c0_i32_0 = arith.constant 0 : i32
    return %arg0, %c0_i32 : i32, i32
  }
}

module attributes {stable_mosaic.version = 11 : i64} {
  func.func @_conv_pool_kernel(%arg0: i32, %arg1: memref<128x256xf32, #tpu.memory_space<vmem>>, %arg2: memref<4x256x32xf32, #tpu.memory_space<vmem>>, %arg3: memref<1x32xf32, #tpu.memory_space<vmem>>, %arg4: memref<128x32xf32, #tpu.memory_space<vmem>>) attributes {dimension_semantics = [#tpu.dimension_semantics<parallel>], iteration_bounds = array<i64: 4>, scalar_prefetch = 0 : i64, scratch_operands = 0 : i64, tpu.core_type = #tpu.core_type<tc>, window_params = [{transform_indices = @transform_0, window_bounds = array<i64: 128, 256>}, {pipeline_mode = #tpu.pipeline_mode<synchronous>, transform_indices = @transform_1, window_bounds = array<i64: 4, 256, 32>}, {pipeline_mode = #tpu.pipeline_mode<synchronous>, transform_indices = @transform_2, window_bounds = array<i64: 1, 32>}, {transform_indices = @transform_3, window_bounds = array<i64: 128, 32>}]} {
    %c0 = arith.constant 0 : index
    %c0_0 = arith.constant 0 : index
    %0 = vector.load %arg1[%c0, %c0_0] : memref<128x256xf32, #tpu.memory_space<vmem>>, vector<128x256xf32>
    %c0_1 = arith.constant 0 : index
    %c0_2 = arith.constant 0 : index
    %c0_3 = arith.constant 0 : index
    %1 = vector.load %arg2[%c0_1, %c0_2, %c0_3] : memref<4x256x32xf32, #tpu.memory_space<vmem>>, vector<1x256x32xf32>
    %2 = vector.shape_cast %1 : vector<1x256x32xf32> to vector<256x32xf32>
    %cst = arith.constant dense<0.000000e+00> : vector<128x32xf32>
    %3 = tpu.matmul %0, %2, %cst {dimension_numbers = #tpu.dot_dimension_numbers<[1], [0], [0], [1], [0, 0, 1, 1], [], []>} : vector<128x256xf32>, vector<256x32xf32>, vector<128x32xf32> -> vector<128x32xf32>
    %c1 = arith.constant 1 : index
    %c0_4 = arith.constant 0 : index
    %c0_5 = arith.constant 0 : index
    %4 = vector.load %arg2[%c1, %c0_4, %c0_5] : memref<4x256x32xf32, #tpu.memory_space<vmem>>, vector<1x256x32xf32>
    %5 = vector.shape_cast %4 : vector<1x256x32xf32> to vector<256x32xf32>
    %cst_6 = arith.constant dense<0.000000e+00> : vector<128x32xf32>
    %6 = tpu.matmul %0, %5, %cst_6 {dimension_numbers = #tpu.dot_dimension_numbers<[1], [0], [0], [1], [0, 0, 1, 1], [], []>} : vector<128x256xf32>, vector<256x32xf32>, vector<128x32xf32> -> vector<128x32xf32>
    %7 = arith.maximumf %3, %6 : vector<128x32xf32>
    %c2 = arith.constant 2 : index
    %c0_7 = arith.constant 0 : index
    %c0_8 = arith.constant 0 : index
    %8 = vector.load %arg2[%c2, %c0_7, %c0_8] : memref<4x256x32xf32, #tpu.memory_space<vmem>>, vector<1x256x32xf32>
    %9 = vector.shape_cast %8 : vector<1x256x32xf32> to vector<256x32xf32>
    %cst_9 = arith.constant dense<0.000000e+00> : vector<128x32xf32>
    %10 = tpu.matmul %0, %9, %cst_9 {dimension_numbers = #tpu.dot_dimension_numbers<[1], [0], [0], [1], [0, 0, 1, 1], [], []>} : vector<128x256xf32>, vector<256x32xf32>, vector<128x32xf32> -> vector<128x32xf32>
    %11 = arith.maximumf %7, %10 : vector<128x32xf32>
    %c3 = arith.constant 3 : index
    %c0_10 = arith.constant 0 : index
    %c0_11 = arith.constant 0 : index
    %12 = vector.load %arg2[%c3, %c0_10, %c0_11] : memref<4x256x32xf32, #tpu.memory_space<vmem>>, vector<1x256x32xf32>
    %13 = vector.shape_cast %12 : vector<1x256x32xf32> to vector<256x32xf32>
    %cst_12 = arith.constant dense<0.000000e+00> : vector<128x32xf32>
    %14 = tpu.matmul %0, %13, %cst_12 {dimension_numbers = #tpu.dot_dimension_numbers<[1], [0], [0], [1], [0, 0, 1, 1], [], []>} : vector<128x256xf32>, vector<256x32xf32>, vector<128x32xf32> -> vector<128x32xf32>
    %15 = arith.maximumf %11, %14 : vector<128x32xf32>
    %c0_13 = arith.constant 0 : index
    %c0_14 = arith.constant 0 : index
    %16 = vector.load %arg3[%c0_13, %c0_14] : memref<1x32xf32, #tpu.memory_space<vmem>>, vector<1x32xf32>
    %17 = vector.broadcast %16 : vector<1x32xf32> to vector<128x32xf32>
    %18 = arith.addf %15, %17 : vector<128x32xf32>
    %cst_15 = arith.constant 0.000000e+00 : f32
    %19 = vector.broadcast %cst_15 : f32 to vector<128x32xf32>
    %20 = arith.maximumf %18, %19 : vector<128x32xf32>
    %c0_16 = arith.constant 0 : index
    %c0_17 = arith.constant 0 : index
    %21 = vector.load %arg4[%c0_16, %c0_17] : memref<128x32xf32, #tpu.memory_space<vmem>>, vector<128x32xf32>
    tpu.vector_store %arg4[%c0_16, %c0_17], %20 {strides = array<i32>} : memref<128x32xf32, #tpu.memory_space<vmem>>, vector<128x32xf32>,
    return
  }
  func.func @transform_0(%arg0: i32) -> (i32, i32) {
    %c0_i32 = arith.constant 0 : i32
    %c0_i32_0 = arith.constant 0 : i32
    return %arg0, %c0_i32 : i32, i32
  }
  func.func @transform_1(%arg0: i32) -> (i32, i32, i32) {
    %c0_i32 = arith.constant 0 : i32
    %c0_i32_0 = arith.constant 0 : i32
    %c0_i32_1 = arith.constant 0 : i32
    %c0_i32_2 = arith.constant 0 : i32
    return %c0_i32, %c0_i32_0, %c0_i32_1 : i32, i32, i32
  }
  func.func @transform_2(%arg0: i32) -> (i32, i32) {
    %c0_i32 = arith.constant 0 : i32
    %c0_i32_0 = arith.constant 0 : i32
    %c0_i32_1 = arith.constant 0 : i32
    return %c0_i32, %c0_i32_0 : i32, i32
  }
  func.func @transform_3(%arg0: i32) -> (i32, i32) {
    %c0_i32 = arith.constant 0 : i32
    %c0_i32_0 = arith.constant 0 : i32
    return %arg0, %c0_i32 : i32, i32
  }
}

module attributes {stable_mosaic.version = 11 : i64} {
  func.func @_conv_pool_kernel(%arg0: i32, %arg1: memref<64x512xf32, #tpu.memory_space<vmem>>, %arg2: memref<4x512x64xf32, #tpu.memory_space<vmem>>, %arg3: memref<1x64xf32, #tpu.memory_space<vmem>>, %arg4: memref<64x64xf32, #tpu.memory_space<vmem>>) attributes {dimension_semantics = [#tpu.dimension_semantics<parallel>], iteration_bounds = array<i64: 2>, scalar_prefetch = 0 : i64, scratch_operands = 0 : i64, tpu.core_type = #tpu.core_type<tc>, window_params = [{transform_indices = @transform_0, window_bounds = array<i64: 64, 512>}, {pipeline_mode = #tpu.pipeline_mode<synchronous>, transform_indices = @transform_1, window_bounds = array<i64: 4, 512, 64>}, {pipeline_mode = #tpu.pipeline_mode<synchronous>, transform_indices = @transform_2, window_bounds = array<i64: 1, 64>}, {transform_indices = @transform_3, window_bounds = array<i64: 64, 64>}]} {
    %c0 = arith.constant 0 : index
    %c0_0 = arith.constant 0 : index
    %0 = vector.load %arg1[%c0, %c0_0] : memref<64x512xf32, #tpu.memory_space<vmem>>, vector<64x512xf32>
    %c0_1 = arith.constant 0 : index
    %c0_2 = arith.constant 0 : index
    %c0_3 = arith.constant 0 : index
    %1 = vector.load %arg2[%c0_1, %c0_2, %c0_3] : memref<4x512x64xf32, #tpu.memory_space<vmem>>, vector<1x512x64xf32>
    %2 = vector.shape_cast %1 : vector<1x512x64xf32> to vector<512x64xf32>
    %cst = arith.constant dense<0.000000e+00> : vector<64x64xf32>
    %3 = tpu.matmul %0, %2, %cst {dimension_numbers = #tpu.dot_dimension_numbers<[1], [0], [0], [1], [0, 0, 1, 1], [], []>} : vector<64x512xf32>, vector<512x64xf32>, vector<64x64xf32> -> vector<64x64xf32>
    %c1 = arith.constant 1 : index
    %c0_4 = arith.constant 0 : index
    %c0_5 = arith.constant 0 : index
    %4 = vector.load %arg2[%c1, %c0_4, %c0_5] : memref<4x512x64xf32, #tpu.memory_space<vmem>>, vector<1x512x64xf32>
    %5 = vector.shape_cast %4 : vector<1x512x64xf32> to vector<512x64xf32>
    %cst_6 = arith.constant dense<0.000000e+00> : vector<64x64xf32>
    %6 = tpu.matmul %0, %5, %cst_6 {dimension_numbers = #tpu.dot_dimension_numbers<[1], [0], [0], [1], [0, 0, 1, 1], [], []>} : vector<64x512xf32>, vector<512x64xf32>, vector<64x64xf32> -> vector<64x64xf32>
    %7 = arith.maximumf %3, %6 : vector<64x64xf32>
    %c2 = arith.constant 2 : index
    %c0_7 = arith.constant 0 : index
    %c0_8 = arith.constant 0 : index
    %8 = vector.load %arg2[%c2, %c0_7, %c0_8] : memref<4x512x64xf32, #tpu.memory_space<vmem>>, vector<1x512x64xf32>
    %9 = vector.shape_cast %8 : vector<1x512x64xf32> to vector<512x64xf32>
    %cst_9 = arith.constant dense<0.000000e+00> : vector<64x64xf32>
    %10 = tpu.matmul %0, %9, %cst_9 {dimension_numbers = #tpu.dot_dimension_numbers<[1], [0], [0], [1], [0, 0, 1, 1], [], []>} : vector<64x512xf32>, vector<512x64xf32>, vector<64x64xf32> -> vector<64x64xf32>
    %11 = arith.maximumf %7, %10 : vector<64x64xf32>
    %c3 = arith.constant 3 : index
    %c0_10 = arith.constant 0 : index
    %c0_11 = arith.constant 0 : index
    %12 = vector.load %arg2[%c3, %c0_10, %c0_11] : memref<4x512x64xf32, #tpu.memory_space<vmem>>, vector<1x512x64xf32>
    %13 = vector.shape_cast %12 : vector<1x512x64xf32> to vector<512x64xf32>
    %cst_12 = arith.constant dense<0.000000e+00> : vector<64x64xf32>
    %14 = tpu.matmul %0, %13, %cst_12 {dimension_numbers = #tpu.dot_dimension_numbers<[1], [0], [0], [1], [0, 0, 1, 1], [], []>} : vector<64x512xf32>, vector<512x64xf32>, vector<64x64xf32> -> vector<64x64xf32>
    %15 = arith.maximumf %11, %14 : vector<64x64xf32>
    %c0_13 = arith.constant 0 : index
    %c0_14 = arith.constant 0 : index
    %16 = vector.load %arg3[%c0_13, %c0_14] : memref<1x64xf32, #tpu.memory_space<vmem>>, vector<1x64xf32>
    %17 = vector.broadcast %16 : vector<1x64xf32> to vector<64x64xf32>
    %18 = arith.addf %15, %17 : vector<64x64xf32>
    %cst_15 = arith.constant 0.000000e+00 : f32
    %19 = vector.broadcast %cst_15 : f32 to vector<64x64xf32>
    %20 = arith.maximumf %18, %19 : vector<64x64xf32>
    %c0_16 = arith.constant 0 : index
    %c0_17 = arith.constant 0 : index
    %21 = vector.load %arg4[%c0_16, %c0_17] : memref<64x64xf32, #tpu.memory_space<vmem>>, vector<64x64xf32>
    tpu.vector_store %arg4[%c0_16, %c0_17], %20 {strides = array<i32>} : memref<64x64xf32, #tpu.memory_space<vmem>>, vector<64x64xf32>,
    return
  }
  func.func @transform_0(%arg0: i32) -> (i32, i32) {
    %c0_i32 = arith.constant 0 : i32
    %c0_i32_0 = arith.constant 0 : i32
    return %arg0, %c0_i32 : i32, i32
  }
  func.func @transform_1(%arg0: i32) -> (i32, i32, i32) {
    %c0_i32 = arith.constant 0 : i32
    %c0_i32_0 = arith.constant 0 : i32
    %c0_i32_1 = arith.constant 0 : i32
    %c0_i32_2 = arith.constant 0 : i32
    return %c0_i32, %c0_i32_0, %c0_i32_1 : i32, i32, i32
  }
  func.func @transform_2(%arg0: i32) -> (i32, i32) {
    %c0_i32 = arith.constant 0 : i32
    %c0_i32_0 = arith.constant 0 : i32
    %c0_i32_1 = arith.constant 0 : i32
    return %c0_i32, %c0_i32_0 : i32, i32
  }
  func.func @transform_3(%arg0: i32) -> (i32, i32) {
    %c0_i32 = arith.constant 0 : i32
    %c0_i32_0 = arith.constant 0 : i32
    return %arg0, %c0_i32 : i32, i32
  }
}

module attributes {stable_mosaic.version = 11 : i64} {
  func.func @_mlp_kernel(%arg0: i32, %arg1: memref<2x4096xf32, #tpu.memory_space<vmem>>, %arg2: memref<4096x128xf32, #tpu.memory_space<vmem>>, %arg3: memref<1x128xf32, #tpu.memory_space<vmem>>, %arg4: memref<128x2xf32, #tpu.memory_space<vmem>>, %arg5: memref<1x2xf32, #tpu.memory_space<vmem>>, %arg6: memref<2x2xf32, #tpu.memory_space<vmem>>) attributes {dimension_semantics = [#tpu.dimension_semantics<arbitrary>], iteration_bounds = array<i64: 1>, scalar_prefetch = 0 : i64, scratch_operands = 0 : i64, tpu.core_type = #tpu.core_type<tc>, window_params = [{pipeline_mode = #tpu.pipeline_mode<synchronous>, transform_indices = @transform_0, window_bounds = array<i64: 2, 4096>}, {pipeline_mode = #tpu.pipeline_mode<synchronous>, transform_indices = @transform_1, window_bounds = array<i64: 4096, 128>}, {pipeline_mode = #tpu.pipeline_mode<synchronous>, transform_indices = @transform_2, window_bounds = array<i64: 1, 128>}, {pipeline_mode = #tpu.pipeline_mode<synchronous>, transform_indices = @transform_3, window_bounds = array<i64: 128, 2>}, {pipeline_mode = #tpu.pipeline_mode<synchronous>, transform_indices = @transform_4, window_bounds = array<i64: 1, 2>}, {pipeline_mode = #tpu.pipeline_mode<synchronous>, transform_indices = @transform_5, window_bounds = array<i64: 2, 2>}]} {
    %c0 = arith.constant 0 : index
    %c0_0 = arith.constant 0 : index
    %0 = vector.load %arg1[%c0, %c0_0] : memref<2x4096xf32, #tpu.memory_space<vmem>>, vector<2x4096xf32>
    %c0_1 = arith.constant 0 : index
    %c0_2 = arith.constant 0 : index
    %1 = vector.load %arg2[%c0_1, %c0_2] : memref<4096x128xf32, #tpu.memory_space<vmem>>, vector<4096x128xf32>
    %cst = arith.constant dense<0.000000e+00> : vector<2x128xf32>
    %2 = tpu.matmul %0, %1, %cst {dimension_numbers = #tpu.dot_dimension_numbers<[1], [0], [0], [1], [0, 0, 1, 1], [], []>} : vector<2x4096xf32>, vector<4096x128xf32>, vector<2x128xf32> -> vector<2x128xf32>
    %c0_3 = arith.constant 0 : index
    %c0_4 = arith.constant 0 : index
    %3 = vector.load %arg3[%c0_3, %c0_4] : memref<1x128xf32, #tpu.memory_space<vmem>>, vector<1x128xf32>
    %4 = vector.broadcast %3 : vector<1x128xf32> to vector<2x128xf32>
    %5 = arith.addf %2, %4 : vector<2x128xf32>
    %cst_5 = arith.constant 0.000000e+00 : f32
    %6 = vector.broadcast %cst_5 : f32 to vector<2x128xf32>
    %7 = arith.maximumf %5, %6 : vector<2x128xf32>
    %c0_6 = arith.constant 0 : index
    %c0_7 = arith.constant 0 : index
    %8 = vector.load %arg4[%c0_6, %c0_7] : memref<128x2xf32, #tpu.memory_space<vmem>>, vector<128x2xf32>
    %cst_8 = arith.constant dense<0.000000e+00> : vector<2x2xf32>
    %9 = tpu.matmul %7, %8, %cst_8 {dimension_numbers = #tpu.dot_dimension_numbers<[1], [0], [0], [1], [0, 0, 1, 1], [], []>} : vector<2x128xf32>, vector<128x2xf32>, vector<2x2xf32> -> vector<2x2xf32>
    %c0_9 = arith.constant 0 : index
    %c0_10 = arith.constant 0 : index
    %10 = vector.load %arg5[%c0_9, %c0_10] : memref<1x2xf32, #tpu.memory_space<vmem>>, vector<1x2xf32>
    %11 = vector.broadcast %10 : vector<1x2xf32> to vector<2x2xf32>
    %12 = arith.addf %9, %11 : vector<2x2xf32>
    %c0_11 = arith.constant 0 : index
    %c0_12 = arith.constant 0 : index
    %13 = vector.load %arg6[%c0_11, %c0_12] : memref<2x2xf32, #tpu.memory_space<vmem>>, vector<2x2xf32>
    tpu.vector_store %arg6[%c0_11, %c0_12], %12 {strides = array<i32>} : memref<2x2xf32, #tpu.memory_space<vmem>>, vector<2x2xf32>,
    return
  }
  func.func @transform_0(%arg0: i32) -> (i32, i32) {
    %c0_i32 = arith.constant 0 : i32
    %c0_i32_0 = arith.constant 0 : i32
    %c0_i32_1 = arith.constant 0 : i32
    return %c0_i32, %c0_i32_0 : i32, i32
  }
  func.func @transform_1(%arg0: i32) -> (i32, i32) {
    %c0_i32 = arith.constant 0 : i32
    %c0_i32_0 = arith.constant 0 : i32
    %c0_i32_1 = arith.constant 0 : i32
    return %c0_i32, %c0_i32_0 : i32, i32
  }
  func.func @transform_2(%arg0: i32) -> (i32, i32) {
    %c0_i32 = arith.constant 0 : i32
    %c0_i32_0 = arith.constant 0 : i32
    %c0_i32_1 = arith.constant 0 : i32
    return %c0_i32, %c0_i32_0 : i32, i32
  }
  func.func @transform_3(%arg0: i32) -> (i32, i32) {
    %c0_i32 = arith.constant 0 : i32
    %c0_i32_0 = arith.constant 0 : i32
    %c0_i32_1 = arith.constant 0 : i32
    return %c0_i32, %c0_i32_0 : i32, i32
  }
  func.func @transform_4(%arg0: i32) -> (i32, i32) {
    %c0_i32 = arith.constant 0 : i32
    %c0_i32_0 = arith.constant 0 : i32
    %c0_i32_1 = arith.constant 0 : i32
    return %c0_i32, %c0_i32_0 : i32, i32
  }
  func.func @transform_5(%arg0: i32) -> (i32, i32) {
    %c0_i32 = arith.constant 0 : i32
    %c0_i32_0 = arith.constant 0 : i32
    %c0_i32_1 = arith.constant 0 : i32
    return %c0_i32, %c0_i32_0 : i32, i32
  }
}

</mosaic_0001>

<llo_original>
// kernel: solarnet_forward.4
$region0: #{solarnet_forward.4}
  #allocation0 [shape = 'u32[]', space=smem, size = 0x4, offset = 0x4, fixed_abs, tag = 'smem constant byte address 0x4 - core index']
  #allocation1 [shape = 'u32[144,128]{1,0:T(1,128)}', space=vmem, size = 0x12000, scoped, tag = 'internal scratch']
  %s0 = inlined_call_operand.vmem [shape: f32[2048,128], index: 0, kind: input, shape index: {}]
  %s1 = inlined_call_operand.vmem [shape: f32[4,128,16], index: 1, kind: input, shape index: {}]
  %s2 = inlined_call_operand.vmem [shape: f32[1,16], index: 2, kind: input, shape index: {}]
  %s3 = inlined_call_operand.vmem [shape: f32[2048,16], index: 3, kind: output, shape index: {}]
  %s4 = sld [smem:[#allocation0]]
  $region45: #{solarnet_forward.4} parent=0
    _
  %s6 = ssub.s32 1, %s4
  %s7 = scalar_select 0, %s6, %s4
  loop: start=0, step=1, limit=6
  $region2: #{solarnet_forward.4} parent=0 // loop_pre_header
    _
  $region3: #{solarnet_forward.4} parent=0 // loop_header
    %s9 = sphi 0, %s13
    %p10 = scmp.ge.s32.totalorder %s9, 6
    %s19 = sphi 0, %s21
    %s22 = sphi 0, %s19
    %s23 = sphi 0, %s22
    %s39 = sphi 0, %s23
    %s43 = sphi 0, %s43
    %s45 = sphi 0, %s43
    %s46 = sphi 0, %s45
    %s60 = sphi 0, %s46
    %s64 = sphi 0, %s64
    %s66 = sphi 0, %s64
    %s67 = sphi 0, %s66
    %s81 = sphi 0, %s67
    %s87 = sphi 0, %s89
    %s90 = sphi 0, %s87
    %s91 = sphi 0, %s90
    %s107 = sphi 0, %s91
  $region4: #{solarnet_forward.4} parent=0 // loop_header_branch
    %12 = sbr.rel (%p10) target = $region8
  $region5: #{solarnet_forward.4} parent=0 // loop_body
    %s14 = ssub.s32 %s9, 1
    %s15 = ssub.s32 %s9, 2
    %s16 = sadd.s32 %s9, 1
    %s17 = ssub.s32 %s9, %s16
    %p18 = scmp.eq.s32.totalorder %s17, 0
    %s20 = sadd.s32 %s19, 1
    %s21 = scalar_select %p18, %s19, %s20
    %p24 = pneg %p18
    %p25 = scmp.eq.s32.totalorder %s9, 3
    %p26 = por %p24, %p25
    %p27 = scmp.ne.s32.totalorder %s19, %s22
    %p28 = scmp.eq.s32.totalorder %s9, 0
    %p29 = por %p27, %p28
    %p30 = scmp.ne.s32.totalorder %s19, %s22
    %p31 = scmp.eq.s32.totalorder %s14, 3
    %p32 = por %p30, %p31
    %p33 = scmp.ne.s32.totalorder %s22, %s23
    %p34 = scmp.eq.s32.totalorder %s14, 0
    %p35 = por %p33, %p34
    %p36 = scmp.ne.s32.totalorder %s22, %s23
    %p37 = scmp.eq.s32.totalorder %s15, 3
    %p38 = por %p36, %p37
    %p40 = scmp.ne.s32.totalorder %s23, %s39
    %p41 = scmp.eq.s32.totalorder %s15, 0
    %p42 = por %p40, %p41
    %s44 = sadd.s32 %s43, 1
    %p47 = scmp.eq.s32.totalorder %s9, 3
    %p48 = scmp.ne.s32.totalorder %s43, %s45
    %p49 = scmp.eq.s32.totalorder %s9, 0
    %p50 = por %p48, %p49
    %p51 = scmp.ne.s32.totalorder %s43, %s45
    %p52 = scmp.eq.s32.totalorder %s14, 3
    %p53 = por %p51, %p52
    %p54 = scmp.ne.s32.totalorder %s45, %s46
    %p55 = scmp.eq.s32.totalorder %s14, 0
    %p56 = por %p54, %p55
    %p57 = scmp.ne.s32.totalorder %s45, %s46
    %p58 = scmp.eq.s32.totalorder %s15, 3
    %p59 = por %p57, %p58
    %p61 = scmp.ne.s32.totalorder %s46, %s60
    %p62 = scmp.eq.s32.totalorder %s15, 0
    %p63 = por %p61, %p62
    %s65 = sadd.s32 %s64, 1
    %p68 = scmp.eq.s32.totalorder %s9, 3
    %p69 = scmp.ne.s32.totalorder %s64, %s66
    %p70 = scmp.eq.s32.totalorder %s9, 0
    %p71 = por %p69, %p70
    %p72 = scmp.ne.s32.totalorder %s64, %s66
    %p73 = scmp.eq.s32.totalorder %s14, 3
    %p74 = por %p72, %p73
    %p75 = scmp.ne.s32.totalorder %s66, %s67
    %p76 = scmp.eq.s32.totalorder %s14, 0
    %p77 = por %p75, %p76
    %p78 = scmp.ne.s32.totalorder %s66, %s67
    %p79 = scmp.eq.s32.totalorder %s15, 3
    %p80 = por %p78, %p79
    %p82 = scmp.ne.s32.totalorder %s67, %s81
    %p83 = scmp.eq.s32.totalorder %s15, 0
    %p84 = por %p82, %p83
    %s85 = ssub.s32 %s9, %s16
    %p86 = scmp.eq.s32.totalorder %s85, 0
    %s88 = sadd.s32 %s87, 1
    %s89 = scalar_select %p86, %s87, %s88
    %p92 = pneg %p86
    %p93 = scmp.eq.s32.totalorder %s9, 3
    %p94 = por %p92, %p93
    %p95 = scmp.ne.s32.totalorder %s87, %s90
    %p96 = scmp.eq.s32.totalorder %s9, 0
    %p97 = por %p95, %p96
    %p98 = scmp.ne.s32.totalorder %s87, %s90
    %p99 = scmp.eq.s32.totalorder %s14, 3
    %p100 = por %p98, %p99
    %p101 = scmp.ne.s32.totalorder %s90, %s91
    %p102 = scmp.eq.s32.totalorder %s14, 0
    %p103 = por %p101, %p102
    %p104 = scmp.ne.s32.totalorder %s90, %s91
    %p105 = scmp.eq.s32.totalorder %s15, 3
    %p106 = por %p104, %p105
    %p108 = scmp.ne.s32.totalorder %s91, %s107
    %p109 = scmp.eq.s32.totalorder %s15, 0
    %p110 = por %p108, %p109
    %p111 = scmp.le.s32.totalorder 1, %s9
    %p112 = scmp.lt.s32.totalorder %s9, 5
    %p113 = pnand %p111, %p112
    %p114 = pneg %p113
    // Predicated region
    $region9: #{solarnet_forward.4} parent=5 // pred_check
      _
    $region10: #{solarnet_forward.4} parent=5 // pred_check_branch
      %116 = sbr.rel (%p113) target = $region12
    $region11: #{solarnet_forward.4} parent=5 // pred_region
      %s117 = ssub.s32 %s9, 1
      // Predicated region
      $region13: #{solarnet_forward.4} parent=11 // pred_check
        %p118 = pneg %p56
      $region14: #{solarnet_forward.4} parent=11 // pred_check_branch
        %120 = sbr.rel (%p118) target = $region16
      $region15: #{solarnet_forward.4} parent=11 // pred_region
        _
      $region16: #{solarnet_forward.4} parent=11 // pred_fallthru
        _
      // Predicated region
      $region17: #{solarnet_forward.4} parent=11 // pred_check
        %p121 = pneg %p77
      $region18: #{solarnet_forward.4} parent=11 // pred_check_branch
        %123 = sbr.rel (%p121) target = $region20
      $region19: #{solarnet_forward.4} parent=11 // pred_region
        _
      $region20: #{solarnet_forward.4} parent=11 // pred_fallthru
        _
    $region12: #{solarnet_forward.4} parent=5 // pred_fallthru
      _
    %p124 = scmp.lt.s32.totalorder %s9, 4
    // Predicated region
    $region21: #{solarnet_forward.4} parent=5 // pred_check
      %p125 = pneg %p124
    $region22: #{solarnet_forward.4} parent=5 // pred_check_branch
      %127 = sbr.rel (%p125) target = $region24
    $region23: #{solarnet_forward.4} parent=5 // pred_region
      // Predicated region
      $region25: #{solarnet_forward.4} parent=23 // pred_check
        %p128 = pneg %p29
      $region26: #{solarnet_forward.4} parent=23 // pred_check_branch
        %130 = sbr.rel (%p128) target = $region28
      $region27: #{solarnet_forward.4} parent=23 // pred_region
        %s131 = smul.u32 64, %s9
        %p132 = scmp.lt.s32.totalorder %s131, 255
        %s133 = scalar_select %p132, %s131, 255
        %s134 = smul.addr %s133, 8
        %s135 = scalar_lea.vmem %s0, %s134
        %s136 = smul.u32 64, %s9
      $region28: #{solarnet_forward.4} parent=23 // pred_fallthru
        _
    $region24: #{solarnet_forward.4} parent=5 // pred_fallthru
      _
    %p137 = scmp.le.s32.totalorder 1, %s9
    %p138 = scmp.lt.s32.totalorder %s9, 5
    %p139 = pnand %p137, %p138
    %p140 = pneg %p139
    // Predicated region
    $region29: #{solarnet_forward.4} parent=5 // pred_check
      _
    $region30: #{solarnet_forward.4} parent=5 // pred_check_branch
      %142 = sbr.rel (%p139) target = $region32
    $region31: #{solarnet_forward.4} parent=5 // pred_region
      %s143 = ssub.s32 %s9, 1
      %s144 = smul.u32 64, %s14
      %p145 = scmp.lt.s32.totalorder %s144, 255
      %s146 = scalar_select %p145, %s144, 255
      %s147 = smul.addr %s146, 8
      %s148 = scalar_lea.vmem %s0, %s147
      %p149 = pneg %p35
      %p150 = pneg %p32
      %p151 = pneg %p56
      %p152 = pneg %p53
      %p153 = pneg %p77
      %p154 = pneg %p74
      %p155 = pneg %p103
      %p156 = pneg %p100
      %s157 = smul.u32 64, %s14
      %p158 = scmp.lt.s32.totalorder %s157, 255
      %s159 = scalar_select %p158, %s157, 255
      %s160 = smul.addr %s159, 8
      %s161 = scalar_lea.vmem %s3, %s160
      %s162 = smul.u32 64, %s14
      %p163 = scmp.lt.s32.totalorder %s162, 255
      %s164 = scalar_select %p163, %s162, 255
      %s165 = smul.addr %s164, 8
      %s166 = scalar_lea.vmem %s0, %s165
      %s167 = smul.u32 64, %s14
      %s168 = smul.u32 64, %s14
      %p169 = scmp.lt.s32.totalorder %s168, 255
      %s170 = scalar_select %p169, %s168, 255
      %s171 = smul.addr %s170, 8
      %s172 = scalar_lea.vmem %s3, %s171
      %s173 = smul.u32 64, %s14
      %v174 = vld [vmem:[%s166] sm:$0xff]
      %v175 = vld [vmem:[%s166 + $0x8] sm:$0xff]
      %v176 = vld [vmem:[%s166 + $0x10] sm:$0xff]
      %v177 = vld [vmem:[%s166 + $0x18] sm:$0xff]
      %v178 = vld [vmem:[%s166 + $0x20] sm:$0xff]
      %v179 = vld [vmem:[%s166 + $0x28] sm:$0xff]
      %v180 = vld [vmem:[%s166 + $0x30] sm:$0xff]
      %v181 = vld [vmem:[%s166 + $0x38] sm:$0xff]
      %v182 = vld [vmem:[%s166 + $0x40] sm:$0xff]
      %v183 = vld [vmem:[%s166 + $0x48] sm:$0xff]
      %v184 = vld [vmem:[%s166 + $0x50] sm:$0xff]
      %v185 = vld [vmem:[%s166 + $0x58] sm:$0xff]
      %v186 = vld [vmem:[%s166 + $0x60] sm:$0xff]
      %v187 = vld [vmem:[%s166 + $0x68] sm:$0xff]
      %v188 = vld [vmem:[%s166 + $0x70] sm:$0xff]
      %v189 = vld [vmem:[%s166 + $0x78] sm:$0xff]
      %v190 = vld [vmem:[%s166 + $0x80] sm:$0xff]
      %v191 = vld [vmem:[%s166 + $0x88] sm:$0xff]
      %v192 = vld [vmem:[%s166 + $0x90] sm:$0xff]
      %v193 = vld [vmem:[%s166 + $0x98] sm:$0xff]
      %v194 = vld [vmem:[%s166 + $0xa0] sm:$0xff]
      %v195 = vld [vmem:[%s166 + $0xa8] sm:$0xff]
      %v196 = vld [vmem:[%s166 + $0xb0] sm:$0xff]
      %v197 = vld [vmem:[%s166 + $0xb8] sm:$0xff]
      %v198 = vld [vmem:[%s166 + $0xc0] sm:$0xff]
      %v199 = vld [vmem:[%s166 + $0xc8] sm:$0xff]
      %v200 = vld [vmem:[%s166 + $0xd0] sm:$0xff]
      %v201 = vld [vmem:[%s166 + $0xd8] sm:$0xff]
      %v202 = vld [vmem:[%s166 + $0xe0] sm:$0xff]
      %v203 = vld [vmem:[%s166 + $0xe8] sm:$0xff]
      %v204 = vld [vmem:[%s166 + $0xf0] sm:$0xff]
      %v205 = vld [vmem:[%s166 + $0xf8] sm:$0xff]
      %v206 = vld [vmem:[%s166 + $0x100] sm:$0xff]
      %v207 = vld [vmem:[%s166 + $0x108] sm:$0xff]
      %v208 = vld [vmem:[%s166 + $0x110] sm:$0xff]
      %v209 = vld [vmem:[%s166 + $0x118] sm:$0xff]
      %v210 = vld [vmem:[%s166 + $0x120] sm:$0xff]
      %v211 = vld [vmem:[%s166 + $0x128] sm:$0xff]
      %v212 = vld [vmem:[%s166 + $0x130] sm:$0xff]
      %v213 = vld [vmem:[%s166 + $0x138] sm:$0xff]
      %v214 = vld [vmem:[%s166 + $0x140] sm:$0xff]
      %v215 = vld [vmem:[%s166 + $0x148] sm:$0xff]
      %v216 = vld [vmem:[%s166 + $0x150] sm:$0xff]
      %v217 = vld [vmem:[%s166 + $0x158] sm:$0xff]
      %v218 = vld [vmem:[%s166 + $0x160] sm:$0xff]
      %v219 = vld [vmem:[%s166 + $0x168] sm:$0xff]
      %v220 = vld [vmem:[%s166 + $0x170] sm:$0xff]
      %v221 = vld [vmem:[%s166 + $0x178] sm:$0xff]
      %v222 = vld [vmem:[%s166 + $0x180] sm:$0xff]
      %v223 = vld [vmem:[%s166 + $0x188] sm:$0xff]
      %v224 = vld [vmem:[%s166 + $0x190] sm:$0xff]
      %v225 = vld [vmem:[%s166 + $0x198] sm:$0xff]
      %v226 = vld [vmem:[%s166 + $0x1a0] sm:$0xff]
      %v227 = vld [vmem:[%s166 + $0x1a8] sm:$0xff]
      %v228 = vld [vmem:[%s166 + $0x1b0] sm:$0xff]
      %v229 = vld [vmem:[%s166 + $0x1b8] sm:$0xff]
      %v230 = vld [vmem:[%s166 + $0x1c0] sm:$0xff]
      %v231 = vld [vmem:[%s166 + $0x1c8] sm:$0xff]
      %v232 = vld [vmem:[%s166 + $0x1d0] sm:$0xff]
      %v233 = vld [vmem:[%s166 + $0x1d8] sm:$0xff]
      %v234 = vld [vmem:[%s166 + $0x1e0] sm:$0xff]
      %v235 = vld [vmem:[%s166 + $0x1e8] sm:$0xff]
      %v236 = vld [vmem:[%s166 + $0x1f0] sm:$0xff]
      %v237 = vld [vmem:[%s166 + $0x1f8] sm:$0xff]
      %v238 = vld [vmem:[%s1] sm:$0xff]
      %v239 = vld [vmem:[%s1 + $0x8] sm:$0xff]
      %v240 = vld [vmem:[%s1 + $0x10] sm:$0xff]
      %v241 = vld [vmem:[%s1 + $0x18] sm:$0xff]
      %v242 = vld [vmem:[%s1 + $0x20] sm:$0xff]
      %v243 = vld [vmem:[%s1 + $0x28] sm:$0xff]
      %v244 = vld [vmem:[%s1 + $0x30] sm:$0xff]
      %v245 = vld [vmem:[%s1 + $0x38] sm:$0xff]
      %v246 = vld [vmem:[%s1 + $0x40] sm:$0xff]
      %v247 = vld [vmem:[%s1 + $0x48] sm:$0xff]
      %v248 = vld [vmem:[%s1 + $0x50] sm:$0xff]
      %v249 = vld [vmem:[%s1 + $0x58] sm:$0xff]
      %v250 = vld [vmem:[%s1 + $0x60] sm:$0xff]
      %v251 = vld [vmem:[%s1 + $0x68] sm:$0xff]
      %v252 = vld [vmem:[%s1 + $0x70] sm:$0xff]
      %v253 = vld [vmem:[%s1 + $0x78] sm:$0xff]
      %254 = vmatprep.subr.mxu0 0.0
      %255 = vmatpush1.msra.mxu0 %v253
      %256 = vmatprep.subr.mxu0 0.0
      %257 = vmatpush1.msra.mxu0 %v252
      %258 = vmatprep.subr.mxu0 0.0
      %259 = vmatpush1.msra.mxu0 %v251
      %260 = vmatprep.subr.mxu0 0.0
      %261 = vmatpush1.msra.mxu0 %v250
      %262 = vmatprep.subr.mxu0 0.0
      %263 = vmatpush1.msra.mxu0 %v249
      %264 = vmatprep.subr.mxu0 0.0
      %265 = vmatpush1.msra.mxu0 %v248
      %266 = vmatprep.subr.mxu0 0.0
      %267 = vmatpush1.msra.mxu0 %v247
      %268 = vmatprep.subr.mxu0 0.0
      %269 = vmatpush1.msra.mxu0 %v246
      %270 = vmatprep.subr.mxu0 0.0
      %271 = vmatpush1.msra.mxu0 %v245
      %272 = vmatprep.subr.mxu0 0.0
      %273 = vmatpush1.msra.mxu0 %v244
      %274 = vmatprep.subr.mxu0 0.0
      %275 = vmatpush1.msra.mxu0 %v243
      %276 = vmatprep.subr.mxu0 0.0
      %277 = vmatpush1.msra.mxu0 %v242
      %278 = vmatprep.subr.mxu0 0.0
      %279 = vmatpush1.msra.mxu0 %v241
      %280 = vmatprep.subr.mxu0 0.0
      %281 = vmatpush1.msra.mxu0 %v240
      %282 = vmatprep.subr.mxu0 0.0
      %283 = vmatpush1.msra.mxu0 %v239
      %284 = vmatprep.subr.mxu0 0.0
      %285 = vmatpush1.msra.mxu0 %v238
      %286 = vmatprep.subr.mxu0 0.0
      %287 = vmatpush2.msra.mxu0 0.0
      %288 = vmatprep.subr.mxu0 0.0
      %289 = vmatpush2.msra.mxu0 0.0
      %290 = vmatprep.subr.mxu0 0.0
      %291 = vmatpush2.msra.mxu0 0.0
      %292 = vmatprep.subr.mxu0 0.0
      %293 = vmatpush2.msra.mxu0 0.0
      %294 = vmatprep.subr.mxu0 0.0
      %295 = vmatpush2.msra.mxu0 0.0
      %296 = vmatprep.subr.mxu0 0.0
      %297 = vmatpush2.msra.mxu0 0.0
      %298 = vmatprep.subr.mxu0 0.0
      %299 = vmatpush2.msra.mxu0 0.0
      %300 = vmatprep.subr.mxu0 0.0
      %301 = vmatpush2.msra.mxu0 0.0
      %302 = vmatprep.subr.mxu0 0.0
      %303 = vmatpush2.msra.mxu0 0.0
      %304 = vmatprep.subr.mxu0 0.0
      %305 = vmatpush2.msra.mxu0 0.0
      %306 = vmatprep.subr.mxu0 0.0
      %307 = vmatpush2.msra.mxu0 0.0
      %308 = vmatprep.subr.mxu0 0.0
      %309 = vmatpush2.msra.mxu0 0.0
      %310 = vmatprep.subr.mxu0 0.0
      %311 = vmatpush2.msra.mxu0 0.0
      %312 = vmatprep.subr.mxu0 0.0
      %313 = vmatpush2.msra.mxu0 0.0
      %314 = vmatprep.subr.mxu0 0.0
      %315 = vmatpush2.msra.mxu0 0.0
      %316 = vmatprep.subr.mxu0 0.0
      %317 = vmatpush2.msra.mxu0 0.0
      %318 = vmatprep.mubr.f32.mxu0 0.0
      %319 = vmatmul.mubr.f32.gmra.mxu0 %v174
      %v320 = vpop.f32.mrf.mxu0
      %v321 = vadd.f32 0.0, %v320
      %v322 = vpop.f32.mrf.mxu0
      %323 = vmatprep.mubr.f32.mxu0 0.0
      %324 = vmatmul.mubr.f32.gmra.mxu0 %v175
      %v325 = vpop.f32.mrf.mxu0
      %v326 = vadd.f32 0.0, %v325
      %v327 = vpop.f32.mrf.mxu0
      %328 = vmatprep.mubr.f32.mxu0 0.0
      %329 = vmatmul.mubr.f32.gmra.mxu0 %v176
      %v330 = vpop.f32.mrf.mxu0
      %v331 = vadd.f32 0.0, %v330
      %v332 = vpop.f32.mrf.mxu0
      %333 = vmatprep.mubr.f32.mxu0 0.0
      %334 = vmatmul.mubr.f32.gmra.mxu0 %v177
      %v335 = vpop.f32.mrf.mxu0
      %v336 = vadd.f32 0.0, %v335
      %v337 = vpop.f32.mrf.mxu0
      %338 = vmatprep.mubr.f32.mxu0 0.0
      %339 = vmatmul.mubr.f32.gmra.mxu0 %v178
      %v340 = vpop.f32.mrf.mxu0
      %v341 = vadd.f32 0.0, %v340
      %v342 = vpop.f32.mrf.mxu0
      %343 = vmatprep.mubr.f32.mxu0 0.0
      %344 = vmatmul.mubr.f32.gmra.mxu0 %v179
      %v345 = vpop.f32.mrf.mxu0
      %v346 = vadd.f32 0.0, %v345
      %v347 = vpop.f32.mrf.mxu0
      %348 = vmatprep.mubr.f32.mxu0 0.0
      %349 = vmatmul.mubr.f32.gmra.mxu0 %v180
      %v350 = vpop.f32.mrf.mxu0
      %v351 = vadd.f32 0.0, %v350
      %v352 = vpop.f32.mrf.mxu0
      %353 = vmatprep.mubr.f32.mxu0 0.0
      %354 = vmatmul.mubr.f32.gmra.mxu0 %v181
      %v355 = vpop.f32.mrf.mxu0
      %v356 = vadd.f32 0.0, %v355
      %v357 = vpop.f32.mrf.mxu0
      %358 = vmatprep.mubr.f32.mxu0 0.0
      %359 = vmatmul.mubr.f32.gmra.mxu0 %v182
      %v360 = vpop.f32.mrf.mxu0
      %v361 = vadd.f32 0.0, %v360
      %v362 = vpop.f32.mrf.mxu0
      %363 = vmatprep.mubr.f32.mxu0 0.0
      %364 = vmatmul.mubr.f32.gmra.mxu0 %v183
      %v365 = vpop.f32.mrf.mxu0
      %v366 = vadd.f32 0.0, %v365
      %v367 = vpop.f32.mrf.mxu0
      %368 = vmatprep.mubr.f32.mxu0 0.0
      %369 = vmatmul.mubr.f32.gmra.mxu0 %v184
      %v370 = vpop.f32.mrf.mxu0
      %v371 = vadd.f32 0.0, %v370
      %v372 = vpop.f32.mrf.mxu0
      %373 = vmatprep.mubr.f32.mxu0 0.0
      %374 = vmatmul.mubr.f32.gmra.mxu0 %v185
      %v375 = vpop.f32.mrf.mxu0
      %v376 = vadd.f32 0.0, %v375
      %v377 = vpop.f32.mrf.mxu0
      %378 = vmatprep.mubr.f32.mxu0 0.0
      %379 = vmatmul.mubr.f32.gmra.mxu0 %v186
      %v380 = vpop.f32.mrf.mxu0
      %v381 = vadd.f32 0.0, %v380
      %v382 = vpop.f32.mrf.mxu0
      %383 = vmatprep.mubr.f32.mxu0 0.0
      %384 = vmatmul.mubr.f32.gmra.mxu0 %v187
      %v385 = vpop.f32.mrf.mxu0
      %v386 = vadd.f32 0.0, %v385
      %v387 = vpop.f32.mrf.mxu0
      %388 = vmatprep.mubr.f32.mxu0 0.0
      %389 = vmatmul.mubr.f32.gmra.mxu0 %v188
      %v390 = vpop.f32.mrf.mxu0
      %v391 = vadd.f32 0.0, %v390
      %v392 = vpop.f32.mrf.mxu0
      %393 = vmatprep.mubr.f32.mxu0 0.0
      %394 = vmatmul.mubr.f32.gmra.mxu0 %v189
      %v395 = vpop.f32.mrf.mxu0
      %v396 = vadd.f32 0.0, %v395
      %v397 = vpop.f32.mrf.mxu0
      %398 = vmatprep.mubr.f32.mxu0 0.0
      %399 = vmatmul.mubr.f32.gmra.mxu0 %v190
      %v400 = vpop.f32.mrf.mxu0
      %v401 = vadd.f32 0.0, %v400
      %v402 = vpop.f32.mrf.mxu0
      %403 = vmatprep.mubr.f32.mxu0 0.0
      %404 = vmatmul.mubr.f32.gmra.mxu0 %v191
      %v405 = vpop.f32.mrf.mxu0
      %v406 = vadd.f32 0.0, %v405
      %v407 = vpop.f32.mrf.mxu0
      %408 = vmatprep.mubr.f32.mxu0 0.0
      %409 = vmatmul.mubr.f32.gmra.mxu0 %v192
      %v410 = vpop.f32.mrf.mxu0
      %v411 = vadd.f32 0.0, %v410
      %v412 = vpop.f32.mrf.mxu0
      %413 = vmatprep.mubr.f32.mxu0 0.0
      %414 = vmatmul.mubr.f32.gmra.mxu0 %v193
      %v415 = vpop.f32.mrf.mxu0
      %v416 = vadd.f32 0.0, %v415
      %v417 = vpop.f32.mrf.mxu0
      %418 = vmatprep.mubr.f32.mxu0 0.0
      %419 = vmatmul.mubr.f32.gmra.mxu0 %v194
      %v420 = vpop.f32.mrf.mxu0
      %v421 = vadd.f32 0.0, %v420
      %v422 = vpop.f32.mrf.mxu0
      %423 = vmatprep.mubr.f32.mxu0 0.0
      %424 = vmatmul.mubr.f32.gmra.mxu0 %v195
      %v425 = vpop.f32.mrf.mxu0
      %v426 = vadd.f32 0.0, %v425
      %v427 = vpop.f32.mrf.mxu0
      %428 = vmatprep.mubr.f32.mxu0 0.0
      %429 = vmatmul.mubr.f32.gmra.mxu0 %v196
      %v430 = vpop.f32.mrf.mxu0
      %v431 = vadd.f32 0.0, %v430
      %v432 = vpop.f32.mrf.mxu0
      %433 = vmatprep.mubr.f32.mxu0 0.0
      %434 = vmatmul.mubr.f32.gmra.mxu0 %v197
      %v435 = vpop.f32.mrf.mxu0
      %v436 = vadd.f32 0.0, %v435
      %v437 = vpop.f32.mrf.mxu0
      %438 = vmatprep.mubr.f32.mxu0 0.0
      %439 = vmatmul.mubr.f32.gmra.mxu0 %v198
      %v440 = vpop.f32.mrf.mxu0
      %v441 = vadd.f32 0.0, %v440
      %v442 = vpop.f32.mrf.mxu0
      %443 = vmatprep.mubr.f32.mxu0 0.0
      %444 = vmatmul.mubr.f32.gmra.mxu0 %v199
      %v445 = vpop.f32.mrf.mxu0
      %v446 = vadd.f32 0.0, %v445
      %v447 = vpop.f32.mrf.mxu0
      %448 = vmatprep.mubr.f32.mxu0 0.0
      %449 = vmatmul.mubr.f32.gmra.mxu0 %v200
      %v450 = vpop.f32.mrf.mxu0
      %v451 = vadd.f32 0.0, %v450
      %v452 = vpop.f32.mrf.mxu0
      %453 = vmatprep.mubr.f32.mxu0 0.0
      %454 = vmatmul.mubr.f32.gmra.mxu0 %v201
      %v455 = vpop.f32.mrf.mxu0
      %v456 = vadd.f32 0.0, %v455
      %v457 = vpop.f32.mrf.mxu0
      %458 = vmatprep.mubr.f32.mxu0 0.0
      %459 = vmatmul.mubr.f32.gmra.mxu0 %v202
      %v460 = vpop.f32.mrf.mxu0
      %v461 = vadd.f32 0.0, %v460
      %v462 = vpop.f32.mrf.mxu0
      %463 = vmatprep.mubr.f32.mxu0 0.0
      %464 = vmatmul.mubr.f32.gmra.mxu0 %v203
      %v465 = vpop.f32.mrf.mxu0
      %v466 = vadd.f32 0.0, %v465
      %v467 = vpop.f32.mrf.mxu0
      %468 = vmatprep.mubr.f32.mxu0 0.0
      %469 = vmatmul.mubr.f32.gmra.mxu0 %v204
      %v470 = vpop.f32.mrf.mxu0
      %v471 = vadd.f32 0.0, %v470
      %v472 = vpop.f32.mrf.mxu0
      %473 = vmatprep.mubr.f32.mxu0 0.0
      %474 = vmatmul.mubr.f32.gmra.mxu0 %v205
      %v475 = vpop.f32.mrf.mxu0
      %v476 = vadd.f32 0.0, %v475
      %v477 = vpop.f32.mrf.mxu0
      %478 = vmatprep.mubr.f32.mxu0 0.0
      %479 = vmatmul.mubr.f32.gmra.mxu0 %v206
      %v480 = vpop.f32.mrf.mxu0
      %v481 = vadd.f32 0.0, %v480
      %v482 = vpop.f32.mrf.mxu0
      %483 = vmatprep.mubr.f32.mxu0 0.0
      %484 = vmatmul.mubr.f32.gmra.mxu0 %v207
      %v485 = vpop.f32.mrf.mxu0
      %v486 = vadd.f32 0.0, %v485
      %v487 = vpop.f32.mrf.mxu0
      %488 = vmatprep.mubr.f32.mxu0 0.0
      %489 = vmatmul.mubr.f32.gmra.mxu0 %v208
      %v490 = vpop.f32.mrf.mxu0
      %v491 = vadd.f32 0.0, %v490
      %v492 = vpop.f32.mrf.mxu0
      %493 = vmatprep.mubr.f32.mxu0 0.0
      %494 = vmatmul.mubr.f32.gmra.mxu0 %v209
      %v495 = vpop.f32.mrf.mxu0
      %v496 = vadd.f32 0.0, %v495
      %v497 = vpop.f32.mrf.mxu0
      %498 = vmatprep.mubr.f32.mxu0 0.0
      %499 = vmatmul.mubr.f32.gmra.mxu0 %v210
      %v500 = vpop.f32.mrf.mxu0
      %v501 = vadd.f32 0.0, %v500
      %v502 = vpop.f32.mrf.mxu0
      %503 = vmatprep.mubr.f32.mxu0 0.0
      %504 = vmatmul.mubr.f32.gmra.mxu0 %v211
      %v505 = vpop.f32.mrf.mxu0
      %v506 = vadd.f32 0.0, %v505
      %v507 = vpop.f32.mrf.mxu0
      %508 = vmatprep.mubr.f32.mxu0 0.0
      %509 = vmatmul.mubr.f32.gmra.mxu0 %v212
      %v510 = vpop.f32.mrf.mxu0
      %v511 = vadd.f32 0.0, %v510
      %v512 = vpop.f32.mrf.mxu0
      %513 = vmatprep.mubr.f32.mxu0 0.0
      %514 = vmatmul.mubr.f32.gmra.mxu0 %v213
      %v515 = vpop.f32.mrf.mxu0
      %v516 = vadd.f32 0.0, %v515
      %v517 = vpop.f32.mrf.mxu0
      %518 = vmatprep.mubr.f32.mxu0 0.0
      %519 = vmatmul.mubr.f32.gmra.mxu0 %v214
      %v520 = vpop.f32.mrf.mxu0
      %v521 = vadd.f32 0.0, %v520
      %v522 = vpop.f32.mrf.mxu0
      %523 = vmatprep.mubr.f32.mxu0 0.0
      %524 = vmatmul.mubr.f32.gmra.mxu0 %v215
      %v525 = vpop.f32.mrf.mxu0
      %v526 = vadd.f32 0.0, %v525
      %v527 = vpop.f32.mrf.mxu0
      %528 = vmatprep.mubr.f32.mxu0 0.0
      %529 = vmatmul.mubr.f32.gmra.mxu0 %v216
      %v530 = vpop.f32.mrf.mxu0
      %v531 = vadd.f32 0.0, %v530
      %v532 = vpop.f32.mrf.mxu0
      %533 = vmatprep.mubr.f32.mxu0 0.0
      %534 = vmatmul.mubr.f32.gmra.mxu0 %v217
      %v535 = vpop.f32.mrf.mxu0
      %v536 = vadd.f32 0.0, %v535
      %v537 = vpop.f32.mrf.mxu0
      %538 = vmatprep.mubr.f32.mxu0 0.0
      %539 = vmatmul.mubr.f32.gmra.mxu0 %v218
      %v540 = vpop.f32.mrf.mxu0
      %v541 = vadd.f32 0.0, %v540
      %v542 = vpop.f32.mrf.mxu0
      %543 = vmatprep.mubr.f32.mxu0 0.0
      %544 = vmatmul.mubr.f32.gmra.mxu0 %v219
      %v545 = vpop.f32.mrf.mxu0
      %v546 = vadd.f32 0.0, %v545
      %v547 = vpop.f32.mrf.mxu0
      %548 = vmatprep.mubr.f32.mxu0 0.0
      %549 = vmatmul.mubr.f32.gmra.mxu0 %v220
      %v550 = vpop.f32.mrf.mxu0
      %v551 = vadd.f32 0.0, %v550
      %v552 = vpop.f32.mrf.mxu0
      %553 = vmatprep.mubr.f32.mxu0 0.0
      %554 = vmatmul.mubr.f32.gmra.mxu0 %v221
      %v555 = vpop.f32.mrf.mxu0
      %v556 = vadd.f32 0.0, %v555
      %v557 = vpop.f32.mrf.mxu0
      %558 = vmatprep.mubr.f32.mxu0 0.0
      %559 = vmatmul.mubr.f32.gmra.mxu0 %v222
      %v560 = vpop.f32.mrf.mxu0
      %v561 = vadd.f32 0.0, %v560
      %v562 = vpop.f32.mrf.mxu0
      %563 = vmatprep.mubr.f32.mxu0 0.0
      %564 = vmatmul.mubr.f32.gmra.mxu0 %v223
      %v565 = vpop.f32.mrf.mxu0
      %v566 = vadd.f32 0.0, %v565
      %v567 = vpop.f32.mrf.mxu0
      %568 = vmatprep.mubr.f32.mxu0 0.0
      %569 = vmatmul.mubr.f32.gmra.mxu0 %v224
      %v570 = vpop.f32.mrf.mxu0
      %v571 = vadd.f32 0.0, %v570
      %v572 = vpop.f32.mrf.mxu0
      %573 = vmatprep.mubr.f32.mxu0 0.0
      %574 = vmatmul.mubr.f32.gmra.mxu0 %v225
      %v575 = vpop.f32.mrf.mxu0
      %v576 = vadd.f32 0.0, %v575
      %v577 = vpop.f32.mrf.mxu0
      %578 = vmatprep.mubr.f32.mxu0 0.0
      %579 = vmatmul.mubr.f32.gmra.mxu0 %v226
      %v580 = vpop.f32.mrf.mxu0
      %v581 = vadd.f32 0.0, %v580
      %v582 = vpop.f32.mrf.mxu0
      %583 = vmatprep.mubr.f32.mxu0 0.0
      %584 = vmatmul.mubr.f32.gmra.mxu0 %v227
      %v585 = vpop.f32.mrf.mxu0
      %v586 = vadd.f32 0.0, %v585
      %v587 = vpop.f32.mrf.mxu0
      %588 = vmatprep.mubr.f32.mxu0 0.0
      %589 = vmatmul.mubr.f32.gmra.mxu0 %v228
      %v590 = vpop.f32.mrf.mxu0
      %v591 = vadd.f32 0.0, %v590
      %v592 = vpop.f32.mrf.mxu0
      %593 = vmatprep.mubr.f32.mxu0 0.0
      %594 = vmatmul.mubr.f32.gmra.mxu0 %v229
      %v595 = vpop.f32.mrf.mxu0
      %v596 = vadd.f32 0.0, %v595
      %v597 = vpop.f32.mrf.mxu0
      %598 = vmatprep.mubr.f32.mxu0 0.0
      %599 = vmatmul.mubr.f32.gmra.mxu0 %v230
      %v600 = vpop.f32.mrf.mxu0
      %v601 = vadd.f32 0.0, %v600
      %v602 = vpop.f32.mrf.mxu0
      %603 = vmatprep.mubr.f32.mxu0 0.0
      %604 = vmatmul.mubr.f32.gmra.mxu0 %v231
      %v605 = vpop.f32.mrf.mxu0
      %v606 = vadd.f32 0.0, %v605
      %v607 = vpop.f32.mrf.mxu0
      %608 = vmatprep.mubr.f32.mxu0 0.0
      %609 = vmatmul.mubr.f32.gmra.mxu0 %v232
      %v610 = vpop.f32.mrf.mxu0
      %v611 = vadd.f32 0.0, %v610
      %v612 = vpop.f32.mrf.mxu0
      %613 = vmatprep.mubr.f32.mxu0 0.0
      %614 = vmatmul.mubr.f32.gmra.mxu0 %v233
      %v615 = vpop.f32.mrf.mxu0
      %v616 = vadd.f32 0.0, %v615
      %v617 = vpop.f32.mrf.mxu0
      %618 = vmatprep.mubr.f32.mxu0 0.0
      %619 = vmatmul.mubr.f32.gmra.mxu0 %v234
      %v620 = vpop.f32.mrf.mxu0
      %v621 = vadd.f32 0.0, %v620
      %v622 = vpop.f32.mrf.mxu0
      %623 = vmatprep.mubr.f32.mxu0 0.0
      %624 = vmatmul.mubr.f32.gmra.mxu0 %v235
      %v625 = vpop.f32.mrf.mxu0
      %v626 = vadd.f32 0.0, %v625
      %v627 = vpop.f32.mrf.mxu0
      %628 = vmatprep.mubr.f32.mxu0 0.0
      %629 = vmatmul.mubr.f32.gmra.mxu0 %v236
      %v630 = vpop.f32.mrf.mxu0
      %v631 = vadd.f32 0.0, %v630
      %v632 = vpop.f32.mrf.mxu0
      %633 = vmatprep.mubr.f32.mxu0 0.0
      %634 = vmatmul.mubr.f32.gmra.mxu0 %v237
      %v635 = vpop.f32.mrf.mxu0
      %v636 = vadd.f32 0.0, %v635
      %v637 = vpop.f32.mrf.mxu0
      %638 = vdwg.mxu0
      %s639 = scalar_lea.vmem %s1, 128
      %v640 = vld [vmem:[%s639] sm:$0xff]
      %v641 = vld [vmem:[%s639 + $0x8] sm:$0xff]
      %v642 = vld [vmem:[%s639 + $0x10] sm:$0xff]
      %v643 = vld [vmem:[%s639 + $0x18] sm:$0xff]
      %v644 = vld [vmem:[%s639 + $0x20] sm:$0xff]
      %v645 = vld [vmem:[%s639 + $0x28] sm:$0xff]
      %v646 = vld [vmem:[%s639 + $0x30] sm:$0xff]
      %v647 = vld [vmem:[%s639 + $0x38] sm:$0xff]
      %v648 = vld [vmem:[%s639 + $0x40] sm:$0xff]
      %v649 = vld [vmem:[%s639 + $0x48] sm:$0xff]
      %v650 = vld [vmem:[%s639 + $0x50] sm:$0xff]
      %v651 = vld [vmem:[%s639 + $0x58] sm:$0xff]
      %v652 = vld [vmem:[%s639 + $0x60] sm:$0xff]
      %v653 = vld [vmem:[%s639 + $0x68] sm:$0xff]
      %v654 = vld [vmem:[%s639 + $0x70] sm:$0xff]
      %v655 = vld [vmem:[%s639 + $0x78] sm:$0xff]
      %656 = vmatprep.subr.mxu0 0.0
      %657 = vmatpush1.msra.mxu0 %v655
      %658 = vmatprep.subr.mxu0 0.0
      %659 = vmatpush1.msra.mxu0 %v654
      %660 = vmatprep.subr.mxu0 0.0
      %661 = vmatpush1.msra.mxu0 %v653
      %662 = vmatprep.subr.mxu0 0.0
      %663 = vmatpush1.msra.mxu0 %v652
      %664 = vmatprep.subr.mxu0 0.0
      %665 = vmatpush1.msra.mxu0 %v651
      %666 = vmatprep.subr.mxu0 0.0
      %667 = vmatpush1.msra.mxu0 %v650
      %668 = vmatprep.subr.mxu0 0.0
      %669 = vmatpush1.msra.mxu0 %v649
      %670 = vmatprep.subr.mxu0 0.0
      %671 = vmatpush1.msra.mxu0 %v648
      %672 = vmatprep.subr.mxu0 0.0
      %673 = vmatpush1.msra.mxu0 %v647
      %674 = vmatprep.subr.mxu0 0.0
      %675 = vmatpush1.msra.mxu0 %v646
      %676 = vmatprep.subr.mxu0 0.0
      %677 = vmatpush1.msra.mxu0 %v645
      %678 = vmatprep.subr.mxu0 0.0
      %679 = vmatpush1.msra.mxu0 %v644
      %680 = vmatprep.subr.mxu0 0.0
      %681 = vmatpush1.msra.mxu0 %v643
      %682 = vmatprep.subr.mxu0 0.0
      %683 = vmatpush1.msra.mxu0 %v642
      %684 = vmatprep.subr.mxu0 0.0
      %685 = vmatpush1.msra.mxu0 %v641
      %686 = vmatprep.subr.mxu0 0.0
      %687 = vmatpush1.msra.mxu0 %v640
      %688 = vmatprep.subr.mxu0 0.0
      %689 = vmatpush2.msra.mxu0 0.0
      %690 = vmatprep.subr.mxu0 0.0
      %691 = vmatpush2.msra.mxu0 0.0
      %692 = vmatprep.subr.mxu0 0.0
      %693 = vmatpush2.msra.mxu0 0.0
      %694 = vmatprep.subr.mxu0 0.0
      %695 = vmatpush2.msra.mxu0 0.0
      %696 = vmatprep.subr.mxu0 0.0
      %697 = vmatpush2.msra.mxu0 0.0
      %698 = vmatprep.subr.mxu0 0.0
      %699 = vmatpush2.msra.mxu0 0.0
      %700 = vmatprep.subr.mxu0 0.0
      %701 = vmatpush2.msra.mxu0 0.0
      %702 = vmatprep.subr.mxu0 0.0
      %703 = vmatpush2.msra.mxu0 0.0
      %704 = vmatprep.subr.mxu0 0.0
      %705 = vmatpush2.msra.mxu0 0.0
      %706 = vmatprep.subr.mxu0 0.0
      %707 = vmatpush2.msra.mxu0 0.0
      %708 = vmatprep.subr.mxu0 0.0
      %709 = vmatpush2.msra.mxu0 0.0
      %710 = vmatprep.subr.mxu0 0.0
      %711 = vmatpush2.msra.mxu0 0.0
      %712 = vmatprep.subr.mxu0 0.0
      %713 = vmatpush2.msra.mxu0 0.0
      %714 = vmatprep.subr.mxu0 0.0
      %715 = vmatpush2.msra.mxu0 0.0
      %716 = vmatprep.subr.mxu0 0.0
      %717 = vmatpush2.msra.mxu0 0.0
      %718 = vmatprep.subr.mxu0 0.0
      %719 = vmatpush2.msra.mxu0 0.0
      %720 = vmatprep.mubr.f32.mxu0 0.0
      %721 = vmatmul.mubr.f32.gmra.mxu0 %v174
      %v722 = vpop.f32.mrf.mxu0
      %v723 = vadd.f32 0.0, %v722
      %v724 = vpop.f32.mrf.mxu0
      %725 = vmatprep.mubr.f32.mxu0 0.0
      %726 = vmatmul.mubr.f32.gmra.mxu0 %v175
      %v727 = vpop.f32.mrf.mxu0
      %v728 = vadd.f32 0.0, %v727
      %v729 = vpop.f32.mrf.mxu0
      %730 = vmatprep.mubr.f32.mxu0 0.0
      %731 = vmatmul.mubr.f32.gmra.mxu0 %v176
      %v732 = vpop.f32.mrf.mxu0
      %v733 = vadd.f32 0.0, %v732
      %v734 = vpop.f32.mrf.mxu0
      %735 = vmatprep.mubr.f32.mxu0 0.0
      %736 = vmatmul.mubr.f32.gmra.mxu0 %v177
      %v737 = vpop.f32.mrf.mxu0
      %v738 = vadd.f32 0.0, %v737
      %v739 = vpop.f32.mrf.mxu0
      %740 = vmatprep.mubr.f32.mxu0 0.0
      %741 = vmatmul.mubr.f32.gmra.mxu0 %v178
      %v742 = vpop.f32.mrf.mxu0
      %v743 = vadd.f32 0.0, %v742
      %v744 = vpop.f32.mrf.mxu0
      %745 = vmatprep.mubr.f32.mxu0 0.0
      %746 = vmatmul.mubr.f32.gmra.mxu0 %v179
      %v747 = vpop.f32.mrf.mxu0
      %v748 = vadd.f32 0.0, %v747
      %v749 = vpop.f32.mrf.mxu0
      %750 = vmatprep.mubr.f32.mxu0 0.0
      %751 = vmatmul.mubr.f32.gmra.mxu0 %v180
      %v752 = vpop.f32.mrf.mxu0
      %v753 = vadd.f32 0.0, %v752
      %v754 = vpop.f32.mrf.mxu0
      %755 = vmatprep.mubr.f32.mxu0 0.0
      %756 = vmatmul.mubr.f32.gmra.mxu0 %v181
      %v757 = vpop.f32.mrf.mxu0
      %v758 = vadd.f32 0.0, %v757
      %v759 = vpop.f32.mrf.mxu0
      %760 = vmatprep.mubr.f32.mxu0 0.0
      %761 = vmatmul.mubr.f32.gmra.mxu0 %v182
      %v762 = vpop.f32.mrf.mxu0
      %v763 = vadd.f32 0.0, %v762
      %v764 = vpop.f32.mrf.mxu0
      %765 = vmatprep.mubr.f32.mxu0 0.0
      %766 = vmatmul.mubr.f32.gmra.mxu0 %v183
      %v767 = vpop.f32.mrf.mxu0
      %v768 = vadd.f32 0.0, %v767
      %v769 = vpop.f32.mrf.mxu0
      %770 = vmatprep.mubr.f32.mxu0 0.0
      %771 = vmatmul.mubr.f32.gmra.mxu0 %v184
      %v772 = vpop.f32.mrf.mxu0
      %v773 = vadd.f32 0.0, %v772
      %v774 = vpop.f32.mrf.mxu0
      %775 = vmatprep.mubr.f32.mxu0 0.0
      %776 = vmatmul.mubr.f32.gmra.mxu0 %v185
      %v777 = vpop.f32.mrf.mxu0
      %v778 = vadd.f32 0.0, %v777
      %v779 = vpop.f32.mrf.mxu0
      %780 = vmatprep.mubr.f32.mxu0 0.0
      %781 = vmatmul.mubr.f32.gmra.mxu0 %v186
      %v782 = vpop.f32.mrf.mxu0
      %v783 = vadd.f32 0.0, %v782
      %v784 = vpop.f32.mrf.mxu0
      %785 = vmatprep.mubr.f32.mxu0 0.0
      %786 = vmatmul.mubr.f32.gmra.mxu0 %v187
      %v787 = vpop.f32.mrf.mxu0
      %v788 = vadd.f32 0.0, %v787
      %v789 = vpop.f32.mrf.mxu0
      %790 = vmatprep.mubr.f32.mxu0 0.0
      %791 = vmatmul.mubr.f32.gmra.mxu0 %v188
      %v792 = vpop.f32.mrf.mxu0
      %v793 = vadd.f32 0.0, %v792
      %v794 = vpop.f32.mrf.mxu0
      %795 = vmatprep.mubr.f32.mxu0 0.0
      %796 = vmatmul.mubr.f32.gmra.mxu0 %v189
      %v797 = vpop.f32.mrf.mxu0
      %v798 = vadd.f32 0.0, %v797
      %v799 = vpop.f32.mrf.mxu0
      %800 = vmatprep.mubr.f32.mxu0 0.0
      %801 = vmatmul.mubr.f32.gmra.mxu0 %v190
      %v802 = vpop.f32.mrf.mxu0
      %v803 = vadd.f32 0.0, %v802
      %v804 = vpop.f32.mrf.mxu0
      %805 = vmatprep.mubr.f32.mxu0 0.0
      %806 = vmatmul.mubr.f32.gmra.mxu0 %v191
      %v807 = vpop.f32.mrf.mxu0
      %v808 = vadd.f32 0.0, %v807
      %v809 = vpop.f32.mrf.mxu0
      %810 = vmatprep.mubr.f32.mxu0 0.0
      %811 = vmatmul.mubr.f32.gmra.mxu0 %v192
      %v812 = vpop.f32.mrf.mxu0
      %v813 = vadd.f32 0.0, %v812
      %v814 = vpop.f32.mrf.mxu0
      %815 = vmatprep.mubr.f32.mxu0 0.0
      %816 = vmatmul.mubr.f32.gmra.mxu0 %v193
      %v817 = vpop.f32.mrf.mxu0
      %v818 = vadd.f32 0.0, %v817
      %v819 = vpop.f32.mrf.mxu0
      %820 = vmatprep.mubr.f32.mxu0 0.0
      %821 = vmatmul.mubr.f32.gmra.mxu0 %v194
      %v822 = vpop.f32.mrf.mxu0
      %v823 = vadd.f32 0.0, %v822
      %v824 = vpop.f32.mrf.mxu0
      %825 = vmatprep.mubr.f32.mxu0 0.0
      %826 = vmatmul.mubr.f32.gmra.mxu0 %v195
      %v827 = vpop.f32.mrf.mxu0
      %v828 = vadd.f32 0.0, %v827
      %v829 = vpop.f32.mrf.mxu0
      %830 = vmatprep.mubr.f32.mxu0 0.0
      %831 = vmatmul.mubr.f32.gmra.mxu0 %v196
      %v832 = vpop.f32.mrf.mxu0
      %v833 = vadd.f32 0.0, %v832
      %v834 = vpop.f32.mrf.mxu0
      %835 = vmatprep.mubr.f32.mxu0 0.0
      %836 = vmatmul.mubr.f32.gmra.mxu0 %v197
      %v837 = vpop.f32.mrf.mxu0
      %v838 = vadd.f32 0.0, %v837
      %v839 = vpop.f32.mrf.mxu0
      %840 = vmatprep.mubr.f32.mxu0 0.0
      %841 = vmatmul.mubr.f32.gmra.mxu0 %v198
      %v842 = vpop.f32.mrf.mxu0
      %v843 = vadd.f32 0.0, %v842
      %v844 = vpop.f32.mrf.mxu0
      %845 = vmatprep.mubr.f32.mxu0 0.0
      %846 = vmatmul.mubr.f32.gmra.mxu0 %v199
      %v847 = vpop.f32.mrf.mxu0
      %v848 = vadd.f32 0.0, %v847
      %v849 = vpop.f32.mrf.mxu0
      %850 = vmatprep.mubr.f32.mxu0 0.0
      %851 = vmatmul.mubr.f32.gmra.mxu0 %v200
      %v852 = vpop.f32.mrf.mxu0
      %v853 = vadd.f32 0.0, %v852
      %v854 = vpop.f32.mrf.mxu0
      %855 = vmatprep.mubr.f32.mxu0 0.0
      %856 = vmatmul.mubr.f32.gmra.mxu0 %v201
      %v857 = vpop.f32.mrf.mxu0
      %v858 = vadd.f32 0.0, %v857
      %v859 = vpop.f32.mrf.mxu0
      %860 = vmatprep.mubr.f32.mxu0 0.0
      %861 = vmatmul.mubr.f32.gmra.mxu0 %v202
      %v862 = vpop.f32.mrf.mxu0
      %v863 = vadd.f32 0.0, %v862
      %v864 = vpop.f32.mrf.mxu0
      %865 = vmatprep.mubr.f32.mxu0 0.0
      %866 = vmatmul.mubr.f32.gmra.mxu0 %v203
      %v867 = vpop.f32.mrf.mxu0
      %v868 = vadd.f32 0.0, %v867
      %v869 = vpop.f32.mrf.mxu0
      %870 = vmatprep.mubr.f32.mxu0 0.0
      %871 = vmatmul.mubr.f32.gmra.mxu0 %v204
      %v872 = vpop.f32.mrf.mxu0
      %v873 = vadd.f32 0.0, %v872
      %v874 = vpop.f32.mrf.mxu0
      %875 = vmatprep.mubr.f32.mxu0 0.0
      %876 = vmatmul.mubr.f32.gmra.mxu0 %v205
      %v877 = vpop.f32.mrf.mxu0
      %v878 = vadd.f32 0.0, %v877
      %v879 = vpop.f32.mrf.mxu0
      %880 = vmatprep.mubr.f32.mxu0 0.0
      %881 = vmatmul.mubr.f32.gmra.mxu0 %v206
      %v882 = vpop.f32.mrf.mxu0
      %v883 = vadd.f32 0.0, %v882
      %v884 = vpop.f32.mrf.mxu0
      %885 = vmatprep.mubr.f32.mxu0 0.0
      %886 = vmatmul.mubr.f32.gmra.mxu0 %v207
      %v887 = vpop.f32.mrf.mxu0
      %v888 = vadd.f32 0.0, %v887
      %v889 = vpop.f32.mrf.mxu0
      %890 = vmatprep.mubr.f32.mxu0 0.0
      %891 = vmatmul.mubr.f32.gmra.mxu0 %v208
      %v892 = vpop.f32.mrf.mxu0
      %v893 = vadd.f32 0.0, %v892
      %v894 = vpop.f32.mrf.mxu0
      %895 = vmatprep.mubr.f32.mxu0 0.0
      %896 = vmatmul.mubr.f32.gmra.mxu0 %v209
      %v897 = vpop.f32.mrf.mxu0
      %v898 = vadd.f32 0.0, %v897
      %v899 = vpop.f32.mrf.mxu0
      %900 = vmatprep.mubr.f32.mxu0 0.0
      %901 = vmatmul.mubr.f32.gmra.mxu0 %v210
      %v902 = vpop.f32.mrf.mxu0
      %v903 = vadd.f32 0.0, %v902
      %v904 = vpop.f32.mrf.mxu0
      %905 = vmatprep.mubr.f32.mxu0 0.0
      %906 = vmatmul.mubr.f32.gmra.mxu0 %v211
      %v907 = vpop.f32.mrf.mxu0
      %v908 = vadd.f32 0.0, %v907
      %v909 = vpop.f32.mrf.mxu0
      %910 = vmatprep.mubr.f32.mxu0 0.0
      %911 = vmatmul.mubr.f32.gmra.mxu0 %v212
      %v912 = vpop.f32.mrf.mxu0
      %v913 = vadd.f32 0.0, %v912
      %v914 = vpop.f32.mrf.mxu0
      %915 = vmatprep.mubr.f32.mxu0 0.0
      %916 = vmatmul.mubr.f32.gmra.mxu0 %v213
      %v917 = vpop.f32.mrf.mxu0
      %v918 = vadd.f32 0.0, %v917
      %v919 = vpop.f32.mrf.mxu0
      %920 = vmatprep.mubr.f32.mxu0 0.0
      %921 = vmatmul.mubr.f32.gmra.mxu0 %v214
      %v922 = vpop.f32.mrf.mxu0
      %v923 = vadd.f32 0.0, %v922
      %v924 = vpop.f32.mrf.mxu0
      %925 = vmatprep.mubr.f32.mxu0 0.0
      %926 = vmatmul.mubr.f32.gmra.mxu0 %v215
      %v927 = vpop.f32.mrf.mxu0
      %v928 = vadd.f32 0.0, %v927
      %v929 = vpop.f32.mrf.mxu0
      %930 = vmatprep.mubr.f32.mxu0 0.0
      %931 = vmatmul.mubr.f32.gmra.mxu0 %v216
      %v932 = vpop.f32.mrf.mxu0
      %v933 = vadd.f32 0.0, %v932
      %v934 = vpop.f32.mrf.mxu0
      %935 = vmatprep.mubr.f32.mxu0 0.0
      %936 = vmatmul.mubr.f32.gmra.mxu0 %v217
      %v937 = vpop.f32.mrf.mxu0
      %v938 = vadd.f32 0.0, %v937
      %v939 = vpop.f32.mrf.mxu0
      %940 = vmatprep.mubr.f32.mxu0 0.0
      %941 = vmatmul.mubr.f32.gmra.mxu0 %v218
      %v942 = vpop.f32.mrf.mxu0
      %v943 = vadd.f32 0.0, %v942
      %v944 = vpop.f32.mrf.mxu0
      %945 = vmatprep.mubr.f32.mxu0 0.0
      %946 = vmatmul.mubr.f32.gmra.mxu0 %v219
      %v947 = vpop.f32.mrf.mxu0
      %v948 = vadd.f32 0.0, %v947
      %v949 = vpop.f32.mrf.mxu0
      %950 = vmatprep.mubr.f32.mxu0 0.0
      %951 = vmatmul.mubr.f32.gmra.mxu0 %v220
      %v952 = vpop.f32.mrf.mxu0
      %v953 = vadd.f32 0.0, %v952
      %v954 = vpop.f32.mrf.mxu0
      %955 = vmatprep.mubr.f32.mxu0 0.0
      %956 = vmatmul.mubr.f32.gmra.mxu0 %v221
      %v957 = vpop.f32.mrf.mxu0
      %v958 = vadd.f32 0.0, %v957
      %v959 = vpop.f32.mrf.mxu0
      %960 = vmatprep.mubr.f32.mxu0 0.0
      %961 = vmatmul.mubr.f32.gmra.mxu0 %v222
      %v962 = vpop.f32.mrf.mxu0
      %v963 = vadd.f32 0.0, %v962
      %v964 = vpop.f32.mrf.mxu0
      %965 = vmatprep.mubr.f32.mxu0 0.0
      %966 = vmatmul.mubr.f32.gmra.mxu0 %v223
      %v967 = vpop.f32.mrf.mxu0
      %v968 = vadd.f32 0.0, %v967
      %v969 = vpop.f32.mrf.mxu0
      %970 = vmatprep.mubr.f32.mxu0 0.0
      %971 = vmatmul.mubr.f32.gmra.mxu0 %v224
      %v972 = vpop.f32.mrf.mxu0
      %v973 = vadd.f32 0.0, %v972
      %v974 = vpop.f32.mrf.mxu0
      %975 = vmatprep.mubr.f32.mxu0 0.0
      %976 = vmatmul.mubr.f32.gmra.mxu0 %v225
      %v977 = vpop.f32.mrf.mxu0
      %v978 = vadd.f32 0.0, %v977
      %v979 = vpop.f32.mrf.mxu0
      %980 = vmatprep.mubr.f32.mxu0 0.0
      %981 = vmatmul.mubr.f32.gmra.mxu0 %v226
      %v982 = vpop.f32.mrf.mxu0
      %v983 = vadd.f32 0.0, %v982
      %v984 = vpop.f32.mrf.mxu0
      %985 = vmatprep.mubr.f32.mxu0 0.0
      %986 = vmatmul.mubr.f32.gmra.mxu0 %v227
      %v987 = vpop.f32.mrf.mxu0
      %v988 = vadd.f32 0.0, %v987
      %v989 = vpop.f32.mrf.mxu0
      %990 = vmatprep.mubr.f32.mxu0 0.0
      %991 = vmatmul.mubr.f32.gmra.mxu0 %v228
      %v992 = vpop.f32.mrf.mxu0
      %v993 = vadd.f32 0.0, %v992
      %v994 = vpop.f32.mrf.mxu0
      %995 = vmatprep.mubr.f32.mxu0 0.0
      %996 = vmatmul.mubr.f32.gmra.mxu0 %v229
      %v997 = vpop.f32.mrf.mxu0
      %v998 = vadd.f32 0.0, %v997
      %v999 = vpop.f32.mrf.mxu0
      %1000 = vmatprep.mubr.f32.mxu0 0.0
      %1001 = vmatmul.mubr.f32.gmra.mxu0 %v230
      %v1002 = vpop.f32.mrf.mxu0
      %v1003 = vadd.f32 0.0, %v1002
      %v1004 = vpop.f32.mrf.mxu0
      %1005 = vmatprep.mubr.f32.mxu0 0.0
      %1006 = vmatmul.mubr.f32.gmra.mxu0 %v231
      %v1007 = vpop.f32.mrf.mxu0
      %v1008 = vadd.f32 0.0, %v1007
      %v1009 = vpop.f32.mrf.mxu0
      %1010 = vmatprep.mubr.f32.mxu0 0.0
      %1011 = vmatmul.mubr.f32.gmra.mxu0 %v232
      %v1012 = vpop.f32.mrf.mxu0
      %v1013 = vadd.f32 0.0, %v1012
      %v1014 = vpop.f32.mrf.mxu0
      %1015 = vmatprep.mubr.f32.mxu0 0.0
      %1016 = vmatmul.mubr.f32.gmra.mxu0 %v233
      %v1017 = vpop.f32.mrf.mxu0
      %v1018 = vadd.f32 0.0, %v1017
      %v1019 = vpop.f32.mrf.mxu0
      %1020 = vmatprep.mubr.f32.mxu0 0.0
      %1021 = vmatmul.mubr.f32.gmra.mxu0 %v234
      %v1022 = vpop.f32.mrf.mxu0
      %v1023 = vadd.f32 0.0, %v1022
      %v1024 = vpop.f32.mrf.mxu0
      %1025 = vmatprep.mubr.f32.mxu0 0.0
      %1026 = vmatmul.mubr.f32.gmra.mxu0 %v235
      %v1027 = vpop.f32.mrf.mxu0
      %v1028 = vadd.f32 0.0, %v1027
      %v1029 = vpop.f32.mrf.mxu0
      %1030 = vmatprep.mubr.f32.mxu0 0.0
      %1031 = vmatmul.mubr.f32.gmra.mxu0 %v236
      %v1032 = vpop.f32.mrf.mxu0
      %v1033 = vadd.f32 0.0, %v1032
      %v1034 = vpop.f32.mrf.mxu0
      %1035 = vmatprep.mubr.f32.mxu0 0.0
      %1036 = vmatmul.mubr.f32.gmra.mxu0 %v237
      %v1037 = vpop.f32.mrf.mxu0
      %v1038 = vadd.f32 0.0, %v1037
      %v1039 = vpop.f32.mrf.mxu0
      %1040 = vdwg.mxu0
      %v1041 = vmax.f32 %v321, %v723
      %v1042 = vmax.f32 %v326, %v728
      %v1043 = vmax.f32 %v331, %v733
      %v1044 = vmax.f32 %v336, %v738
      %v1045 = vmax.f32 %v341, %v743
      %v1046 = vmax.f32 %v346, %v748
      %v1047 = vmax.f32 %v351, %v753
      %v1048 = vmax.f32 %v356, %v758
      %v1049 = vmax.f32 %v361, %v763
      %v1050 = vmax.f32 %v366, %v768
      %v1051 = vmax.f32 %v371, %v773
      %v1052 = vmax.f32 %v376, %v778
      %v1053 = vmax.f32 %v381, %v783
      %v1054 = vmax.f32 %v386, %v788
      %v1055 = vmax.f32 %v391, %v793
      %v1056 = vmax.f32 %v396, %v798
      %v1057 = vmax.f32 %v401, %v803
      %v1058 = vmax.f32 %v406, %v808
      %v1059 = vmax.f32 %v411, %v813
      %v1060 = vmax.f32 %v416, %v818
      %v1061 = vmax.f32 %v421, %v823
      %v1062 = vmax.f32 %v426, %v828
      %v1063 = vmax.f32 %v431, %v833
      %v1064 = vmax.f32 %v436, %v838
      %v1065 = vmax.f32 %v441, %v843
      %v1066 = vmax.f32 %v446, %v848
      %v1067 = vmax.f32 %v451, %v853
      %v1068 = vmax.f32 %v456, %v858
      %v1069 = vmax.f32 %v461, %v863
      %v1070 = vmax.f32 %v466, %v868
      %v1071 = vmax.f32 %v471, %v873
      %v1072 = vmax.f32 %v476, %v878
      %v1073 = vmax.f32 %v481, %v883
      %v1074 = vmax.f32 %v486, %v888
      %v1075 = vmax.f32 %v491, %v893
      %v1076 = vmax.f32 %v496, %v898
      %v1077 = vmax.f32 %v501, %v903
      %v1078 = vmax.f32 %v506, %v908
      %v1079 = vmax.f32 %v511, %v913
      %v1080 = vmax.f32 %v516, %v918
      %v1081 = vmax.f32 %v521, %v923
      %v1082 = vmax.f32 %v526, %v928
      %v1083 = vmax.f32 %v531, %v933
      %v1084 = vmax.f32 %v536, %v938
      %v1085 = vmax.f32 %v541, %v943
      %v1086 = vmax.f32 %v546, %v948
      %v1087 = vmax.f32 %v551, %v953
      %v1088 = vmax.f32 %v556, %v958
      %v1089 = vmax.f32 %v561, %v963
      %v1090 = vmax.f32 %v566, %v968
      %v1091 = vmax.f32 %v571, %v973
      %v1092 = vmax.f32 %v576, %v978
      %v1093 = vmax.f32 %v581, %v983
      %v1094 = vmax.f32 %v586, %v988
      %v1095 = vmax.f32 %v591, %v993
      %v1096 = vmax.f32 %v596, %v998
      %v1097 = vmax.f32 %v601, %v1003
      %v1098 = vmax.f32 %v606, %v1008
      %v1099 = vmax.f32 %v611, %v1013
      %v1100 = vmax.f32 %v616, %v1018
      %v1101 = vmax.f32 %v621, %v1023
      %v1102 = vmax.f32 %v626, %v1028
      %v1103 = vmax.f32 %v631, %v1033
      %v1104 = vmax.f32 %v636, %v1038
      %s1105 = scalar_lea.vmem %s1, 256
      %v1106 = vld [vmem:[%s1105] sm:$0xff]
      %v1107 = vld [vmem:[%s1105 + $0x8] sm:$0xff]
      %v1108 = vld [vmem:[%s1105 + $0x10] sm:$0xff]
      %v1109 = vld [vmem:[%s1105 + $0x18] sm:$0xff]
      %v1110 = vld [vmem:[%s1105 + $0x20] sm:$0xff]
      %v1111 = vld [vmem:[%s1105 + $0x28] sm:$0xff]
      %v1112 = vld [vmem:[%s1105 + $0x30] sm:$0xff]
      %v1113 = vld [vmem:[%s1105 + $0x38] sm:$0xff]
      %v1114 = vld [vmem:[%s1105 + $0x40] sm:$0xff]
      %v1115 = vld [vmem:[%s1105 + $0x48] sm:$0xff]
      %v1116 = vld [vmem:[%s1105 + $0x50] sm:$0xff]
      %v1117 = vld [vmem:[%s1105 + $0x58] sm:$0xff]
      %v1118 = vld [vmem:[%s1105 + $0x60] sm:$0xff]
      %v1119 = vld [vmem:[%s1105 + $0x68] sm:$0xff]
      %v1120 = vld [vmem:[%s1105 + $0x70] sm:$0xff]
      %v1121 = vld [vmem:[%s1105 + $0x78] sm:$0xff]
      %1122 = vmatprep.subr.mxu0 0.0
      %1123 = vmatpush1.msra.mxu0 %v1121
      %1124 = vmatprep.subr.mxu0 0.0
      %1125 = vmatpush1.msra.mxu0 %v1120
      %1126 = vmatprep.subr.mxu0 0.0
      %1127 = vmatpush1.msra.mxu0 %v1119
      %1128 = vmatprep.subr.mxu0 0.0
      %1129 = vmatpush1.msra.mxu0 %v1118
      %1130 = vmatprep.subr.mxu0 0.0
      %1131 = vmatpush1.msra.mxu0 %v1117
      %1132 = vmatprep.subr.mxu0 0.0
      %1133 = vmatpush1.msra.mxu0 %v1116
      %1134 = vmatprep.subr.mxu0 0.0
      %1135 = vmatpush1.msra.mxu0 %v1115
      %1136 = vmatprep.subr.mxu0 0.0
      %1137 = vmatpush1.msra.mxu0 %v1114
      %1138 = vmatprep.subr.mxu0 0.0
      %1139 = vmatpush1.msra.mxu0 %v1113
      %1140 = vmatprep.subr.mxu0 0.0
      %1141 = vmatpush1.msra.mxu0 %v1112
      %1142 = vmatprep.subr.mxu0 0.0
      %1143 = vmatpush1.msra.mxu0 %v1111
      %1144 = vmatprep.subr.mxu0 0.0
      %1145 = vmatpush1.msra.mxu0 %v1110
      %1146 = vmatprep.subr.mxu0 0.0
      %1147 = vmatpush1.msra.mxu0 %v1109
      %1148 = vmatprep.subr.mxu0 0.0
      %1149 = vmatpush1.msra.mxu0 %v1108
      %1150 = vmatprep.subr.mxu0 0.0
      %1151 = vmatpush1.msra.mxu0 %v1107
      %1152 = vmatprep.subr.mxu0 0.0
      %1153 = vmatpush1.msra.mxu0 %v1106
      %1154 = vmatprep.subr.mxu0 0.0
      %1155 = vmatpush2.msra.mxu0 0.0
      %1156 = vmatprep.subr.mxu0 0.0
      %1157 = vmatpush2.msra.mxu0 0.0
      %1158 = vmatprep.subr.mxu0 0.0
      %1159 = vmatpush2.msra.mxu0 0.0
      %1160 = vmatprep.subr.mxu0 0.0
      %1161 = vmatpush2.msra.mxu0 0.0
      %1162 = vmatprep.subr.mxu0 0.0
      %1163 = vmatpush2.msra.mxu0 0.0
      %1164 = vmatprep.subr.mxu0 0.0
      %1165 = vmatpush2.msra.mxu0 0.0
      %1166 = vmatprep.subr.mxu0 0.0
      %1167 = vmatpush2.msra.mxu0 0.0
      %1168 = vmatprep.subr.mxu0 0.0
      %1169 = vmatpush2.msra.mxu0 0.0
      %1170 = vmatprep.subr.mxu0 0.0
      %1171 = vmatpush2.msra.mxu0 0.0
      %1172 = vmatprep.subr.mxu0 0.0
      %1173 = vmatpush2.msra.mxu0 0.0
      %1174 = vmatprep.subr.mxu0 0.0
      %1175 = vmatpush2.msra.mxu0 0.0
      %1176 = vmatprep.subr.mxu0 0.0
      %1177 = vmatpush2.msra.mxu0 0.0
      %1178 = vmatprep.subr.mxu0 0.0
      %1179 = vmatpush2.msra.mxu0 0.0
      %1180 = vmatprep.subr.mxu0 0.0
      %1181 = vmatpush2.msra.mxu0 0.0
      %1182 = vmatprep.subr.mxu0 0.0
      %1183 = vmatpush2.msra.mxu0 0.0
      %1184 = vmatprep.subr.mxu0 0.0
      %1185 = vmatpush2.msra.mxu0 0.0
      %1186 = vmatprep.mubr.f32.mxu0 0.0
      %1187 = vmatmul.mubr.f32.gmra.mxu0 %v174
      %v1188 = vpop.f32.mrf.mxu0
      %v1189 = vadd.f32 0.0, %v1188
      %v1190 = vpop.f32.mrf.mxu0
      %1191 = vmatprep.mubr.f32.mxu0 0.0
      %1192 = vmatmul.mubr.f32.gmra.mxu0 %v175
      %v1193 = vpop.f32.mrf.mxu0
      %v1194 = vadd.f32 0.0, %v1193
      %v1195 = vpop.f32.mrf.mxu0
      %1196 = vmatprep.mubr.f32.mxu0 0.0
      %1197 = vmatmul.mubr.f32.gmra.mxu0 %v176
      %v1198 = vpop.f32.mrf.mxu0
      %v1199 = vadd.f32 0.0, %v1198
      %v1200 = vpop.f32.mrf.mxu0
      %1201 = vmatprep.mubr.f32.mxu0 0.0
      %1202 = vmatmul.mubr.f32.gmra.mxu0 %v177
      %v1203 = vpop.f32.mrf.mxu0
      %v1204 = vadd.f32 0.0, %v1203
      %v1205 = vpop.f32.mrf.mxu0
      %1206 = vmatprep.mubr.f32.mxu0 0.0
      %1207 = vmatmul.mubr.f32.gmra.mxu0 %v178
      %v1208 = vpop.f32.mrf.mxu0
      %v1209 = vadd.f32 0.0, %v1208
      %v1210 = vpop.f32.mrf.mxu0
      %1211 = vmatprep.mubr.f32.mxu0 0.0
      %1212 = vmatmul.mubr.f32.gmra.mxu0 %v179
      %v1213 = vpop.f32.mrf.mxu0
      %v1214 = vadd.f32 0.0, %v1213
      %v1215 = vpop.f32.mrf.mxu0
      %1216 = vmatprep.mubr.f32.mxu0 0.0
      %1217 = vmatmul.mubr.f32.gmra.mxu0 %v180
      %v1218 = vpop.f32.mrf.mxu0
      %v1219 = vadd.f32 0.0, %v1218
      %v1220 = vpop.f32.mrf.mxu0
      %1221 = vmatprep.mubr.f32.mxu0 0.0
      %1222 = vmatmul.mubr.f32.gmra.mxu0 %v181
      %v1223 = vpop.f32.mrf.mxu0
      %v1224 = vadd.f32 0.0, %v1223
      %v1225 = vpop.f32.mrf.mxu0
      %1226 = vmatprep.mubr.f32.mxu0 0.0
      %1227 = vmatmul.mubr.f32.gmra.mxu0 %v182
      %v1228 = vpop.f32.mrf.mxu0
      %v1229 = vadd.f32 0.0, %v1228
      %v1230 = vpop.f32.mrf.mxu0
      %1231 = vmatprep.mubr.f32.mxu0 0.0
      %1232 = vmatmul.mubr.f32.gmra.mxu0 %v183
      %v1233 = vpop.f32.mrf.mxu0
      %v1234 = vadd.f32 0.0, %v1233
      %v1235 = vpop.f32.mrf.mxu0
      %1236 = vmatprep.mubr.f32.mxu0 0.0
      %1237 = vmatmul.mubr.f32.gmra.mxu0 %v184
      %v1238 = vpop.f32.mrf.mxu0
      %v1239 = vadd.f32 0.0, %v1238
      %v1240 = vpop.f32.mrf.mxu0
      %1241 = vmatprep.mubr.f32.mxu0 0.0
      %1242 = vmatmul.mubr.f32.gmra.mxu0 %v185
      %v1243 = vpop.f32.mrf.mxu0
      %v1244 = vadd.f32 0.0, %v1243
      %v1245 = vpop.f32.mrf.mxu0
      %1246 = vmatprep.mubr.f32.mxu0 0.0
      %1247 = vmatmul.mubr.f32.gmra.mxu0 %v186
      %v1248 = vpop.f32.mrf.mxu0
      %v1249 = vadd.f32 0.0, %v1248
      %v1250 = vpop.f32.mrf.mxu0
      %1251 = vmatprep.mubr.f32.mxu0 0.0
      %1252 = vmatmul.mubr.f32.gmra.mxu0 %v187
      %v1253 = vpop.f32.mrf.mxu0
      %v1254 = vadd.f32 0.0, %v1253
      %v1255 = vpop.f32.mrf.mxu0
      %1256 = vmatprep.mubr.f32.mxu0 0.0
      %1257 = vmatmul.mubr.f32.gmra.mxu0 %v188
      %v1258 = vpop.f32.mrf.mxu0
      %v1259 = vadd.f32 0.0, %v1258
      %v1260 = vpop.f32.mrf.mxu0
      %1261 = vmatprep.mubr.f32.mxu0 0.0
      %1262 = vmatmul.mubr.f32.gmra.mxu0 %v189
      %v1263 = vpop.f32.mrf.mxu0
      %v1264 = vadd.f32 0.0, %v1263
      %v1265 = vpop.f32.mrf.mxu0
      %1266 = vmatprep.mubr.f32.mxu0 0.0
      %1267 = vmatmul.mubr.f32.gmra.mxu0 %v190
      %v1268 = vpop.f32.mrf.mxu0
      %v1269 = vadd.f32 0.0, %v1268
      %v1270 = vpop.f32.mrf.mxu0
      %1271 = vmatprep.mubr.f32.mxu0 0.0
      %1272 = vmatmul.mubr.f32.gmra.mxu0 %v191
      %v1273 = vpop.f32.mrf.mxu0
      %v1274 = vadd.f32 0.0, %v1273
      %v1275 = vpop.f32.mrf.mxu0
      %1276 = vmatprep.mubr.f32.mxu0 0.0
      %1277 = vmatmul.mubr.f32.gmra.mxu0 %v192
      %v1278 = vpop.f32.mrf.mxu0
      %v1279 = vadd.f32 0.0, %v1278
      %v1280 = vpop.f32.mrf.mxu0
      %1281 = vmatprep.mubr.f32.mxu0 0.0
      %1282 = vmatmul.mubr.f32.gmra.mxu0 %v193
      %v1283 = vpop.f32.mrf.mxu0
      %v1284 = vadd.f32 0.0, %v1283
      %v1285 = vpop.f32.mrf.mxu0
      %1286 = vmatprep.mubr.f32.mxu0 0.0
      %1287 = vmatmul.mubr.f32.gmra.mxu0 %v194
      %v1288 = vpop.f32.mrf.mxu0
      %v1289 = vadd.f32 0.0, %v1288
      %v1290 = vpop.f32.mrf.mxu0
      %1291 = vmatprep.mubr.f32.mxu0 0.0
      %1292 = vmatmul.mubr.f32.gmra.mxu0 %v195
      %v1293 = vpop.f32.mrf.mxu0
      %v1294 = vadd.f32 0.0, %v1293
      %v1295 = vpop.f32.mrf.mxu0
      %1296 = vmatprep.mubr.f32.mxu0 0.0
      %1297 = vmatmul.mubr.f32.gmra.mxu0 %v196
      %v1298 = vpop.f32.mrf.mxu0
      %v1299 = vadd.f32 0.0, %v1298
      %v1300 = vpop.f32.mrf.mxu0
      %1301 = vmatprep.mubr.f32.mxu0 0.0
      %1302 = vmatmul.mubr.f32.gmra.mxu0 %v197
      %v1303 = vpop.f32.mrf.mxu0
      %v1304 = vadd.f32 0.0, %v1303
      %v1305 = vpop.f32.mrf.mxu0
      %1306 = vmatprep.mubr.f32.mxu0 0.0
      %1307 = vmatmul.mubr.f32.gmra.mxu0 %v198
      %v1308 = vpop.f32.mrf.mxu0
      %v1309 = vadd.f32 0.0, %v1308
      %v1310 = vpop.f32.mrf.mxu0
      %1311 = vmatprep.mubr.f32.mxu0 0.0
      %1312 = vmatmul.mubr.f32.gmra.mxu0 %v199
      %v1313 = vpop.f32.mrf.mxu0
      %v1314 = vadd.f32 0.0, %v1313
      %v1315 = vpop.f32.mrf.mxu0
      %1316 = vmatprep.mubr.f32.mxu0 0.0
      %1317 = vmatmul.mubr.f32.gmra.mxu0 %v200
      %v1318 = vpop.f32.mrf.mxu0
      %v1319 = vadd.f32 0.0, %v1318
      %v1320 = vpop.f32.mrf.mxu0
      %1321 = vmatprep.mubr.f32.mxu0 0.0
      %1322 = vmatmul.mubr.f32.gmra.mxu0 %v201
      %v1323 = vpop.f32.mrf.mxu0
      %v1324 = vadd.f32 0.0, %v1323
      %v1325 = vpop.f32.mrf.mxu0
      %1326 = vmatprep.mubr.f32.mxu0 0.0
      %1327 = vmatmul.mubr.f32.gmra.mxu0 %v202
      %v1328 = vpop.f32.mrf.mxu0
      %v1329 = vadd.f32 0.0, %v1328
      %v1330 = vpop.f32.mrf.mxu0
      %1331 = vmatprep.mubr.f32.mxu0 0.0
      %1332 = vmatmul.mubr.f32.gmra.mxu0 %v203
      %v1333 = vpop.f32.mrf.mxu0
      %v1334 = vadd.f32 0.0, %v1333
      %v1335 = vpop.f32.mrf.mxu0
      %1336 = vmatprep.mubr.f32.mxu0 0.0
      %1337 = vmatmul.mubr.f32.gmra.mxu0 %v204
      %v1338 = vpop.f32.mrf.mxu0
      %v1339 = vadd.f32 0.0, %v1338
      %v1340 = vpop.f32.mrf.mxu0
      %1341 = vmatprep.mubr.f32.mxu0 0.0
      %1342 = vmatmul.mubr.f32.gmra.mxu0 %v205
      %v1343 = vpop.f32.mrf.mxu0
      %v1344 = vadd.f32 0.0, %v1343
      %v1345 = vpop.f32.mrf.mxu0
      %1346 = vmatprep.mubr.f32.mxu0 0.0
      %1347 = vmatmul.mubr.f32.gmra.mxu0 %v206
      %v1348 = vpop.f32.mrf.mxu0
      %v1349 = vadd.f32 0.0, %v1348
      %v1350 = vpop.f32.mrf.mxu0
      %1351 = vmatprep.mubr.f32.mxu0 0.0
      %1352 = vmatmul.mubr.f32.gmra.mxu0 %v207
      %v1353 = vpop.f32.mrf.mxu0
      %v1354 = vadd.f32 0.0, %v1353
      %v1355 = vpop.f32.mrf.mxu0
      %1356 = vmatprep.mubr.f32.mxu0 0.0
      %1357 = vmatmul.mubr.f32.gmra.mxu0 %v208
      %v1358 = vpop.f32.mrf.mxu0
      %v1359 = vadd.f32 0.0, %v1358
      %v1360 = vpop.f32.mrf.mxu0
      %1361 = vmatprep.mubr.f32.mxu0 0.0
      %1362 = vmatmul.mubr.f32.gmra.mxu0 %v209
      %v1363 = vpop.f32.mrf.mxu0
      %v1364 = vadd.f32 0.0, %v1363
      %v1365 = vpop.f32.mrf.mxu0
      %1366 = vmatprep.mubr.f32.mxu0 0.0
      %1367 = vmatmul.mubr.f32.gmra.mxu0 %v210
      %v1368 = vpop.f32.mrf.mxu0
      %v1369 = vadd.f32 0.0, %v1368
      %v1370 = vpop.f32.mrf.mxu0
      %1371 = vmatprep.mubr.f32.mxu0 0.0
      %1372 = vmatmul.mubr.f32.gmra.mxu0 %v211
      %v1373 = vpop.f32.mrf.mxu0
      %v1374 = vadd.f32 0.0, %v1373
      %v1375 = vpop.f32.mrf.mxu0
      %1376 = vmatprep.mubr.f32.mxu0 0.0
      %1377 = vmatmul.mubr.f32.gmra.mxu0 %v212
      %v1378 = vpop.f32.mrf.mxu0
      %v1379 = vadd.f32 0.0, %v1378
      %v1380 = vpop.f32.mrf.mxu0
      %1381 = vmatprep.mubr.f32.mxu0 0.0
      %1382 = vmatmul.mubr.f32.gmra.mxu0 %v213
      %v1383 = vpop.f32.mrf.mxu0
      %v1384 = vadd.f32 0.0, %v1383
      %v1385 = vpop.f32.mrf.mxu0
      %1386 = vmatprep.mubr.f32.mxu0 0.0
      %1387 = vmatmul.mubr.f32.gmra.mxu0 %v214
      %v1388 = vpop.f32.mrf.mxu0
      %v1389 = vadd.f32 0.0, %v1388
      %v1390 = vpop.f32.mrf.mxu0
      %1391 = vmatprep.mubr.f32.mxu0 0.0
      %1392 = vmatmul.mubr.f32.gmra.mxu0 %v215
      %v1393 = vpop.f32.mrf.mxu0
      %v1394 = vadd.f32 0.0, %v1393
      %v1395 = vpop.f32.mrf.mxu0
      %1396 = vmatprep.mubr.f32.mxu0 0.0
      %1397 = vmatmul.mubr.f32.gmra.mxu0 %v216
      %v1398 = vpop.f32.mrf.mxu0
      %v1399 = vadd.f32 0.0, %v1398
      %v1400 = vpop.f32.mrf.mxu0
      %1401 = vmatprep.mubr.f32.mxu0 0.0
      %1402 = vmatmul.mubr.f32.gmra.mxu0 %v217
      %v1403 = vpop.f32.mrf.mxu0
      %v1404 = vadd.f32 0.0, %v1403
      %v1405 = vpop.f32.mrf.mxu0
      %1406 = vmatprep.mubr.f32.mxu0 0.0
      %1407 = vmatmul.mubr.f32.gmra.mxu0 %v218
      %v1408 = vpop.f32.mrf.mxu0
      %v1409 = vadd.f32 0.0, %v1408
      %v1410 = vpop.f32.mrf.mxu0
      %1411 = vmatprep.mubr.f32.mxu0 0.0
      %1412 = vmatmul.mubr.f32.gmra.mxu0 %v219
      %v1413 = vpop.f32.mrf.mxu0
      %v1414 = vadd.f32 0.0, %v1413
      %v1415 = vpop.f32.mrf.mxu0
      %1416 = vmatprep.mubr.f32.mxu0 0.0
      %1417 = vmatmul.mubr.f32.gmra.mxu0 %v220
      %v1418 = vpop.f32.mrf.mxu0
      %v1419 = vadd.f32 0.0, %v1418
      %v1420 = vpop.f32.mrf.mxu0
      %1421 = vmatprep.mubr.f32.mxu0 0.0
      %1422 = vmatmul.mubr.f32.gmra.mxu0 %v221
      %v1423 = vpop.f32.mrf.mxu0
      %v1424 = vadd.f32 0.0, %v1423
      %v1425 = vpop.f32.mrf.mxu0
      %1426 = vmatprep.mubr.f32.mxu0 0.0
      %1427 = vmatmul.mubr.f32.gmra.mxu0 %v222
      %v1428 = vpop.f32.mrf.mxu0
      %v1429 = vadd.f32 0.0, %v1428
      %v1430 = vpop.f32.mrf.mxu0
      %1431 = vmatprep.mubr.f32.mxu0 0.0
      %1432 = vmatmul.mubr.f32.gmra.mxu0 %v223
      %v1433 = vpop.f32.mrf.mxu0
      %v1434 = vadd.f32 0.0, %v1433
      %v1435 = vpop.f32.mrf.mxu0
      %1436 = vmatprep.mubr.f32.mxu0 0.0
      %1437 = vmatmul.mubr.f32.gmra.mxu0 %v224
      %v1438 = vpop.f32.mrf.mxu0
      %v1439 = vadd.f32 0.0, %v1438
      %v1440 = vpop.f32.mrf.mxu0
      %1441 = vmatprep.mubr.f32.mxu0 0.0
      %1442 = vmatmul.mubr.f32.gmra.mxu0 %v225
      %v1443 = vpop.f32.mrf.mxu0
      %v1444 = vadd.f32 0.0, %v1443
      %v1445 = vpop.f32.mrf.mxu0
      %1446 = vmatprep.mubr.f32.mxu0 0.0
      %1447 = vmatmul.mubr.f32.gmra.mxu0 %v226
      %v1448 = vpop.f32.mrf.mxu0
      %v1449 = vadd.f32 0.0, %v1448
      %v1450 = vpop.f32.mrf.mxu0
      %1451 = vmatprep.mubr.f32.mxu0 0.0
      %1452 = vmatmul.mubr.f32.gmra.mxu0 %v227
      %v1453 = vpop.f32.mrf.mxu0
      %v1454 = vadd.f32 0.0, %v1453
      %v1455 = vpop.f32.mrf.mxu0
      %1456 = vmatprep.mubr.f32.mxu0 0.0
      %1457 = vmatmul.mubr.f32.gmra.mxu0 %v228
      %v1458 = vpop.f32.mrf.mxu0
      %v1459 = vadd.f32 0.0, %v1458
      %v1460 = vpop.f32.mrf.mxu0
      %1461 = vmatprep.mubr.f32.mxu0 0.0
      %1462 = vmatmul.mubr.f32.gmra.mxu0 %v229
      %v1463 = vpop.f32.mrf.mxu0
      %v1464 = vadd.f32 0.0, %v1463
      %v1465 = vpop.f32.mrf.mxu0
      %1466 = vmatprep.mubr.f32.mxu0 0.0
      %1467 = vmatmul.mubr.f32.gmra.mxu0 %v230
      %v1468 = vpop.f32.mrf.mxu0
      %v1469 = vadd.f32 0.0, %v1468
      %v1470 = vpop.f32.mrf.mxu0
      %1471 = vmatprep.mubr.f32.mxu0 0.0
      %1472 = vmatmul.mubr.f32.gmra.mxu0 %v231
      %v1473 = vpop.f32.mrf.mxu0
      %v1474 = vadd.f32 0.0, %v1473
      %v1475 = vpop.f32.mrf.mxu0
      %1476 = vmatprep.mubr.f32.mxu0 0.0
      %1477 = vmatmul.mubr.f32.gmra.mxu0 %v232
      %v1478 = vpop.f32.mrf.mxu0
      %v1479 = vadd.f32 0.0, %v1478
      %v1480 = vpop.f32.mrf.mxu0
      %1481 = vmatprep.mubr.f32.mxu0 0.0
      %1482 = vmatmul.mubr.f32.gmra.mxu0 %v233
      %v1483 = vpop.f32.mrf.mxu0
      %v1484 = vadd.f32 0.0, %v1483
      %v1485 = vpop.f32.mrf.mxu0
      %1486 = vmatprep.mubr.f32.mxu0 0.0
      %1487 = vmatmul.mubr.f32.gmra.mxu0 %v234
      %v1488 = vpop.f32.mrf.mxu0
      %v1489 = vadd.f32 0.0, %v1488
      %v1490 = vpop.f32.mrf.mxu0
      %1491 = vmatprep.mubr.f32.mxu0 0.0
      %1492 = vmatmul.mubr.f32.gmra.mxu0 %v235
      %v1493 = vpop.f32.mrf.mxu0
      %v1494 = vadd.f32 0.0, %v1493
      %v1495 = vpop.f32.mrf.mxu0
      %1496 = vmatprep.mubr.f32.mxu0 0.0
      %1497 = vmatmul.mubr.f32.gmra.mxu0 %v236
      %v1498 = vpop.f32.mrf.mxu0
      %v1499 = vadd.f32 0.0, %v1498
      %v1500 = vpop.f32.mrf.mxu0
      %1501 = vmatprep.mubr.f32.mxu0 0.0
      %1502 = vmatmul.mubr.f32.gmra.mxu0 %v237
      %v1503 = vpop.f32.mrf.mxu0
      %v1504 = vadd.f32 0.0, %v1503
      %v1505 = vpop.f32.mrf.mxu0
      %1506 = vdwg.mxu0
      %v1507 = vmax.f32 %v1041, %v1189
      %v1508 = vmax.f32 %v1042, %v1194
      %v1509 = vmax.f32 %v1043, %v1199
      %v1510 = vmax.f32 %v1044, %v1204
      %v1511 = vmax.f32 %v1045, %v1209
      %v1512 = vmax.f32 %v1046, %v1214
      %v1513 = vmax.f32 %v1047, %v1219
      %v1514 = vmax.f32 %v1048, %v1224
      %v1515 = vmax.f32 %v1049, %v1229
      %v1516 = vmax.f32 %v1050, %v1234
      %v1517 = vmax.f32 %v1051, %v1239
      %v1518 = vmax.f32 %v1052, %v1244
      %v1519 = vmax.f32 %v1053, %v1249
      %v1520 = vmax.f32 %v1054, %v1254
      %v1521 = vmax.f32 %v1055, %v1259
      %v1522 = vmax.f32 %v1056, %v1264
      %v1523 = vmax.f32 %v1057, %v1269
      %v1524 = vmax.f32 %v1058, %v1274
      %v1525 = vmax.f32 %v1059, %v1279
      %v1526 = vmax.f32 %v1060, %v1284
      %v1527 = vmax.f32 %v1061, %v1289
      %v1528 = vmax.f32 %v1062, %v1294
      %v1529 = vmax.f32 %v1063, %v1299
      %v1530 = vmax.f32 %v1064, %v1304
      %v1531 = vmax.f32 %v1065, %v1309
      %v1532 = vmax.f32 %v1066, %v1314
      %v1533 = vmax.f32 %v1067, %v1319
      %v1534 = vmax.f32 %v1068, %v1324
      %v1535 = vmax.f32 %v1069, %v1329
      %v1536 = vmax.f32 %v1070, %v1334
      %v1537 = vmax.f32 %v1071, %v1339
      %v1538 = vmax.f32 %v1072, %v1344
      %v1539 = vmax.f32 %v1073, %v1349
      %v1540 = vmax.f32 %v1074, %v1354
      %v1541 = vmax.f32 %v1075, %v1359
      %v1542 = vmax.f32 %v1076, %v1364
      %v1543 = vmax.f32 %v1077, %v1369
      %v1544 = vmax.f32 %v1078, %v1374
      %v1545 = vmax.f32 %v1079, %v1379
      %v1546 = vmax.f32 %v1080, %v1384
      %v1547 = vmax.f32 %v1081, %v1389
      %v1548 = vmax.f32 %v1082, %v1394
      %v1549 = vmax.f32 %v1083, %v1399
      %v1550 = vmax.f32 %v1084, %v1404
      %v1551 = vmax.f32 %v1085, %v1409
      %v1552 = vmax.f32 %v1086, %v1414
      %v1553 = vmax.f32 %v1087, %v1419
      %v1554 = vmax.f32 %v1088, %v1424
      %v1555 = vmax.f32 %v1089, %v1429
      %v1556 = vmax.f32 %v1090, %v1434
      %v1557 = vmax.f32 %v1091, %v1439
      %v1558 = vmax.f32 %v1092, %v1444
      %v1559 = vmax.f32 %v1093, %v1449
      %v1560 = vmax.f32 %v1094, %v1454
      %v1561 = vmax.f32 %v1095, %v1459
      %v1562 = vmax.f32 %v1096, %v1464
      %v1563 = vmax.f32 %v1097, %v1469
      %v1564 = vmax.f32 %v1098, %v1474
      %v1565 = vmax.f32 %v1099, %v1479
      %v1566 = vmax.f32 %v1100, %v1484
      %v1567 = vmax.f32 %v1101, %v1489
      %v1568 = vmax.f32 %v1102, %v1494
      %v1569 = vmax.f32 %v1103, %v1499
      %v1570 = vmax.f32 %v1104, %v1504
      %s1571 = scalar_lea.vmem %s1, 384
      %v1572 = vld [vmem:[%s1571] sm:$0xff]
      %v1573 = vld [vmem:[%s1571 + $0x8] sm:$0xff]
      %v1574 = vld [vmem:[%s1571 + $0x10] sm:$0xff]
      %v1575 = vld [vmem:[%s1571 + $0x18] sm:$0xff]
      %v1576 = vld [vmem:[%s1571 + $0x20] sm:$0xff]
      %v1577 = vld [vmem:[%s1571 + $0x28] sm:$0xff]
      %v1578 = vld [vmem:[%s1571 + $0x30] sm:$0xff]
      %v1579 = vld [vmem:[%s1571 + $0x38] sm:$0xff]
      %v1580 = vld [vmem:[%s1571 + $0x40] sm:$0xff]
      %v1581 = vld [vmem:[%s1571 + $0x48] sm:$0xff]
      %v1582 = vld [vmem:[%s1571 + $0x50] sm:$0xff]
      %v1583 = vld [vmem:[%s1571 + $0x58] sm:$0xff]
      %v1584 = vld [vmem:[%s1571 + $0x60] sm:$0xff]
      %v1585 = vld [vmem:[%s1571 + $0x68] sm:$0xff]
      %v1586 = vld [vmem:[%s1571 + $0x70] sm:$0xff]
      %v1587 = vld [vmem:[%s1571 + $0x78] sm:$0xff]
      %1588 = vmatprep.subr.mxu0 0.0
      %1589 = vmatpush1.msra.mxu0 %v1587
      %1590 = vmatprep.subr.mxu0 0.0
      %1591 = vmatpush1.msra.mxu0 %v1586
      %1592 = vmatprep.subr.mxu0 0.0
      %1593 = vmatpush1.msra.mxu0 %v1585
      %1594 = vmatprep.subr.mxu0 0.0
      %1595 = vmatpush1.msra.mxu0 %v1584
      %1596 = vmatprep.subr.mxu0 0.0
      %1597 = vmatpush1.msra.mxu0 %v1583
      %1598 = vmatprep.subr.mxu0 0.0
      %1599 = vmatpush1.msra.mxu0 %v1582
      %1600 = vmatprep.subr.mxu0 0.0
      %1601 = vmatpush1.msra.mxu0 %v1581
      %1602 = vmatprep.subr.mxu0 0.0
      %1603 = vmatpush1.msra.mxu0 %v1580
      %1604 = vmatprep.subr.mxu0 0.0
      %1605 = vmatpush1.msra.mxu0 %v1579
      %1606 = vmatprep.subr.mxu0 0.0
      %1607 = vmatpush1.msra.mxu0 %v1578
      %1608 = vmatprep.subr.mxu0 0.0
      %1609 = vmatpush1.msra.mxu0 %v1577
      %1610 = vmatprep.subr.mxu0 0.0
      %1611 = vmatpush1.msra.mxu0 %v1576
      %1612 = vmatprep.subr.mxu0 0.0
      %1613 = vmatpush1.msra.mxu0 %v1575
      %1614 = vmatprep.subr.mxu0 0.0
      %1615 = vmatpush1.msra.mxu0 %v1574
      %1616 = vmatprep.subr.mxu0 0.0
      %1617 = vmatpush1.msra.mxu0 %v1573
      %1618 = vmatprep.subr.mxu0 0.0
      %1619 = vmatpush1.msra.mxu0 %v1572
      %1620 = vmatprep.subr.mxu0 0.0
      %1621 = vmatpush2.msra.mxu0 0.0
      %1622 = vmatprep.subr.mxu0 0.0
      %1623 = vmatpush2.msra.mxu0 0.0
      %1624 = vmatprep.subr.mxu0 0.0
      %1625 = vmatpush2.msra.mxu0 0.0
      %1626 = vmatprep.subr.mxu0 0.0
      %1627 = vmatpush2.msra.mxu0 0.0
      %1628 = vmatprep.subr.mxu0 0.0
      %1629 = vmatpush2.msra.mxu0 0.0
      %1630 = vmatprep.subr.mxu0 0.0
      %1631 = vmatpush2.msra.mxu0 0.0
      %1632 = vmatprep.subr.mxu0 0.0
      %1633 = vmatpush2.msra.mxu0 0.0
      %1634 = vmatprep.subr.mxu0 0.0
      %1635 = vmatpush2.msra.mxu0 0.0
      %1636 = vmatprep.subr.mxu0 0.0
      %1637 = vmatpush2.msra.mxu0 0.0
      %1638 = vmatprep.subr.mxu0 0.0
      %1639 = vmatpush2.msra.mxu0 0.0
      %1640 = vmatprep.subr.mxu0 0.0
      %1641 = vmatpush2.msra.mxu0 0.0
      %1642 = vmatprep.subr.mxu0 0.0
      %1643 = vmatpush2.msra.mxu0 0.0
      %1644 = vmatprep.subr.mxu0 0.0
      %1645 = vmatpush2.msra.mxu0 0.0
      %1646 = vmatprep.subr.mxu0 0.0
      %1647 = vmatpush2.msra.mxu0 0.0
      %1648 = vmatprep.subr.mxu0 0.0
      %1649 = vmatpush2.msra.mxu0 0.0
      %1650 = vmatprep.subr.mxu0 0.0
      %1651 = vmatpush2.msra.mxu0 0.0
      %1652 = vmatprep.mubr.f32.mxu0 0.0
      %1653 = vmatmul.mubr.f32.gmra.mxu0 %v174
      %v1654 = vpop.f32.mrf.mxu0
      %v1655 = vadd.f32 0.0, %v1654
      %v1656 = vpop.f32.mrf.mxu0
      %1657 = vmatprep.mubr.f32.mxu0 0.0
      %1658 = vmatmul.mubr.f32.gmra.mxu0 %v175
      %v1659 = vpop.f32.mrf.mxu0
      %v1660 = vadd.f32 0.0, %v1659
      %v1661 = vpop.f32.mrf.mxu0
      %1662 = vmatprep.mubr.f32.mxu0 0.0
      %1663 = vmatmul.mubr.f32.gmra.mxu0 %v176
      %v1664 = vpop.f32.mrf.mxu0
      %v1665 = vadd.f32 0.0, %v1664
      %v1666 = vpop.f32.mrf.mxu0
      %1667 = vmatprep.mubr.f32.mxu0 0.0
      %1668 = vmatmul.mubr.f32.gmra.mxu0 %v177
      %v1669 = vpop.f32.mrf.mxu0
      %v1670 = vadd.f32 0.0, %v1669
      %v1671 = vpop.f32.mrf.mxu0
      %1672 = vmatprep.mubr.f32.mxu0 0.0
      %1673 = vmatmul.mubr.f32.gmra.mxu0 %v178
      %v1674 = vpop.f32.mrf.mxu0
      %v1675 = vadd.f32 0.0, %v1674
      %v1676 = vpop.f32.mrf.mxu0
      %1677 = vmatprep.mubr.f32.mxu0 0.0
      %1678 = vmatmul.mubr.f32.gmra.mxu0 %v179
      %v1679 = vpop.f32.mrf.mxu0
      %v1680 = vadd.f32 0.0, %v1679
      %v1681 = vpop.f32.mrf.mxu0
      %1682 = vmatprep.mubr.f32.mxu0 0.0
      %1683 = vmatmul.mubr.f32.gmra.mxu0 %v180
      %v1684 = vpop.f32.mrf.mxu0
      %v1685 = vadd.f32 0.0, %v1684
      %v1686 = vpop.f32.mrf.mxu0
      %1687 = vmatprep.mubr.f32.mxu0 0.0
      %1688 = vmatmul.mubr.f32.gmra.mxu0 %v181
      %v1689 = vpop.f32.mrf.mxu0
      %v1690 = vadd.f32 0.0, %v1689
      %v1691 = vpop.f32.mrf.mxu0
      %1692 = vmatprep.mubr.f32.mxu0 0.0
      %1693 = vmatmul.mubr.f32.gmra.mxu0 %v182
      %v1694 = vpop.f32.mrf.mxu0
      %v1695 = vadd.f32 0.0, %v1694
      %v1696 = vpop.f32.mrf.mxu0
      %1697 = vmatprep.mubr.f32.mxu0 0.0
      %1698 = vmatmul.mubr.f32.gmra.mxu0 %v183
      %v1699 = vpop.f32.mrf.mxu0
      %v1700 = vadd.f32 0.0, %v1699
      %v1701 = vpop.f32.mrf.mxu0
      %1702 = vmatprep.mubr.f32.mxu0 0.0
      %1703 = vmatmul.mubr.f32.gmra.mxu0 %v184
      %v1704 = vpop.f32.mrf.mxu0
      %v1705 = vadd.f32 0.0, %v1704
      %v1706 = vpop.f32.mrf.mxu0
      %1707 = vmatprep.mubr.f32.mxu0 0.0
      %1708 = vmatmul.mubr.f32.gmra.mxu0 %v185
      %v1709 = vpop.f32.mrf.mxu0
      %v1710 = vadd.f32 0.0, %v1709
      %v1711 = vpop.f32.mrf.mxu0
      %1712 = vmatprep.mubr.f32.mxu0 0.0
      %1713 = vmatmul.mubr.f32.gmra.mxu0 %v186
      %v1714 = vpop.f32.mrf.mxu0
      %v1715 = vadd.f32 0.0, %v1714
      %v1716 = vpop.f32.mrf.mxu0
      %1717 = vmatprep.mubr.f32.mxu0 0.0
      %1718 = vmatmul.mubr.f32.gmra.mxu0 %v187
      %v1719 = vpop.f32.mrf.mxu0
      %v1720 = vadd.f32 0.0, %v1719
      %v1721 = vpop.f32.mrf.mxu0
      %1722 = vmatprep.mubr.f32.mxu0 0.0
      %1723 = vmatmul.mubr.f32.gmra.mxu0 %v188
      %v1724 = vpop.f32.mrf.mxu0
      %v1725 = vadd.f32 0.0, %v1724
      %v1726 = vpop.f32.mrf.mxu0
      %1727 = vmatprep.mubr.f32.mxu0 0.0
      %1728 = vmatmul.mubr.f32.gmra.mxu0 %v189
      %v1729 = vpop.f32.mrf.mxu0
      %v1730 = vadd.f32 0.0, %v1729
      %v1731 = vpop.f32.mrf.mxu0
      %1732 = vmatprep.mubr.f32.mxu0 0.0
      %1733 = vmatmul.mubr.f32.gmra.mxu0 %v190
      %v1734 = vpop.f32.mrf.mxu0
      %v1735 = vadd.f32 0.0, %v1734
      %v1736 = vpop.f32.mrf.mxu0
      %1737 = vmatprep.mubr.f32.mxu0 0.0
      %1738 = vmatmul.mubr.f32.gmra.mxu0 %v191
      %v1739 = vpop.f32.mrf.mxu0
      %v1740 = vadd.f32 0.0, %v1739
      %v1741 = vpop.f32.mrf.mxu0
      %1742 = vmatprep.mubr.f32.mxu0 0.0
      %1743 = vmatmul.mubr.f32.gmra.mxu0 %v192
      %v1744 = vpop.f32.mrf.mxu0
      %v1745 = vadd.f32 0.0, %v1744
      %v1746 = vpop.f32.mrf.mxu0
      %1747 = vmatprep.mubr.f32.mxu0 0.0
      %1748 = vmatmul.mubr.f32.gmra.mxu0 %v193
      %v1749 = vpop.f32.mrf.mxu0
      %v1750 = vadd.f32 0.0, %v1749
      %v1751 = vpop.f32.mrf.mxu0
      %1752 = vmatprep.mubr.f32.mxu0 0.0
      %1753 = vmatmul.mubr.f32.gmra.mxu0 %v194
      %v1754 = vpop.f32.mrf.mxu0
      %v1755 = vadd.f32 0.0, %v1754
      %v1756 = vpop.f32.mrf.mxu0
      %1757 = vmatprep.mubr.f32.mxu0 0.0
      %1758 = vmatmul.mubr.f32.gmra.mxu0 %v195
      %v1759 = vpop.f32.mrf.mxu0
      %v1760 = vadd.f32 0.0, %v1759
      %v1761 = vpop.f32.mrf.mxu0
      %1762 = vmatprep.mubr.f32.mxu0 0.0
      %1763 = vmatmul.mubr.f32.gmra.mxu0 %v196
      %v1764 = vpop.f32.mrf.mxu0
      %v1765 = vadd.f32 0.0, %v1764
      %v1766 = vpop.f32.mrf.mxu0
      %1767 = vmatprep.mubr.f32.mxu0 0.0
      %1768 = vmatmul.mubr.f32.gmra.mxu0 %v197
      %v1769 = vpop.f32.mrf.mxu0
      %v1770 = vadd.f32 0.0, %v1769
      %v1771 = vpop.f32.mrf.mxu0
      %1772 = vmatprep.mubr.f32.mxu0 0.0
      %1773 = vmatmul.mubr.f32.gmra.mxu0 %v198
      %v1774 = vpop.f32.mrf.mxu0
      %v1775 = vadd.f32 0.0, %v1774
      %v1776 = vpop.f32.mrf.mxu0
      %1777 = vmatprep.mubr.f32.mxu0 0.0
      %1778 = vmatmul.mubr.f32.gmra.mxu0 %v199
      %v1779 = vpop.f32.mrf.mxu0
      %v1780 = vadd.f32 0.0, %v1779
      %v1781 = vpop.f32.mrf.mxu0
      %1782 = vmatprep.mubr.f32.mxu0 0.0
      %1783 = vmatmul.mubr.f32.gmra.mxu0 %v200
      %v1784 = vpop.f32.mrf.mxu0
      %v1785 = vadd.f32 0.0, %v1784
      %v1786 = vpop.f32.mrf.mxu0
      %1787 = vmatprep.mubr.f32.mxu0 0.0
      %1788 = vmatmul.mubr.f32.gmra.mxu0 %v201
      %v1789 = vpop.f32.mrf.mxu0
      %v1790 = vadd.f32 0.0, %v1789
      %v1791 = vpop.f32.mrf.mxu0
      %1792 = vmatprep.mubr.f32.mxu0 0.0
      %1793 = vmatmul.mubr.f32.gmra.mxu0 %v202
      %v1794 = vpop.f32.mrf.mxu0
      %v1795 = vadd.f32 0.0, %v1794
      %v1796 = vpop.f32.mrf.mxu0
      %1797 = vmatprep.mubr.f32.mxu0 0.0
      %1798 = vmatmul.mubr.f32.gmra.mxu0 %v203
      %v1799 = vpop.f32.mrf.mxu0
      %v1800 = vadd.f32 0.0, %v1799
      %v1801 = vpop.f32.mrf.mxu0
      %1802 = vmatprep.mubr.f32.mxu0 0.0
      %1803 = vmatmul.mubr.f32.gmra.mxu0 %v204
      %v1804 = vpop.f32.mrf.mxu0
      %v1805 = vadd.f32 0.0, %v1804
      %v1806 = vpop.f32.mrf.mxu0
      %1807 = vmatprep.mubr.f32.mxu0 0.0
      %1808 = vmatmul.mubr.f32.gmra.mxu0 %v205
      %v1809 = vpop.f32.mrf.mxu0
      %v1810 = vadd.f32 0.0, %v1809
      %v1811 = vpop.f32.mrf.mxu0
      %1812 = vmatprep.mubr.f32.mxu0 0.0
      %1813 = vmatmul.mubr.f32.gmra.mxu0 %v206
      %v1814 = vpop.f32.mrf.mxu0
      %v1815 = vadd.f32 0.0, %v1814
      %v1816 = vpop.f32.mrf.mxu0
      %1817 = vmatprep.mubr.f32.mxu0 0.0
      %1818 = vmatmul.mubr.f32.gmra.mxu0 %v207
      %v1819 = vpop.f32.mrf.mxu0
      %v1820 = vadd.f32 0.0, %v1819
      %v1821 = vpop.f32.mrf.mxu0
      %1822 = vmatprep.mubr.f32.mxu0 0.0
      %1823 = vmatmul.mubr.f32.gmra.mxu0 %v208
      %v1824 = vpop.f32.mrf.mxu0
      %v1825 = vadd.f32 0.0, %v1824
      %v1826 = vpop.f32.mrf.mxu0
      %1827 = vmatprep.mubr.f32.mxu0 0.0
      %1828 = vmatmul.mubr.f32.gmra.mxu0 %v209
      %v1829 = vpop.f32.mrf.mxu0
      %v1830 = vadd.f32 0.0, %v1829
      %v1831 = vpop.f32.mrf.mxu0
      %1832 = vmatprep.mubr.f32.mxu0 0.0
      %1833 = vmatmul.mubr.f32.gmra.mxu0 %v210
      %v1834 = vpop.f32.mrf.mxu0
      %v1835 = vadd.f32 0.0, %v1834
      %v1836 = vpop.f32.mrf.mxu0
      %1837 = vmatprep.mubr.f32.mxu0 0.0
      %1838 = vmatmul.mubr.f32.gmra.mxu0 %v211
      %v1839 = vpop.f32.mrf.mxu0
      %v1840 = vadd.f32 0.0, %v1839
      %v1841 = vpop.f32.mrf.mxu0
      %1842 = vmatprep.mubr.f32.mxu0 0.0
      %1843 = vmatmul.mubr.f32.gmra.mxu0 %v212
      %v1844 = vpop.f32.mrf.mxu0
      %v1845 = vadd.f32 0.0, %v1844
      %v1846 = vpop.f32.mrf.mxu0
      %1847 = vmatprep.mubr.f32.mxu0 0.0
      %1848 = vmatmul.mubr.f32.gmra.mxu0 %v213
      %v1849 = vpop.f32.mrf.mxu0
      %v1850 = vadd.f32 0.0, %v1849
      %v1851 = vpop.f32.mrf.mxu0
      %1852 = vmatprep.mubr.f32.mxu0 0.0
      %1853 = vmatmul.mubr.f32.gmra.mxu0 %v214
      %v1854 = vpop.f32.mrf.mxu0
      %v1855 = vadd.f32 0.0, %v1854
      %v1856 = vpop.f32.mrf.mxu0
      %1857 = vmatprep.mubr.f32.mxu0 0.0
      %1858 = vmatmul.mubr.f32.gmra.mxu0 %v215
      %v1859 = vpop.f32.mrf.mxu0
      %v1860 = vadd.f32 0.0, %v1859
      %v1861 = vpop.f32.mrf.mxu0
      %1862 = vmatprep.mubr.f32.mxu0 0.0
      %1863 = vmatmul.mubr.f32.gmra.mxu0 %v216
      %v1864 = vpop.f32.mrf.mxu0
      %v1865 = vadd.f32 0.0, %v1864
      %v1866 = vpop.f32.mrf.mxu0
      %1867 = vmatprep.mubr.f32.mxu0 0.0
      %1868 = vmatmul.mubr.f32.gmra.mxu0 %v217
      %v1869 = vpop.f32.mrf.mxu0
      %v1870 = vadd.f32 0.0, %v1869
      %v1871 = vpop.f32.mrf.mxu0
      %1872 = vmatprep.mubr.f32.mxu0 0.0
      %1873 = vmatmul.mubr.f32.gmra.mxu0 %v218
      %v1874 = vpop.f32.mrf.mxu0
      %v1875 = vadd.f32 0.0, %v1874
      %v1876 = vpop.f32.mrf.mxu0
      %1877 = vmatprep.mubr.f32.mxu0 0.0
      %1878 = vmatmul.mubr.f32.gmra.mxu0 %v219
      %v1879 = vpop.f32.mrf.mxu0
      %v1880 = vadd.f32 0.0, %v1879
      %v1881 = vpop.f32.mrf.mxu0
      %1882 = vmatprep.mubr.f32.mxu0 0.0
      %1883 = vmatmul.mubr.f32.gmra.mxu0 %v220
      %v1884 = vpop.f32.mrf.mxu0
      %v1885 = vadd.f32 0.0, %v1884
      %v1886 = vpop.f32.mrf.mxu0
      %1887 = vmatprep.mubr.f32.mxu0 0.0
      %1888 = vmatmul.mubr.f32.gmra.mxu0 %v221
      %v1889 = vpop.f32.mrf.mxu0
      %v1890 = vadd.f32 0.0, %v1889
      %v1891 = vpop.f32.mrf.mxu0
      %1892 = vmatprep.mubr.f32.mxu0 0.0
      %1893 = vmatmul.mubr.f32.gmra.mxu0 %v222
      %v1894 = vpop.f32.mrf.mxu0
      %v1895 = vadd.f32 0.0, %v1894
      %v1896 = vpop.f32.mrf.mxu0
      %1897 = vmatprep.mubr.f32.mxu0 0.0
      %1898 = vmatmul.mubr.f32.gmra.mxu0 %v223
      %v1899 = vpop.f32.mrf.mxu0
      %v1900 = vadd.f32 0.0, %v1899
      %v1901 = vpop.f32.mrf.mxu0
      %1902 = vmatprep.mubr.f32.mxu0 0.0
      %1903 = vmatmul.mubr.f32.gmra.mxu0 %v224
      %v1904 = vpop.f32.mrf.mxu0
      %v1905 = vadd.f32 0.0, %v1904
      %v1906 = vpop.f32.mrf.mxu0
      %1907 = vmatprep.mubr.f32.mxu0 0.0
      %1908 = vmatmul.mubr.f32.gmra.mxu0 %v225
      %v1909 = vpop.f32.mrf.mxu0
      %v1910 = vadd.f32 0.0, %v1909
      %v1911 = vpop.f32.mrf.mxu0
      %1912 = vmatprep.mubr.f32.mxu0 0.0
      %1913 = vmatmul.mubr.f32.gmra.mxu0 %v226
      %v1914 = vpop.f32.mrf.mxu0
      %v1915 = vadd.f32 0.0, %v1914
      %v1916 = vpop.f32.mrf.mxu0
      %1917 = vmatprep.mubr.f32.mxu0 0.0
      %1918 = vmatmul.mubr.f32.gmra.mxu0 %v227
      %v1919 = vpop.f32.mrf.mxu0
      %v1920 = vadd.f32 0.0, %v1919
      %v1921 = vpop.f32.mrf.mxu0
      %1922 = vmatprep.mubr.f32.mxu0 0.0
      %1923 = vmatmul.mubr.f32.gmra.mxu0 %v228
      %v1924 = vpop.f32.mrf.mxu0
      %v1925 = vadd.f32 0.0, %v1924
      %v1926 = vpop.f32.mrf.mxu0
      %1927 = vmatprep.mubr.f32.mxu0 0.0
      %1928 = vmatmul.mubr.f32.gmra.mxu0 %v229
      %v1929 = vpop.f32.mrf.mxu0
      %v1930 = vadd.f32 0.0, %v1929
      %v1931 = vpop.f32.mrf.mxu0
      %1932 = vmatprep.mubr.f32.mxu0 0.0
      %1933 = vmatmul.mubr.f32.gmra.mxu0 %v230
      %v1934 = vpop.f32.mrf.mxu0
      %v1935 = vadd.f32 0.0, %v1934
      %v1936 = vpop.f32.mrf.mxu0
      %1937 = vmatprep.mubr.f32.mxu0 0.0
      %1938 = vmatmul.mubr.f32.gmra.mxu0 %v231
      %v1939 = vpop.f32.mrf.mxu0
      %v1940 = vadd.f32 0.0, %v1939
      %v1941 = vpop.f32.mrf.mxu0
      %1942 = vmatprep.mubr.f32.mxu0 0.0
      %1943 = vmatmul.mubr.f32.gmra.mxu0 %v232
      %v1944 = vpop.f32.mrf.mxu0
      %v1945 = vadd.f32 0.0, %v1944
      %v1946 = vpop.f32.mrf.mxu0
      %1947 = vmatprep.mubr.f32.mxu0 0.0
      %1948 = vmatmul.mubr.f32.gmra.mxu0 %v233
      %v1949 = vpop.f32.mrf.mxu0
      %v1950 = vadd.f32 0.0, %v1949
      %v1951 = vpop.f32.mrf.mxu0
      %1952 = vmatprep.mubr.f32.mxu0 0.0
      %1953 = vmatmul.mubr.f32.gmra.mxu0 %v234
      %v1954 = vpop.f32.mrf.mxu0
      %v1955 = vadd.f32 0.0, %v1954
      %v1956 = vpop.f32.mrf.mxu0
      %1957 = vmatprep.mubr.f32.mxu0 0.0
      %1958 = vmatmul.mubr.f32.gmra.mxu0 %v235
      %v1959 = vpop.f32.mrf.mxu0
      %v1960 = vadd.f32 0.0, %v1959
      %v1961 = vpop.f32.mrf.mxu0
      %1962 = vmatprep.mubr.f32.mxu0 0.0
      %1963 = vmatmul.mubr.f32.gmra.mxu0 %v236
      %v1964 = vpop.f32.mrf.mxu0
      %v1965 = vadd.f32 0.0, %v1964
      %v1966 = vpop.f32.mrf.mxu0
      %1967 = vmatprep.mubr.f32.mxu0 0.0
      %1968 = vmatmul.mubr.f32.gmra.mxu0 %v237
      %v1969 = vpop.f32.mrf.mxu0
      %v1970 = vadd.f32 0.0, %v1969
      %v1971 = vpop.f32.mrf.mxu0
      %1972 = vdwg.mxu0
      %v1973 = vmax.f32 %v1507, %v1655
      %v1974 = vmax.f32 %v1508, %v1660
      %v1975 = vmax.f32 %v1509, %v1665
      %v1976 = vmax.f32 %v1510, %v1670
      %v1977 = vmax.f32 %v1511, %v1675
      %v1978 = vmax.f32 %v1512, %v1680
      %v1979 = vmax.f32 %v1513, %v1685
      %v1980 = vmax.f32 %v1514, %v1690
      %v1981 = vmax.f32 %v1515, %v1695
      %v1982 = vmax.f32 %v1516, %v1700
      %v1983 = vmax.f32 %v1517, %v1705
      %v1984 = vmax.f32 %v1518, %v1710
      %v1985 = vmax.f32 %v1519, %v1715
      %v1986 = vmax.f32 %v1520, %v1720
      %v1987 = vmax.f32 %v1521, %v1725
      %v1988 = vmax.f32 %v1522, %v1730
      %v1989 = vmax.f32 %v1523, %v1735
      %v1990 = vmax.f32 %v1524, %v1740
      %v1991 = vmax.f32 %v1525, %v1745
      %v1992 = vmax.f32 %v1526, %v1750
      %v1993 = vmax.f32 %v1527, %v1755
      %v1994 = vmax.f32 %v1528, %v1760
      %v1995 = vmax.f32 %v1529, %v1765
      %v1996 = vmax.f32 %v1530, %v1770
      %v1997 = vmax.f32 %v1531, %v1775
      %v1998 = vmax.f32 %v1532, %v1780
      %v1999 = vmax.f32 %v1533, %v1785
      %v2000 = vmax.f32 %v1534, %v1790
      %v2001 = vmax.f32 %v1535, %v1795
      %v2002 = vmax.f32 %v1536, %v1800
      %v2003 = vmax.f32 %v1537, %v1805
      %v2004 = vmax.f32 %v1538, %v1810
      %v2005 = vmax.f32 %v1539, %v1815
      %v2006 = vmax.f32 %v1540, %v1820
      %v2007 = vmax.f32 %v1541, %v1825
      %v2008 = vmax.f32 %v1542, %v1830
      %v2009 = vmax.f32 %v1543, %v1835
      %v2010 = vmax.f32 %v1544, %v1840
      %v2011 = vmax.f32 %v1545, %v1845
      %v2012 = vmax.f32 %v1546, %v1850
      %v2013 = vmax.f32 %v1547, %v1855
      %v2014 = vmax.f32 %v1548, %v1860
      %v2015 = vmax.f32 %v1549, %v1865
      %v2016 = vmax.f32 %v1550, %v1870
      %v2017 = vmax.f32 %v1551, %v1875
      %v2018 = vmax.f32 %v1552, %v1880
      %v2019 = vmax.f32 %v1553, %v1885
      %v2020 = vmax.f32 %v1554, %v1890
      %v2021 = vmax.f32 %v1555, %v1895
      %v2022 = vmax.f32 %v1556, %v1900
      %v2023 = vmax.f32 %v1557, %v1905
      %v2024 = vmax.f32 %v1558, %v1910
      %v2025 = vmax.f32 %v1559, %v1915
      %v2026 = vmax.f32 %v1560, %v1920
      %v2027 = vmax.f32 %v1561, %v1925
      %v2028 = vmax.f32 %v1562, %v1930
      %v2029 = vmax.f32 %v1563, %v1935
      %v2030 = vmax.f32 %v1564, %v1940
      %v2031 = vmax.f32 %v1565, %v1945
      %v2032 = vmax.f32 %v1566, %v1950
      %v2033 = vmax.f32 %v1567, %v1955
      %v2034 = vmax.f32 %v1568, %v1960
      %v2035 = vmax.f32 %v1569, %v1965
      %v2036 = vmax.f32 %v1570, %v1970
      %v2037 = vld [vmem:[%s2] sm:$0x1]
      %v2039 = vlaneseq
      %v2040 = vshrl.u32 %v2039, 7
      %v2041 = vsub.s32 0, %v2040
      %v2042 = vrot.slane %v2037, %v2041
      %v2044 = vadd.f32 %v1973, %v2042
      %v2045 = vadd.f32 %v1974, %v2042
      %v2046 = vadd.f32 %v1975, %v2042
      %v2047 = vadd.f32 %v1976, %v2042
      %v2048 = vadd.f32 %v1977, %v2042
      %v2049 = vadd.f32 %v1978, %v2042
      %v2050 = vadd.f32 %v1979, %v2042
      %v2051 = vadd.f32 %v1980, %v2042
      %v2052 = vadd.f32 %v1981, %v2042
      %v2053 = vadd.f32 %v1982, %v2042
      %v2054 = vadd.f32 %v1983, %v2042
      %v2055 = vadd.f32 %v1984, %v2042
      %v2056 = vadd.f32 %v1985, %v2042
      %v2057 = vadd.f32 %v1986, %v2042
      %v2058 = vadd.f32 %v1987, %v2042
      %v2059 = vadd.f32 %v1988, %v2042
      %v2060 = vadd.f32 %v1989, %v2042
      %v2061 = vadd.f32 %v1990, %v2042
      %v2062 = vadd.f32 %v1991, %v2042
      %v2063 = vadd.f32 %v1992, %v2042
      %v2064 = vadd.f32 %v1993, %v2042
      %v2065 = vadd.f32 %v1994, %v2042
      %v2066 = vadd.f32 %v1995, %v2042
      %v2067 = vadd.f32 %v1996, %v2042
      %v2068 = vadd.f32 %v1997, %v2042
      %v2069 = vadd.f32 %v1998, %v2042
      %v2070 = vadd.f32 %v1999, %v2042
      %v2071 = vadd.f32 %v2000, %v2042
      %v2072 = vadd.f32 %v2001, %v2042
      %v2073 = vadd.f32 %v2002, %v2042
      %v2074 = vadd.f32 %v2003, %v2042
      %v2075 = vadd.f32 %v2004, %v2042
      %v2076 = vadd.f32 %v2005, %v2042
      %v2077 = vadd.f32 %v2006, %v2042
      %v2078 = vadd.f32 %v2007, %v2042
      %v2079 = vadd.f32 %v2008, %v2042
      %v2080 = vadd.f32 %v2009, %v2042
      %v2081 = vadd.f32 %v2010, %v2042
      %v2082 = vadd.f32 %v2011, %v2042
      %v2083 = vadd.f32 %v2012, %v2042
      %v2084 = vadd.f32 %v2013, %v2042
      %v2085 = vadd.f32 %v2014, %v2042
      %v2086 = vadd.f32 %v2015, %v2042
      %v2087 = vadd.f32 %v2016, %v2042
      %v2088 = vadd.f32 %v2017, %v2042
      %v2089 = vadd.f32 %v2018, %v2042
      %v2090 = vadd.f32 %v2019, %v2042
      %v2091 = vadd.f32 %v2020, %v2042
      %v2092 = vadd.f32 %v2021, %v2042
      %v2093 = vadd.f32 %v2022, %v2042
      %v2094 = vadd.f32 %v2023, %v2042
      %v2095 = vadd.f32 %v2024, %v2042
      %v2096 = vadd.f32 %v2025, %v2042
      %v2097 = vadd.f32 %v2026, %v2042
      %v2098 = vadd.f32 %v2027, %v2042
      %v2099 = vadd.f32 %v2028, %v2042
      %v2100 = vadd.f32 %v2029, %v2042
      %v2101 = vadd.f32 %v2030, %v2042
      %v2102 = vadd.f32 %v2031, %v2042
      %v2103 = vadd.f32 %v2032, %v2042
      %v2104 = vadd.f32 %v2033, %v2042
      %v2105 = vadd.f32 %v2034, %v2042
      %v2106 = vadd.f32 %v2035, %v2042
      %v2107 = vadd.f32 %v2036, %v2042
      %v2108 = vmax.f32 %v2044, 0.0
      %v2109 = vmax.f32 %v2045, 0.0
      %v2110 = vmax.f32 %v2046, 0.0
      %v2111 = vmax.f32 %v2047, 0.0
      %v2112 = vmax.f32 %v2048, 0.0
      %v2113 = vmax.f32 %v2049, 0.0
      %v2114 = vmax.f32 %v2050, 0.0
      %v2115 = vmax.f32 %v2051, 0.0
      %v2116 = vmax.f32 %v2052, 0.0
      %v2117 = vmax.f32 %v2053, 0.0
      %v2118 = vmax.f32 %v2054, 0.0
      %v2119 = vmax.f32 %v2055, 0.0
      %v2120 = vmax.f32 %v2056, 0.0
      %v2121 = vmax.f32 %v2057, 0.0
      %v2122 = vmax.f32 %v2058, 0.0
      %v2123 = vmax.f32 %v2059, 0.0
      %v2124 = vmax.f32 %v2060, 0.0
      %v2125 = vmax.f32 %v2061, 0.0
      %v2126 = vmax.f32 %v2062, 0.0
      %v2127 = vmax.f32 %v2063, 0.0
      %v2128 = vmax.f32 %v2064, 0.0
      %v2129 = vmax.f32 %v2065, 0.0
      %v2130 = vmax.f32 %v2066, 0.0
      %v2131 = vmax.f32 %v2067, 0.0
      %v2132 = vmax.f32 %v2068, 0.0
      %v2133 = vmax.f32 %v2069, 0.0
      %v2134 = vmax.f32 %v2070, 0.0
      %v2135 = vmax.f32 %v2071, 0.0
      %v2136 = vmax.f32 %v2072, 0.0
      %v2137 = vmax.f32 %v2073, 0.0
      %v2138 = vmax.f32 %v2074, 0.0
      %v2139 = vmax.f32 %v2075, 0.0
      %v2140 = vmax.f32 %v2076, 0.0
      %v2141 = vmax.f32 %v2077, 0.0
      %v2142 = vmax.f32 %v2078, 0.0
      %v2143 = vmax.f32 %v2079, 0.0
      %v2144 = vmax.f32 %v2080, 0.0
      %v2145 = vmax.f32 %v2081, 0.0
      %v2146 = vmax.f32 %v2082, 0.0
      %v2147 = vmax.f32 %v2083, 0.0
      %v2148 = vmax.f32 %v2084, 0.0
      %v2149 = vmax.f32 %v2085, 0.0
      %v2150 = vmax.f32 %v2086, 0.0
      %v2151 = vmax.f32 %v2087, 0.0
      %v2152 = vmax.f32 %v2088, 0.0
      %v2153 = vmax.f32 %v2089, 0.0
      %v2154 = vmax.f32 %v2090, 0.0
      %v2155 = vmax.f32 %v2091, 0.0
      %v2156 = vmax.f32 %v2092, 0.0
      %v2157 = vmax.f32 %v2093, 0.0
      %v2158 = vmax.f32 %v2094, 0.0
      %v2159 = vmax.f32 %v2095, 0.0
      %v2160 = vmax.f32 %v2096, 0.0
      %v2161 = vmax.f32 %v2097, 0.0
      %v2162 = vmax.f32 %v2098, 0.0
      %v2163 = vmax.f32 %v2099, 0.0
      %v2164 = vmax.f32 %v2100, 0.0
      %v2165 = vmax.f32 %v2101, 0.0
      %v2166 = vmax.f32 %v2102, 0.0
      %v2167 = vmax.f32 %v2103, 0.0
      %v2168 = vmax.f32 %v2104, 0.0
      %v2169 = vmax.f32 %v2105, 0.0
      %v2170 = vmax.f32 %v2106, 0.0
      %v2171 = vmax.f32 %v2107, 0.0
      %vm2172 = vcmask 130048
      %2173 = vst.msk [vmem:[%s172] sm:$0xff] %vm2172, %v2108
      %2174 = vst.msk [vmem:[%s172 + $0x8] sm:$0xff] %vm2172, %v2109
      %2175 = vst.msk [vmem:[%s172 + $0x10] sm:$0xff] %vm2172, %v2110
      %2176 = vst.msk [vmem:[%s172 + $0x18] sm:$0xff] %vm2172, %v2111
      %2177 = vst.msk [vmem:[%s172 + $0x20] sm:$0xff] %vm2172, %v2112
      %2178 = vst.msk [vmem:[%s172 + $0x28] sm:$0xff] %vm2172, %v2113
      %2179 = vst.msk [vmem:[%s172 + $0x30] sm:$0xff] %vm2172, %v2114
      %2180 = vst.msk [vmem:[%s172 + $0x38] sm:$0xff] %vm2172, %v2115
      %2181 = vst.msk [vmem:[%s172 + $0x40] sm:$0xff] %vm2172, %v2116
      %2182 = vst.msk [vmem:[%s172 + $0x48] sm:$0xff] %vm2172, %v2117
      %2183 = vst.msk [vmem:[%s172 + $0x50] sm:$0xff] %vm2172, %v2118
      %2184 = vst.msk [vmem:[%s172 + $0x58] sm:$0xff] %vm2172, %v2119
      %2185 = vst.msk [vmem:[%s172 + $0x60] sm:$0xff] %vm2172, %v2120
      %2186 = vst.msk [vmem:[%s172 + $0x68] sm:$0xff] %vm2172, %v2121
      %2187 = vst.msk [vmem:[%s172 + $0x70] sm:$0xff] %vm2172, %v2122
      %2188 = vst.msk [vmem:[%s172 + $0x78] sm:$0xff] %vm2172, %v2123
      %2189 = vst.msk [vmem:[%s172 + $0x80] sm:$0xff] %vm2172, %v2124
      %2190 = vst.msk [vmem:[%s172 + $0x88] sm:$0xff] %vm2172, %v2125
      %2191 = vst.msk [vmem:[%s172 + $0x90] sm:$0xff] %vm2172, %v2126
      %2192 = vst.msk [vmem:[%s172 + $0x98] sm:$0xff] %vm2172, %v2127
      %2193 = vst.msk [vmem:[%s172 + $0xa0] sm:$0xff] %vm2172, %v2128
      %2194 = vst.msk [vmem:[%s172 + $0xa8] sm:$0xff] %vm2172, %v2129
      %2195 = vst.msk [vmem:[%s172 + $0xb0] sm:$0xff] %vm2172, %v2130
      %2196 = vst.msk [vmem:[%s172 + $0xb8] sm:$0xff] %vm2172, %v2131
      %2197 = vst.msk [vmem:[%s172 + $0xc0] sm:$0xff] %vm2172, %v2132
      %2198 = vst.msk [vmem:[%s172 + $0xc8] sm:$0xff] %vm2172, %v2133
      %2199 = vst.msk [vmem:[%s172 + $0xd0] sm:$0xff] %vm2172, %v2134
      %2200 = vst.msk [vmem:[%s172 + $0xd8] sm:$0xff] %vm2172, %v2135
      %2201 = vst.msk [vmem:[%s172 + $0xe0] sm:$0xff] %vm2172, %v2136
      %2202 = vst.msk [vmem:[%s172 + $0xe8] sm:$0xff] %vm2172, %v2137
      %2203 = vst.msk [vmem:[%s172 + $0xf0] sm:$0xff] %vm2172, %v2138
      %2204 = vst.msk [vmem:[%s172 + $0xf8] sm:$0xff] %vm2172, %v2139
      %2205 = vst.msk [vmem:[%s172 + $0x100] sm:$0xff] %vm2172, %v2140
      %2206 = vst.msk [vmem:[%s172 + $0x108] sm:$0xff] %vm2172, %v2141
      %2207 = vst.msk [vmem:[%s172 + $0x110] sm:$0xff] %vm2172, %v2142
      %2208 = vst.msk [vmem:[%s172 + $0x118] sm:$0xff] %vm2172, %v2143
      %2209 = vst.msk [vmem:[%s172 + $0x120] sm:$0xff] %vm2172, %v2144
      %2210 = vst.msk [vmem:[%s172 + $0x128] sm:$0xff] %vm2172, %v2145
      %2211 = vst.msk [vmem:[%s172 + $0x130] sm:$0xff] %vm2172, %v2146
      %2212 = vst.msk [vmem:[%s172 + $0x138] sm:$0xff] %vm2172, %v2147
      %2213 = vst.msk [vmem:[%s172 + $0x140] sm:$0xff] %vm2172, %v2148
      %2214 = vst.msk [vmem:[%s172 + $0x148] sm:$0xff] %vm2172, %v2149
      %2215 = vst.msk [vmem:[%s172 + $0x150] sm:$0xff] %vm2172, %v2150
      %2216 = vst.msk [vmem:[%s172 + $0x158] sm:$0xff] %vm2172, %v2151
      %2217 = vst.msk [vmem:[%s172 + $0x160] sm:$0xff] %vm2172, %v2152
      %2218 = vst.msk [vmem:[%s172 + $0x168] sm:$0xff] %vm2172, %v2153
      %2219 = vst.msk [vmem:[%s172 + $0x170] sm:$0xff] %vm2172, %v2154
      %2220 = vst.msk [vmem:[%s172 + $0x178] sm:$0xff] %vm2172, %v2155
      %2221 = vst.msk [vmem:[%s172 + $0x180] sm:$0xff] %vm2172, %v2156
      %2222 = vst.msk [vmem:[%s172 + $0x188] sm:$0xff] %vm2172, %v2157
      %2223 = vst.msk [vmem:[%s172 + $0x190] sm:$0xff] %vm2172, %v2158
      %2224 = vst.msk [vmem:[%s172 + $0x198] sm:$0xff] %vm2172, %v2159
      %2225 = vst.msk [vmem:[%s172 + $0x1a0] sm:$0xff] %vm2172, %v2160
      %2226 = vst.msk [vmem:[%s172 + $0x1a8] sm:$0xff] %vm2172, %v2161
      %2227 = vst.msk [vmem:[%s172 + $0x1b0] sm:$0xff] %vm2172, %v2162
      %2228 = vst.msk [vmem:[%s172 + $0x1b8] sm:$0xff] %vm2172, %v2163
      %2229 = vst.msk [vmem:[%s172 + $0x1c0] sm:$0xff] %vm2172, %v2164
      %2230 = vst.msk [vmem:[%s172 + $0x1c8] sm:$0xff] %vm2172, %v2165
      %2231 = vst.msk [vmem:[%s172 + $0x1d0] sm:$0xff] %vm2172, %v2166
      %2232 = vst.msk [vmem:[%s172 + $0x1d8] sm:$0xff] %vm2172, %v2167
      %2233 = vst.msk [vmem:[%s172 + $0x1e0] sm:$0xff] %vm2172, %v2168
      %2234 = vst.msk [vmem:[%s172 + $0x1e8] sm:$0xff] %vm2172, %v2169
      %2235 = vst.msk [vmem:[%s172 + $0x1f0] sm:$0xff] %vm2172, %v2170
      %2236 = vst.msk [vmem:[%s172 + $0x1f8] sm:$0xff] %vm2172, %v2171
      %s2237 = smul.u32 64, %s14
      %p2238 = scmp.lt.s32.totalorder %s2237, 255
      %s2239 = scalar_select %p2238, %s2237, 255
      %s2240 = smul.addr %s2239, 8
      %s2241 = scalar_lea.vmem %s3, %s2240
      // Predicated region
      $region33: #{solarnet_forward.4} parent=31 // pred_check
        %p2242 = pneg %p100
      $region34: #{solarnet_forward.4} parent=31 // pred_check_branch
        %2244 = sbr.rel (%p2242) target = $region36
      $region35: #{solarnet_forward.4} parent=31 // pred_region
        %s2245 = smul.u32 64, %s14
      $region36: #{solarnet_forward.4} parent=31 // pred_fallthru
        _
    $region32: #{solarnet_forward.4} parent=5 // pred_fallthru
      _
    %p2246 = scmp.le.s32.totalorder 2, %s9
    // Predicated region
    $region37: #{solarnet_forward.4} parent=5 // pred_check
      %p2247 = pneg %p2246
    $region38: #{solarnet_forward.4} parent=5 // pred_check_branch
      %2249 = sbr.rel (%p2247) target = $region40
    $region39: #{solarnet_forward.4} parent=5 // pred_region
      %s2250 = ssub.s32 %s9, 2
      // Predicated region
      $region41: #{solarnet_forward.4} parent=39 // pred_check
        %p2251 = pneg %p106
      $region42: #{solarnet_forward.4} parent=39 // pred_check_branch
        %2253 = sbr.rel (%p2251) target = $region44
      $region43: #{solarnet_forward.4} parent=39 // pred_region
        %s2254 = smul.u32 64, %s15
        %p2255 = scmp.lt.s32.totalorder %s2254, 255
        %s2256 = scalar_select %p2255, %s2254, 255
        %s2257 = smul.addr %s2256, 8
        %s2258 = scalar_lea.vmem %s3, %s2257
      $region44: #{solarnet_forward.4} parent=39 // pred_fallthru
        _
    $region40: #{solarnet_forward.4} parent=5 // pred_fallthru
      _
  $region6: #{solarnet_forward.4} parent=0 // loop_footer
    %s13 = sadd.s32 1, %s9
  $region7: #{solarnet_forward.4} parent=0 // loop_footer_branch
    %8 = sbr.rel target = $region3
  $region8: #{solarnet_forward.4} parent=0 // loop_exit
    _

// kernel: solarnet_forward.5
$region0: #{solarnet_forward.5}
  #allocation0 [shape = 'u32[]', space=smem, size = 0x4, offset = 0x4, fixed_abs, tag = 'smem constant byte address 0x4 - core index']
  #allocation1 [shape = 'u32[144,128]{1,0:T(1,128)}', space=vmem, size = 0x12000, scoped, tag = 'internal scratch']
  %s0 = inlined_call_operand.vmem [shape: f32[512,256], index: 0, kind: input, shape index: {}]
  %s1 = inlined_call_operand.vmem [shape: f32[4,256,32], index: 1, kind: input, shape index: {}]
  %s2 = inlined_call_operand.vmem [shape: f32[1,32], index: 2, kind: input, shape index: {}]
  %s3 = inlined_call_operand.vmem [shape: f32[512,32], index: 3, kind: output, shape index: {}]
  %s4 = sld [smem:[#allocation0]]
  $region45: #{solarnet_forward.5} parent=0
    _
  %s6 = ssub.s32 1, %s4
  %s7 = scalar_select 0, %s6, %s4
  loop: start=0, step=1, limit=6
  $region2: #{solarnet_forward.5} parent=0 // loop_pre_header
    _
  $region3: #{solarnet_forward.5} parent=0 // loop_header
    %s9 = sphi 0, %s13
    %p10 = scmp.ge.s32.totalorder %s9, 6
    %s19 = sphi 0, %s21
    %s22 = sphi 0, %s19
    %s23 = sphi 0, %s22
    %s39 = sphi 0, %s23
    %s43 = sphi 0, %s43
    %s45 = sphi 0, %s43
    %s46 = sphi 0, %s45
    %s60 = sphi 0, %s46
    %s64 = sphi 0, %s64
    %s66 = sphi 0, %s64
    %s67 = sphi 0, %s66
    %s81 = sphi 0, %s67
    %s87 = sphi 0, %s89
    %s90 = sphi 0, %s87
    %s91 = sphi 0, %s90
    %s107 = sphi 0, %s91
  $region4: #{solarnet_forward.5} parent=0 // loop_header_branch
    %12 = sbr.rel (%p10) target = $region8
  $region5: #{solarnet_forward.5} parent=0 // loop_body
    %s14 = ssub.s32 %s9, 1
    %s15 = ssub.s32 %s9, 2
    %s16 = sadd.s32 %s9, 1
    %s17 = ssub.s32 %s9, %s16
    %p18 = scmp.eq.s32.totalorder %s17, 0
    %s20 = sadd.s32 %s19, 1
    %s21 = scalar_select %p18, %s19, %s20
    %p24 = pneg %p18
    %p25 = scmp.eq.s32.totalorder %s9, 3
    %p26 = por %p24, %p25
    %p27 = scmp.ne.s32.totalorder %s19, %s22
    %p28 = scmp.eq.s32.totalorder %s9, 0
    %p29 = por %p27, %p28
    %p30 = scmp.ne.s32.totalorder %s19, %s22
    %p31 = scmp.eq.s32.totalorder %s14, 3
    %p32 = por %p30, %p31
    %p33 = scmp.ne.s32.totalorder %s22, %s23
    %p34 = scmp.eq.s32.totalorder %s14, 0
    %p35 = por %p33, %p34
    %p36 = scmp.ne.s32.totalorder %s22, %s23
    %p37 = scmp.eq.s32.totalorder %s15, 3
    %p38 = por %p36, %p37
    %p40 = scmp.ne.s32.totalorder %s23, %s39
    %p41 = scmp.eq.s32.totalorder %s15, 0
    %p42 = por %p40, %p41
    %s44 = sadd.s32 %s43, 1
    %p47 = scmp.eq.s32.totalorder %s9, 3
    %p48 = scmp.ne.s32.totalorder %s43, %s45
    %p49 = scmp.eq.s32.totalorder %s9, 0
    %p50 = por %p48, %p49
    %p51 = scmp.ne.s32.totalorder %s43, %s45
    %p52 = scmp.eq.s32.totalorder %s14, 3
    %p53 = por %p51, %p52
    %p54 = scmp.ne.s32.totalorder %s45, %s46
    %p55 = scmp.eq.s32.totalorder %s14, 0
    %p56 = por %p54, %p55
    %p57 = scmp.ne.s32.totalorder %s45, %s46
    %p58 = scmp.eq.s32.totalorder %s15, 3
    %p59 = por %p57, %p58
    %p61 = scmp.ne.s32.totalorder %s46, %s60
    %p62 = scmp.eq.s32.totalorder %s15, 0
    %p63 = por %p61, %p62
    %s65 = sadd.s32 %s64, 1
    %p68 = scmp.eq.s32.totalorder %s9, 3
    %p69 = scmp.ne.s32.totalorder %s64, %s66
    %p70 = scmp.eq.s32.totalorder %s9, 0
    %p71 = por %p69, %p70
    %p72 = scmp.ne.s32.totalorder %s64, %s66
    %p73 = scmp.eq.s32.totalorder %s14, 3
    %p74 = por %p72, %p73
    %p75 = scmp.ne.s32.totalorder %s66, %s67
    %p76 = scmp.eq.s32.totalorder %s14, 0
    %p77 = por %p75, %p76
    %p78 = scmp.ne.s32.totalorder %s66, %s67
    %p79 = scmp.eq.s32.totalorder %s15, 3
    %p80 = por %p78, %p79
    %p82 = scmp.ne.s32.totalorder %s67, %s81
    %p83 = scmp.eq.s32.totalorder %s15, 0
    %p84 = por %p82, %p83
    %s85 = ssub.s32 %s9, %s16
    %p86 = scmp.eq.s32.totalorder %s85, 0
    %s88 = sadd.s32 %s87, 1
    %s89 = scalar_select %p86, %s87, %s88
    %p92 = pneg %p86
    %p93 = scmp.eq.s32.totalorder %s9, 3
    %p94 = por %p92, %p93
    %p95 = scmp.ne.s32.totalorder %s87, %s90
    %p96 = scmp.eq.s32.totalorder %s9, 0
    %p97 = por %p95, %p96
    %p98 = scmp.ne.s32.totalorder %s87, %s90
    %p99 = scmp.eq.s32.totalorder %s14, 3
    %p100 = por %p98, %p99
    %p101 = scmp.ne.s32.totalorder %s90, %s91
    %p102 = scmp.eq.s32.totalorder %s14, 0
    %p103 = por %p101, %p102
    %p104 = scmp.ne.s32.totalorder %s90, %s91
    %p105 = scmp.eq.s32.totalorder %s15, 3
    %p106 = por %p104, %p105
    %p108 = scmp.ne.s32.totalorder %s91, %s107
    %p109 = scmp.eq.s32.totalorder %s15, 0
    %p110 = por %p108, %p109
    %p111 = scmp.le.s32.totalorder 1, %s9
    %p112 = scmp.lt.s32.totalorder %s9, 5
    %p113 = pnand %p111, %p112
    %p114 = pneg %p113
    // Predicated region
    $region9: #{solarnet_forward.5} parent=5 // pred_check
      _
    $region10: #{solarnet_forward.5} parent=5 // pred_check_branch
      %116 = sbr.rel (%p113) target = $region12
    $region11: #{solarnet_forward.5} parent=5 // pred_region
      %s117 = ssub.s32 %s9, 1
      // Predicated region
      $region13: #{solarnet_forward.5} parent=11 // pred_check
        %p118 = pneg %p56
      $region14: #{solarnet_forward.5} parent=11 // pred_check_branch
        %120 = sbr.rel (%p118) target = $region16
      $region15: #{solarnet_forward.5} parent=11 // pred_region
        _
      $region16: #{solarnet_forward.5} parent=11 // pred_fallthru
        _
      // Predicated region
      $region17: #{solarnet_forward.5} parent=11 // pred_check
        %p121 = pneg %p77
      $region18: #{solarnet_forward.5} parent=11 // pred_check_branch
        %123 = sbr.rel (%p121) target = $region20
      $region19: #{solarnet_forward.5} parent=11 // pred_region
        _
      $region20: #{solarnet_forward.5} parent=11 // pred_fallthru
        _
    $region12: #{solarnet_forward.5} parent=5 // pred_fallthru
      _
    %p124 = scmp.lt.s32.totalorder %s9, 4
    // Predicated region
    $region21: #{solarnet_forward.5} parent=5 // pred_check
      %p125 = pneg %p124
    $region22: #{solarnet_forward.5} parent=5 // pred_check_branch
      %127 = sbr.rel (%p125) target = $region24
    $region23: #{solarnet_forward.5} parent=5 // pred_region
      // Predicated region
      $region25: #{solarnet_forward.5} parent=23 // pred_check
        %p128 = pneg %p29
      $region26: #{solarnet_forward.5} parent=23 // pred_check_branch
        %130 = sbr.rel (%p128) target = $region28
      $region27: #{solarnet_forward.5} parent=23 // pred_region
        %s131 = smul.u32 16, %s9
        %p132 = scmp.lt.s32.totalorder %s131, 63
        %s133 = scalar_select %p132, %s131, 63
        %s134 = smul.addr %s133, 2
        %s135 = smul.addr %s134, 8
        %s136 = scalar_lea.vmem %s0, %s135
        %s137 = smul.u32 16, %s9
      $region28: #{solarnet_forward.5} parent=23 // pred_fallthru
        _
    $region24: #{solarnet_forward.5} parent=5 // pred_fallthru
      _
    %p138 = scmp.le.s32.totalorder 1, %s9
    %p139 = scmp.lt.s32.totalorder %s9, 5
    %p140 = pnand %p138, %p139
    %p141 = pneg %p140
    // Predicated region
    $region29: #{solarnet_forward.5} parent=5 // pred_check
      _
    $region30: #{solarnet_forward.5} parent=5 // pred_check_branch
      %143 = sbr.rel (%p140) target = $region32
    $region31: #{solarnet_forward.5} parent=5 // pred_region
      %s144 = ssub.s32 %s9, 1
      %s145 = smul.u32 16, %s14
      %p146 = scmp.lt.s32.totalorder %s145, 63
      %s147 = scalar_select %p146, %s145, 63
      %s148 = smul.addr %s147, 2
      %s149 = smul.addr %s148, 8
      %s150 = scalar_lea.vmem %s0, %s149
      %p151 = pneg %p35
      %p152 = pneg %p32
      %p153 = pneg %p56
      %p154 = pneg %p53
      %p155 = pneg %p77
      %p156 = pneg %p74
      %p157 = pneg %p103
      %p158 = pneg %p100
      %s159 = smul.u32 16, %s14
      %p160 = scmp.lt.s32.totalorder %s159, 63
      %s161 = scalar_select %p160, %s159, 63
      %s162 = smul.addr %s161, 8
      %s163 = scalar_lea.vmem %s3, %s162
      %s164 = smul.u32 16, %s14
      %p165 = scmp.lt.s32.totalorder %s164, 63
      %s166 = scalar_select %p165, %s164, 63
      %s167 = smul.addr %s166, 2
      %s168 = smul.addr %s167, 8
      %s169 = scalar_lea.vmem %s0, %s168
      %s170 = smul.u32 16, %s14
      %s171 = smul.u32 16, %s14
      %p172 = scmp.lt.s32.totalorder %s171, 63
      %s173 = scalar_select %p172, %s171, 63
      %s174 = smul.addr %s173, 8
      %s175 = scalar_lea.vmem %s3, %s174
      %s176 = smul.u32 16, %s14
      %v177 = vld [vmem:[%s169] sm:$0xff]
      %v178 = vld [vmem:[%s169 + $0x8] sm:$0xff]
      %v179 = vld [vmem:[%s169 + $0x10] sm:$0xff]
      %v180 = vld [vmem:[%s169 + $0x18] sm:$0xff]
      %v181 = vld [vmem:[%s169 + $0x20] sm:$0xff]
      %v182 = vld [vmem:[%s169 + $0x28] sm:$0xff]
      %v183 = vld [vmem:[%s169 + $0x30] sm:$0xff]
      %v184 = vld [vmem:[%s169 + $0x38] sm:$0xff]
      %v185 = vld [vmem:[%s169 + $0x40] sm:$0xff]
      %v186 = vld [vmem:[%s169 + $0x48] sm:$0xff]
      %v187 = vld [vmem:[%s169 + $0x50] sm:$0xff]
      %v188 = vld [vmem:[%s169 + $0x58] sm:$0xff]
      %v189 = vld [vmem:[%s169 + $0x60] sm:$0xff]
      %v190 = vld [vmem:[%s169 + $0x68] sm:$0xff]
      %v191 = vld [vmem:[%s169 + $0x70] sm:$0xff]
      %v192 = vld [vmem:[%s169 + $0x78] sm:$0xff]
      %v193 = vld [vmem:[%s169 + $0x80] sm:$0xff]
      %v194 = vld [vmem:[%s169 + $0x88] sm:$0xff]
      %v195 = vld [vmem:[%s169 + $0x90] sm:$0xff]
      %v196 = vld [vmem:[%s169 + $0x98] sm:$0xff]
      %v197 = vld [vmem:[%s169 + $0xa0] sm:$0xff]
      %v198 = vld [vmem:[%s169 + $0xa8] sm:$0xff]
      %v199 = vld [vmem:[%s169 + $0xb0] sm:$0xff]
      %v200 = vld [vmem:[%s169 + $0xb8] sm:$0xff]
      %v201 = vld [vmem:[%s169 + $0xc0] sm:$0xff]
      %v202 = vld [vmem:[%s169 + $0xc8] sm:$0xff]
      %v203 = vld [vmem:[%s169 + $0xd0] sm:$0xff]
      %v204 = vld [vmem:[%s169 + $0xd8] sm:$0xff]
      %v205 = vld [vmem:[%s169 + $0xe0] sm:$0xff]
      %v206 = vld [vmem:[%s169 + $0xe8] sm:$0xff]
      %v207 = vld [vmem:[%s169 + $0xf0] sm:$0xff]
      %v208 = vld [vmem:[%s169 + $0xf8] sm:$0xff]
      %v209 = vld [vmem:[%s1] sm:$0xff]
      %v210 = vld [vmem:[%s1 + $0x8] sm:$0xff]
      %v211 = vld [vmem:[%s1 + $0x10] sm:$0xff]
      %v212 = vld [vmem:[%s1 + $0x18] sm:$0xff]
      %v213 = vld [vmem:[%s1 + $0x20] sm:$0xff]
      %v214 = vld [vmem:[%s1 + $0x28] sm:$0xff]
      %v215 = vld [vmem:[%s1 + $0x30] sm:$0xff]
      %v216 = vld [vmem:[%s1 + $0x38] sm:$0xff]
      %v217 = vld [vmem:[%s1 + $0x40] sm:$0xff]
      %v218 = vld [vmem:[%s1 + $0x48] sm:$0xff]
      %v219 = vld [vmem:[%s1 + $0x50] sm:$0xff]
      %v220 = vld [vmem:[%s1 + $0x58] sm:$0xff]
      %v221 = vld [vmem:[%s1 + $0x60] sm:$0xff]
      %v222 = vld [vmem:[%s1 + $0x68] sm:$0xff]
      %v223 = vld [vmem:[%s1 + $0x70] sm:$0xff]
      %v224 = vld [vmem:[%s1 + $0x78] sm:$0xff]
      %v225 = vld [vmem:[%s1 + $0x80] sm:$0xff]
      %v226 = vld [vmem:[%s1 + $0x88] sm:$0xff]
      %v227 = vld [vmem:[%s1 + $0x90] sm:$0xff]
      %v228 = vld [vmem:[%s1 + $0x98] sm:$0xff]
      %v229 = vld [vmem:[%s1 + $0xa0] sm:$0xff]
      %v230 = vld [vmem:[%s1 + $0xa8] sm:$0xff]
      %v231 = vld [vmem:[%s1 + $0xb0] sm:$0xff]
      %v232 = vld [vmem:[%s1 + $0xb8] sm:$0xff]
      %v233 = vld [vmem:[%s1 + $0xc0] sm:$0xff]
      %v234 = vld [vmem:[%s1 + $0xc8] sm:$0xff]
      %v235 = vld [vmem:[%s1 + $0xd0] sm:$0xff]
      %v236 = vld [vmem:[%s1 + $0xd8] sm:$0xff]
      %v237 = vld [vmem:[%s1 + $0xe0] sm:$0xff]
      %v238 = vld [vmem:[%s1 + $0xe8] sm:$0xff]
      %v239 = vld [vmem:[%s1 + $0xf0] sm:$0xff]
      %v240 = vld [vmem:[%s1 + $0xf8] sm:$0xff]
      %241 = vmatprep.subr.mxu0 0.0
      %242 = vmatpush1.msra.mxu0 %v224
      %243 = vmatprep.subr.mxu0 0.0
      %244 = vmatpush1.msra.mxu0 %v223
      %245 = vmatprep.subr.mxu0 0.0
      %246 = vmatpush1.msra.mxu0 %v222
      %247 = vmatprep.subr.mxu0 0.0
      %248 = vmatpush1.msra.mxu0 %v221
      %249 = vmatprep.subr.mxu0 0.0
      %250 = vmatpush1.msra.mxu0 %v220
      %251 = vmatprep.subr.mxu0 0.0
      %252 = vmatpush1.msra.mxu0 %v219
      %253 = vmatprep.subr.mxu0 0.0
      %254 = vmatpush1.msra.mxu0 %v218
      %255 = vmatprep.subr.mxu0 0.0
      %256 = vmatpush1.msra.mxu0 %v217
      %257 = vmatprep.subr.mxu0 0.0
      %258 = vmatpush1.msra.mxu0 %v216
      %259 = vmatprep.subr.mxu0 0.0
      %260 = vmatpush1.msra.mxu0 %v215
      %261 = vmatprep.subr.mxu0 0.0
      %262 = vmatpush1.msra.mxu0 %v214
      %263 = vmatprep.subr.mxu0 0.0
      %264 = vmatpush1.msra.mxu0 %v213
      %265 = vmatprep.subr.mxu0 0.0
      %266 = vmatpush1.msra.mxu0 %v212
      %267 = vmatprep.subr.mxu0 0.0
      %268 = vmatpush1.msra.mxu0 %v211
      %269 = vmatprep.subr.mxu0 0.0
      %270 = vmatpush1.msra.mxu0 %v210
      %271 = vmatprep.subr.mxu0 0.0
      %272 = vmatpush1.msra.mxu0 %v209
      %273 = vmatprep.subr.mxu0 0.0
      %274 = vmatpush2.msra.mxu0 %v240
      %275 = vmatprep.subr.mxu0 0.0
      %276 = vmatpush2.msra.mxu0 %v239
      %277 = vmatprep.subr.mxu0 0.0
      %278 = vmatpush2.msra.mxu0 %v238
      %279 = vmatprep.subr.mxu0 0.0
      %280 = vmatpush2.msra.mxu0 %v237
      %281 = vmatprep.subr.mxu0 0.0
      %282 = vmatpush2.msra.mxu0 %v236
      %283 = vmatprep.subr.mxu0 0.0
      %284 = vmatpush2.msra.mxu0 %v235
      %285 = vmatprep.subr.mxu0 0.0
      %286 = vmatpush2.msra.mxu0 %v234
      %287 = vmatprep.subr.mxu0 0.0
      %288 = vmatpush2.msra.mxu0 %v233
      %289 = vmatprep.subr.mxu0 0.0
      %290 = vmatpush2.msra.mxu0 %v232
      %291 = vmatprep.subr.mxu0 0.0
      %292 = vmatpush2.msra.mxu0 %v231
      %293 = vmatprep.subr.mxu0 0.0
      %294 = vmatpush2.msra.mxu0 %v230
      %295 = vmatprep.subr.mxu0 0.0
      %296 = vmatpush2.msra.mxu0 %v229
      %297 = vmatprep.subr.mxu0 0.0
      %298 = vmatpush2.msra.mxu0 %v228
      %299 = vmatprep.subr.mxu0 0.0
      %300 = vmatpush2.msra.mxu0 %v227
      %301 = vmatprep.subr.mxu0 0.0
      %302 = vmatpush2.msra.mxu0 %v226
      %303 = vmatprep.subr.mxu0 0.0
      %304 = vmatpush2.msra.mxu0 %v225
      %305 = vmatprep.mubr.f32.mxu0 %v178
      %306 = vmatmul.mubr.f32.gmra.mxu0 %v177
      %v307 = vpop.f32.mrf.mxu0
      %v308 = vadd.f32 0.0, %v307
      %v309 = vpop.f32.mrf.mxu0
      %310 = vmatprep.mubr.f32.mxu0 %v180
      %311 = vmatmul.mubr.f32.gmra.mxu0 %v179
      %v312 = vpop.f32.mrf.mxu0
      %v313 = vadd.f32 0.0, %v312
      %v314 = vpop.f32.mrf.mxu0
      %315 = vmatprep.mubr.f32.mxu0 %v182
      %316 = vmatmul.mubr.f32.gmra.mxu0 %v181
      %v317 = vpop.f32.mrf.mxu0
      %v318 = vadd.f32 0.0, %v317
      %v319 = vpop.f32.mrf.mxu0
      %320 = vmatprep.mubr.f32.mxu0 %v184
      %321 = vmatmul.mubr.f32.gmra.mxu0 %v183
      %v322 = vpop.f32.mrf.mxu0
      %v323 = vadd.f32 0.0, %v322
      %v324 = vpop.f32.mrf.mxu0
      %325 = vmatprep.mubr.f32.mxu0 %v186
      %326 = vmatmul.mubr.f32.gmra.mxu0 %v185
      %v327 = vpop.f32.mrf.mxu0
      %v328 = vadd.f32 0.0, %v327
      %v329 = vpop.f32.mrf.mxu0
      %330 = vmatprep.mubr.f32.mxu0 %v188
      %331 = vmatmul.mubr.f32.gmra.mxu0 %v187
      %v332 = vpop.f32.mrf.mxu0
      %v333 = vadd.f32 0.0, %v332
      %v334 = vpop.f32.mrf.mxu0
      %335 = vmatprep.mubr.f32.mxu0 %v190
      %336 = vmatmul.mubr.f32.gmra.mxu0 %v189
      %v337 = vpop.f32.mrf.mxu0
      %v338 = vadd.f32 0.0, %v337
      %v339 = vpop.f32.mrf.mxu0
      %340 = vmatprep.mubr.f32.mxu0 %v192
      %341 = vmatmul.mubr.f32.gmra.mxu0 %v191
      %v342 = vpop.f32.mrf.mxu0
      %v343 = vadd.f32 0.0, %v342
      %v344 = vpop.f32.mrf.mxu0
      %345 = vmatprep.mubr.f32.mxu0 %v194
      %346 = vmatmul.mubr.f32.gmra.mxu0 %v193
      %v347 = vpop.f32.mrf.mxu0
      %v348 = vadd.f32 0.0, %v347
      %v349 = vpop.f32.mrf.mxu0
      %350 = vmatprep.mubr.f32.mxu0 %v196
      %351 = vmatmul.mubr.f32.gmra.mxu0 %v195
      %v352 = vpop.f32.mrf.mxu0
      %v353 = vadd.f32 0.0, %v352
      %v354 = vpop.f32.mrf.mxu0
      %355 = vmatprep.mubr.f32.mxu0 %v198
      %356 = vmatmul.mubr.f32.gmra.mxu0 %v197
      %v357 = vpop.f32.mrf.mxu0
      %v358 = vadd.f32 0.0, %v357
      %v359 = vpop.f32.mrf.mxu0
      %360 = vmatprep.mubr.f32.mxu0 %v200
      %361 = vmatmul.mubr.f32.gmra.mxu0 %v199
      %v362 = vpop.f32.mrf.mxu0
      %v363 = vadd.f32 0.0, %v362
      %v364 = vpop.f32.mrf.mxu0
      %365 = vmatprep.mubr.f32.mxu0 %v202
      %366 = vmatmul.mubr.f32.gmra.mxu0 %v201
      %v367 = vpop.f32.mrf.mxu0
      %v368 = vadd.f32 0.0, %v367
      %v369 = vpop.f32.mrf.mxu0
      %370 = vmatprep.mubr.f32.mxu0 %v204
      %371 = vmatmul.mubr.f32.gmra.mxu0 %v203
      %v372 = vpop.f32.mrf.mxu0
      %v373 = vadd.f32 0.0, %v372
      %v374 = vpop.f32.mrf.mxu0
      %375 = vmatprep.mubr.f32.mxu0 %v206
      %376 = vmatmul.mubr.f32.gmra.mxu0 %v205
      %v377 = vpop.f32.mrf.mxu0
      %v378 = vadd.f32 0.0, %v377
      %v379 = vpop.f32.mrf.mxu0
      %380 = vmatprep.mubr.f32.mxu0 %v208
      %381 = vmatmul.mubr.f32.gmra.mxu0 %v207
      %v382 = vpop.f32.mrf.mxu0
      %v383 = vadd.f32 0.0, %v382
      %v384 = vpop.f32.mrf.mxu0
      %385 = vdwg.mxu0
      %s386 = scalar_lea.vmem %s1, 256
      %v387 = vld [vmem:[%s386] sm:$0xff]
      %v388 = vld [vmem:[%s386 + $0x8] sm:$0xff]
      %v389 = vld [vmem:[%s386 + $0x10] sm:$0xff]
      %v390 = vld [vmem:[%s386 + $0x18] sm:$0xff]
      %v391 = vld [vmem:[%s386 + $0x20] sm:$0xff]
      %v392 = vld [vmem:[%s386 + $0x28] sm:$0xff]
      %v393 = vld [vmem:[%s386 + $0x30] sm:$0xff]
      %v394 = vld [vmem:[%s386 + $0x38] sm:$0xff]
      %v395 = vld [vmem:[%s386 + $0x40] sm:$0xff]
      %v396 = vld [vmem:[%s386 + $0x48] sm:$0xff]
      %v397 = vld [vmem:[%s386 + $0x50] sm:$0xff]
      %v398 = vld [vmem:[%s386 + $0x58] sm:$0xff]
      %v399 = vld [vmem:[%s386 + $0x60] sm:$0xff]
      %v400 = vld [vmem:[%s386 + $0x68] sm:$0xff]
      %v401 = vld [vmem:[%s386 + $0x70] sm:$0xff]
      %v402 = vld [vmem:[%s386 + $0x78] sm:$0xff]
      %v403 = vld [vmem:[%s386 + $0x80] sm:$0xff]
      %v404 = vld [vmem:[%s386 + $0x88] sm:$0xff]
      %v405 = vld [vmem:[%s386 + $0x90] sm:$0xff]
      %v406 = vld [vmem:[%s386 + $0x98] sm:$0xff]
      %v407 = vld [vmem:[%s386 + $0xa0] sm:$0xff]
      %v408 = vld [vmem:[%s386 + $0xa8] sm:$0xff]
      %v409 = vld [vmem:[%s386 + $0xb0] sm:$0xff]
      %v410 = vld [vmem:[%s386 + $0xb8] sm:$0xff]
      %v411 = vld [vmem:[%s386 + $0xc0] sm:$0xff]
      %v412 = vld [vmem:[%s386 + $0xc8] sm:$0xff]
      %v413 = vld [vmem:[%s386 + $0xd0] sm:$0xff]
      %v414 = vld [vmem:[%s386 + $0xd8] sm:$0xff]
      %v415 = vld [vmem:[%s386 + $0xe0] sm:$0xff]
      %v416 = vld [vmem:[%s386 + $0xe8] sm:$0xff]
      %v417 = vld [vmem:[%s386 + $0xf0] sm:$0xff]
      %v418 = vld [vmem:[%s386 + $0xf8] sm:$0xff]
      %419 = vmatprep.subr.mxu0 0.0
      %420 = vmatpush1.msra.mxu0 %v402
      %421 = vmatprep.subr.mxu0 0.0
      %422 = vmatpush1.msra.mxu0 %v401
      %423 = vmatprep.subr.mxu0 0.0
      %424 = vmatpush1.msra.mxu0 %v400
      %425 = vmatprep.subr.mxu0 0.0
      %426 = vmatpush1.msra.mxu0 %v399
      %427 = vmatprep.subr.mxu0 0.0
      %428 = vmatpush1.msra.mxu0 %v398
      %429 = vmatprep.subr.mxu0 0.0
      %430 = vmatpush1.msra.mxu0 %v397
      %431 = vmatprep.subr.mxu0 0.0
      %432 = vmatpush1.msra.mxu0 %v396
      %433 = vmatprep.subr.mxu0 0.0
      %434 = vmatpush1.msra.mxu0 %v395
      %435 = vmatprep.subr.mxu0 0.0
      %436 = vmatpush1.msra.mxu0 %v394
      %437 = vmatprep.subr.mxu0 0.0
      %438 = vmatpush1.msra.mxu0 %v393
      %439 = vmatprep.subr.mxu0 0.0
      %440 = vmatpush1.msra.mxu0 %v392
      %441 = vmatprep.subr.mxu0 0.0
      %442 = vmatpush1.msra.mxu0 %v391
      %443 = vmatprep.subr.mxu0 0.0
      %444 = vmatpush1.msra.mxu0 %v390
      %445 = vmatprep.subr.mxu0 0.0
      %446 = vmatpush1.msra.mxu0 %v389
      %447 = vmatprep.subr.mxu0 0.0
      %448 = vmatpush1.msra.mxu0 %v388
      %449 = vmatprep.subr.mxu0 0.0
      %450 = vmatpush1.msra.mxu0 %v387
      %451 = vmatprep.subr.mxu0 0.0
      %452 = vmatpush2.msra.mxu0 %v418
      %453 = vmatprep.subr.mxu0 0.0
      %454 = vmatpush2.msra.mxu0 %v417
      %455 = vmatprep.subr.mxu0 0.0
      %456 = vmatpush2.msra.mxu0 %v416
      %457 = vmatprep.subr.mxu0 0.0
      %458 = vmatpush2.msra.mxu0 %v415
      %459 = vmatprep.subr.mxu0 0.0
      %460 = vmatpush2.msra.mxu0 %v414
      %461 = vmatprep.subr.mxu0 0.0
      %462 = vmatpush2.msra.mxu0 %v413
      %463 = vmatprep.subr.mxu0 0.0
      %464 = vmatpush2.msra.mxu0 %v412
      %465 = vmatprep.subr.mxu0 0.0
      %466 = vmatpush2.msra.mxu0 %v411
      %467 = vmatprep.subr.mxu0 0.0
      %468 = vmatpush2.msra.mxu0 %v410
      %469 = vmatprep.subr.mxu0 0.0
      %470 = vmatpush2.msra.mxu0 %v409
      %471 = vmatprep.subr.mxu0 0.0
      %472 = vmatpush2.msra.mxu0 %v408
      %473 = vmatprep.subr.mxu0 0.0
      %474 = vmatpush2.msra.mxu0 %v407
      %475 = vmatprep.subr.mxu0 0.0
      %476 = vmatpush2.msra.mxu0 %v406
      %477 = vmatprep.subr.mxu0 0.0
      %478 = vmatpush2.msra.mxu0 %v405
      %479 = vmatprep.subr.mxu0 0.0
      %480 = vmatpush2.msra.mxu0 %v404
      %481 = vmatprep.subr.mxu0 0.0
      %482 = vmatpush2.msra.mxu0 %v403
      %483 = vmatprep.mubr.f32.mxu0 %v178
      %484 = vmatmul.mubr.f32.gmra.mxu0 %v177
      %v485 = vpop.f32.mrf.mxu0
      %v486 = vadd.f32 0.0, %v485
      %v487 = vpop.f32.mrf.mxu0
      %488 = vmatprep.mubr.f32.mxu0 %v180
      %489 = vmatmul.mubr.f32.gmra.mxu0 %v179
      %v490 = vpop.f32.mrf.mxu0
      %v491 = vadd.f32 0.0, %v490
      %v492 = vpop.f32.mrf.mxu0
      %493 = vmatprep.mubr.f32.mxu0 %v182
      %494 = vmatmul.mubr.f32.gmra.mxu0 %v181
      %v495 = vpop.f32.mrf.mxu0
      %v496 = vadd.f32 0.0, %v495
      %v497 = vpop.f32.mrf.mxu0
      %498 = vmatprep.mubr.f32.mxu0 %v184
      %499 = vmatmul.mubr.f32.gmra.mxu0 %v183
      %v500 = vpop.f32.mrf.mxu0
      %v501 = vadd.f32 0.0, %v500
      %v502 = vpop.f32.mrf.mxu0
      %503 = vmatprep.mubr.f32.mxu0 %v186
      %504 = vmatmul.mubr.f32.gmra.mxu0 %v185
      %v505 = vpop.f32.mrf.mxu0
      %v506 = vadd.f32 0.0, %v505
      %v507 = vpop.f32.mrf.mxu0
      %508 = vmatprep.mubr.f32.mxu0 %v188
      %509 = vmatmul.mubr.f32.gmra.mxu0 %v187
      %v510 = vpop.f32.mrf.mxu0
      %v511 = vadd.f32 0.0, %v510
      %v512 = vpop.f32.mrf.mxu0
      %513 = vmatprep.mubr.f32.mxu0 %v190
      %514 = vmatmul.mubr.f32.gmra.mxu0 %v189
      %v515 = vpop.f32.mrf.mxu0
      %v516 = vadd.f32 0.0, %v515
      %v517 = vpop.f32.mrf.mxu0
      %518 = vmatprep.mubr.f32.mxu0 %v192
      %519 = vmatmul.mubr.f32.gmra.mxu0 %v191
      %v520 = vpop.f32.mrf.mxu0
      %v521 = vadd.f32 0.0, %v520
      %v522 = vpop.f32.mrf.mxu0
      %523 = vmatprep.mubr.f32.mxu0 %v194
      %524 = vmatmul.mubr.f32.gmra.mxu0 %v193
      %v525 = vpop.f32.mrf.mxu0
      %v526 = vadd.f32 0.0, %v525
      %v527 = vpop.f32.mrf.mxu0
      %528 = vmatprep.mubr.f32.mxu0 %v196
      %529 = vmatmul.mubr.f32.gmra.mxu0 %v195
      %v530 = vpop.f32.mrf.mxu0
      %v531 = vadd.f32 0.0, %v530
      %v532 = vpop.f32.mrf.mxu0
      %533 = vmatprep.mubr.f32.mxu0 %v198
      %534 = vmatmul.mubr.f32.gmra.mxu0 %v197
      %v535 = vpop.f32.mrf.mxu0
      %v536 = vadd.f32 0.0, %v535
      %v537 = vpop.f32.mrf.mxu0
      %538 = vmatprep.mubr.f32.mxu0 %v200
      %539 = vmatmul.mubr.f32.gmra.mxu0 %v199
      %v540 = vpop.f32.mrf.mxu0
      %v541 = vadd.f32 0.0, %v540
      %v542 = vpop.f32.mrf.mxu0
      %543 = vmatprep.mubr.f32.mxu0 %v202
      %544 = vmatmul.mubr.f32.gmra.mxu0 %v201
      %v545 = vpop.f32.mrf.mxu0
      %v546 = vadd.f32 0.0, %v545
      %v547 = vpop.f32.mrf.mxu0
      %548 = vmatprep.mubr.f32.mxu0 %v204
      %549 = vmatmul.mubr.f32.gmra.mxu0 %v203
      %v550 = vpop.f32.mrf.mxu0
      %v551 = vadd.f32 0.0, %v550
      %v552 = vpop.f32.mrf.mxu0
      %553 = vmatprep.mubr.f32.mxu0 %v206
      %554 = vmatmul.mubr.f32.gmra.mxu0 %v205
      %v555 = vpop.f32.mrf.mxu0
      %v556 = vadd.f32 0.0, %v555
      %v557 = vpop.f32.mrf.mxu0
      %558 = vmatprep.mubr.f32.mxu0 %v208
      %559 = vmatmul.mubr.f32.gmra.mxu0 %v207
      %v560 = vpop.f32.mrf.mxu0
      %v561 = vadd.f32 0.0, %v560
      %v562 = vpop.f32.mrf.mxu0
      %563 = vdwg.mxu0
      %v564 = vmax.f32 %v308, %v486
      %v565 = vmax.f32 %v313, %v491
      %v566 = vmax.f32 %v318, %v496
      %v567 = vmax.f32 %v323, %v501
      %v568 = vmax.f32 %v328, %v506
      %v569 = vmax.f32 %v333, %v511
      %v570 = vmax.f32 %v338, %v516
      %v571 = vmax.f32 %v343, %v521
      %v572 = vmax.f32 %v348, %v526
      %v573 = vmax.f32 %v353, %v531
      %v574 = vmax.f32 %v358, %v536
      %v575 = vmax.f32 %v363, %v541
      %v576 = vmax.f32 %v368, %v546
      %v577 = vmax.f32 %v373, %v551
      %v578 = vmax.f32 %v378, %v556
      %v579 = vmax.f32 %v383, %v561
      %s580 = scalar_lea.vmem %s1, 512
      %v581 = vld [vmem:[%s580] sm:$0xff]
      %v582 = vld [vmem:[%s580 + $0x8] sm:$0xff]
      %v583 = vld [vmem:[%s580 + $0x10] sm:$0xff]
      %v584 = vld [vmem:[%s580 + $0x18] sm:$0xff]
      %v585 = vld [vmem:[%s580 + $0x20] sm:$0xff]
      %v586 = vld [vmem:[%s580 + $0x28] sm:$0xff]
      %v587 = vld [vmem:[%s580 + $0x30] sm:$0xff]
      %v588 = vld [vmem:[%s580 + $0x38] sm:$0xff]
      %v589 = vld [vmem:[%s580 + $0x40] sm:$0xff]
      %v590 = vld [vmem:[%s580 + $0x48] sm:$0xff]
      %v591 = vld [vmem:[%s580 + $0x50] sm:$0xff]
      %v592 = vld [vmem:[%s580 + $0x58] sm:$0xff]
      %v593 = vld [vmem:[%s580 + $0x60] sm:$0xff]
      %v594 = vld [vmem:[%s580 + $0x68] sm:$0xff]
      %v595 = vld [vmem:[%s580 + $0x70] sm:$0xff]
      %v596 = vld [vmem:[%s580 + $0x78] sm:$0xff]
      %v597 = vld [vmem:[%s580 + $0x80] sm:$0xff]
      %v598 = vld [vmem:[%s580 + $0x88] sm:$0xff]
      %v599 = vld [vmem:[%s580 + $0x90] sm:$0xff]
      %v600 = vld [vmem:[%s580 + $0x98] sm:$0xff]
      %v601 = vld [vmem:[%s580 + $0xa0] sm:$0xff]
      %v602 = vld [vmem:[%s580 + $0xa8] sm:$0xff]
      %v603 = vld [vmem:[%s580 + $0xb0] sm:$0xff]
      %v604 = vld [vmem:[%s580 + $0xb8] sm:$0xff]
      %v605 = vld [vmem:[%s580 + $0xc0] sm:$0xff]
      %v606 = vld [vmem:[%s580 + $0xc8] sm:$0xff]
      %v607 = vld [vmem:[%s580 + $0xd0] sm:$0xff]
      %v608 = vld [vmem:[%s580 + $0xd8] sm:$0xff]
      %v609 = vld [vmem:[%s580 + $0xe0] sm:$0xff]
      %v610 = vld [vmem:[%s580 + $0xe8] sm:$0xff]
      %v611 = vld [vmem:[%s580 + $0xf0] sm:$0xff]
      %v612 = vld [vmem:[%s580 + $0xf8] sm:$0xff]
      %613 = vmatprep.subr.mxu0 0.0
      %614 = vmatpush1.msra.mxu0 %v596
      %615 = vmatprep.subr.mxu0 0.0
      %616 = vmatpush1.msra.mxu0 %v595
      %617 = vmatprep.subr.mxu0 0.0
      %618 = vmatpush1.msra.mxu0 %v594
      %619 = vmatprep.subr.mxu0 0.0
      %620 = vmatpush1.msra.mxu0 %v593
      %621 = vmatprep.subr.mxu0 0.0
      %622 = vmatpush1.msra.mxu0 %v592
      %623 = vmatprep.subr.mxu0 0.0
      %624 = vmatpush1.msra.mxu0 %v591
      %625 = vmatprep.subr.mxu0 0.0
      %626 = vmatpush1.msra.mxu0 %v590
      %627 = vmatprep.subr.mxu0 0.0
      %628 = vmatpush1.msra.mxu0 %v589
      %629 = vmatprep.subr.mxu0 0.0
      %630 = vmatpush1.msra.mxu0 %v588
      %631 = vmatprep.subr.mxu0 0.0
      %632 = vmatpush1.msra.mxu0 %v587
      %633 = vmatprep.subr.mxu0 0.0
      %634 = vmatpush1.msra.mxu0 %v586
      %635 = vmatprep.subr.mxu0 0.0
      %636 = vmatpush1.msra.mxu0 %v585
      %637 = vmatprep.subr.mxu0 0.0
      %638 = vmatpush1.msra.mxu0 %v584
      %639 = vmatprep.subr.mxu0 0.0
      %640 = vmatpush1.msra.mxu0 %v583
      %641 = vmatprep.subr.mxu0 0.0
      %642 = vmatpush1.msra.mxu0 %v582
      %643 = vmatprep.subr.mxu0 0.0
      %644 = vmatpush1.msra.mxu0 %v581
      %645 = vmatprep.subr.mxu0 0.0
      %646 = vmatpush2.msra.mxu0 %v612
      %647 = vmatprep.subr.mxu0 0.0
      %648 = vmatpush2.msra.mxu0 %v611
      %649 = vmatprep.subr.mxu0 0.0
      %650 = vmatpush2.msra.mxu0 %v610
      %651 = vmatprep.subr.mxu0 0.0
      %652 = vmatpush2.msra.mxu0 %v609
      %653 = vmatprep.subr.mxu0 0.0
      %654 = vmatpush2.msra.mxu0 %v608
      %655 = vmatprep.subr.mxu0 0.0
      %656 = vmatpush2.msra.mxu0 %v607
      %657 = vmatprep.subr.mxu0 0.0
      %658 = vmatpush2.msra.mxu0 %v606
      %659 = vmatprep.subr.mxu0 0.0
      %660 = vmatpush2.msra.mxu0 %v605
      %661 = vmatprep.subr.mxu0 0.0
      %662 = vmatpush2.msra.mxu0 %v604
      %663 = vmatprep.subr.mxu0 0.0
      %664 = vmatpush2.msra.mxu0 %v603
      %665 = vmatprep.subr.mxu0 0.0
      %666 = vmatpush2.msra.mxu0 %v602
      %667 = vmatprep.subr.mxu0 0.0
      %668 = vmatpush2.msra.mxu0 %v601
      %669 = vmatprep.subr.mxu0 0.0
      %670 = vmatpush2.msra.mxu0 %v600
      %671 = vmatprep.subr.mxu0 0.0
      %672 = vmatpush2.msra.mxu0 %v599
      %673 = vmatprep.subr.mxu0 0.0
      %674 = vmatpush2.msra.mxu0 %v598
      %675 = vmatprep.subr.mxu0 0.0
      %676 = vmatpush2.msra.mxu0 %v597
      %677 = vmatprep.mubr.f32.mxu0 %v178
      %678 = vmatmul.mubr.f32.gmra.mxu0 %v177
      %v679 = vpop.f32.mrf.mxu0
      %v680 = vadd.f32 0.0, %v679
      %v681 = vpop.f32.mrf.mxu0
      %682 = vmatprep.mubr.f32.mxu0 %v180
      %683 = vmatmul.mubr.f32.gmra.mxu0 %v179
      %v684 = vpop.f32.mrf.mxu0
      %v685 = vadd.f32 0.0, %v684
      %v686 = vpop.f32.mrf.mxu0
      %687 = vmatprep.mubr.f32.mxu0 %v182
      %688 = vmatmul.mubr.f32.gmra.mxu0 %v181
      %v689 = vpop.f32.mrf.mxu0
      %v690 = vadd.f32 0.0, %v689
      %v691 = vpop.f32.mrf.mxu0
      %692 = vmatprep.mubr.f32.mxu0 %v184
      %693 = vmatmul.mubr.f32.gmra.mxu0 %v183
      %v694 = vpop.f32.mrf.mxu0
      %v695 = vadd.f32 0.0, %v694
      %v696 = vpop.f32.mrf.mxu0
      %697 = vmatprep.mubr.f32.mxu0 %v186
      %698 = vmatmul.mubr.f32.gmra.mxu0 %v185
      %v699 = vpop.f32.mrf.mxu0
      %v700 = vadd.f32 0.0, %v699
      %v701 = vpop.f32.mrf.mxu0
      %702 = vmatprep.mubr.f32.mxu0 %v188
      %703 = vmatmul.mubr.f32.gmra.mxu0 %v187
      %v704 = vpop.f32.mrf.mxu0
      %v705 = vadd.f32 0.0, %v704
      %v706 = vpop.f32.mrf.mxu0
      %707 = vmatprep.mubr.f32.mxu0 %v190
      %708 = vmatmul.mubr.f32.gmra.mxu0 %v189
      %v709 = vpop.f32.mrf.mxu0
      %v710 = vadd.f32 0.0, %v709
      %v711 = vpop.f32.mrf.mxu0
      %712 = vmatprep.mubr.f32.mxu0 %v192
      %713 = vmatmul.mubr.f32.gmra.mxu0 %v191
      %v714 = vpop.f32.mrf.mxu0
      %v715 = vadd.f32 0.0, %v714
      %v716 = vpop.f32.mrf.mxu0
      %717 = vmatprep.mubr.f32.mxu0 %v194
      %718 = vmatmul.mubr.f32.gmra.mxu0 %v193
      %v719 = vpop.f32.mrf.mxu0
      %v720 = vadd.f32 0.0, %v719
      %v721 = vpop.f32.mrf.mxu0
      %722 = vmatprep.mubr.f32.mxu0 %v196
      %723 = vmatmul.mubr.f32.gmra.mxu0 %v195
      %v724 = vpop.f32.mrf.mxu0
      %v725 = vadd.f32 0.0, %v724
      %v726 = vpop.f32.mrf.mxu0
      %727 = vmatprep.mubr.f32.mxu0 %v198
      %728 = vmatmul.mubr.f32.gmra.mxu0 %v197
      %v729 = vpop.f32.mrf.mxu0
      %v730 = vadd.f32 0.0, %v729
      %v731 = vpop.f32.mrf.mxu0
      %732 = vmatprep.mubr.f32.mxu0 %v200
      %733 = vmatmul.mubr.f32.gmra.mxu0 %v199
      %v734 = vpop.f32.mrf.mxu0
      %v735 = vadd.f32 0.0, %v734
      %v736 = vpop.f32.mrf.mxu0
      %737 = vmatprep.mubr.f32.mxu0 %v202
      %738 = vmatmul.mubr.f32.gmra.mxu0 %v201
      %v739 = vpop.f32.mrf.mxu0
      %v740 = vadd.f32 0.0, %v739
      %v741 = vpop.f32.mrf.mxu0
      %742 = vmatprep.mubr.f32.mxu0 %v204
      %743 = vmatmul.mubr.f32.gmra.mxu0 %v203
      %v744 = vpop.f32.mrf.mxu0
      %v745 = vadd.f32 0.0, %v744
      %v746 = vpop.f32.mrf.mxu0
      %747 = vmatprep.mubr.f32.mxu0 %v206
      %748 = vmatmul.mubr.f32.gmra.mxu0 %v205
      %v749 = vpop.f32.mrf.mxu0
      %v750 = vadd.f32 0.0, %v749
      %v751 = vpop.f32.mrf.mxu0
      %752 = vmatprep.mubr.f32.mxu0 %v208
      %753 = vmatmul.mubr.f32.gmra.mxu0 %v207
      %v754 = vpop.f32.mrf.mxu0
      %v755 = vadd.f32 0.0, %v754
      %v756 = vpop.f32.mrf.mxu0
      %757 = vdwg.mxu0
      %v758 = vmax.f32 %v564, %v680
      %v759 = vmax.f32 %v565, %v685
      %v760 = vmax.f32 %v566, %v690
      %v761 = vmax.f32 %v567, %v695
      %v762 = vmax.f32 %v568, %v700
      %v763 = vmax.f32 %v569, %v705
      %v764 = vmax.f32 %v570, %v710
      %v765 = vmax.f32 %v571, %v715
      %v766 = vmax.f32 %v572, %v720
      %v767 = vmax.f32 %v573, %v725
      %v768 = vmax.f32 %v574, %v730
      %v769 = vmax.f32 %v575, %v735
      %v770 = vmax.f32 %v576, %v740
      %v771 = vmax.f32 %v577, %v745
      %v772 = vmax.f32 %v578, %v750
      %v773 = vmax.f32 %v579, %v755
      %s774 = scalar_lea.vmem %s1, 768
      %v775 = vld [vmem:[%s774] sm:$0xff]
      %v776 = vld [vmem:[%s774 + $0x8] sm:$0xff]
      %v777 = vld [vmem:[%s774 + $0x10] sm:$0xff]
      %v778 = vld [vmem:[%s774 + $0x18] sm:$0xff]
      %v779 = vld [vmem:[%s774 + $0x20] sm:$0xff]
      %v780 = vld [vmem:[%s774 + $0x28] sm:$0xff]
      %v781 = vld [vmem:[%s774 + $0x30] sm:$0xff]
      %v782 = vld [vmem:[%s774 + $0x38] sm:$0xff]
      %v783 = vld [vmem:[%s774 + $0x40] sm:$0xff]
      %v784 = vld [vmem:[%s774 + $0x48] sm:$0xff]
      %v785 = vld [vmem:[%s774 + $0x50] sm:$0xff]
      %v786 = vld [vmem:[%s774 + $0x58] sm:$0xff]
      %v787 = vld [vmem:[%s774 + $0x60] sm:$0xff]
      %v788 = vld [vmem:[%s774 + $0x68] sm:$0xff]
      %v789 = vld [vmem:[%s774 + $0x70] sm:$0xff]
      %v790 = vld [vmem:[%s774 + $0x78] sm:$0xff]
      %v791 = vld [vmem:[%s774 + $0x80] sm:$0xff]
      %v792 = vld [vmem:[%s774 + $0x88] sm:$0xff]
      %v793 = vld [vmem:[%s774 + $0x90] sm:$0xff]
      %v794 = vld [vmem:[%s774 + $0x98] sm:$0xff]
      %v795 = vld [vmem:[%s774 + $0xa0] sm:$0xff]
      %v796 = vld [vmem:[%s774 + $0xa8] sm:$0xff]
      %v797 = vld [vmem:[%s774 + $0xb0] sm:$0xff]
      %v798 = vld [vmem:[%s774 + $0xb8] sm:$0xff]
      %v799 = vld [vmem:[%s774 + $0xc0] sm:$0xff]
      %v800 = vld [vmem:[%s774 + $0xc8] sm:$0xff]
      %v801 = vld [vmem:[%s774 + $0xd0] sm:$0xff]
      %v802 = vld [vmem:[%s774 + $0xd8] sm:$0xff]
      %v803 = vld [vmem:[%s774 + $0xe0] sm:$0xff]
      %v804 = vld [vmem:[%s774 + $0xe8] sm:$0xff]
      %v805 = vld [vmem:[%s774 + $0xf0] sm:$0xff]
      %v806 = vld [vmem:[%s774 + $0xf8] sm:$0xff]
      %807 = vmatprep.subr.mxu0 0.0
      %808 = vmatpush1.msra.mxu0 %v790
      %809 = vmatprep.subr.mxu0 0.0
      %810 = vmatpush1.msra.mxu0 %v789
      %811 = vmatprep.subr.mxu0 0.0
      %812 = vmatpush1.msra.mxu0 %v788
      %813 = vmatprep.subr.mxu0 0.0
      %814 = vmatpush1.msra.mxu0 %v787
      %815 = vmatprep.subr.mxu0 0.0
      %816 = vmatpush1.msra.mxu0 %v786
      %817 = vmatprep.subr.mxu0 0.0
      %818 = vmatpush1.msra.mxu0 %v785
      %819 = vmatprep.subr.mxu0 0.0
      %820 = vmatpush1.msra.mxu0 %v784
      %821 = vmatprep.subr.mxu0 0.0
      %822 = vmatpush1.msra.mxu0 %v783
      %823 = vmatprep.subr.mxu0 0.0
      %824 = vmatpush1.msra.mxu0 %v782
      %825 = vmatprep.subr.mxu0 0.0
      %826 = vmatpush1.msra.mxu0 %v781
      %827 = vmatprep.subr.mxu0 0.0
      %828 = vmatpush1.msra.mxu0 %v780
      %829 = vmatprep.subr.mxu0 0.0
      %830 = vmatpush1.msra.mxu0 %v779
      %831 = vmatprep.subr.mxu0 0.0
      %832 = vmatpush1.msra.mxu0 %v778
      %833 = vmatprep.subr.mxu0 0.0
      %834 = vmatpush1.msra.mxu0 %v777
      %835 = vmatprep.subr.mxu0 0.0
      %836 = vmatpush1.msra.mxu0 %v776
      %837 = vmatprep.subr.mxu0 0.0
      %838 = vmatpush1.msra.mxu0 %v775
      %839 = vmatprep.subr.mxu0 0.0
      %840 = vmatpush2.msra.mxu0 %v806
      %841 = vmatprep.subr.mxu0 0.0
      %842 = vmatpush2.msra.mxu0 %v805
      %843 = vmatprep.subr.mxu0 0.0
      %844 = vmatpush2.msra.mxu0 %v804
      %845 = vmatprep.subr.mxu0 0.0
      %846 = vmatpush2.msra.mxu0 %v803
      %847 = vmatprep.subr.mxu0 0.0
      %848 = vmatpush2.msra.mxu0 %v802
      %849 = vmatprep.subr.mxu0 0.0
      %850 = vmatpush2.msra.mxu0 %v801
      %851 = vmatprep.subr.mxu0 0.0
      %852 = vmatpush2.msra.mxu0 %v800
      %853 = vmatprep.subr.mxu0 0.0
      %854 = vmatpush2.msra.mxu0 %v799
      %855 = vmatprep.subr.mxu0 0.0
      %856 = vmatpush2.msra.mxu0 %v798
      %857 = vmatprep.subr.mxu0 0.0
      %858 = vmatpush2.msra.mxu0 %v797
      %859 = vmatprep.subr.mxu0 0.0
      %860 = vmatpush2.msra.mxu0 %v796
      %861 = vmatprep.subr.mxu0 0.0
      %862 = vmatpush2.msra.mxu0 %v795
      %863 = vmatprep.subr.mxu0 0.0
      %864 = vmatpush2.msra.mxu0 %v794
      %865 = vmatprep.subr.mxu0 0.0
      %866 = vmatpush2.msra.mxu0 %v793
      %867 = vmatprep.subr.mxu0 0.0
      %868 = vmatpush2.msra.mxu0 %v792
      %869 = vmatprep.subr.mxu0 0.0
      %870 = vmatpush2.msra.mxu0 %v791
      %871 = vmatprep.mubr.f32.mxu0 %v178
      %872 = vmatmul.mubr.f32.gmra.mxu0 %v177
      %v873 = vpop.f32.mrf.mxu0
      %v874 = vadd.f32 0.0, %v873
      %v875 = vpop.f32.mrf.mxu0
      %876 = vmatprep.mubr.f32.mxu0 %v180
      %877 = vmatmul.mubr.f32.gmra.mxu0 %v179
      %v878 = vpop.f32.mrf.mxu0
      %v879 = vadd.f32 0.0, %v878
      %v880 = vpop.f32.mrf.mxu0
      %881 = vmatprep.mubr.f32.mxu0 %v182
      %882 = vmatmul.mubr.f32.gmra.mxu0 %v181
      %v883 = vpop.f32.mrf.mxu0
      %v884 = vadd.f32 0.0, %v883
      %v885 = vpop.f32.mrf.mxu0
      %886 = vmatprep.mubr.f32.mxu0 %v184
      %887 = vmatmul.mubr.f32.gmra.mxu0 %v183
      %v888 = vpop.f32.mrf.mxu0
      %v889 = vadd.f32 0.0, %v888
      %v890 = vpop.f32.mrf.mxu0
      %891 = vmatprep.mubr.f32.mxu0 %v186
      %892 = vmatmul.mubr.f32.gmra.mxu0 %v185
      %v893 = vpop.f32.mrf.mxu0
      %v894 = vadd.f32 0.0, %v893
      %v895 = vpop.f32.mrf.mxu0
      %896 = vmatprep.mubr.f32.mxu0 %v188
      %897 = vmatmul.mubr.f32.gmra.mxu0 %v187
      %v898 = vpop.f32.mrf.mxu0
      %v899 = vadd.f32 0.0, %v898
      %v900 = vpop.f32.mrf.mxu0
      %901 = vmatprep.mubr.f32.mxu0 %v190
      %902 = vmatmul.mubr.f32.gmra.mxu0 %v189
      %v903 = vpop.f32.mrf.mxu0
      %v904 = vadd.f32 0.0, %v903
      %v905 = vpop.f32.mrf.mxu0
      %906 = vmatprep.mubr.f32.mxu0 %v192
      %907 = vmatmul.mubr.f32.gmra.mxu0 %v191
      %v908 = vpop.f32.mrf.mxu0
      %v909 = vadd.f32 0.0, %v908
      %v910 = vpop.f32.mrf.mxu0
      %911 = vmatprep.mubr.f32.mxu0 %v194
      %912 = vmatmul.mubr.f32.gmra.mxu0 %v193
      %v913 = vpop.f32.mrf.mxu0
      %v914 = vadd.f32 0.0, %v913
      %v915 = vpop.f32.mrf.mxu0
      %916 = vmatprep.mubr.f32.mxu0 %v196
      %917 = vmatmul.mubr.f32.gmra.mxu0 %v195
      %v918 = vpop.f32.mrf.mxu0
      %v919 = vadd.f32 0.0, %v918
      %v920 = vpop.f32.mrf.mxu0
      %921 = vmatprep.mubr.f32.mxu0 %v198
      %922 = vmatmul.mubr.f32.gmra.mxu0 %v197
      %v923 = vpop.f32.mrf.mxu0
      %v924 = vadd.f32 0.0, %v923
      %v925 = vpop.f32.mrf.mxu0
      %926 = vmatprep.mubr.f32.mxu0 %v200
      %927 = vmatmul.mubr.f32.gmra.mxu0 %v199
      %v928 = vpop.f32.mrf.mxu0
      %v929 = vadd.f32 0.0, %v928
      %v930 = vpop.f32.mrf.mxu0
      %931 = vmatprep.mubr.f32.mxu0 %v202
      %932 = vmatmul.mubr.f32.gmra.mxu0 %v201
      %v933 = vpop.f32.mrf.mxu0
      %v934 = vadd.f32 0.0, %v933
      %v935 = vpop.f32.mrf.mxu0
      %936 = vmatprep.mubr.f32.mxu0 %v204
      %937 = vmatmul.mubr.f32.gmra.mxu0 %v203
      %v938 = vpop.f32.mrf.mxu0
      %v939 = vadd.f32 0.0, %v938
      %v940 = vpop.f32.mrf.mxu0
      %941 = vmatprep.mubr.f32.mxu0 %v206
      %942 = vmatmul.mubr.f32.gmra.mxu0 %v205
      %v943 = vpop.f32.mrf.mxu0
      %v944 = vadd.f32 0.0, %v943
      %v945 = vpop.f32.mrf.mxu0
      %946 = vmatprep.mubr.f32.mxu0 %v208
      %947 = vmatmul.mubr.f32.gmra.mxu0 %v207
      %v948 = vpop.f32.mrf.mxu0
      %v949 = vadd.f32 0.0, %v948
      %v950 = vpop.f32.mrf.mxu0
      %951 = vdwg.mxu0
      %v952 = vmax.f32 %v758, %v874
      %v953 = vmax.f32 %v759, %v879
      %v954 = vmax.f32 %v760, %v884
      %v955 = vmax.f32 %v761, %v889
      %v956 = vmax.f32 %v762, %v894
      %v957 = vmax.f32 %v763, %v899
      %v958 = vmax.f32 %v764, %v904
      %v959 = vmax.f32 %v765, %v909
      %v960 = vmax.f32 %v766, %v914
      %v961 = vmax.f32 %v767, %v919
      %v962 = vmax.f32 %v768, %v924
      %v963 = vmax.f32 %v769, %v929
      %v964 = vmax.f32 %v770, %v934
      %v965 = vmax.f32 %v771, %v939
      %v966 = vmax.f32 %v772, %v944
      %v967 = vmax.f32 %v773, %v949
      %v968 = vld [vmem:[%s2] sm:$0x1]
      %v970 = vlaneseq
      %v971 = vshrl.u32 %v970, 7
      %v972 = vsub.s32 0, %v971
      %v973 = vrot.slane %v968, %v972
      %v975 = vadd.f32 %v952, %v973
      %v976 = vadd.f32 %v953, %v973
      %v977 = vadd.f32 %v954, %v973
      %v978 = vadd.f32 %v955, %v973
      %v979 = vadd.f32 %v956, %v973
      %v980 = vadd.f32 %v957, %v973
      %v981 = vadd.f32 %v958, %v973
      %v982 = vadd.f32 %v959, %v973
      %v983 = vadd.f32 %v960, %v973
      %v984 = vadd.f32 %v961, %v973
      %v985 = vadd.f32 %v962, %v973
      %v986 = vadd.f32 %v963, %v973
      %v987 = vadd.f32 %v964, %v973
      %v988 = vadd.f32 %v965, %v973
      %v989 = vadd.f32 %v966, %v973
      %v990 = vadd.f32 %v967, %v973
      %v991 = vmax.f32 %v975, 0.0
      %v992 = vmax.f32 %v976, 0.0
      %v993 = vmax.f32 %v977, 0.0
      %v994 = vmax.f32 %v978, 0.0
      %v995 = vmax.f32 %v979, 0.0
      %v996 = vmax.f32 %v980, 0.0
      %v997 = vmax.f32 %v981, 0.0
      %v998 = vmax.f32 %v982, 0.0
      %v999 = vmax.f32 %v983, 0.0
      %v1000 = vmax.f32 %v984, 0.0
      %v1001 = vmax.f32 %v985, 0.0
      %v1002 = vmax.f32 %v986, 0.0
      %v1003 = vmax.f32 %v987, 0.0
      %v1004 = vmax.f32 %v988, 0.0
      %v1005 = vmax.f32 %v989, 0.0
      %v1006 = vmax.f32 %v990, 0.0
      %vm1007 = vcmask 261120
      %1008 = vst.msk [vmem:[%s175] sm:$0xff] %vm1007, %v991
      %1009 = vst.msk [vmem:[%s175 + $0x8] sm:$0xff] %vm1007, %v992
      %1010 = vst.msk [vmem:[%s175 + $0x10] sm:$0xff] %vm1007, %v993
      %1011 = vst.msk [vmem:[%s175 + $0x18] sm:$0xff] %vm1007, %v994
      %1012 = vst.msk [vmem:[%s175 + $0x20] sm:$0xff] %vm1007, %v995
      %1013 = vst.msk [vmem:[%s175 + $0x28] sm:$0xff] %vm1007, %v996
      %1014 = vst.msk [vmem:[%s175 + $0x30] sm:$0xff] %vm1007, %v997
      %1015 = vst.msk [vmem:[%s175 + $0x38] sm:$0xff] %vm1007, %v998
      %1016 = vst.msk [vmem:[%s175 + $0x40] sm:$0xff] %vm1007, %v999
      %1017 = vst.msk [vmem:[%s175 + $0x48] sm:$0xff] %vm1007, %v1000
      %1018 = vst.msk [vmem:[%s175 + $0x50] sm:$0xff] %vm1007, %v1001
      %1019 = vst.msk [vmem:[%s175 + $0x58] sm:$0xff] %vm1007, %v1002
      %1020 = vst.msk [vmem:[%s175 + $0x60] sm:$0xff] %vm1007, %v1003
      %1021 = vst.msk [vmem:[%s175 + $0x68] sm:$0xff] %vm1007, %v1004
      %1022 = vst.msk [vmem:[%s175 + $0x70] sm:$0xff] %vm1007, %v1005
      %1023 = vst.msk [vmem:[%s175 + $0x78] sm:$0xff] %vm1007, %v1006
      %s1024 = smul.u32 16, %s14
      %p1025 = scmp.lt.s32.totalorder %s1024, 63
      %s1026 = scalar_select %p1025, %s1024, 63
      %s1027 = smul.addr %s1026, 8
      %s1028 = scalar_lea.vmem %s3, %s1027
      // Predicated region
      $region33: #{solarnet_forward.5} parent=31 // pred_check
        %p1029 = pneg %p100
      $region34: #{solarnet_forward.5} parent=31 // pred_check_branch
        %1031 = sbr.rel (%p1029) target = $region36
      $region35: #{solarnet_forward.5} parent=31 // pred_region
        %s1032 = smul.u32 16, %s14
      $region36: #{solarnet_forward.5} parent=31 // pred_fallthru
        _
    $region32: #{solarnet_forward.5} parent=5 // pred_fallthru
      _
    %p1033 = scmp.le.s32.totalorder 2, %s9
    // Predicated region
    $region37: #{solarnet_forward.5} parent=5 // pred_check
      %p1034 = pneg %p1033
    $region38: #{solarnet_forward.5} parent=5 // pred_check_branch
      %1036 = sbr.rel (%p1034) target = $region40
    $region39: #{solarnet_forward.5} parent=5 // pred_region
      %s1037 = ssub.s32 %s9, 2
      // Predicated region
      $region41: #{solarnet_forward.5} parent=39 // pred_check
        %p1038 = pneg %p106
      $region42: #{solarnet_forward.5} parent=39 // pred_check_branch
        %1040 = sbr.rel (%p1038) target = $region44
      $region43: #{solarnet_forward.5} parent=39 // pred_region
        %s1041 = smul.u32 16, %s15
        %p1042 = scmp.lt.s32.totalorder %s1041, 63
        %s1043 = scalar_select %p1042, %s1041, 63
        %s1044 = smul.addr %s1043, 8
        %s1045 = scalar_lea.vmem %s3, %s1044
      $region44: #{solarnet_forward.5} parent=39 // pred_fallthru
        _
    $region40: #{solarnet_forward.5} parent=5 // pred_fallthru
      _
  $region6: #{solarnet_forward.5} parent=0 // loop_footer
    %s13 = sadd.s32 1, %s9
  $region7: #{solarnet_forward.5} parent=0 // loop_footer_branch
    %8 = sbr.rel target = $region3
  $region8: #{solarnet_forward.5} parent=0 // loop_exit
    _

// kernel: solarnet_forward.6
$region0: #{solarnet_forward.6}
  #allocation0 [shape = 'u32[]', space=smem, size = 0x4, offset = 0x4, fixed_abs, tag = 'smem constant byte address 0x4 - core index']
  #allocation1 [shape = 'u32[144,128]{1,0:T(1,128)}', space=vmem, size = 0x12000, scoped, tag = 'internal scratch']
  %s0 = inlined_call_operand.vmem [shape: f32[128,512], index: 0, kind: input, shape index: {}]
  %s1 = inlined_call_operand.vmem [shape: f32[4,512,64], index: 1, kind: input, shape index: {}]
  %s2 = inlined_call_operand.vmem [shape: f32[1,64], index: 2, kind: input, shape index: {}]
  %s3 = inlined_call_operand.vmem [shape: f32[128,64], index: 3, kind: output, shape index: {}]
  %s4 = sld [smem:[#allocation0]]
  $region45: #{solarnet_forward.6} parent=0
    _
  %s6 = ssub.s32 1, %s4
  %s7 = scalar_select 0, %s6, %s4
  loop: start=0, step=1, limit=4
  $region2: #{solarnet_forward.6} parent=0 // loop_pre_header
    _
  $region3: #{solarnet_forward.6} parent=0 // loop_header
    %s9 = sphi 0, %s13
    %p10 = scmp.ge.s32.totalorder %s9, 4
    %s19 = sphi 0, %s21
    %s22 = sphi 0, %s19
    %s23 = sphi 0, %s22
    %s39 = sphi 0, %s23
    %s43 = sphi 0, %s43
    %s45 = sphi 0, %s43
    %s46 = sphi 0, %s45
    %s60 = sphi 0, %s46
    %s64 = sphi 0, %s64
    %s66 = sphi 0, %s64
    %s67 = sphi 0, %s66
    %s81 = sphi 0, %s67
    %s87 = sphi 0, %s89
    %s90 = sphi 0, %s87
    %s91 = sphi 0, %s90
    %s107 = sphi 0, %s91
  $region4: #{solarnet_forward.6} parent=0 // loop_header_branch
    %12 = sbr.rel (%p10) target = $region8
  $region5: #{solarnet_forward.6} parent=0 // loop_body
    %s14 = ssub.s32 %s9, 1
    %s15 = ssub.s32 %s9, 2
    %s16 = sadd.s32 %s9, 1
    %s17 = ssub.s32 %s9, %s16
    %p18 = scmp.eq.s32.totalorder %s17, 0
    %s20 = sadd.s32 %s19, 1
    %s21 = scalar_select %p18, %s19, %s20
    %p24 = pneg %p18
    %p25 = scmp.eq.s32.totalorder %s9, 1
    %p26 = por %p24, %p25
    %p27 = scmp.ne.s32.totalorder %s19, %s22
    %p28 = scmp.eq.s32.totalorder %s9, 0
    %p29 = por %p27, %p28
    %p30 = scmp.ne.s32.totalorder %s19, %s22
    %p31 = scmp.eq.s32.totalorder %s14, 1
    %p32 = por %p30, %p31
    %p33 = scmp.ne.s32.totalorder %s22, %s23
    %p34 = scmp.eq.s32.totalorder %s14, 0
    %p35 = por %p33, %p34
    %p36 = scmp.ne.s32.totalorder %s22, %s23
    %p37 = scmp.eq.s32.totalorder %s15, 1
    %p38 = por %p36, %p37
    %p40 = scmp.ne.s32.totalorder %s23, %s39
    %p41 = scmp.eq.s32.totalorder %s15, 0
    %p42 = por %p40, %p41
    %s44 = sadd.s32 %s43, 1
    %p47 = scmp.eq.s32.totalorder %s9, 1
    %p48 = scmp.ne.s32.totalorder %s43, %s45
    %p49 = scmp.eq.s32.totalorder %s9, 0
    %p50 = por %p48, %p49
    %p51 = scmp.ne.s32.totalorder %s43, %s45
    %p52 = scmp.eq.s32.totalorder %s14, 1
    %p53 = por %p51, %p52
    %p54 = scmp.ne.s32.totalorder %s45, %s46
    %p55 = scmp.eq.s32.totalorder %s14, 0
    %p56 = por %p54, %p55
    %p57 = scmp.ne.s32.totalorder %s45, %s46
    %p58 = scmp.eq.s32.totalorder %s15, 1
    %p59 = por %p57, %p58
    %p61 = scmp.ne.s32.totalorder %s46, %s60
    %p62 = scmp.eq.s32.totalorder %s15, 0
    %p63 = por %p61, %p62
    %s65 = sadd.s32 %s64, 1
    %p68 = scmp.eq.s32.totalorder %s9, 1
    %p69 = scmp.ne.s32.totalorder %s64, %s66
    %p70 = scmp.eq.s32.totalorder %s9, 0
    %p71 = por %p69, %p70
    %p72 = scmp.ne.s32.totalorder %s64, %s66
    %p73 = scmp.eq.s32.totalorder %s14, 1
    %p74 = por %p72, %p73
    %p75 = scmp.ne.s32.totalorder %s66, %s67
    %p76 = scmp.eq.s32.totalorder %s14, 0
    %p77 = por %p75, %p76
    %p78 = scmp.ne.s32.totalorder %s66, %s67
    %p79 = scmp.eq.s32.totalorder %s15, 1
    %p80 = por %p78, %p79
    %p82 = scmp.ne.s32.totalorder %s67, %s81
    %p83 = scmp.eq.s32.totalorder %s15, 0
    %p84 = por %p82, %p83
    %s85 = ssub.s32 %s9, %s16
    %p86 = scmp.eq.s32.totalorder %s85, 0
    %s88 = sadd.s32 %s87, 1
    %s89 = scalar_select %p86, %s87, %s88
    %p92 = pneg %p86
    %p93 = scmp.eq.s32.totalorder %s9, 1
    %p94 = por %p92, %p93
    %p95 = scmp.ne.s32.totalorder %s87, %s90
    %p96 = scmp.eq.s32.totalorder %s9, 0
    %p97 = por %p95, %p96
    %p98 = scmp.ne.s32.totalorder %s87, %s90
    %p99 = scmp.eq.s32.totalorder %s14, 1
    %p100 = por %p98, %p99
    %p101 = scmp.ne.s32.totalorder %s90, %s91
    %p102 = scmp.eq.s32.totalorder %s14, 0
    %p103 = por %p101, %p102
    %p104 = scmp.ne.s32.totalorder %s90, %s91
    %p105 = scmp.eq.s32.totalorder %s15, 1
    %p106 = por %p104, %p105
    %p108 = scmp.ne.s32.totalorder %s91, %s107
    %p109 = scmp.eq.s32.totalorder %s15, 0
    %p110 = por %p108, %p109
    %p111 = scmp.le.s32.totalorder 1, %s9
    %p112 = scmp.lt.s32.totalorder %s9, 3
    %p113 = pnand %p111, %p112
    %p114 = pneg %p113
    // Predicated region
    $region9: #{solarnet_forward.6} parent=5 // pred_check
      _
    $region10: #{solarnet_forward.6} parent=5 // pred_check_branch
      %116 = sbr.rel (%p113) target = $region12
    $region11: #{solarnet_forward.6} parent=5 // pred_region
      %s117 = ssub.s32 %s9, 1
      // Predicated region
      $region13: #{solarnet_forward.6} parent=11 // pred_check
        %p118 = pneg %p56
      $region14: #{solarnet_forward.6} parent=11 // pred_check_branch
        %120 = sbr.rel (%p118) target = $region16
      $region15: #{solarnet_forward.6} parent=11 // pred_region
        _
      $region16: #{solarnet_forward.6} parent=11 // pred_fallthru
        _
      // Predicated region
      $region17: #{solarnet_forward.6} parent=11 // pred_check
        %p121 = pneg %p77
      $region18: #{solarnet_forward.6} parent=11 // pred_check_branch
        %123 = sbr.rel (%p121) target = $region20
      $region19: #{solarnet_forward.6} parent=11 // pred_region
        _
      $region20: #{solarnet_forward.6} parent=11 // pred_fallthru
        _
    $region12: #{solarnet_forward.6} parent=5 // pred_fallthru
      _
    %p124 = scmp.lt.s32.totalorder %s9, 2
    // Predicated region
    $region21: #{solarnet_forward.6} parent=5 // pred_check
      %p125 = pneg %p124
    $region22: #{solarnet_forward.6} parent=5 // pred_check_branch
      %127 = sbr.rel (%p125) target = $region24
    $region23: #{solarnet_forward.6} parent=5 // pred_region
      // Predicated region
      $region25: #{solarnet_forward.6} parent=23 // pred_check
        %p128 = pneg %p29
      $region26: #{solarnet_forward.6} parent=23 // pred_check_branch
        %130 = sbr.rel (%p128) target = $region28
      $region27: #{solarnet_forward.6} parent=23 // pred_region
        %s131 = smul.u32 8, %s9
        %p132 = scmp.lt.s32.totalorder %s131, 15
        %s133 = scalar_select %p132, %s131, 15
        %s134 = smul.addr %s133, 4
        %s135 = smul.addr %s134, 8
        %s136 = scalar_lea.vmem %s0, %s135
        %s137 = smul.u32 8, %s9
      $region28: #{solarnet_forward.6} parent=23 // pred_fallthru
        _
    $region24: #{solarnet_forward.6} parent=5 // pred_fallthru
      _
    %p138 = scmp.le.s32.totalorder 1, %s9
    %p139 = scmp.lt.s32.totalorder %s9, 3
    %p140 = pnand %p138, %p139
    %p141 = pneg %p140
    // Predicated region
    $region29: #{solarnet_forward.6} parent=5 // pred_check
      _
    $region30: #{solarnet_forward.6} parent=5 // pred_check_branch
      %143 = sbr.rel (%p140) target = $region32
    $region31: #{solarnet_forward.6} parent=5 // pred_region
      %s144 = ssub.s32 %s9, 1
      %s145 = smul.u32 8, %s14
      %p146 = scmp.lt.s32.totalorder %s145, 15
      %s147 = scalar_select %p146, %s145, 15
      %s148 = smul.addr %s147, 4
      %s149 = smul.addr %s148, 8
      %s150 = scalar_lea.vmem %s0, %s149
      %p151 = pneg %p35
      %p152 = pneg %p32
      %p153 = pneg %p56
      %p154 = pneg %p53
      %p155 = pneg %p77
      %p156 = pneg %p74
      %p157 = pneg %p103
      %p158 = pneg %p100
      %s159 = smul.u32 8, %s14
      %p160 = scmp.lt.s32.totalorder %s159, 15
      %s161 = scalar_select %p160, %s159, 15
      %s162 = smul.addr %s161, 8
      %s163 = scalar_lea.vmem %s3, %s162
      %s164 = smul.u32 8, %s14
      %p165 = scmp.lt.s32.totalorder %s164, 15
      %s166 = scalar_select %p165, %s164, 15
      %s167 = smul.addr %s166, 4
      %s168 = smul.addr %s167, 8
      %s169 = scalar_lea.vmem %s0, %s168
      %s170 = smul.u32 8, %s14
      %s171 = smul.u32 8, %s14
      %p172 = scmp.lt.s32.totalorder %s171, 15
      %s173 = scalar_select %p172, %s171, 15
      %s174 = smul.addr %s173, 8
      %s175 = scalar_lea.vmem %s3, %s174
      %s176 = smul.u32 8, %s14
      %v177 = vld [vmem:[%s169] sm:$0xff]
      %v178 = vld [vmem:[%s169 + $0x8] sm:$0xff]
      %v179 = vld [vmem:[%s169 + $0x10] sm:$0xff]
      %v180 = vld [vmem:[%s169 + $0x18] sm:$0xff]
      %v181 = vld [vmem:[%s169 + $0x20] sm:$0xff]
      %v182 = vld [vmem:[%s169 + $0x28] sm:$0xff]
      %v183 = vld [vmem:[%s169 + $0x30] sm:$0xff]
      %v184 = vld [vmem:[%s169 + $0x38] sm:$0xff]
      %v185 = vld [vmem:[%s169 + $0x40] sm:$0xff]
      %v186 = vld [vmem:[%s169 + $0x48] sm:$0xff]
      %v187 = vld [vmem:[%s169 + $0x50] sm:$0xff]
      %v188 = vld [vmem:[%s169 + $0x58] sm:$0xff]
      %v189 = vld [vmem:[%s169 + $0x60] sm:$0xff]
      %v190 = vld [vmem:[%s169 + $0x68] sm:$0xff]
      %v191 = vld [vmem:[%s169 + $0x70] sm:$0xff]
      %v192 = vld [vmem:[%s169 + $0x78] sm:$0xff]
      %v193 = vld [vmem:[%s169 + $0x80] sm:$0xff]
      %v194 = vld [vmem:[%s169 + $0x88] sm:$0xff]
      %v195 = vld [vmem:[%s169 + $0x90] sm:$0xff]
      %v196 = vld [vmem:[%s169 + $0x98] sm:$0xff]
      %v197 = vld [vmem:[%s169 + $0xa0] sm:$0xff]
      %v198 = vld [vmem:[%s169 + $0xa8] sm:$0xff]
      %v199 = vld [vmem:[%s169 + $0xb0] sm:$0xff]
      %v200 = vld [vmem:[%s169 + $0xb8] sm:$0xff]
      %v201 = vld [vmem:[%s169 + $0xc0] sm:$0xff]
      %v202 = vld [vmem:[%s169 + $0xc8] sm:$0xff]
      %v203 = vld [vmem:[%s169 + $0xd0] sm:$0xff]
      %v204 = vld [vmem:[%s169 + $0xd8] sm:$0xff]
      %v205 = vld [vmem:[%s169 + $0xe0] sm:$0xff]
      %v206 = vld [vmem:[%s169 + $0xe8] sm:$0xff]
      %v207 = vld [vmem:[%s169 + $0xf0] sm:$0xff]
      %v208 = vld [vmem:[%s169 + $0xf8] sm:$0xff]
      %v209 = vld [vmem:[%s1] sm:$0xff]
      %v210 = vld [vmem:[%s1 + $0x8] sm:$0xff]
      %v211 = vld [vmem:[%s1 + $0x10] sm:$0xff]
      %v212 = vld [vmem:[%s1 + $0x18] sm:$0xff]
      %v213 = vld [vmem:[%s1 + $0x20] sm:$0xff]
      %v214 = vld [vmem:[%s1 + $0x28] sm:$0xff]
      %v215 = vld [vmem:[%s1 + $0x30] sm:$0xff]
      %v216 = vld [vmem:[%s1 + $0x38] sm:$0xff]
      %v217 = vld [vmem:[%s1 + $0x40] sm:$0xff]
      %v218 = vld [vmem:[%s1 + $0x48] sm:$0xff]
      %v219 = vld [vmem:[%s1 + $0x50] sm:$0xff]
      %v220 = vld [vmem:[%s1 + $0x58] sm:$0xff]
      %v221 = vld [vmem:[%s1 + $0x60] sm:$0xff]
      %v222 = vld [vmem:[%s1 + $0x68] sm:$0xff]
      %v223 = vld [vmem:[%s1 + $0x70] sm:$0xff]
      %v224 = vld [vmem:[%s1 + $0x78] sm:$0xff]
      %v225 = vld [vmem:[%s1 + $0x80] sm:$0xff]
      %v226 = vld [vmem:[%s1 + $0x88] sm:$0xff]
      %v227 = vld [vmem:[%s1 + $0x90] sm:$0xff]
      %v228 = vld [vmem:[%s1 + $0x98] sm:$0xff]
      %v229 = vld [vmem:[%s1 + $0xa0] sm:$0xff]
      %v230 = vld [vmem:[%s1 + $0xa8] sm:$0xff]
      %v231 = vld [vmem:[%s1 + $0xb0] sm:$0xff]
      %v232 = vld [vmem:[%s1 + $0xb8] sm:$0xff]
      %v233 = vld [vmem:[%s1 + $0xc0] sm:$0xff]
      %v234 = vld [vmem:[%s1 + $0xc8] sm:$0xff]
      %v235 = vld [vmem:[%s1 + $0xd0] sm:$0xff]
      %v236 = vld [vmem:[%s1 + $0xd8] sm:$0xff]
      %v237 = vld [vmem:[%s1 + $0xe0] sm:$0xff]
      %v238 = vld [vmem:[%s1 + $0xe8] sm:$0xff]
      %v239 = vld [vmem:[%s1 + $0xf0] sm:$0xff]
      %v240 = vld [vmem:[%s1 + $0xf8] sm:$0xff]
      %v241 = vld [vmem:[%s1 + $0x100] sm:$0xff]
      %v242 = vld [vmem:[%s1 + $0x108] sm:$0xff]
      %v243 = vld [vmem:[%s1 + $0x110] sm:$0xff]
      %v244 = vld [vmem:[%s1 + $0x118] sm:$0xff]
      %v245 = vld [vmem:[%s1 + $0x120] sm:$0xff]
      %v246 = vld [vmem:[%s1 + $0x128] sm:$0xff]
      %v247 = vld [vmem:[%s1 + $0x130] sm:$0xff]
      %v248 = vld [vmem:[%s1 + $0x138] sm:$0xff]
      %v249 = vld [vmem:[%s1 + $0x140] sm:$0xff]
      %v250 = vld [vmem:[%s1 + $0x148] sm:$0xff]
      %v251 = vld [vmem:[%s1 + $0x150] sm:$0xff]
      %v252 = vld [vmem:[%s1 + $0x158] sm:$0xff]
      %v253 = vld [vmem:[%s1 + $0x160] sm:$0xff]
      %v254 = vld [vmem:[%s1 + $0x168] sm:$0xff]
      %v255 = vld [vmem:[%s1 + $0x170] sm:$0xff]
      %v256 = vld [vmem:[%s1 + $0x178] sm:$0xff]
      %v257 = vld [vmem:[%s1 + $0x180] sm:$0xff]
      %v258 = vld [vmem:[%s1 + $0x188] sm:$0xff]
      %v259 = vld [vmem:[%s1 + $0x190] sm:$0xff]
      %v260 = vld [vmem:[%s1 + $0x198] sm:$0xff]
      %v261 = vld [vmem:[%s1 + $0x1a0] sm:$0xff]
      %v262 = vld [vmem:[%s1 + $0x1a8] sm:$0xff]
      %v263 = vld [vmem:[%s1 + $0x1b0] sm:$0xff]
      %v264 = vld [vmem:[%s1 + $0x1b8] sm:$0xff]
      %v265 = vld [vmem:[%s1 + $0x1c0] sm:$0xff]
      %v266 = vld [vmem:[%s1 + $0x1c8] sm:$0xff]
      %v267 = vld [vmem:[%s1 + $0x1d0] sm:$0xff]
      %v268 = vld [vmem:[%s1 + $0x1d8] sm:$0xff]
      %v269 = vld [vmem:[%s1 + $0x1e0] sm:$0xff]
      %v270 = vld [vmem:[%s1 + $0x1e8] sm:$0xff]
      %v271 = vld [vmem:[%s1 + $0x1f0] sm:$0xff]
      %v272 = vld [vmem:[%s1 + $0x1f8] sm:$0xff]
      %273 = vmatprep.subr.mxu0 0.0
      %274 = vmatpush1.msra.mxu0 %v224
      %275 = vmatprep.subr.mxu0 0.0
      %276 = vmatpush1.msra.mxu0 %v223
      %277 = vmatprep.subr.mxu0 0.0
      %278 = vmatpush1.msra.mxu0 %v222
      %279 = vmatprep.subr.mxu0 0.0
      %280 = vmatpush1.msra.mxu0 %v221
      %281 = vmatprep.subr.mxu0 0.0
      %282 = vmatpush1.msra.mxu0 %v220
      %283 = vmatprep.subr.mxu0 0.0
      %284 = vmatpush1.msra.mxu0 %v219
      %285 = vmatprep.subr.mxu0 0.0
      %286 = vmatpush1.msra.mxu0 %v218
      %287 = vmatprep.subr.mxu0 0.0
      %288 = vmatpush1.msra.mxu0 %v217
      %289 = vmatprep.subr.mxu0 0.0
      %290 = vmatpush1.msra.mxu0 %v216
      %291 = vmatprep.subr.mxu0 0.0
      %292 = vmatpush1.msra.mxu0 %v215
      %293 = vmatprep.subr.mxu0 0.0
      %294 = vmatpush1.msra.mxu0 %v214
      %295 = vmatprep.subr.mxu0 0.0
      %296 = vmatpush1.msra.mxu0 %v213
      %297 = vmatprep.subr.mxu0 0.0
      %298 = vmatpush1.msra.mxu0 %v212
      %299 = vmatprep.subr.mxu0 0.0
      %300 = vmatpush1.msra.mxu0 %v211
      %301 = vmatprep.subr.mxu0 0.0
      %302 = vmatpush1.msra.mxu0 %v210
      %303 = vmatprep.subr.mxu0 0.0
      %304 = vmatpush1.msra.mxu0 %v209
      %305 = vmatprep.subr.mxu0 0.0
      %306 = vmatpush2.msra.mxu0 %v240
      %307 = vmatprep.subr.mxu0 0.0
      %308 = vmatpush2.msra.mxu0 %v239
      %309 = vmatprep.subr.mxu0 0.0
      %310 = vmatpush2.msra.mxu0 %v238
      %311 = vmatprep.subr.mxu0 0.0
      %312 = vmatpush2.msra.mxu0 %v237
      %313 = vmatprep.subr.mxu0 0.0
      %314 = vmatpush2.msra.mxu0 %v236
      %315 = vmatprep.subr.mxu0 0.0
      %316 = vmatpush2.msra.mxu0 %v235
      %317 = vmatprep.subr.mxu0 0.0
      %318 = vmatpush2.msra.mxu0 %v234
      %319 = vmatprep.subr.mxu0 0.0
      %320 = vmatpush2.msra.mxu0 %v233
      %321 = vmatprep.subr.mxu0 0.0
      %322 = vmatpush2.msra.mxu0 %v232
      %323 = vmatprep.subr.mxu0 0.0
      %324 = vmatpush2.msra.mxu0 %v231
      %325 = vmatprep.subr.mxu0 0.0
      %326 = vmatpush2.msra.mxu0 %v230
      %327 = vmatprep.subr.mxu0 0.0
      %328 = vmatpush2.msra.mxu0 %v229
      %329 = vmatprep.subr.mxu0 0.0
      %330 = vmatpush2.msra.mxu0 %v228
      %331 = vmatprep.subr.mxu0 0.0
      %332 = vmatpush2.msra.mxu0 %v227
      %333 = vmatprep.subr.mxu0 0.0
      %334 = vmatpush2.msra.mxu0 %v226
      %335 = vmatprep.subr.mxu0 0.0
      %336 = vmatpush2.msra.mxu0 %v225
      %337 = vmatprep.mubr.f32.mxu0 %v178
      %338 = vmatmul.mubr.f32.gmra.mxu0 %v177
      %v339 = vpop.f32.mrf.mxu0
      %v340 = vadd.f32 0.0, %v339
      %v341 = vpop.f32.mrf.mxu0
      %342 = vmatprep.mubr.f32.mxu0 %v182
      %343 = vmatmul.mubr.f32.gmra.mxu0 %v181
      %v344 = vpop.f32.mrf.mxu0
      %v345 = vadd.f32 0.0, %v344
      %v346 = vpop.f32.mrf.mxu0
      %347 = vmatprep.mubr.f32.mxu0 %v186
      %348 = vmatmul.mubr.f32.gmra.mxu0 %v185
      %v349 = vpop.f32.mrf.mxu0
      %v350 = vadd.f32 0.0, %v349
      %v351 = vpop.f32.mrf.mxu0
      %352 = vmatprep.mubr.f32.mxu0 %v190
      %353 = vmatmul.mubr.f32.gmra.mxu0 %v189
      %v354 = vpop.f32.mrf.mxu0
      %v355 = vadd.f32 0.0, %v354
      %v356 = vpop.f32.mrf.mxu0
      %357 = vmatprep.mubr.f32.mxu0 %v194
      %358 = vmatmul.mubr.f32.gmra.mxu0 %v193
      %v359 = vpop.f32.mrf.mxu0
      %v360 = vadd.f32 0.0, %v359
      %v361 = vpop.f32.mrf.mxu0
      %362 = vmatprep.mubr.f32.mxu0 %v198
      %363 = vmatmul.mubr.f32.gmra.mxu0 %v197
      %v364 = vpop.f32.mrf.mxu0
      %v365 = vadd.f32 0.0, %v364
      %v366 = vpop.f32.mrf.mxu0
      %367 = vmatprep.mubr.f32.mxu0 %v202
      %368 = vmatmul.mubr.f32.gmra.mxu0 %v201
      %v369 = vpop.f32.mrf.mxu0
      %v370 = vadd.f32 0.0, %v369
      %v371 = vpop.f32.mrf.mxu0
      %372 = vmatprep.mubr.f32.mxu0 %v206
      %373 = vmatmul.mubr.f32.gmra.mxu0 %v205
      %v374 = vpop.f32.mrf.mxu0
      %v375 = vadd.f32 0.0, %v374
      %v376 = vpop.f32.mrf.mxu0
      %377 = vdwg.mxu0
      %378 = vmatprep.subr.mxu0 0.0
      %379 = vmatpush1.msra.mxu0 %v256
      %380 = vmatprep.subr.mxu0 0.0
      %381 = vmatpush1.msra.mxu0 %v255
      %382 = vmatprep.subr.mxu0 0.0
      %383 = vmatpush1.msra.mxu0 %v254
      %384 = vmatprep.subr.mxu0 0.0
      %385 = vmatpush1.msra.mxu0 %v253
      %386 = vmatprep.subr.mxu0 0.0
      %387 = vmatpush1.msra.mxu0 %v252
      %388 = vmatprep.subr.mxu0 0.0
      %389 = vmatpush1.msra.mxu0 %v251
      %390 = vmatprep.subr.mxu0 0.0
      %391 = vmatpush1.msra.mxu0 %v250
      %392 = vmatprep.subr.mxu0 0.0
      %393 = vmatpush1.msra.mxu0 %v249
      %394 = vmatprep.subr.mxu0 0.0
      %395 = vmatpush1.msra.mxu0 %v248
      %396 = vmatprep.subr.mxu0 0.0
      %397 = vmatpush1.msra.mxu0 %v247
      %398 = vmatprep.subr.mxu0 0.0
      %399 = vmatpush1.msra.mxu0 %v246
      %400 = vmatprep.subr.mxu0 0.0
      %401 = vmatpush1.msra.mxu0 %v245
      %402 = vmatprep.subr.mxu0 0.0
      %403 = vmatpush1.msra.mxu0 %v244
      %404 = vmatprep.subr.mxu0 0.0
      %405 = vmatpush1.msra.mxu0 %v243
      %406 = vmatprep.subr.mxu0 0.0
      %407 = vmatpush1.msra.mxu0 %v242
      %408 = vmatprep.subr.mxu0 0.0
      %409 = vmatpush1.msra.mxu0 %v241
      %410 = vmatprep.subr.mxu0 0.0
      %411 = vmatpush2.msra.mxu0 %v272
      %412 = vmatprep.subr.mxu0 0.0
      %413 = vmatpush2.msra.mxu0 %v271
      %414 = vmatprep.subr.mxu0 0.0
      %415 = vmatpush2.msra.mxu0 %v270
      %416 = vmatprep.subr.mxu0 0.0
      %417 = vmatpush2.msra.mxu0 %v269
      %418 = vmatprep.subr.mxu0 0.0
      %419 = vmatpush2.msra.mxu0 %v268
      %420 = vmatprep.subr.mxu0 0.0
      %421 = vmatpush2.msra.mxu0 %v267
      %422 = vmatprep.subr.mxu0 0.0
      %423 = vmatpush2.msra.mxu0 %v266
      %424 = vmatprep.subr.mxu0 0.0
      %425 = vmatpush2.msra.mxu0 %v265
      %426 = vmatprep.subr.mxu0 0.0
      %427 = vmatpush2.msra.mxu0 %v264
      %428 = vmatprep.subr.mxu0 0.0
      %429 = vmatpush2.msra.mxu0 %v263
      %430 = vmatprep.subr.mxu0 0.0
      %431 = vmatpush2.msra.mxu0 %v262
      %432 = vmatprep.subr.mxu0 0.0
      %433 = vmatpush2.msra.mxu0 %v261
      %434 = vmatprep.subr.mxu0 0.0
      %435 = vmatpush2.msra.mxu0 %v260
      %436 = vmatprep.subr.mxu0 0.0
      %437 = vmatpush2.msra.mxu0 %v259
      %438 = vmatprep.subr.mxu0 0.0
      %439 = vmatpush2.msra.mxu0 %v258
      %440 = vmatprep.subr.mxu0 0.0
      %441 = vmatpush2.msra.mxu0 %v257
      %442 = vmatprep.mubr.f32.mxu0 %v180
      %443 = vmatmul.mubr.f32.gmra.mxu0 %v179
      %v444 = vpop.f32.mrf.mxu0
      %v445 = vadd.f32 %v340, %v444
      %v446 = vpop.f32.mrf.mxu0
      %447 = vmatprep.mubr.f32.mxu0 %v184
      %448 = vmatmul.mubr.f32.gmra.mxu0 %v183
      %v449 = vpop.f32.mrf.mxu0
      %v450 = vadd.f32 %v345, %v449
      %v451 = vpop.f32.mrf.mxu0
      %452 = vmatprep.mubr.f32.mxu0 %v188
      %453 = vmatmul.mubr.f32.gmra.mxu0 %v187
      %v454 = vpop.f32.mrf.mxu0
      %v455 = vadd.f32 %v350, %v454
      %v456 = vpop.f32.mrf.mxu0
      %457 = vmatprep.mubr.f32.mxu0 %v192
      %458 = vmatmul.mubr.f32.gmra.mxu0 %v191
      %v459 = vpop.f32.mrf.mxu0
      %v460 = vadd.f32 %v355, %v459
      %v461 = vpop.f32.mrf.mxu0
      %462 = vmatprep.mubr.f32.mxu0 %v196
      %463 = vmatmul.mubr.f32.gmra.mxu0 %v195
      %v464 = vpop.f32.mrf.mxu0
      %v465 = vadd.f32 %v360, %v464
      %v466 = vpop.f32.mrf.mxu0
      %467 = vmatprep.mubr.f32.mxu0 %v200
      %468 = vmatmul.mubr.f32.gmra.mxu0 %v199
      %v469 = vpop.f32.mrf.mxu0
      %v470 = vadd.f32 %v365, %v469
      %v471 = vpop.f32.mrf.mxu0
      %472 = vmatprep.mubr.f32.mxu0 %v204
      %473 = vmatmul.mubr.f32.gmra.mxu0 %v203
      %v474 = vpop.f32.mrf.mxu0
      %v475 = vadd.f32 %v370, %v474
      %v476 = vpop.f32.mrf.mxu0
      %477 = vmatprep.mubr.f32.mxu0 %v208
      %478 = vmatmul.mubr.f32.gmra.mxu0 %v207
      %v479 = vpop.f32.mrf.mxu0
      %v480 = vadd.f32 %v375, %v479
      %v481 = vpop.f32.mrf.mxu0
      %482 = vdwg.mxu0
      %s483 = scalar_lea.vmem %s1, 512
      %v484 = vld [vmem:[%s483] sm:$0xff]
      %v485 = vld [vmem:[%s483 + $0x8] sm:$0xff]
      %v486 = vld [vmem:[%s483 + $0x10] sm:$0xff]
      %v487 = vld [vmem:[%s483 + $0x18] sm:$0xff]
      %v488 = vld [vmem:[%s483 + $0x20] sm:$0xff]
      %v489 = vld [vmem:[%s483 + $0x28] sm:$0xff]
      %v490 = vld [vmem:[%s483 + $0x30] sm:$0xff]
      %v491 = vld [vmem:[%s483 + $0x38] sm:$0xff]
      %v492 = vld [vmem:[%s483 + $0x40] sm:$0xff]
      %v493 = vld [vmem:[%s483 + $0x48] sm:$0xff]
      %v494 = vld [vmem:[%s483 + $0x50] sm:$0xff]
      %v495 = vld [vmem:[%s483 + $0x58] sm:$0xff]
      %v496 = vld [vmem:[%s483 + $0x60] sm:$0xff]
      %v497 = vld [vmem:[%s483 + $0x68] sm:$0xff]
      %v498 = vld [vmem:[%s483 + $0x70] sm:$0xff]
      %v499 = vld [vmem:[%s483 + $0x78] sm:$0xff]
      %v500 = vld [vmem:[%s483 + $0x80] sm:$0xff]
      %v501 = vld [vmem:[%s483 + $0x88] sm:$0xff]
      %v502 = vld [vmem:[%s483 + $0x90] sm:$0xff]
      %v503 = vld [vmem:[%s483 + $0x98] sm:$0xff]
      %v504 = vld [vmem:[%s483 + $0xa0] sm:$0xff]
      %v505 = vld [vmem:[%s483 + $0xa8] sm:$0xff]
      %v506 = vld [vmem:[%s483 + $0xb0] sm:$0xff]
      %v507 = vld [vmem:[%s483 + $0xb8] sm:$0xff]
      %v508 = vld [vmem:[%s483 + $0xc0] sm:$0xff]
      %v509 = vld [vmem:[%s483 + $0xc8] sm:$0xff]
      %v510 = vld [vmem:[%s483 + $0xd0] sm:$0xff]
      %v511 = vld [vmem:[%s483 + $0xd8] sm:$0xff]
      %v512 = vld [vmem:[%s483 + $0xe0] sm:$0xff]
      %v513 = vld [vmem:[%s483 + $0xe8] sm:$0xff]
      %v514 = vld [vmem:[%s483 + $0xf0] sm:$0xff]
      %v515 = vld [vmem:[%s483 + $0xf8] sm:$0xff]
      %v516 = vld [vmem:[%s483 + $0x100] sm:$0xff]
      %v517 = vld [vmem:[%s483 + $0x108] sm:$0xff]
      %v518 = vld [vmem:[%s483 + $0x110] sm:$0xff]
      %v519 = vld [vmem:[%s483 + $0x118] sm:$0xff]
      %v520 = vld [vmem:[%s483 + $0x120] sm:$0xff]
      %v521 = vld [vmem:[%s483 + $0x128] sm:$0xff]
      %v522 = vld [vmem:[%s483 + $0x130] sm:$0xff]
      %v523 = vld [vmem:[%s483 + $0x138] sm:$0xff]
      %v524 = vld [vmem:[%s483 + $0x140] sm:$0xff]
      %v525 = vld [vmem:[%s483 + $0x148] sm:$0xff]
      %v526 = vld [vmem:[%s483 + $0x150] sm:$0xff]
      %v527 = vld [vmem:[%s483 + $0x158] sm:$0xff]
      %v528 = vld [vmem:[%s483 + $0x160] sm:$0xff]
      %v529 = vld [vmem:[%s483 + $0x168] sm:$0xff]
      %v530 = vld [vmem:[%s483 + $0x170] sm:$0xff]
      %v531 = vld [vmem:[%s483 + $0x178] sm:$0xff]
      %v532 = vld [vmem:[%s483 + $0x180] sm:$0xff]
      %v533 = vld [vmem:[%s483 + $0x188] sm:$0xff]
      %v534 = vld [vmem:[%s483 + $0x190] sm:$0xff]
      %v535 = vld [vmem:[%s483 + $0x198] sm:$0xff]
      %v536 = vld [vmem:[%s483 + $0x1a0] sm:$0xff]
      %v537 = vld [vmem:[%s483 + $0x1a8] sm:$0xff]
      %v538 = vld [vmem:[%s483 + $0x1b0] sm:$0xff]
      %v539 = vld [vmem:[%s483 + $0x1b8] sm:$0xff]
      %v540 = vld [vmem:[%s483 + $0x1c0] sm:$0xff]
      %v541 = vld [vmem:[%s483 + $0x1c8] sm:$0xff]
      %v542 = vld [vmem:[%s483 + $0x1d0] sm:$0xff]
      %v543 = vld [vmem:[%s483 + $0x1d8] sm:$0xff]
      %v544 = vld [vmem:[%s483 + $0x1e0] sm:$0xff]
      %v545 = vld [vmem:[%s483 + $0x1e8] sm:$0xff]
      %v546 = vld [vmem:[%s483 + $0x1f0] sm:$0xff]
      %v547 = vld [vmem:[%s483 + $0x1f8] sm:$0xff]
      %548 = vmatprep.subr.mxu0 0.0
      %549 = vmatpush1.msra.mxu0 %v499
      %550 = vmatprep.subr.mxu0 0.0
      %551 = vmatpush1.msra.mxu0 %v498
      %552 = vmatprep.subr.mxu0 0.0
      %553 = vmatpush1.msra.mxu0 %v497
      %554 = vmatprep.subr.mxu0 0.0
      %555 = vmatpush1.msra.mxu0 %v496
      %556 = vmatprep.subr.mxu0 0.0
      %557 = vmatpush1.msra.mxu0 %v495
      %558 = vmatprep.subr.mxu0 0.0
      %559 = vmatpush1.msra.mxu0 %v494
      %560 = vmatprep.subr.mxu0 0.0
      %561 = vmatpush1.msra.mxu0 %v493
      %562 = vmatprep.subr.mxu0 0.0
      %563 = vmatpush1.msra.mxu0 %v492
      %564 = vmatprep.subr.mxu0 0.0
      %565 = vmatpush1.msra.mxu0 %v491
      %566 = vmatprep.subr.mxu0 0.0
      %567 = vmatpush1.msra.mxu0 %v490
      %568 = vmatprep.subr.mxu0 0.0
      %569 = vmatpush1.msra.mxu0 %v489
      %570 = vmatprep.subr.mxu0 0.0
      %571 = vmatpush1.msra.mxu0 %v488
      %572 = vmatprep.subr.mxu0 0.0
      %573 = vmatpush1.msra.mxu0 %v487
      %574 = vmatprep.subr.mxu0 0.0
      %575 = vmatpush1.msra.mxu0 %v486
      %576 = vmatprep.subr.mxu0 0.0
      %577 = vmatpush1.msra.mxu0 %v485
      %578 = vmatprep.subr.mxu0 0.0
      %579 = vmatpush1.msra.mxu0 %v484
      %580 = vmatprep.subr.mxu0 0.0
      %581 = vmatpush2.msra.mxu0 %v515
      %582 = vmatprep.subr.mxu0 0.0
      %583 = vmatpush2.msra.mxu0 %v514
      %584 = vmatprep.subr.mxu0 0.0
      %585 = vmatpush2.msra.mxu0 %v513
      %586 = vmatprep.subr.mxu0 0.0
      %587 = vmatpush2.msra.mxu0 %v512
      %588 = vmatprep.subr.mxu0 0.0
      %589 = vmatpush2.msra.mxu0 %v511
      %590 = vmatprep.subr.mxu0 0.0
      %591 = vmatpush2.msra.mxu0 %v510
      %592 = vmatprep.subr.mxu0 0.0
      %593 = vmatpush2.msra.mxu0 %v509
      %594 = vmatprep.subr.mxu0 0.0
      %595 = vmatpush2.msra.mxu0 %v508
      %596 = vmatprep.subr.mxu0 0.0
      %597 = vmatpush2.msra.mxu0 %v507
      %598 = vmatprep.subr.mxu0 0.0
      %599 = vmatpush2.msra.mxu0 %v506
      %600 = vmatprep.subr.mxu0 0.0
      %601 = vmatpush2.msra.mxu0 %v505
      %602 = vmatprep.subr.mxu0 0.0
      %603 = vmatpush2.msra.mxu0 %v504
      %604 = vmatprep.subr.mxu0 0.0
      %605 = vmatpush2.msra.mxu0 %v503
      %606 = vmatprep.subr.mxu0 0.0
      %607 = vmatpush2.msra.mxu0 %v502
      %608 = vmatprep.subr.mxu0 0.0
      %609 = vmatpush2.msra.mxu0 %v501
      %610 = vmatprep.subr.mxu0 0.0
      %611 = vmatpush2.msra.mxu0 %v500
      %612 = vmatprep.mubr.f32.mxu0 %v178
      %613 = vmatmul.mubr.f32.gmra.mxu0 %v177
      %v614 = vpop.f32.mrf.mxu0
      %v615 = vadd.f32 0.0, %v614
      %v616 = vpop.f32.mrf.mxu0
      %617 = vmatprep.mubr.f32.mxu0 %v182
      %618 = vmatmul.mubr.f32.gmra.mxu0 %v181
      %v619 = vpop.f32.mrf.mxu0
      %v620 = vadd.f32 0.0, %v619
      %v621 = vpop.f32.mrf.mxu0
      %622 = vmatprep.mubr.f32.mxu0 %v186
      %623 = vmatmul.mubr.f32.gmra.mxu0 %v185
      %v624 = vpop.f32.mrf.mxu0
      %v625 = vadd.f32 0.0, %v624
      %v626 = vpop.f32.mrf.mxu0
      %627 = vmatprep.mubr.f32.mxu0 %v190
      %628 = vmatmul.mubr.f32.gmra.mxu0 %v189
      %v629 = vpop.f32.mrf.mxu0
      %v630 = vadd.f32 0.0, %v629
      %v631 = vpop.f32.mrf.mxu0
      %632 = vmatprep.mubr.f32.mxu0 %v194
      %633 = vmatmul.mubr.f32.gmra.mxu0 %v193
      %v634 = vpop.f32.mrf.mxu0
      %v635 = vadd.f32 0.0, %v634
      %v636 = vpop.f32.mrf.mxu0
      %637 = vmatprep.mubr.f32.mxu0 %v198
      %638 = vmatmul.mubr.f32.gmra.mxu0 %v197
      %v639 = vpop.f32.mrf.mxu0
      %v640 = vadd.f32 0.0, %v639
      %v641 = vpop.f32.mrf.mxu0
      %642 = vmatprep.mubr.f32.mxu0 %v202
      %643 = vmatmul.mubr.f32.gmra.mxu0 %v201
      %v644 = vpop.f32.mrf.mxu0
      %v645 = vadd.f32 0.0, %v644
      %v646 = vpop.f32.mrf.mxu0
      %647 = vmatprep.mubr.f32.mxu0 %v206
      %648 = vmatmul.mubr.f32.gmra.mxu0 %v205
      %v649 = vpop.f32.mrf.mxu0
      %v650 = vadd.f32 0.0, %v649
      %v651 = vpop.f32.mrf.mxu0
      %652 = vdwg.mxu0
      %653 = vmatprep.subr.mxu0 0.0
      %654 = vmatpush1.msra.mxu0 %v531
      %655 = vmatprep.subr.mxu0 0.0
      %656 = vmatpush1.msra.mxu0 %v530
      %657 = vmatprep.subr.mxu0 0.0
      %658 = vmatpush1.msra.mxu0 %v529
      %659 = vmatprep.subr.mxu0 0.0
      %660 = vmatpush1.msra.mxu0 %v528
      %661 = vmatprep.subr.mxu0 0.0
      %662 = vmatpush1.msra.mxu0 %v527
      %663 = vmatprep.subr.mxu0 0.0
      %664 = vmatpush1.msra.mxu0 %v526
      %665 = vmatprep.subr.mxu0 0.0
      %666 = vmatpush1.msra.mxu0 %v525
      %667 = vmatprep.subr.mxu0 0.0
      %668 = vmatpush1.msra.mxu0 %v524
      %669 = vmatprep.subr.mxu0 0.0
      %670 = vmatpush1.msra.mxu0 %v523
      %671 = vmatprep.subr.mxu0 0.0
      %672 = vmatpush1.msra.mxu0 %v522
      %673 = vmatprep.subr.mxu0 0.0
      %674 = vmatpush1.msra.mxu0 %v521
      %675 = vmatprep.subr.mxu0 0.0
      %676 = vmatpush1.msra.mxu0 %v520
      %677 = vmatprep.subr.mxu0 0.0
      %678 = vmatpush1.msra.mxu0 %v519
      %679 = vmatprep.subr.mxu0 0.0
      %680 = vmatpush1.msra.mxu0 %v518
      %681 = vmatprep.subr.mxu0 0.0
      %682 = vmatpush1.msra.mxu0 %v517
      %683 = vmatprep.subr.mxu0 0.0
      %684 = vmatpush1.msra.mxu0 %v516
      %685 = vmatprep.subr.mxu0 0.0
      %686 = vmatpush2.msra.mxu0 %v547
      %687 = vmatprep.subr.mxu0 0.0
      %688 = vmatpush2.msra.mxu0 %v546
      %689 = vmatprep.subr.mxu0 0.0
      %690 = vmatpush2.msra.mxu0 %v545
      %691 = vmatprep.subr.mxu0 0.0
      %692 = vmatpush2.msra.mxu0 %v544
      %693 = vmatprep.subr.mxu0 0.0
      %694 = vmatpush2.msra.mxu0 %v543
      %695 = vmatprep.subr.mxu0 0.0
      %696 = vmatpush2.msra.mxu0 %v542
      %697 = vmatprep.subr.mxu0 0.0
      %698 = vmatpush2.msra.mxu0 %v541
      %699 = vmatprep.subr.mxu0 0.0
      %700 = vmatpush2.msra.mxu0 %v540
      %701 = vmatprep.subr.mxu0 0.0
      %702 = vmatpush2.msra.mxu0 %v539
      %703 = vmatprep.subr.mxu0 0.0
      %704 = vmatpush2.msra.mxu0 %v538
      %705 = vmatprep.subr.mxu0 0.0
      %706 = vmatpush2.msra.mxu0 %v537
      %707 = vmatprep.subr.mxu0 0.0
      %708 = vmatpush2.msra.mxu0 %v536
      %709 = vmatprep.subr.mxu0 0.0
      %710 = vmatpush2.msra.mxu0 %v535
      %711 = vmatprep.subr.mxu0 0.0
      %712 = vmatpush2.msra.mxu0 %v534
      %713 = vmatprep.subr.mxu0 0.0
      %714 = vmatpush2.msra.mxu0 %v533
      %715 = vmatprep.subr.mxu0 0.0
      %716 = vmatpush2.msra.mxu0 %v532
      %717 = vmatprep.mubr.f32.mxu0 %v180
      %718 = vmatmul.mubr.f32.gmra.mxu0 %v179
      %v719 = vpop.f32.mrf.mxu0
      %v720 = vadd.f32 %v615, %v719
      %v721 = vpop.f32.mrf.mxu0
      %722 = vmatprep.mubr.f32.mxu0 %v184
      %723 = vmatmul.mubr.f32.gmra.mxu0 %v183
      %v724 = vpop.f32.mrf.mxu0
      %v725 = vadd.f32 %v620, %v724
      %v726 = vpop.f32.mrf.mxu0
      %727 = vmatprep.mubr.f32.mxu0 %v188
      %728 = vmatmul.mubr.f32.gmra.mxu0 %v187
      %v729 = vpop.f32.mrf.mxu0
      %v730 = vadd.f32 %v625, %v729
      %v731 = vpop.f32.mrf.mxu0
      %732 = vmatprep.mubr.f32.mxu0 %v192
      %733 = vmatmul.mubr.f32.gmra.mxu0 %v191
      %v734 = vpop.f32.mrf.mxu0
      %v735 = vadd.f32 %v630, %v734
      %v736 = vpop.f32.mrf.mxu0
      %737 = vmatprep.mubr.f32.mxu0 %v196
      %738 = vmatmul.mubr.f32.gmra.mxu0 %v195
      %v739 = vpop.f32.mrf.mxu0
      %v740 = vadd.f32 %v635, %v739
      %v741 = vpop.f32.mrf.mxu0
      %742 = vmatprep.mubr.f32.mxu0 %v200
      %743 = vmatmul.mubr.f32.gmra.mxu0 %v199
      %v744 = vpop.f32.mrf.mxu0
      %v745 = vadd.f32 %v640, %v744
      %v746 = vpop.f32.mrf.mxu0
      %747 = vmatprep.mubr.f32.mxu0 %v204
      %748 = vmatmul.mubr.f32.gmra.mxu0 %v203
      %v749 = vpop.f32.mrf.mxu0
      %v750 = vadd.f32 %v645, %v749
      %v751 = vpop.f32.mrf.mxu0
      %752 = vmatprep.mubr.f32.mxu0 %v208
      %753 = vmatmul.mubr.f32.gmra.mxu0 %v207
      %v754 = vpop.f32.mrf.mxu0
      %v755 = vadd.f32 %v650, %v754
      %v756 = vpop.f32.mrf.mxu0
      %757 = vdwg.mxu0
      %v758 = vmax.f32 %v445, %v720
      %v759 = vmax.f32 %v450, %v725
      %v760 = vmax.f32 %v455, %v730
      %v761 = vmax.f32 %v460, %v735
      %v762 = vmax.f32 %v465, %v740
      %v763 = vmax.f32 %v470, %v745
      %v764 = vmax.f32 %v475, %v750
      %v765 = vmax.f32 %v480, %v755
      %s766 = scalar_lea.vmem %s1, 1024
      %v767 = vld [vmem:[%s766] sm:$0xff]
      %v768 = vld [vmem:[%s766 + $0x8] sm:$0xff]
      %v769 = vld [vmem:[%s766 + $0x10] sm:$0xff]
      %v770 = vld [vmem:[%s766 + $0x18] sm:$0xff]
      %v771 = vld [vmem:[%s766 + $0x20] sm:$0xff]
      %v772 = vld [vmem:[%s766 + $0x28] sm:$0xff]
      %v773 = vld [vmem:[%s766 + $0x30] sm:$0xff]
      %v774 = vld [vmem:[%s766 + $0x38] sm:$0xff]
      %v775 = vld [vmem:[%s766 + $0x40] sm:$0xff]
      %v776 = vld [vmem:[%s766 + $0x48] sm:$0xff]
      %v777 = vld [vmem:[%s766 + $0x50] sm:$0xff]
      %v778 = vld [vmem:[%s766 + $0x58] sm:$0xff]
      %v779 = vld [vmem:[%s766 + $0x60] sm:$0xff]
      %v780 = vld [vmem:[%s766 + $0x68] sm:$0xff]
      %v781 = vld [vmem:[%s766 + $0x70] sm:$0xff]
      %v782 = vld [vmem:[%s766 + $0x78] sm:$0xff]
      %v783 = vld [vmem:[%s766 + $0x80] sm:$0xff]
      %v784 = vld [vmem:[%s766 + $0x88] sm:$0xff]
      %v785 = vld [vmem:[%s766 + $0x90] sm:$0xff]
      %v786 = vld [vmem:[%s766 + $0x98] sm:$0xff]
      %v787 = vld [vmem:[%s766 + $0xa0] sm:$0xff]
      %v788 = vld [vmem:[%s766 + $0xa8] sm:$0xff]
      %v789 = vld [vmem:[%s766 + $0xb0] sm:$0xff]
      %v790 = vld [vmem:[%s766 + $0xb8] sm:$0xff]
      %v791 = vld [vmem:[%s766 + $0xc0] sm:$0xff]
      %v792 = vld [vmem:[%s766 + $0xc8] sm:$0xff]
      %v793 = vld [vmem:[%s766 + $0xd0] sm:$0xff]
      %v794 = vld [vmem:[%s766 + $0xd8] sm:$0xff]
      %v795 = vld [vmem:[%s766 + $0xe0] sm:$0xff]
      %v796 = vld [vmem:[%s766 + $0xe8] sm:$0xff]
      %v797 = vld [vmem:[%s766 + $0xf0] sm:$0xff]
      %v798 = vld [vmem:[%s766 + $0xf8] sm:$0xff]
      %v799 = vld [vmem:[%s766 + $0x100] sm:$0xff]
      %v800 = vld [vmem:[%s766 + $0x108] sm:$0xff]
      %v801 = vld [vmem:[%s766 + $0x110] sm:$0xff]
      %v802 = vld [vmem:[%s766 + $0x118] sm:$0xff]
      %v803 = vld [vmem:[%s766 + $0x120] sm:$0xff]
      %v804 = vld [vmem:[%s766 + $0x128] sm:$0xff]
      %v805 = vld [vmem:[%s766 + $0x130] sm:$0xff]
      %v806 = vld [vmem:[%s766 + $0x138] sm:$0xff]
      %v807 = vld [vmem:[%s766 + $0x140] sm:$0xff]
      %v808 = vld [vmem:[%s766 + $0x148] sm:$0xff]
      %v809 = vld [vmem:[%s766 + $0x150] sm:$0xff]
      %v810 = vld [vmem:[%s766 + $0x158] sm:$0xff]
      %v811 = vld [vmem:[%s766 + $0x160] sm:$0xff]
      %v812 = vld [vmem:[%s766 + $0x168] sm:$0xff]
      %v813 = vld [vmem:[%s766 + $0x170] sm:$0xff]
      %v814 = vld [vmem:[%s766 + $0x178] sm:$0xff]
      %v815 = vld [vmem:[%s766 + $0x180] sm:$0xff]
      %v816 = vld [vmem:[%s766 + $0x188] sm:$0xff]
      %v817 = vld [vmem:[%s766 + $0x190] sm:$0xff]
      %v818 = vld [vmem:[%s766 + $0x198] sm:$0xff]
      %v819 = vld [vmem:[%s766 + $0x1a0] sm:$0xff]
      %v820 = vld [vmem:[%s766 + $0x1a8] sm:$0xff]
      %v821 = vld [vmem:[%s766 + $0x1b0] sm:$0xff]
      %v822 = vld [vmem:[%s766 + $0x1b8] sm:$0xff]
      %v823 = vld [vmem:[%s766 + $0x1c0] sm:$0xff]
      %v824 = vld [vmem:[%s766 + $0x1c8] sm:$0xff]
      %v825 = vld [vmem:[%s766 + $0x1d0] sm:$0xff]
      %v826 = vld [vmem:[%s766 + $0x1d8] sm:$0xff]
      %v827 = vld [vmem:[%s766 + $0x1e0] sm:$0xff]
      %v828 = vld [vmem:[%s766 + $0x1e8] sm:$0xff]
      %v829 = vld [vmem:[%s766 + $0x1f0] sm:$0xff]
      %v830 = vld [vmem:[%s766 + $0x1f8] sm:$0xff]
      %831 = vmatprep.subr.mxu0 0.0
      %832 = vmatpush1.msra.mxu0 %v782
      %833 = vmatprep.subr.mxu0 0.0
      %834 = vmatpush1.msra.mxu0 %v781
      %835 = vmatprep.subr.mxu0 0.0
      %836 = vmatpush1.msra.mxu0 %v780
      %837 = vmatprep.subr.mxu0 0.0
      %838 = vmatpush1.msra.mxu0 %v779
      %839 = vmatprep.subr.mxu0 0.0
      %840 = vmatpush1.msra.mxu0 %v778
      %841 = vmatprep.subr.mxu0 0.0
      %842 = vmatpush1.msra.mxu0 %v777
      %843 = vmatprep.subr.mxu0 0.0
      %844 = vmatpush1.msra.mxu0 %v776
      %845 = vmatprep.subr.mxu0 0.0
      %846 = vmatpush1.msra.mxu0 %v775
      %847 = vmatprep.subr.mxu0 0.0
      %848 = vmatpush1.msra.mxu0 %v774
      %849 = vmatprep.subr.mxu0 0.0
      %850 = vmatpush1.msra.mxu0 %v773
      %851 = vmatprep.subr.mxu0 0.0
      %852 = vmatpush1.msra.mxu0 %v772
      %853 = vmatprep.subr.mxu0 0.0
      %854 = vmatpush1.msra.mxu0 %v771
      %855 = vmatprep.subr.mxu0 0.0
      %856 = vmatpush1.msra.mxu0 %v770
      %857 = vmatprep.subr.mxu0 0.0
      %858 = vmatpush1.msra.mxu0 %v769
      %859 = vmatprep.subr.mxu0 0.0
      %860 = vmatpush1.msra.mxu0 %v768
      %861 = vmatprep.subr.mxu0 0.0
      %862 = vmatpush1.msra.mxu0 %v767
      %863 = vmatprep.subr.mxu0 0.0
      %864 = vmatpush2.msra.mxu0 %v798
      %865 = vmatprep.subr.mxu0 0.0
      %866 = vmatpush2.msra.mxu0 %v797
      %867 = vmatprep.subr.mxu0 0.0
      %868 = vmatpush2.msra.mxu0 %v796
      %869 = vmatprep.subr.mxu0 0.0
      %870 = vmatpush2.msra.mxu0 %v795
      %871 = vmatprep.subr.mxu0 0.0
      %872 = vmatpush2.msra.mxu0 %v794
      %873 = vmatprep.subr.mxu0 0.0
      %874 = vmatpush2.msra.mxu0 %v793
      %875 = vmatprep.subr.mxu0 0.0
      %876 = vmatpush2.msra.mxu0 %v792
      %877 = vmatprep.subr.mxu0 0.0
      %878 = vmatpush2.msra.mxu0 %v791
      %879 = vmatprep.subr.mxu0 0.0
      %880 = vmatpush2.msra.mxu0 %v790
      %881 = vmatprep.subr.mxu0 0.0
      %882 = vmatpush2.msra.mxu0 %v789
      %883 = vmatprep.subr.mxu0 0.0
      %884 = vmatpush2.msra.mxu0 %v788
      %885 = vmatprep.subr.mxu0 0.0
      %886 = vmatpush2.msra.mxu0 %v787
      %887 = vmatprep.subr.mxu0 0.0
      %888 = vmatpush2.msra.mxu0 %v786
      %889 = vmatprep.subr.mxu0 0.0
      %890 = vmatpush2.msra.mxu0 %v785
      %891 = vmatprep.subr.mxu0 0.0
      %892 = vmatpush2.msra.mxu0 %v784
      %893 = vmatprep.subr.mxu0 0.0
      %894 = vmatpush2.msra.mxu0 %v783
      %895 = vmatprep.mubr.f32.mxu0 %v178
      %896 = vmatmul.mubr.f32.gmra.mxu0 %v177
      %v897 = vpop.f32.mrf.mxu0
      %v898 = vadd.f32 0.0, %v897
      %v899 = vpop.f32.mrf.mxu0
      %900 = vmatprep.mubr.f32.mxu0 %v182
      %901 = vmatmul.mubr.f32.gmra.mxu0 %v181
      %v902 = vpop.f32.mrf.mxu0
      %v903 = vadd.f32 0.0, %v902
      %v904 = vpop.f32.mrf.mxu0
      %905 = vmatprep.mubr.f32.mxu0 %v186
      %906 = vmatmul.mubr.f32.gmra.mxu0 %v185
      %v907 = vpop.f32.mrf.mxu0
      %v908 = vadd.f32 0.0, %v907
      %v909 = vpop.f32.mrf.mxu0
      %910 = vmatprep.mubr.f32.mxu0 %v190
      %911 = vmatmul.mubr.f32.gmra.mxu0 %v189
      %v912 = vpop.f32.mrf.mxu0
      %v913 = vadd.f32 0.0, %v912
      %v914 = vpop.f32.mrf.mxu0
      %915 = vmatprep.mubr.f32.mxu0 %v194
      %916 = vmatmul.mubr.f32.gmra.mxu0 %v193
      %v917 = vpop.f32.mrf.mxu0
      %v918 = vadd.f32 0.0, %v917
      %v919 = vpop.f32.mrf.mxu0
      %920 = vmatprep.mubr.f32.mxu0 %v198
      %921 = vmatmul.mubr.f32.gmra.mxu0 %v197
      %v922 = vpop.f32.mrf.mxu0
      %v923 = vadd.f32 0.0, %v922
      %v924 = vpop.f32.mrf.mxu0
      %925 = vmatprep.mubr.f32.mxu0 %v202
      %926 = vmatmul.mubr.f32.gmra.mxu0 %v201
      %v927 = vpop.f32.mrf.mxu0
      %v928 = vadd.f32 0.0, %v927
      %v929 = vpop.f32.mrf.mxu0
      %930 = vmatprep.mubr.f32.mxu0 %v206
      %931 = vmatmul.mubr.f32.gmra.mxu0 %v205
      %v932 = vpop.f32.mrf.mxu0
      %v933 = vadd.f32 0.0, %v932
      %v934 = vpop.f32.mrf.mxu0
      %935 = vdwg.mxu0
      %936 = vmatprep.subr.mxu0 0.0
      %937 = vmatpush1.msra.mxu0 %v814
      %938 = vmatprep.subr.mxu0 0.0
      %939 = vmatpush1.msra.mxu0 %v813
      %940 = vmatprep.subr.mxu0 0.0
      %941 = vmatpush1.msra.mxu0 %v812
      %942 = vmatprep.subr.mxu0 0.0
      %943 = vmatpush1.msra.mxu0 %v811
      %944 = vmatprep.subr.mxu0 0.0
      %945 = vmatpush1.msra.mxu0 %v810
      %946 = vmatprep.subr.mxu0 0.0
      %947 = vmatpush1.msra.mxu0 %v809
      %948 = vmatprep.subr.mxu0 0.0
      %949 = vmatpush1.msra.mxu0 %v808
      %950 = vmatprep.subr.mxu0 0.0
      %951 = vmatpush1.msra.mxu0 %v807
      %952 = vmatprep.subr.mxu0 0.0
      %953 = vmatpush1.msra.mxu0 %v806
      %954 = vmatprep.subr.mxu0 0.0
      %955 = vmatpush1.msra.mxu0 %v805
      %956 = vmatprep.subr.mxu0 0.0
      %957 = vmatpush1.msra.mxu0 %v804
      %958 = vmatprep.subr.mxu0 0.0
      %959 = vmatpush1.msra.mxu0 %v803
      %960 = vmatprep.subr.mxu0 0.0
      %961 = vmatpush1.msra.mxu0 %v802
      %962 = vmatprep.subr.mxu0 0.0
      %963 = vmatpush1.msra.mxu0 %v801
      %964 = vmatprep.subr.mxu0 0.0
      %965 = vmatpush1.msra.mxu0 %v800
      %966 = vmatprep.subr.mxu0 0.0
      %967 = vmatpush1.msra.mxu0 %v799
      %968 = vmatprep.subr.mxu0 0.0
      %969 = vmatpush2.msra.mxu0 %v830
      %970 = vmatprep.subr.mxu0 0.0
      %971 = vmatpush2.msra.mxu0 %v829
      %972 = vmatprep.subr.mxu0 0.0
      %973 = vmatpush2.msra.mxu0 %v828
      %974 = vmatprep.subr.mxu0 0.0
      %975 = vmatpush2.msra.mxu0 %v827
      %976 = vmatprep.subr.mxu0 0.0
      %977 = vmatpush2.msra.mxu0 %v826
      %978 = vmatprep.subr.mxu0 0.0
      %979 = vmatpush2.msra.mxu0 %v825
      %980 = vmatprep.subr.mxu0 0.0
      %981 = vmatpush2.msra.mxu0 %v824
      %982 = vmatprep.subr.mxu0 0.0
      %983 = vmatpush2.msra.mxu0 %v823
      %984 = vmatprep.subr.mxu0 0.0
      %985 = vmatpush2.msra.mxu0 %v822
      %986 = vmatprep.subr.mxu0 0.0
      %987 = vmatpush2.msra.mxu0 %v821
      %988 = vmatprep.subr.mxu0 0.0
      %989 = vmatpush2.msra.mxu0 %v820
      %990 = vmatprep.subr.mxu0 0.0
      %991 = vmatpush2.msra.mxu0 %v819
      %992 = vmatprep.subr.mxu0 0.0
      %993 = vmatpush2.msra.mxu0 %v818
      %994 = vmatprep.subr.mxu0 0.0
      %995 = vmatpush2.msra.mxu0 %v817
      %996 = vmatprep.subr.mxu0 0.0
      %997 = vmatpush2.msra.mxu0 %v816
      %998 = vmatprep.subr.mxu0 0.0
      %999 = vmatpush2.msra.mxu0 %v815
      %1000 = vmatprep.mubr.f32.mxu0 %v180
      %1001 = vmatmul.mubr.f32.gmra.mxu0 %v179
      %v1002 = vpop.f32.mrf.mxu0
      %v1003 = vadd.f32 %v898, %v1002
      %v1004 = vpop.f32.mrf.mxu0
      %1005 = vmatprep.mubr.f32.mxu0 %v184
      %1006 = vmatmul.mubr.f32.gmra.mxu0 %v183
      %v1007 = vpop.f32.mrf.mxu0
      %v1008 = vadd.f32 %v903, %v1007
      %v1009 = vpop.f32.mrf.mxu0
      %1010 = vmatprep.mubr.f32.mxu0 %v188
      %1011 = vmatmul.mubr.f32.gmra.mxu0 %v187
      %v1012 = vpop.f32.mrf.mxu0
      %v1013 = vadd.f32 %v908, %v1012
      %v1014 = vpop.f32.mrf.mxu0
      %1015 = vmatprep.mubr.f32.mxu0 %v192
      %1016 = vmatmul.mubr.f32.gmra.mxu0 %v191
      %v1017 = vpop.f32.mrf.mxu0
      %v1018 = vadd.f32 %v913, %v1017
      %v1019 = vpop.f32.mrf.mxu0
      %1020 = vmatprep.mubr.f32.mxu0 %v196
      %1021 = vmatmul.mubr.f32.gmra.mxu0 %v195
      %v1022 = vpop.f32.mrf.mxu0
      %v1023 = vadd.f32 %v918, %v1022
      %v1024 = vpop.f32.mrf.mxu0
      %1025 = vmatprep.mubr.f32.mxu0 %v200
      %1026 = vmatmul.mubr.f32.gmra.mxu0 %v199
      %v1027 = vpop.f32.mrf.mxu0
      %v1028 = vadd.f32 %v923, %v1027
      %v1029 = vpop.f32.mrf.mxu0
      %1030 = vmatprep.mubr.f32.mxu0 %v204
      %1031 = vmatmul.mubr.f32.gmra.mxu0 %v203
      %v1032 = vpop.f32.mrf.mxu0
      %v1033 = vadd.f32 %v928, %v1032
      %v1034 = vpop.f32.mrf.mxu0
      %1035 = vmatprep.mubr.f32.mxu0 %v208
      %1036 = vmatmul.mubr.f32.gmra.mxu0 %v207
      %v1037 = vpop.f32.mrf.mxu0
      %v1038 = vadd.f32 %v933, %v1037
      %v1039 = vpop.f32.mrf.mxu0
      %1040 = vdwg.mxu0
      %v1041 = vmax.f32 %v758, %v1003
      %v1042 = vmax.f32 %v759, %v1008
      %v1043 = vmax.f32 %v760, %v1013
      %v1044 = vmax.f32 %v761, %v1018
      %v1045 = vmax.f32 %v762, %v1023
      %v1046 = vmax.f32 %v763, %v1028
      %v1047 = vmax.f32 %v764, %v1033
      %v1048 = vmax.f32 %v765, %v1038
      %s1049 = scalar_lea.vmem %s1, 1536
      %v1050 = vld [vmem:[%s1049] sm:$0xff]
      %v1051 = vld [vmem:[%s1049 + $0x8] sm:$0xff]
      %v1052 = vld [vmem:[%s1049 + $0x10] sm:$0xff]
      %v1053 = vld [vmem:[%s1049 + $0x18] sm:$0xff]
      %v1054 = vld [vmem:[%s1049 + $0x20] sm:$0xff]
      %v1055 = vld [vmem:[%s1049 + $0x28] sm:$0xff]
      %v1056 = vld [vmem:[%s1049 + $0x30] sm:$0xff]
      %v1057 = vld [vmem:[%s1049 + $0x38] sm:$0xff]
      %v1058 = vld [vmem:[%s1049 + $0x40] sm:$0xff]
      %v1059 = vld [vmem:[%s1049 + $0x48] sm:$0xff]
      %v1060 = vld [vmem:[%s1049 + $0x50] sm:$0xff]
      %v1061 = vld [vmem:[%s1049 + $0x58] sm:$0xff]
      %v1062 = vld [vmem:[%s1049 + $0x60] sm:$0xff]
      %v1063 = vld [vmem:[%s1049 + $0x68] sm:$0xff]
      %v1064 = vld [vmem:[%s1049 + $0x70] sm:$0xff]
      %v1065 = vld [vmem:[%s1049 + $0x78] sm:$0xff]
      %v1066 = vld [vmem:[%s1049 + $0x80] sm:$0xff]
      %v1067 = vld [vmem:[%s1049 + $0x88] sm:$0xff]
      %v1068 = vld [vmem:[%s1049 + $0x90] sm:$0xff]
      %v1069 = vld [vmem:[%s1049 + $0x98] sm:$0xff]
      %v1070 = vld [vmem:[%s1049 + $0xa0] sm:$0xff]
      %v1071 = vld [vmem:[%s1049 + $0xa8] sm:$0xff]
      %v1072 = vld [vmem:[%s1049 + $0xb0] sm:$0xff]
      %v1073 = vld [vmem:[%s1049 + $0xb8] sm:$0xff]
      %v1074 = vld [vmem:[%s1049 + $0xc0] sm:$0xff]
      %v1075 = vld [vmem:[%s1049 + $0xc8] sm:$0xff]
      %v1076 = vld [vmem:[%s1049 + $0xd0] sm:$0xff]
      %v1077 = vld [vmem:[%s1049 + $0xd8] sm:$0xff]
      %v1078 = vld [vmem:[%s1049 + $0xe0] sm:$0xff]
      %v1079 = vld [vmem:[%s1049 + $0xe8] sm:$0xff]
      %v1080 = vld [vmem:[%s1049 + $0xf0] sm:$0xff]
      %v1081 = vld [vmem:[%s1049 + $0xf8] sm:$0xff]
      %v1082 = vld [vmem:[%s1049 + $0x100] sm:$0xff]
      %v1083 = vld [vmem:[%s1049 + $0x108] sm:$0xff]
      %v1084 = vld [vmem:[%s1049 + $0x110] sm:$0xff]
      %v1085 = vld [vmem:[%s1049 + $0x118] sm:$0xff]
      %v1086 = vld [vmem:[%s1049 + $0x120] sm:$0xff]
      %v1087 = vld [vmem:[%s1049 + $0x128] sm:$0xff]
      %v1088 = vld [vmem:[%s1049 + $0x130] sm:$0xff]
      %v1089 = vld [vmem:[%s1049 + $0x138] sm:$0xff]
      %v1090 = vld [vmem:[%s1049 + $0x140] sm:$0xff]
      %v1091 = vld [vmem:[%s1049 + $0x148] sm:$0xff]
      %v1092 = vld [vmem:[%s1049 + $0x150] sm:$0xff]
      %v1093 = vld [vmem:[%s1049 + $0x158] sm:$0xff]
      %v1094 = vld [vmem:[%s1049 + $0x160] sm:$0xff]
      %v1095 = vld [vmem:[%s1049 + $0x168] sm:$0xff]
      %v1096 = vld [vmem:[%s1049 + $0x170] sm:$0xff]
      %v1097 = vld [vmem:[%s1049 + $0x178] sm:$0xff]
      %v1098 = vld [vmem:[%s1049 + $0x180] sm:$0xff]
      %v1099 = vld [vmem:[%s1049 + $0x188] sm:$0xff]
      %v1100 = vld [vmem:[%s1049 + $0x190] sm:$0xff]
      %v1101 = vld [vmem:[%s1049 + $0x198] sm:$0xff]
      %v1102 = vld [vmem:[%s1049 + $0x1a0] sm:$0xff]
      %v1103 = vld [vmem:[%s1049 + $0x1a8] sm:$0xff]
      %v1104 = vld [vmem:[%s1049 + $0x1b0] sm:$0xff]
      %v1105 = vld [vmem:[%s1049 + $0x1b8] sm:$0xff]
      %v1106 = vld [vmem:[%s1049 + $0x1c0] sm:$0xff]
      %v1107 = vld [vmem:[%s1049 + $0x1c8] sm:$0xff]
      %v1108 = vld [vmem:[%s1049 + $0x1d0] sm:$0xff]
      %v1109 = vld [vmem:[%s1049 + $0x1d8] sm:$0xff]
      %v1110 = vld [vmem:[%s1049 + $0x1e0] sm:$0xff]
      %v1111 = vld [vmem:[%s1049 + $0x1e8] sm:$0xff]
      %v1112 = vld [vmem:[%s1049 + $0x1f0] sm:$0xff]
      %v1113 = vld [vmem:[%s1049 + $0x1f8] sm:$0xff]
      %1114 = vmatprep.subr.mxu0 0.0
      %1115 = vmatpush1.msra.mxu0 %v1065
      %1116 = vmatprep.subr.mxu0 0.0
      %1117 = vmatpush1.msra.mxu0 %v1064
      %1118 = vmatprep.subr.mxu0 0.0
      %1119 = vmatpush1.msra.mxu0 %v1063
      %1120 = vmatprep.subr.mxu0 0.0
      %1121 = vmatpush1.msra.mxu0 %v1062
      %1122 = vmatprep.subr.mxu0 0.0
      %1123 = vmatpush1.msra.mxu0 %v1061
      %1124 = vmatprep.subr.mxu0 0.0
      %1125 = vmatpush1.msra.mxu0 %v1060
      %1126 = vmatprep.subr.mxu0 0.0
      %1127 = vmatpush1.msra.mxu0 %v1059
      %1128 = vmatprep.subr.mxu0 0.0
      %1129 = vmatpush1.msra.mxu0 %v1058
      %1130 = vmatprep.subr.mxu0 0.0
      %1131 = vmatpush1.msra.mxu0 %v1057
      %1132 = vmatprep.subr.mxu0 0.0
      %1133 = vmatpush1.msra.mxu0 %v1056
      %1134 = vmatprep.subr.mxu0 0.0
      %1135 = vmatpush1.msra.mxu0 %v1055
      %1136 = vmatprep.subr.mxu0 0.0
      %1137 = vmatpush1.msra.mxu0 %v1054
      %1138 = vmatprep.subr.mxu0 0.0
      %1139 = vmatpush1.msra.mxu0 %v1053
      %1140 = vmatprep.subr.mxu0 0.0
      %1141 = vmatpush1.msra.mxu0 %v1052
      %1142 = vmatprep.subr.mxu0 0.0
      %1143 = vmatpush1.msra.mxu0 %v1051
      %1144 = vmatprep.subr.mxu0 0.0
      %1145 = vmatpush1.msra.mxu0 %v1050
      %1146 = vmatprep.subr.mxu0 0.0
      %1147 = vmatpush2.msra.mxu0 %v1081
      %1148 = vmatprep.subr.mxu0 0.0
      %1149 = vmatpush2.msra.mxu0 %v1080
      %1150 = vmatprep.subr.mxu0 0.0
      %1151 = vmatpush2.msra.mxu0 %v1079
      %1152 = vmatprep.subr.mxu0 0.0
      %1153 = vmatpush2.msra.mxu0 %v1078
      %1154 = vmatprep.subr.mxu0 0.0
      %1155 = vmatpush2.msra.mxu0 %v1077
      %1156 = vmatprep.subr.mxu0 0.0
      %1157 = vmatpush2.msra.mxu0 %v1076
      %1158 = vmatprep.subr.mxu0 0.0
      %1159 = vmatpush2.msra.mxu0 %v1075
      %1160 = vmatprep.subr.mxu0 0.0
      %1161 = vmatpush2.msra.mxu0 %v1074
      %1162 = vmatprep.subr.mxu0 0.0
      %1163 = vmatpush2.msra.mxu0 %v1073
      %1164 = vmatprep.subr.mxu0 0.0
      %1165 = vmatpush2.msra.mxu0 %v1072
      %1166 = vmatprep.subr.mxu0 0.0
      %1167 = vmatpush2.msra.mxu0 %v1071
      %1168 = vmatprep.subr.mxu0 0.0
      %1169 = vmatpush2.msra.mxu0 %v1070
      %1170 = vmatprep.subr.mxu0 0.0
      %1171 = vmatpush2.msra.mxu0 %v1069
      %1172 = vmatprep.subr.mxu0 0.0
      %1173 = vmatpush2.msra.mxu0 %v1068
      %1174 = vmatprep.subr.mxu0 0.0
      %1175 = vmatpush2.msra.mxu0 %v1067
      %1176 = vmatprep.subr.mxu0 0.0
      %1177 = vmatpush2.msra.mxu0 %v1066
      %1178 = vmatprep.mubr.f32.mxu0 %v178
      %1179 = vmatmul.mubr.f32.gmra.mxu0 %v177
      %v1180 = vpop.f32.mrf.mxu0
      %v1181 = vadd.f32 0.0, %v1180
      %v1182 = vpop.f32.mrf.mxu0
      %1183 = vmatprep.mubr.f32.mxu0 %v182
      %1184 = vmatmul.mubr.f32.gmra.mxu0 %v181
      %v1185 = vpop.f32.mrf.mxu0
      %v1186 = vadd.f32 0.0, %v1185
      %v1187 = vpop.f32.mrf.mxu0
      %1188 = vmatprep.mubr.f32.mxu0 %v186
      %1189 = vmatmul.mubr.f32.gmra.mxu0 %v185
      %v1190 = vpop.f32.mrf.mxu0
      %v1191 = vadd.f32 0.0, %v1190
      %v1192 = vpop.f32.mrf.mxu0
      %1193 = vmatprep.mubr.f32.mxu0 %v190
      %1194 = vmatmul.mubr.f32.gmra.mxu0 %v189
      %v1195 = vpop.f32.mrf.mxu0
      %v1196 = vadd.f32 0.0, %v1195
      %v1197 = vpop.f32.mrf.mxu0
      %1198 = vmatprep.mubr.f32.mxu0 %v194
      %1199 = vmatmul.mubr.f32.gmra.mxu0 %v193
      %v1200 = vpop.f32.mrf.mxu0
      %v1201 = vadd.f32 0.0, %v1200
      %v1202 = vpop.f32.mrf.mxu0
      %1203 = vmatprep.mubr.f32.mxu0 %v198
      %1204 = vmatmul.mubr.f32.gmra.mxu0 %v197
      %v1205 = vpop.f32.mrf.mxu0
      %v1206 = vadd.f32 0.0, %v1205
      %v1207 = vpop.f32.mrf.mxu0
      %1208 = vmatprep.mubr.f32.mxu0 %v202
      %1209 = vmatmul.mubr.f32.gmra.mxu0 %v201
      %v1210 = vpop.f32.mrf.mxu0
      %v1211 = vadd.f32 0.0, %v1210
      %v1212 = vpop.f32.mrf.mxu0
      %1213 = vmatprep.mubr.f32.mxu0 %v206
      %1214 = vmatmul.mubr.f32.gmra.mxu0 %v205
      %v1215 = vpop.f32.mrf.mxu0
      %v1216 = vadd.f32 0.0, %v1215
      %v1217 = vpop.f32.mrf.mxu0
      %1218 = vdwg.mxu0
      %1219 = vmatprep.subr.mxu0 0.0
      %1220 = vmatpush1.msra.mxu0 %v1097
      %1221 = vmatprep.subr.mxu0 0.0
      %1222 = vmatpush1.msra.mxu0 %v1096
      %1223 = vmatprep.subr.mxu0 0.0
      %1224 = vmatpush1.msra.mxu0 %v1095
      %1225 = vmatprep.subr.mxu0 0.0
      %1226 = vmatpush1.msra.mxu0 %v1094
      %1227 = vmatprep.subr.mxu0 0.0
      %1228 = vmatpush1.msra.mxu0 %v1093
      %1229 = vmatprep.subr.mxu0 0.0
      %1230 = vmatpush1.msra.mxu0 %v1092
      %1231 = vmatprep.subr.mxu0 0.0
      %1232 = vmatpush1.msra.mxu0 %v1091
      %1233 = vmatprep.subr.mxu0 0.0
      %1234 = vmatpush1.msra.mxu0 %v1090
      %1235 = vmatprep.subr.mxu0 0.0
      %1236 = vmatpush1.msra.mxu0 %v1089
      %1237 = vmatprep.subr.mxu0 0.0
      %1238 = vmatpush1.msra.mxu0 %v1088
      %1239 = vmatprep.subr.mxu0 0.0
      %1240 = vmatpush1.msra.mxu0 %v1087
      %1241 = vmatprep.subr.mxu0 0.0
      %1242 = vmatpush1.msra.mxu0 %v1086
      %1243 = vmatprep.subr.mxu0 0.0
      %1244 = vmatpush1.msra.mxu0 %v1085
      %1245 = vmatprep.subr.mxu0 0.0
      %1246 = vmatpush1.msra.mxu0 %v1084
      %1247 = vmatprep.subr.mxu0 0.0
      %1248 = vmatpush1.msra.mxu0 %v1083
      %1249 = vmatprep.subr.mxu0 0.0
      %1250 = vmatpush1.msra.mxu0 %v1082
      %1251 = vmatprep.subr.mxu0 0.0
      %1252 = vmatpush2.msra.mxu0 %v1113
      %1253 = vmatprep.subr.mxu0 0.0
      %1254 = vmatpush2.msra.mxu0 %v1112
      %1255 = vmatprep.subr.mxu0 0.0
      %1256 = vmatpush2.msra.mxu0 %v1111
      %1257 = vmatprep.subr.mxu0 0.0
      %1258 = vmatpush2.msra.mxu0 %v1110
      %1259 = vmatprep.subr.mxu0 0.0
      %1260 = vmatpush2.msra.mxu0 %v1109
      %1261 = vmatprep.subr.mxu0 0.0
      %1262 = vmatpush2.msra.mxu0 %v1108
      %1263 = vmatprep.subr.mxu0 0.0
      %1264 = vmatpush2.msra.mxu0 %v1107
      %1265 = vmatprep.subr.mxu0 0.0
      %1266 = vmatpush2.msra.mxu0 %v1106
      %1267 = vmatprep.subr.mxu0 0.0
      %1268 = vmatpush2.msra.mxu0 %v1105
      %1269 = vmatprep.subr.mxu0 0.0
      %1270 = vmatpush2.msra.mxu0 %v1104
      %1271 = vmatprep.subr.mxu0 0.0
      %1272 = vmatpush2.msra.mxu0 %v1103
      %1273 = vmatprep.subr.mxu0 0.0
      %1274 = vmatpush2.msra.mxu0 %v1102
      %1275 = vmatprep.subr.mxu0 0.0
      %1276 = vmatpush2.msra.mxu0 %v1101
      %1277 = vmatprep.subr.mxu0 0.0
      %1278 = vmatpush2.msra.mxu0 %v1100
      %1279 = vmatprep.subr.mxu0 0.0
      %1280 = vmatpush2.msra.mxu0 %v1099
      %1281 = vmatprep.subr.mxu0 0.0
      %1282 = vmatpush2.msra.mxu0 %v1098
      %1283 = vmatprep.mubr.f32.mxu0 %v180
      %1284 = vmatmul.mubr.f32.gmra.mxu0 %v179
      %v1285 = vpop.f32.mrf.mxu0
      %v1286 = vadd.f32 %v1181, %v1285
      %v1287 = vpop.f32.mrf.mxu0
      %1288 = vmatprep.mubr.f32.mxu0 %v184
      %1289 = vmatmul.mubr.f32.gmra.mxu0 %v183
      %v1290 = vpop.f32.mrf.mxu0
      %v1291 = vadd.f32 %v1186, %v1290
      %v1292 = vpop.f32.mrf.mxu0
      %1293 = vmatprep.mubr.f32.mxu0 %v188
      %1294 = vmatmul.mubr.f32.gmra.mxu0 %v187
      %v1295 = vpop.f32.mrf.mxu0
      %v1296 = vadd.f32 %v1191, %v1295
      %v1297 = vpop.f32.mrf.mxu0
      %1298 = vmatprep.mubr.f32.mxu0 %v192
      %1299 = vmatmul.mubr.f32.gmra.mxu0 %v191
      %v1300 = vpop.f32.mrf.mxu0
      %v1301 = vadd.f32 %v1196, %v1300
      %v1302 = vpop.f32.mrf.mxu0
      %1303 = vmatprep.mubr.f32.mxu0 %v196
      %1304 = vmatmul.mubr.f32.gmra.mxu0 %v195
      %v1305 = vpop.f32.mrf.mxu0
      %v1306 = vadd.f32 %v1201, %v1305
      %v1307 = vpop.f32.mrf.mxu0
      %1308 = vmatprep.mubr.f32.mxu0 %v200
      %1309 = vmatmul.mubr.f32.gmra.mxu0 %v199
      %v1310 = vpop.f32.mrf.mxu0
      %v1311 = vadd.f32 %v1206, %v1310
      %v1312 = vpop.f32.mrf.mxu0
      %1313 = vmatprep.mubr.f32.mxu0 %v204
      %1314 = vmatmul.mubr.f32.gmra.mxu0 %v203
      %v1315 = vpop.f32.mrf.mxu0
      %v1316 = vadd.f32 %v1211, %v1315
      %v1317 = vpop.f32.mrf.mxu0
      %1318 = vmatprep.mubr.f32.mxu0 %v208
      %1319 = vmatmul.mubr.f32.gmra.mxu0 %v207
      %v1320 = vpop.f32.mrf.mxu0
      %v1321 = vadd.f32 %v1216, %v1320
      %v1322 = vpop.f32.mrf.mxu0
      %1323 = vdwg.mxu0
      %v1324 = vmax.f32 %v1041, %v1286
      %v1325 = vmax.f32 %v1042, %v1291
      %v1326 = vmax.f32 %v1043, %v1296
      %v1327 = vmax.f32 %v1044, %v1301
      %v1328 = vmax.f32 %v1045, %v1306
      %v1329 = vmax.f32 %v1046, %v1311
      %v1330 = vmax.f32 %v1047, %v1316
      %v1331 = vmax.f32 %v1048, %v1321
      %v1332 = vld [vmem:[%s2] sm:$0x1]
      %v1334 = vlaneseq
      %v1335 = vshrl.u32 %v1334, 7
      %v1336 = vsub.s32 0, %v1335
      %v1337 = vrot.slane %v1332, %v1336
      %v1339 = vadd.f32 %v1324, %v1337
      %v1340 = vadd.f32 %v1325, %v1337
      %v1341 = vadd.f32 %v1326, %v1337
      %v1342 = vadd.f32 %v1327, %v1337
      %v1343 = vadd.f32 %v1328, %v1337
      %v1344 = vadd.f32 %v1329, %v1337
      %v1345 = vadd.f32 %v1330, %v1337
      %v1346 = vadd.f32 %v1331, %v1337
      %v1347 = vmax.f32 %v1339, 0.0
      %v1348 = vmax.f32 %v1340, 0.0
      %v1349 = vmax.f32 %v1341, 0.0
      %v1350 = vmax.f32 %v1342, 0.0
      %v1351 = vmax.f32 %v1343, 0.0
      %v1352 = vmax.f32 %v1344, 0.0
      %v1353 = vmax.f32 %v1345, 0.0
      %v1354 = vmax.f32 %v1346, 0.0
      %vm1355 = vcmask 523264
      %1356 = vst.msk [vmem:[%s175] sm:$0xff] %vm1355, %v1347
      %1357 = vst.msk [vmem:[%s175 + $0x8] sm:$0xff] %vm1355, %v1348
      %1358 = vst.msk [vmem:[%s175 + $0x10] sm:$0xff] %vm1355, %v1349
      %1359 = vst.msk [vmem:[%s175 + $0x18] sm:$0xff] %vm1355, %v1350
      %1360 = vst.msk [vmem:[%s175 + $0x20] sm:$0xff] %vm1355, %v1351
      %1361 = vst.msk [vmem:[%s175 + $0x28] sm:$0xff] %vm1355, %v1352
      %1362 = vst.msk [vmem:[%s175 + $0x30] sm:$0xff] %vm1355, %v1353
      %1363 = vst.msk [vmem:[%s175 + $0x38] sm:$0xff] %vm1355, %v1354
      %s1364 = smul.u32 8, %s14
      %p1365 = scmp.lt.s32.totalorder %s1364, 15
      %s1366 = scalar_select %p1365, %s1364, 15
      %s1367 = smul.addr %s1366, 8
      %s1368 = scalar_lea.vmem %s3, %s1367
      // Predicated region
      $region33: #{solarnet_forward.6} parent=31 // pred_check
        %p1369 = pneg %p100
      $region34: #{solarnet_forward.6} parent=31 // pred_check_branch
        %1371 = sbr.rel (%p1369) target = $region36
      $region35: #{solarnet_forward.6} parent=31 // pred_region
        %s1372 = smul.u32 8, %s14
      $region36: #{solarnet_forward.6} parent=31 // pred_fallthru
        _
    $region32: #{solarnet_forward.6} parent=5 // pred_fallthru
      _
    %p1373 = scmp.le.s32.totalorder 2, %s9
    // Predicated region
    $region37: #{solarnet_forward.6} parent=5 // pred_check
      %p1374 = pneg %p1373
    $region38: #{solarnet_forward.6} parent=5 // pred_check_branch
      %1376 = sbr.rel (%p1374) target = $region40
    $region39: #{solarnet_forward.6} parent=5 // pred_region
      %s1377 = ssub.s32 %s9, 2
      // Predicated region
      $region41: #{solarnet_forward.6} parent=39 // pred_check
        %p1378 = pneg %p106
      $region42: #{solarnet_forward.6} parent=39 // pred_check_branch
        %1380 = sbr.rel (%p1378) target = $region44
      $region43: #{solarnet_forward.6} parent=39 // pred_region
        %s1381 = smul.u32 8, %s15
        %p1382 = scmp.lt.s32.totalorder %s1381, 15
        %s1383 = scalar_select %p1382, %s1381, 15
        %s1384 = smul.addr %s1383, 8
        %s1385 = scalar_lea.vmem %s3, %s1384
      $region44: #{solarnet_forward.6} parent=39 // pred_fallthru
        _
    $region40: #{solarnet_forward.6} parent=5 // pred_fallthru
      _
  $region6: #{solarnet_forward.6} parent=0 // loop_footer
    %s13 = sadd.s32 1, %s9
  $region7: #{solarnet_forward.6} parent=0 // loop_footer_branch
    %8 = sbr.rel target = $region3
  $region8: #{solarnet_forward.6} parent=0 // loop_exit
    _

// kernel: solarnet_forward.7
$region0: #{solarnet_forward.7}
  #allocation0 [shape = 'u32[]', space=smem, size = 0x4, offset = 0x4, fixed_abs, tag = 'smem constant byte address 0x4 - core index']
  #allocation1 [shape = 'u32[144,128]{1,0:T(1,128)}', space=vmem, size = 0x12000, scoped, tag = 'internal scratch']
  %s0 = inlined_call_operand.vmem [shape: f32[2,4096], index: 0, kind: input, shape index: {}]
  %s1 = inlined_call_operand.vmem [shape: f32[4096,128], index: 1, kind: input, shape index: {}]
  %s2 = inlined_call_operand.vmem [shape: f32[1,128], index: 2, kind: input, shape index: {}]
  %s3 = inlined_call_operand.vmem [shape: f32[128,2], index: 3, kind: input, shape index: {}]
  %s4 = inlined_call_operand.vmem [shape: f32[1,2], index: 4, kind: input, shape index: {}]
  %s5 = inlined_call_operand.hbm [shape: f32[2,2], index: 5, kind: output, shape index: {}]
  %s6 = sld [smem:[#allocation0]]
  $region30: #{solarnet_forward.7} parent=0
    _
  %s8 = ssub.s32 1, %s6
  %s9 = scalar_select 0, %s8, %s6
  $region1: #{solarnet_forward.7} parent=0
    #allocation2 [shape = 'u8[1024]{0}', space=vmem, size = 0x400, scoped, tag = 'output window, operand 0, single buffered']
    #allocation3 [shape = 's32[1]{0}', space=sflag, size = 0x4, scoped, tag = 'scoped memory for solarnet_forward.7']
    %10 = vsyncpa [#allocation3], 0
    // Predicated region
    $region2: #{solarnet_forward.7} parent=1 // pred_check
      _
    $region3: #{solarnet_forward.7} parent=1 // pred_check_branch
      %12 = sbr.rel (0) target = $region5
    $region4: #{solarnet_forward.7} parent=1 // pred_region
      _
    $region5: #{solarnet_forward.7} parent=1 // pred_fallthru
      _
    // Predicated region
    $region6: #{solarnet_forward.7} parent=1 // pred_check
      _
    $region7: #{solarnet_forward.7} parent=1 // pred_check_branch
      %14 = sbr.rel (0) target = $region9
    $region8: #{solarnet_forward.7} parent=1 // pred_region
      _
    $region9: #{solarnet_forward.7} parent=1 // pred_fallthru
      _
    // Predicated region
    $region10: #{solarnet_forward.7} parent=1 // pred_check
      _
    $region11: #{solarnet_forward.7} parent=1 // pred_check_branch
      %16 = sbr.rel (0) target = $region13
    $region12: #{solarnet_forward.7} parent=1 // pred_region
      _
    $region13: #{solarnet_forward.7} parent=1 // pred_fallthru
      _
    // Predicated region
    $region14: #{solarnet_forward.7} parent=1 // pred_check
      _
    $region15: #{solarnet_forward.7} parent=1 // pred_check_branch
      %18 = sbr.rel (0) target = $region17
    $region16: #{solarnet_forward.7} parent=1 // pred_region
      _
    $region17: #{solarnet_forward.7} parent=1 // pred_fallthru
      _
    // Predicated region
    $region18: #{solarnet_forward.7} parent=1 // pred_check
      _
    $region19: #{solarnet_forward.7} parent=1 // pred_check_branch
      %20 = sbr.rel (0) target = $region21
    $region20: #{solarnet_forward.7} parent=1 // pred_region
      _
    $region21: #{solarnet_forward.7} parent=1 // pred_fallthru
      _
    %v21 = vld [vmem:[%s0] sm:$0xff]
    %v22 = vld [vmem:[%s0 + $0x8] sm:$0xff]
    %v23 = vld [vmem:[%s0 + $0x10] sm:$0xff]
    %v24 = vld [vmem:[%s0 + $0x18] sm:$0xff]
    %v25 = vld [vmem:[%s0 + $0x20] sm:$0xff]
    %v26 = vld [vmem:[%s0 + $0x28] sm:$0xff]
    %v27 = vld [vmem:[%s0 + $0x30] sm:$0xff]
    %v28 = vld [vmem:[%s0 + $0x38] sm:$0xff]
    %v29 = vld [vmem:[%s1] sm:$0xff]
    %v30 = vld [vmem:[%s1 + $0x8] sm:$0xff]
    %v31 = vld [vmem:[%s1 + $0x10] sm:$0xff]
    %v32 = vld [vmem:[%s1 + $0x18] sm:$0xff]
    %v33 = vld [vmem:[%s1 + $0x20] sm:$0xff]
    %v34 = vld [vmem:[%s1 + $0x28] sm:$0xff]
    %v35 = vld [vmem:[%s1 + $0x30] sm:$0xff]
    %v36 = vld [vmem:[%s1 + $0x38] sm:$0xff]
    %v37 = vld [vmem:[%s1 + $0x40] sm:$0xff]
    %v38 = vld [vmem:[%s1 + $0x48] sm:$0xff]
    %v39 = vld [vmem:[%s1 + $0x50] sm:$0xff]
    %v40 = vld [vmem:[%s1 + $0x58] sm:$0xff]
    %v41 = vld [vmem:[%s1 + $0x60] sm:$0xff]
    %v42 = vld [vmem:[%s1 + $0x68] sm:$0xff]
    %v43 = vld [vmem:[%s1 + $0x70] sm:$0xff]
    %v44 = vld [vmem:[%s1 + $0x78] sm:$0xff]
    %v45 = vld [vmem:[%s1 + $0x80] sm:$0xff]
    %v46 = vld [vmem:[%s1 + $0x88] sm:$0xff]
    %v47 = vld [vmem:[%s1 + $0x90] sm:$0xff]
    %v48 = vld [vmem:[%s1 + $0x98] sm:$0xff]
    %v49 = vld [vmem:[%s1 + $0xa0] sm:$0xff]
    %v50 = vld [vmem:[%s1 + $0xa8] sm:$0xff]
    %v51 = vld [vmem:[%s1 + $0xb0] sm:$0xff]
    %v52 = vld [vmem:[%s1 + $0xb8] sm:$0xff]
    %v53 = vld [vmem:[%s1 + $0xc0] sm:$0xff]
    %v54 = vld [vmem:[%s1 + $0xc8] sm:$0xff]
    %v55 = vld [vmem:[%s1 + $0xd0] sm:$0xff]
    %v56 = vld [vmem:[%s1 + $0xd8] sm:$0xff]
    %v57 = vld [vmem:[%s1 + $0xe0] sm:$0xff]
    %v58 = vld [vmem:[%s1 + $0xe8] sm:$0xff]
    %v59 = vld [vmem:[%s1 + $0xf0] sm:$0xff]
    %v60 = vld [vmem:[%s1 + $0xf8] sm:$0xff]
    %v61 = vld [vmem:[%s1 + $0x100] sm:$0xff]
    %v62 = vld [vmem:[%s1 + $0x108] sm:$0xff]
    %v63 = vld [vmem:[%s1 + $0x110] sm:$0xff]
    %v64 = vld [vmem:[%s1 + $0x118] sm:$0xff]
    %v65 = vld [vmem:[%s1 + $0x120] sm:$0xff]
    %v66 = vld [vmem:[%s1 + $0x128] sm:$0xff]
    %v67 = vld [vmem:[%s1 + $0x130] sm:$0xff]
    %v68 = vld [vmem:[%s1 + $0x138] sm:$0xff]
    %v69 = vld [vmem:[%s1 + $0x140] sm:$0xff]
    %v70 = vld [vmem:[%s1 + $0x148] sm:$0xff]
    %v71 = vld [vmem:[%s1 + $0x150] sm:$0xff]
    %v72 = vld [vmem:[%s1 + $0x158] sm:$0xff]
    %v73 = vld [vmem:[%s1 + $0x160] sm:$0xff]
    %v74 = vld [vmem:[%s1 + $0x168] sm:$0xff]
    %v75 = vld [vmem:[%s1 + $0x170] sm:$0xff]
    %v76 = vld [vmem:[%s1 + $0x178] sm:$0xff]
    %v77 = vld [vmem:[%s1 + $0x180] sm:$0xff]
    %v78 = vld [vmem:[%s1 + $0x188] sm:$0xff]
    %v79 = vld [vmem:[%s1 + $0x190] sm:$0xff]
    %v80 = vld [vmem:[%s1 + $0x198] sm:$0xff]
    %v81 = vld [vmem:[%s1 + $0x1a0] sm:$0xff]
    %v82 = vld [vmem:[%s1 + $0x1a8] sm:$0xff]
    %v83 = vld [vmem:[%s1 + $0x1b0] sm:$0xff]
    %v84 = vld [vmem:[%s1 + $0x1b8] sm:$0xff]
    %v85 = vld [vmem:[%s1 + $0x1c0] sm:$0xff]
    %v86 = vld [vmem:[%s1 + $0x1c8] sm:$0xff]
    %v87 = vld [vmem:[%s1 + $0x1d0] sm:$0xff]
    %v88 = vld [vmem:[%s1 + $0x1d8] sm:$0xff]
    %v89 = vld [vmem:[%s1 + $0x1e0] sm:$0xff]
    %v90 = vld [vmem:[%s1 + $0x1e8] sm:$0xff]
    %v91 = vld [vmem:[%s1 + $0x1f0] sm:$0xff]
    %v92 = vld [vmem:[%s1 + $0x1f8] sm:$0xff]
    %v93 = vld [vmem:[%s1 + $0x200] sm:$0xff]
    %v94 = vld [vmem:[%s1 + $0x208] sm:$0xff]
    %v95 = vld [vmem:[%s1 + $0x210] sm:$0xff]
    %v96 = vld [vmem:[%s1 + $0x218] sm:$0xff]
    %v97 = vld [vmem:[%s1 + $0x220] sm:$0xff]
    %v98 = vld [vmem:[%s1 + $0x228] sm:$0xff]
    %v99 = vld [vmem:[%s1 + $0x230] sm:$0xff]
    %v100 = vld [vmem:[%s1 + $0x238] sm:$0xff]
    %v101 = vld [vmem:[%s1 + $0x240] sm:$0xff]
    %v102 = vld [vmem:[%s1 + $0x248] sm:$0xff]
    %v103 = vld [vmem:[%s1 + $0x250] sm:$0xff]
    %v104 = vld [vmem:[%s1 + $0x258] sm:$0xff]
    %v105 = vld [vmem:[%s1 + $0x260] sm:$0xff]
    %v106 = vld [vmem:[%s1 + $0x268] sm:$0xff]
    %v107 = vld [vmem:[%s1 + $0x270] sm:$0xff]
    %v108 = vld [vmem:[%s1 + $0x278] sm:$0xff]
    %v109 = vld [vmem:[%s1 + $0x280] sm:$0xff]
    %v110 = vld [vmem:[%s1 + $0x288] sm:$0xff]
    %v111 = vld [vmem:[%s1 + $0x290] sm:$0xff]
    %v112 = vld [vmem:[%s1 + $0x298] sm:$0xff]
    %v113 = vld [vmem:[%s1 + $0x2a0] sm:$0xff]
    %v114 = vld [vmem:[%s1 + $0x2a8] sm:$0xff]
    %v115 = vld [vmem:[%s1 + $0x2b0] sm:$0xff]
    %v116 = vld [vmem:[%s1 + $0x2b8] sm:$0xff]
    %v117 = vld [vmem:[%s1 + $0x2c0] sm:$0xff]
    %v118 = vld [vmem:[%s1 + $0x2c8] sm:$0xff]
    %v119 = vld [vmem:[%s1 + $0x2d0] sm:$0xff]
    %v120 = vld [vmem:[%s1 + $0x2d8] sm:$0xff]
    %v121 = vld [vmem:[%s1 + $0x2e0] sm:$0xff]
    %v122 = vld [vmem:[%s1 + $0x2e8] sm:$0xff]
    %v123 = vld [vmem:[%s1 + $0x2f0] sm:$0xff]
    %v124 = vld [vmem:[%s1 + $0x2f8] sm:$0xff]
    %v125 = vld [vmem:[%s1 + $0x300] sm:$0xff]
    %v126 = vld [vmem:[%s1 + $0x308] sm:$0xff]
    %v127 = vld [vmem:[%s1 + $0x310] sm:$0xff]
    %v128 = vld [vmem:[%s1 + $0x318] sm:$0xff]
    %v129 = vld [vmem:[%s1 + $0x320] sm:$0xff]
    %v130 = vld [vmem:[%s1 + $0x328] sm:$0xff]
    %v131 = vld [vmem:[%s1 + $0x330] sm:$0xff]
    %v132 = vld [vmem:[%s1 + $0x338] sm:$0xff]
    %v133 = vld [vmem:[%s1 + $0x340] sm:$0xff]
    %v134 = vld [vmem:[%s1 + $0x348] sm:$0xff]
    %v135 = vld [vmem:[%s1 + $0x350] sm:$0xff]
    %v136 = vld [vmem:[%s1 + $0x358] sm:$0xff]
    %v137 = vld [vmem:[%s1 + $0x360] sm:$0xff]
    %v138 = vld [vmem:[%s1 + $0x368] sm:$0xff]
    %v139 = vld [vmem:[%s1 + $0x370] sm:$0xff]
    %v140 = vld [vmem:[%s1 + $0x378] sm:$0xff]
    %v141 = vld [vmem:[%s1 + $0x380] sm:$0xff]
    %v142 = vld [vmem:[%s1 + $0x388] sm:$0xff]
    %v143 = vld [vmem:[%s1 + $0x390] sm:$0xff]
    %v144 = vld [vmem:[%s1 + $0x398] sm:$0xff]
    %v145 = vld [vmem:[%s1 + $0x3a0] sm:$0xff]
    %v146 = vld [vmem:[%s1 + $0x3a8] sm:$0xff]
    %v147 = vld [vmem:[%s1 + $0x3b0] sm:$0xff]
    %v148 = vld [vmem:[%s1 + $0x3b8] sm:$0xff]
    %v149 = vld [vmem:[%s1 + $0x3c0] sm:$0xff]
    %v150 = vld [vmem:[%s1 + $0x3c8] sm:$0xff]
    %v151 = vld [vmem:[%s1 + $0x3d0] sm:$0xff]
    %v152 = vld [vmem:[%s1 + $0x3d8] sm:$0xff]
    %v153 = vld [vmem:[%s1 + $0x3e0] sm:$0xff]
    %v154 = vld [vmem:[%s1 + $0x3e8] sm:$0xff]
    %v155 = vld [vmem:[%s1 + $0x3f0] sm:$0xff]
    %v156 = vld [vmem:[%s1 + $0x3f8] sm:$0xff]
    %v157 = vld [vmem:[%s1 + $0x400] sm:$0xff]
    %v158 = vld [vmem:[%s1 + $0x408] sm:$0xff]
    %v159 = vld [vmem:[%s1 + $0x410] sm:$0xff]
    %v160 = vld [vmem:[%s1 + $0x418] sm:$0xff]
    %v161 = vld [vmem:[%s1 + $0x420] sm:$0xff]
    %v162 = vld [vmem:[%s1 + $0x428] sm:$0xff]
    %v163 = vld [vmem:[%s1 + $0x430] sm:$0xff]
    %v164 = vld [vmem:[%s1 + $0x438] sm:$0xff]
    %v165 = vld [vmem:[%s1 + $0x440] sm:$0xff]
    %v166 = vld [vmem:[%s1 + $0x448] sm:$0xff]
    %v167 = vld [vmem:[%s1 + $0x450] sm:$0xff]
    %v168 = vld [vmem:[%s1 + $0x458] sm:$0xff]
    %v169 = vld [vmem:[%s1 + $0x460] sm:$0xff]
    %v170 = vld [vmem:[%s1 + $0x468] sm:$0xff]
    %v171 = vld [vmem:[%s1 + $0x470] sm:$0xff]
    %v172 = vld [vmem:[%s1 + $0x478] sm:$0xff]
    %v173 = vld [vmem:[%s1 + $0x480] sm:$0xff]
    %v174 = vld [vmem:[%s1 + $0x488] sm:$0xff]
    %v175 = vld [vmem:[%s1 + $0x490] sm:$0xff]
    %v176 = vld [vmem:[%s1 + $0x498] sm:$0xff]
    %v177 = vld [vmem:[%s1 + $0x4a0] sm:$0xff]
    %v178 = vld [vmem:[%s1 + $0x4a8] sm:$0xff]
    %v179 = vld [vmem:[%s1 + $0x4b0] sm:$0xff]
    %v180 = vld [vmem:[%s1 + $0x4b8] sm:$0xff]
    %v181 = vld [vmem:[%s1 + $0x4c0] sm:$0xff]
    %v182 = vld [vmem:[%s1 + $0x4c8] sm:$0xff]
    %v183 = vld [vmem:[%s1 + $0x4d0] sm:$0xff]
    %v184 = vld [vmem:[%s1 + $0x4d8] sm:$0xff]
    %v185 = vld [vmem:[%s1 + $0x4e0] sm:$0xff]
    %v186 = vld [vmem:[%s1 + $0x4e8] sm:$0xff]
    %v187 = vld [vmem:[%s1 + $0x4f0] sm:$0xff]
    %v188 = vld [vmem:[%s1 + $0x4f8] sm:$0xff]
    %v189 = vld [vmem:[%s1 + $0x500] sm:$0xff]
    %v190 = vld [vmem:[%s1 + $0x508] sm:$0xff]
    %v191 = vld [vmem:[%s1 + $0x510] sm:$0xff]
    %v192 = vld [vmem:[%s1 + $0x518] sm:$0xff]
    %v193 = vld [vmem:[%s1 + $0x520] sm:$0xff]
    %v194 = vld [vmem:[%s1 + $0x528] sm:$0xff]
    %v195 = vld [vmem:[%s1 + $0x530] sm:$0xff]
    %v196 = vld [vmem:[%s1 + $0x538] sm:$0xff]
    %v197 = vld [vmem:[%s1 + $0x540] sm:$0xff]
    %v198 = vld [vmem:[%s1 + $0x548] sm:$0xff]
    %v199 = vld [vmem:[%s1 + $0x550] sm:$0xff]
    %v200 = vld [vmem:[%s1 + $0x558] sm:$0xff]
    %v201 = vld [vmem:[%s1 + $0x560] sm:$0xff]
    %v202 = vld [vmem:[%s1 + $0x568] sm:$0xff]
    %v203 = vld [vmem:[%s1 + $0x570] sm:$0xff]
    %v204 = vld [vmem:[%s1 + $0x578] sm:$0xff]
    %v205 = vld [vmem:[%s1 + $0x580] sm:$0xff]
    %v206 = vld [vmem:[%s1 + $0x588] sm:$0xff]
    %v207 = vld [vmem:[%s1 + $0x590] sm:$0xff]
    %v208 = vld [vmem:[%s1 + $0x598] sm:$0xff]
    %v209 = vld [vmem:[%s1 + $0x5a0] sm:$0xff]
    %v210 = vld [vmem:[%s1 + $0x5a8] sm:$0xff]
    %v211 = vld [vmem:[%s1 + $0x5b0] sm:$0xff]
    %v212 = vld [vmem:[%s1 + $0x5b8] sm:$0xff]
    %v213 = vld [vmem:[%s1 + $0x5c0] sm:$0xff]
    %v214 = vld [vmem:[%s1 + $0x5c8] sm:$0xff]
    %v215 = vld [vmem:[%s1 + $0x5d0] sm:$0xff]
    %v216 = vld [vmem:[%s1 + $0x5d8] sm:$0xff]
    %v217 = vld [vmem:[%s1 + $0x5e0] sm:$0xff]
    %v218 = vld [vmem:[%s1 + $0x5e8] sm:$0xff]
    %v219 = vld [vmem:[%s1 + $0x5f0] sm:$0xff]
    %v220 = vld [vmem:[%s1 + $0x5f8] sm:$0xff]
    %v221 = vld [vmem:[%s1 + $0x600] sm:$0xff]
    %v222 = vld [vmem:[%s1 + $0x608] sm:$0xff]
    %v223 = vld [vmem:[%s1 + $0x610] sm:$0xff]
    %v224 = vld [vmem:[%s1 + $0x618] sm:$0xff]
    %v225 = vld [vmem:[%s1 + $0x620] sm:$0xff]
    %v226 = vld [vmem:[%s1 + $0x628] sm:$0xff]
    %v227 = vld [vmem:[%s1 + $0x630] sm:$0xff]
    %v228 = vld [vmem:[%s1 + $0x638] sm:$0xff]
    %v229 = vld [vmem:[%s1 + $0x640] sm:$0xff]
    %v230 = vld [vmem:[%s1 + $0x648] sm:$0xff]
    %v231 = vld [vmem:[%s1 + $0x650] sm:$0xff]
    %v232 = vld [vmem:[%s1 + $0x658] sm:$0xff]
    %v233 = vld [vmem:[%s1 + $0x660] sm:$0xff]
    %v234 = vld [vmem:[%s1 + $0x668] sm:$0xff]
    %v235 = vld [vmem:[%s1 + $0x670] sm:$0xff]
    %v236 = vld [vmem:[%s1 + $0x678] sm:$0xff]
    %v237 = vld [vmem:[%s1 + $0x680] sm:$0xff]
    %v238 = vld [vmem:[%s1 + $0x688] sm:$0xff]
    %v239 = vld [vmem:[%s1 + $0x690] sm:$0xff]
    %v240 = vld [vmem:[%s1 + $0x698] sm:$0xff]
    %v241 = vld [vmem:[%s1 + $0x6a0] sm:$0xff]
    %v242 = vld [vmem:[%s1 + $0x6a8] sm:$0xff]
    %v243 = vld [vmem:[%s1 + $0x6b0] sm:$0xff]
    %v244 = vld [vmem:[%s1 + $0x6b8] sm:$0xff]
    %v245 = vld [vmem:[%s1 + $0x6c0] sm:$0xff]
    %v246 = vld [vmem:[%s1 + $0x6c8] sm:$0xff]
    %v247 = vld [vmem:[%s1 + $0x6d0] sm:$0xff]
    %v248 = vld [vmem:[%s1 + $0x6d8] sm:$0xff]
    %v249 = vld [vmem:[%s1 + $0x6e0] sm:$0xff]
    %v250 = vld [vmem:[%s1 + $0x6e8] sm:$0xff]
    %v251 = vld [vmem:[%s1 + $0x6f0] sm:$0xff]
    %v252 = vld [vmem:[%s1 + $0x6f8] sm:$0xff]
    %v253 = vld [vmem:[%s1 + $0x700] sm:$0xff]
    %v254 = vld [vmem:[%s1 + $0x708] sm:$0xff]
    %v255 = vld [vmem:[%s1 + $0x710] sm:$0xff]
    %v256 = vld [vmem:[%s1 + $0x718] sm:$0xff]
    %v257 = vld [vmem:[%s1 + $0x720] sm:$0xff]
    %v258 = vld [vmem:[%s1 + $0x728] sm:$0xff]
    %v259 = vld [vmem:[%s1 + $0x730] sm:$0xff]
    %v260 = vld [vmem:[%s1 + $0x738] sm:$0xff]
    %v261 = vld [vmem:[%s1 + $0x740] sm:$0xff]
    %v262 = vld [vmem:[%s1 + $0x748] sm:$0xff]
    %v263 = vld [vmem:[%s1 + $0x750] sm:$0xff]
    %v264 = vld [vmem:[%s1 + $0x758] sm:$0xff]
    %v265 = vld [vmem:[%s1 + $0x760] sm:$0xff]
    %v266 = vld [vmem:[%s1 + $0x768] sm:$0xff]
    %v267 = vld [vmem:[%s1 + $0x770] sm:$0xff]
    %v268 = vld [vmem:[%s1 + $0x778] sm:$0xff]
    %v269 = vld [vmem:[%s1 + $0x780] sm:$0xff]
    %v270 = vld [vmem:[%s1 + $0x788] sm:$0xff]
    %v271 = vld [vmem:[%s1 + $0x790] sm:$0xff]
    %v272 = vld [vmem:[%s1 + $0x798] sm:$0xff]
    %v273 = vld [vmem:[%s1 + $0x7a0] sm:$0xff]
    %v274 = vld [vmem:[%s1 + $0x7a8] sm:$0xff]
    %v275 = vld [vmem:[%s1 + $0x7b0] sm:$0xff]
    %v276 = vld [vmem:[%s1 + $0x7b8] sm:$0xff]
    %v277 = vld [vmem:[%s1 + $0x7c0] sm:$0xff]
    %v278 = vld [vmem:[%s1 + $0x7c8] sm:$0xff]
    %v279 = vld [vmem:[%s1 + $0x7d0] sm:$0xff]
    %v280 = vld [vmem:[%s1 + $0x7d8] sm:$0xff]
    %v281 = vld [vmem:[%s1 + $0x7e0] sm:$0xff]
    %v282 = vld [vmem:[%s1 + $0x7e8] sm:$0xff]
    %v283 = vld [vmem:[%s1 + $0x7f0] sm:$0xff]
    %v284 = vld [vmem:[%s1 + $0x7f8] sm:$0xff]
    %v285 = vld [vmem:[%s1 + $0x800] sm:$0xff]
    %v286 = vld [vmem:[%s1 + $0x808] sm:$0xff]
    %v287 = vld [vmem:[%s1 + $0x810] sm:$0xff]
    %v288 = vld [vmem:[%s1 + $0x818] sm:$0xff]
    %v289 = vld [vmem:[%s1 + $0x820] sm:$0xff]
    %v290 = vld [vmem:[%s1 + $0x828] sm:$0xff]
    %v291 = vld [vmem:[%s1 + $0x830] sm:$0xff]
    %v292 = vld [vmem:[%s1 + $0x838] sm:$0xff]
    %v293 = vld [vmem:[%s1 + $0x840] sm:$0xff]
    %v294 = vld [vmem:[%s1 + $0x848] sm:$0xff]
    %v295 = vld [vmem:[%s1 + $0x850] sm:$0xff]
    %v296 = vld [vmem:[%s1 + $0x858] sm:$0xff]
    %v297 = vld [vmem:[%s1 + $0x860] sm:$0xff]
    %v298 = vld [vmem:[%s1 + $0x868] sm:$0xff]
    %v299 = vld [vmem:[%s1 + $0x870] sm:$0xff]
    %v300 = vld [vmem:[%s1 + $0x878] sm:$0xff]
    %v301 = vld [vmem:[%s1 + $0x880] sm:$0xff]
    %v302 = vld [vmem:[%s1 + $0x888] sm:$0xff]
    %v303 = vld [vmem:[%s1 + $0x890] sm:$0xff]
    %v304 = vld [vmem:[%s1 + $0x898] sm:$0xff]
    %v305 = vld [vmem:[%s1 + $0x8a0] sm:$0xff]
    %v306 = vld [vmem:[%s1 + $0x8a8] sm:$0xff]
    %v307 = vld [vmem:[%s1 + $0x8b0] sm:$0xff]
    %v308 = vld [vmem:[%s1 + $0x8b8] sm:$0xff]
    %v309 = vld [vmem:[%s1 + $0x8c0] sm:$0xff]
    %v310 = vld [vmem:[%s1 + $0x8c8] sm:$0xff]
    %v311 = vld [vmem:[%s1 + $0x8d0] sm:$0xff]
    %v312 = vld [vmem:[%s1 + $0x8d8] sm:$0xff]
    %v313 = vld [vmem:[%s1 + $0x8e0] sm:$0xff]
    %v314 = vld [vmem:[%s1 + $0x8e8] sm:$0xff]
    %v315 = vld [vmem:[%s1 + $0x8f0] sm:$0xff]
    %v316 = vld [vmem:[%s1 + $0x8f8] sm:$0xff]
    %v317 = vld [vmem:[%s1 + $0x900] sm:$0xff]
    %v318 = vld [vmem:[%s1 + $0x908] sm:$0xff]
    %v319 = vld [vmem:[%s1 + $0x910] sm:$0xff]
    %v320 = vld [vmem:[%s1 + $0x918] sm:$0xff]
    %v321 = vld [vmem:[%s1 + $0x920] sm:$0xff]
    %v322 = vld [vmem:[%s1 + $0x928] sm:$0xff]
    %v323 = vld [vmem:[%s1 + $0x930] sm:$0xff]
    %v324 = vld [vmem:[%s1 + $0x938] sm:$0xff]
    %v325 = vld [vmem:[%s1 + $0x940] sm:$0xff]
    %v326 = vld [vmem:[%s1 + $0x948] sm:$0xff]
    %v327 = vld [vmem:[%s1 + $0x950] sm:$0xff]
    %v328 = vld [vmem:[%s1 + $0x958] sm:$0xff]
    %v329 = vld [vmem:[%s1 + $0x960] sm:$0xff]
    %v330 = vld [vmem:[%s1 + $0x968] sm:$0xff]
    %v331 = vld [vmem:[%s1 + $0x970] sm:$0xff]
    %v332 = vld [vmem:[%s1 + $0x978] sm:$0xff]
    %v333 = vld [vmem:[%s1 + $0x980] sm:$0xff]
    %v334 = vld [vmem:[%s1 + $0x988] sm:$0xff]
    %v335 = vld [vmem:[%s1 + $0x990] sm:$0xff]
    %v336 = vld [vmem:[%s1 + $0x998] sm:$0xff]
    %v337 = vld [vmem:[%s1 + $0x9a0] sm:$0xff]
    %v338 = vld [vmem:[%s1 + $0x9a8] sm:$0xff]
    %v339 = vld [vmem:[%s1 + $0x9b0] sm:$0xff]
    %v340 = vld [vmem:[%s1 + $0x9b8] sm:$0xff]
    %v341 = vld [vmem:[%s1 + $0x9c0] sm:$0xff]
    %v342 = vld [vmem:[%s1 + $0x9c8] sm:$0xff]
    %v343 = vld [vmem:[%s1 + $0x9d0] sm:$0xff]
    %v344 = vld [vmem:[%s1 + $0x9d8] sm:$0xff]
    %v345 = vld [vmem:[%s1 + $0x9e0] sm:$0xff]
    %v346 = vld [vmem:[%s1 + $0x9e8] sm:$0xff]
    %v347 = vld [vmem:[%s1 + $0x9f0] sm:$0xff]
    %v348 = vld [vmem:[%s1 + $0x9f8] sm:$0xff]
    %v349 = vld [vmem:[%s1 + $0xa00] sm:$0xff]
    %v350 = vld [vmem:[%s1 + $0xa08] sm:$0xff]
    %v351 = vld [vmem:[%s1 + $0xa10] sm:$0xff]
    %v352 = vld [vmem:[%s1 + $0xa18] sm:$0xff]
    %v353 = vld [vmem:[%s1 + $0xa20] sm:$0xff]
    %v354 = vld [vmem:[%s1 + $0xa28] sm:$0xff]
    %v355 = vld [vmem:[%s1 + $0xa30] sm:$0xff]
    %v356 = vld [vmem:[%s1 + $0xa38] sm:$0xff]
    %v357 = vld [vmem:[%s1 + $0xa40] sm:$0xff]
    %v358 = vld [vmem:[%s1 + $0xa48] sm:$0xff]
    %v359 = vld [vmem:[%s1 + $0xa50] sm:$0xff]
    %v360 = vld [vmem:[%s1 + $0xa58] sm:$0xff]
    %v361 = vld [vmem:[%s1 + $0xa60] sm:$0xff]
    %v362 = vld [vmem:[%s1 + $0xa68] sm:$0xff]
    %v363 = vld [vmem:[%s1 + $0xa70] sm:$0xff]
    %v364 = vld [vmem:[%s1 + $0xa78] sm:$0xff]
    %v365 = vld [vmem:[%s1 + $0xa80] sm:$0xff]
    %v366 = vld [vmem:[%s1 + $0xa88] sm:$0xff]
    %v367 = vld [vmem:[%s1 + $0xa90] sm:$0xff]
    %v368 = vld [vmem:[%s1 + $0xa98] sm:$0xff]
    %v369 = vld [vmem:[%s1 + $0xaa0] sm:$0xff]
    %v370 = vld [vmem:[%s1 + $0xaa8] sm:$0xff]
    %v371 = vld [vmem:[%s1 + $0xab0] sm:$0xff]
    %v372 = vld [vmem:[%s1 + $0xab8] sm:$0xff]
    %v373 = vld [vmem:[%s1 + $0xac0] sm:$0xff]
    %v374 = vld [vmem:[%s1 + $0xac8] sm:$0xff]
    %v375 = vld [vmem:[%s1 + $0xad0] sm:$0xff]
    %v376 = vld [vmem:[%s1 + $0xad8] sm:$0xff]
    %v377 = vld [vmem:[%s1 + $0xae0] sm:$0xff]
    %v378 = vld [vmem:[%s1 + $0xae8] sm:$0xff]
    %v379 = vld [vmem:[%s1 + $0xaf0] sm:$0xff]
    %v380 = vld [vmem:[%s1 + $0xaf8] sm:$0xff]
    %v381 = vld [vmem:[%s1 + $0xb00] sm:$0xff]
    %v382 = vld [vmem:[%s1 + $0xb08] sm:$0xff]
    %v383 = vld [vmem:[%s1 + $0xb10] sm:$0xff]
    %v384 = vld [vmem:[%s1 + $0xb18] sm:$0xff]
    %v385 = vld [vmem:[%s1 + $0xb20] sm:$0xff]
    %v386 = vld [vmem:[%s1 + $0xb28] sm:$0xff]
    %v387 = vld [vmem:[%s1 + $0xb30] sm:$0xff]
    %v388 = vld [vmem:[%s1 + $0xb38] sm:$0xff]
    %v389 = vld [vmem:[%s1 + $0xb40] sm:$0xff]
    %v390 = vld [vmem:[%s1 + $0xb48] sm:$0xff]
    %v391 = vld [vmem:[%s1 + $0xb50] sm:$0xff]
    %v392 = vld [vmem:[%s1 + $0xb58] sm:$0xff]
    %v393 = vld [vmem:[%s1 + $0xb60] sm:$0xff]
    %v394 = vld [vmem:[%s1 + $0xb68] sm:$0xff]
    %v395 = vld [vmem:[%s1 + $0xb70] sm:$0xff]
    %v396 = vld [vmem:[%s1 + $0xb78] sm:$0xff]
    %v397 = vld [vmem:[%s1 + $0xb80] sm:$0xff]
    %v398 = vld [vmem:[%s1 + $0xb88] sm:$0xff]
    %v399 = vld [vmem:[%s1 + $0xb90] sm:$0xff]
    %v400 = vld [vmem:[%s1 + $0xb98] sm:$0xff]
    %v401 = vld [vmem:[%s1 + $0xba0] sm:$0xff]
    %v402 = vld [vmem:[%s1 + $0xba8] sm:$0xff]
    %v403 = vld [vmem:[%s1 + $0xbb0] sm:$0xff]
    %v404 = vld [vmem:[%s1 + $0xbb8] sm:$0xff]
    %v405 = vld [vmem:[%s1 + $0xbc0] sm:$0xff]
    %v406 = vld [vmem:[%s1 + $0xbc8] sm:$0xff]
    %v407 = vld [vmem:[%s1 + $0xbd0] sm:$0xff]
    %v408 = vld [vmem:[%s1 + $0xbd8] sm:$0xff]
    %v409 = vld [vmem:[%s1 + $0xbe0] sm:$0xff]
    %v410 = vld [vmem:[%s1 + $0xbe8] sm:$0xff]
    %v411 = vld [vmem:[%s1 + $0xbf0] sm:$0xff]
    %v412 = vld [vmem:[%s1 + $0xbf8] sm:$0xff]
    %v413 = vld [vmem:[%s1 + $0xc00] sm:$0xff]
    %v414 = vld [vmem:[%s1 + $0xc08] sm:$0xff]
    %v415 = vld [vmem:[%s1 + $0xc10] sm:$0xff]
    %v416 = vld [vmem:[%s1 + $0xc18] sm:$0xff]
    %v417 = vld [vmem:[%s1 + $0xc20] sm:$0xff]
    %v418 = vld [vmem:[%s1 + $0xc28] sm:$0xff]
    %v419 = vld [vmem:[%s1 + $0xc30] sm:$0xff]
    %v420 = vld [vmem:[%s1 + $0xc38] sm:$0xff]
    %v421 = vld [vmem:[%s1 + $0xc40] sm:$0xff]
    %v422 = vld [vmem:[%s1 + $0xc48] sm:$0xff]
    %v423 = vld [vmem:[%s1 + $0xc50] sm:$0xff]
    %v424 = vld [vmem:[%s1 + $0xc58] sm:$0xff]
    %v425 = vld [vmem:[%s1 + $0xc60] sm:$0xff]
    %v426 = vld [vmem:[%s1 + $0xc68] sm:$0xff]
    %v427 = vld [vmem:[%s1 + $0xc70] sm:$0xff]
    %v428 = vld [vmem:[%s1 + $0xc78] sm:$0xff]
    %v429 = vld [vmem:[%s1 + $0xc80] sm:$0xff]
    %v430 = vld [vmem:[%s1 + $0xc88] sm:$0xff]
    %v431 = vld [vmem:[%s1 + $0xc90] sm:$0xff]
    %v432 = vld [vmem:[%s1 + $0xc98] sm:$0xff]
    %v433 = vld [vmem:[%s1 + $0xca0] sm:$0xff]
    %v434 = vld [vmem:[%s1 + $0xca8] sm:$0xff]
    %v435 = vld [vmem:[%s1 + $0xcb0] sm:$0xff]
    %v436 = vld [vmem:[%s1 + $0xcb8] sm:$0xff]
    %v437 = vld [vmem:[%s1 + $0xcc0] sm:$0xff]
    %v438 = vld [vmem:[%s1 + $0xcc8] sm:$0xff]
    %v439 = vld [vmem:[%s1 + $0xcd0] sm:$0xff]
    %v440 = vld [vmem:[%s1 + $0xcd8] sm:$0xff]
    %v441 = vld [vmem:[%s1 + $0xce0] sm:$0xff]
    %v442 = vld [vmem:[%s1 + $0xce8] sm:$0xff]
    %v443 = vld [vmem:[%s1 + $0xcf0] sm:$0xff]
    %v444 = vld [vmem:[%s1 + $0xcf8] sm:$0xff]
    %v445 = vld [vmem:[%s1 + $0xd00] sm:$0xff]
    %v446 = vld [vmem:[%s1 + $0xd08] sm:$0xff]
    %v447 = vld [vmem:[%s1 + $0xd10] sm:$0xff]
    %v448 = vld [vmem:[%s1 + $0xd18] sm:$0xff]
    %v449 = vld [vmem:[%s1 + $0xd20] sm:$0xff]
    %v450 = vld [vmem:[%s1 + $0xd28] sm:$0xff]
    %v451 = vld [vmem:[%s1 + $0xd30] sm:$0xff]
    %v452 = vld [vmem:[%s1 + $0xd38] sm:$0xff]
    %v453 = vld [vmem:[%s1 + $0xd40] sm:$0xff]
    %v454 = vld [vmem:[%s1 + $0xd48] sm:$0xff]
    %v455 = vld [vmem:[%s1 + $0xd50] sm:$0xff]
    %v456 = vld [vmem:[%s1 + $0xd58] sm:$0xff]
    %v457 = vld [vmem:[%s1 + $0xd60] sm:$0xff]
    %v458 = vld [vmem:[%s1 + $0xd68] sm:$0xff]
    %v459 = vld [vmem:[%s1 + $0xd70] sm:$0xff]
    %v460 = vld [vmem:[%s1 + $0xd78] sm:$0xff]
    %v461 = vld [vmem:[%s1 + $0xd80] sm:$0xff]
    %v462 = vld [vmem:[%s1 + $0xd88] sm:$0xff]
    %v463 = vld [vmem:[%s1 + $0xd90] sm:$0xff]
    %v464 = vld [vmem:[%s1 + $0xd98] sm:$0xff]
    %v465 = vld [vmem:[%s1 + $0xda0] sm:$0xff]
    %v466 = vld [vmem:[%s1 + $0xda8] sm:$0xff]
    %v467 = vld [vmem:[%s1 + $0xdb0] sm:$0xff]
    %v468 = vld [vmem:[%s1 + $0xdb8] sm:$0xff]
    %v469 = vld [vmem:[%s1 + $0xdc0] sm:$0xff]
    %v470 = vld [vmem:[%s1 + $0xdc8] sm:$0xff]
    %v471 = vld [vmem:[%s1 + $0xdd0] sm:$0xff]
    %v472 = vld [vmem:[%s1 + $0xdd8] sm:$0xff]
    %v473 = vld [vmem:[%s1 + $0xde0] sm:$0xff]
    %v474 = vld [vmem:[%s1 + $0xde8] sm:$0xff]
    %v475 = vld [vmem:[%s1 + $0xdf0] sm:$0xff]
    %v476 = vld [vmem:[%s1 + $0xdf8] sm:$0xff]
    %v477 = vld [vmem:[%s1 + $0xe00] sm:$0xff]
    %v478 = vld [vmem:[%s1 + $0xe08] sm:$0xff]
    %v479 = vld [vmem:[%s1 + $0xe10] sm:$0xff]
    %v480 = vld [vmem:[%s1 + $0xe18] sm:$0xff]
    %v481 = vld [vmem:[%s1 + $0xe20] sm:$0xff]
    %v482 = vld [vmem:[%s1 + $0xe28] sm:$0xff]
    %v483 = vld [vmem:[%s1 + $0xe30] sm:$0xff]
    %v484 = vld [vmem:[%s1 + $0xe38] sm:$0xff]
    %v485 = vld [vmem:[%s1 + $0xe40] sm:$0xff]
    %v486 = vld [vmem:[%s1 + $0xe48] sm:$0xff]
    %v487 = vld [vmem:[%s1 + $0xe50] sm:$0xff]
    %v488 = vld [vmem:[%s1 + $0xe58] sm:$0xff]
    %v489 = vld [vmem:[%s1 + $0xe60] sm:$0xff]
    %v490 = vld [vmem:[%s1 + $0xe68] sm:$0xff]
    %v491 = vld [vmem:[%s1 + $0xe70] sm:$0xff]
    %v492 = vld [vmem:[%s1 + $0xe78] sm:$0xff]
    %v493 = vld [vmem:[%s1 + $0xe80] sm:$0xff]
    %v494 = vld [vmem:[%s1 + $0xe88] sm:$0xff]
    %v495 = vld [vmem:[%s1 + $0xe90] sm:$0xff]
    %v496 = vld [vmem:[%s1 + $0xe98] sm:$0xff]
    %v497 = vld [vmem:[%s1 + $0xea0] sm:$0xff]
    %v498 = vld [vmem:[%s1 + $0xea8] sm:$0xff]
    %v499 = vld [vmem:[%s1 + $0xeb0] sm:$0xff]
    %v500 = vld [vmem:[%s1 + $0xeb8] sm:$0xff]
    %v501 = vld [vmem:[%s1 + $0xec0] sm:$0xff]
    %v502 = vld [vmem:[%s1 + $0xec8] sm:$0xff]
    %v503 = vld [vmem:[%s1 + $0xed0] sm:$0xff]
    %v504 = vld [vmem:[%s1 + $0xed8] sm:$0xff]
    %v505 = vld [vmem:[%s1 + $0xee0] sm:$0xff]
    %v506 = vld [vmem:[%s1 + $0xee8] sm:$0xff]
    %v507 = vld [vmem:[%s1 + $0xef0] sm:$0xff]
    %v508 = vld [vmem:[%s1 + $0xef8] sm:$0xff]
    %v509 = vld [vmem:[%s1 + $0xf00] sm:$0xff]
    %v510 = vld [vmem:[%s1 + $0xf08] sm:$0xff]
    %v511 = vld [vmem:[%s1 + $0xf10] sm:$0xff]
    %v512 = vld [vmem:[%s1 + $0xf18] sm:$0xff]
    %v513 = vld [vmem:[%s1 + $0xf20] sm:$0xff]
    %v514 = vld [vmem:[%s1 + $0xf28] sm:$0xff]
    %v515 = vld [vmem:[%s1 + $0xf30] sm:$0xff]
    %v516 = vld [vmem:[%s1 + $0xf38] sm:$0xff]
    %v517 = vld [vmem:[%s1 + $0xf40] sm:$0xff]
    %v518 = vld [vmem:[%s1 + $0xf48] sm:$0xff]
    %v519 = vld [vmem:[%s1 + $0xf50] sm:$0xff]
    %v520 = vld [vmem:[%s1 + $0xf58] sm:$0xff]
    %v521 = vld [vmem:[%s1 + $0xf60] sm:$0xff]
    %v522 = vld [vmem:[%s1 + $0xf68] sm:$0xff]
    %v523 = vld [vmem:[%s1 + $0xf70] sm:$0xff]
    %v524 = vld [vmem:[%s1 + $0xf78] sm:$0xff]
    %v525 = vld [vmem:[%s1 + $0xf80] sm:$0xff]
    %v526 = vld [vmem:[%s1 + $0xf88] sm:$0xff]
    %v527 = vld [vmem:[%s1 + $0xf90] sm:$0xff]
    %v528 = vld [vmem:[%s1 + $0xf98] sm:$0xff]
    %v529 = vld [vmem:[%s1 + $0xfa0] sm:$0xff]
    %v530 = vld [vmem:[%s1 + $0xfa8] sm:$0xff]
    %v531 = vld [vmem:[%s1 + $0xfb0] sm:$0xff]
    %v532 = vld [vmem:[%s1 + $0xfb8] sm:$0xff]
    %v533 = vld [vmem:[%s1 + $0xfc0] sm:$0xff]
    %v534 = vld [vmem:[%s1 + $0xfc8] sm:$0xff]
    %v535 = vld [vmem:[%s1 + $0xfd0] sm:$0xff]
    %v536 = vld [vmem:[%s1 + $0xfd8] sm:$0xff]
    %v537 = vld [vmem:[%s1 + $0xfe0] sm:$0xff]
    %v538 = vld [vmem:[%s1 + $0xfe8] sm:$0xff]
    %v539 = vld [vmem:[%s1 + $0xff0] sm:$0xff]
    %v540 = vld [vmem:[%s1 + $0xff8] sm:$0xff]
    %v541 = vld [vmem:[%s2] sm:$0x1]
    %v543 = vlaneseq
    %v544 = vshrl.u32 %v543, 7
    %v545 = vsub.s32 0, %v544
    %v546 = vrot.slane %v541, %v545
    %v556 = vcombine.high %v21, %v21
    %v558 = vunpack.c.l.s4 1983009808
    %v559 = vunpack.c.0.s8 %v558
    %v560 = vlaneseq
    %v561 = vshrl.u32 %v560, 7
    %v562 = vsub.s32 %v559, %v561
    %v563 = vrot.slane %v21, %v562
    %v565 = vunpack.c.l.s4 1983009808
    %v566 = vunpack.c.0.s8 %v565
    %v567 = vlaneseq
    %v568 = vshrl.u32 %v567, 7
    %v569 = vsub.s32 %v566, %v568
    %v570 = vrot.slane %v556, %v569
    %v571 = vcombine.high %v563, %v563
    %v572 = vcombine.high %v570, %v570
    %v573 = vcombine.high %v22, %v22
    %v575 = vunpack.c.l.s4 1983009808
    %v576 = vunpack.c.0.s8 %v575
    %v577 = vlaneseq
    %v578 = vshrl.u32 %v577, 7
    %v579 = vsub.s32 %v576, %v578
    %v580 = vrot.slane %v22, %v579
    %v582 = vunpack.c.l.s4 1983009808
    %v583 = vunpack.c.0.s8 %v582
    %v584 = vlaneseq
    %v585 = vshrl.u32 %v584, 7
    %v586 = vsub.s32 %v583, %v585
    %v587 = vrot.slane %v573, %v586
    %v588 = vcombine.high %v580, %v580
    %v589 = vcombine.high %v587, %v587
    %v590 = vcombine.high %v23, %v23
    %v592 = vunpack.c.l.s4 1983009808
    %v593 = vunpack.c.0.s8 %v592
    %v594 = vlaneseq
    %v595 = vshrl.u32 %v594, 7
    %v596 = vsub.s32 %v593, %v595
    %v597 = vrot.slane %v23, %v596
    %v599 = vunpack.c.l.s4 1983009808
    %v600 = vunpack.c.0.s8 %v599
    %v601 = vlaneseq
    %v602 = vshrl.u32 %v601, 7
    %v603 = vsub.s32 %v600, %v602
    %v604 = vrot.slane %v590, %v603
    %v605 = vcombine.high %v597, %v597
    %v606 = vcombine.high %v604, %v604
    %v607 = vcombine.high %v24, %v24
    %v609 = vunpack.c.l.s4 1983009808
    %v610 = vunpack.c.0.s8 %v609
    %v611 = vlaneseq
    %v612 = vshrl.u32 %v611, 7
    %v613 = vsub.s32 %v610, %v612
    %v614 = vrot.slane %v24, %v613
    %v616 = vunpack.c.l.s4 1983009808
    %v617 = vunpack.c.0.s8 %v616
    %v618 = vlaneseq
    %v619 = vshrl.u32 %v618, 7
    %v620 = vsub.s32 %v617, %v619
    %v621 = vrot.slane %v607, %v620
    %v622 = vcombine.high %v614, %v614
    %v623 = vcombine.high %v621, %v621
    %v624 = vcombine.high %v25, %v25
    %v626 = vunpack.c.l.s4 1983009808
    %v627 = vunpack.c.0.s8 %v626
    %v628 = vlaneseq
    %v629 = vshrl.u32 %v628, 7
    %v630 = vsub.s32 %v627, %v629
    %v631 = vrot.slane %v25, %v630
    %v633 = vunpack.c.l.s4 1983009808
    %v634 = vunpack.c.0.s8 %v633
    %v635 = vlaneseq
    %v636 = vshrl.u32 %v635, 7
    %v637 = vsub.s32 %v634, %v636
    %v638 = vrot.slane %v624, %v637
    %v639 = vcombine.high %v631, %v631
    %v640 = vcombine.high %v638, %v638
    %v641 = vcombine.high %v26, %v26
    %v643 = vunpack.c.l.s4 1983009808
    %v644 = vunpack.c.0.s8 %v643
    %v645 = vlaneseq
    %v646 = vshrl.u32 %v645, 7
    %v647 = vsub.s32 %v644, %v646
    %v648 = vrot.slane %v26, %v647
    %v650 = vunpack.c.l.s4 1983009808
    %v651 = vunpack.c.0.s8 %v650
    %v652 = vlaneseq
    %v653 = vshrl.u32 %v652, 7
    %v654 = vsub.s32 %v651, %v653
    %v655 = vrot.slane %v641, %v654
    %v656 = vcombine.high %v648, %v648
    %v657 = vcombine.high %v655, %v655
    %v658 = vcombine.high %v27, %v27
    %v660 = vunpack.c.l.s4 1983009808
    %v661 = vunpack.c.0.s8 %v660
    %v662 = vlaneseq
    %v663 = vshrl.u32 %v662, 7
    %v664 = vsub.s32 %v661, %v663
    %v665 = vrot.slane %v27, %v664
    %v667 = vunpack.c.l.s4 1983009808
    %v668 = vunpack.c.0.s8 %v667
    %v669 = vlaneseq
    %v670 = vshrl.u32 %v669, 7
    %v671 = vsub.s32 %v668, %v670
    %v672 = vrot.slane %v658, %v671
    %v673 = vcombine.high %v665, %v665
    %v674 = vcombine.high %v672, %v672
    %v675 = vcombine.high %v28, %v28
    %v677 = vunpack.c.l.s4 1983009808
    %v678 = vunpack.c.0.s8 %v677
    %v679 = vlaneseq
    %v680 = vshrl.u32 %v679, 7
    %v681 = vsub.s32 %v678, %v680
    %v682 = vrot.slane %v28, %v681
    %v684 = vunpack.c.l.s4 1983009808
    %v685 = vunpack.c.0.s8 %v684
    %v686 = vlaneseq
    %v687 = vshrl.u32 %v686, 7
    %v688 = vsub.s32 %v685, %v687
    %v689 = vrot.slane %v675, %v688
    %v690 = vcombine.high %v682, %v682
    %v691 = vcombine.high %v689, %v689
    %724 = vmatprep.subr.mxu0 0.0
    %725 = vmatpush1.msra.mxu0 %v44
    %726 = vmatprep.subr.mxu0 0.0
    %727 = vmatpush1.msra.mxu0 %v43
    %728 = vmatprep.subr.mxu0 0.0
    %729 = vmatpush1.msra.mxu0 %v42
    %730 = vmatprep.subr.mxu0 0.0
    %731 = vmatpush1.msra.mxu0 %v41
    %732 = vmatprep.subr.mxu0 0.0
    %733 = vmatpush1.msra.mxu0 %v40
    %734 = vmatprep.subr.mxu0 0.0
    %735 = vmatpush1.msra.mxu0 %v39
    %736 = vmatprep.subr.mxu0 0.0
    %737 = vmatpush1.msra.mxu0 %v38
    %738 = vmatprep.subr.mxu0 0.0
    %739 = vmatpush1.msra.mxu0 %v37
    %740 = vmatprep.subr.mxu0 0.0
    %741 = vmatpush1.msra.mxu0 %v36
    %742 = vmatprep.subr.mxu0 0.0
    %743 = vmatpush1.msra.mxu0 %v35
    %744 = vmatprep.subr.mxu0 0.0
    %745 = vmatpush1.msra.mxu0 %v34
    %746 = vmatprep.subr.mxu0 0.0
    %747 = vmatpush1.msra.mxu0 %v33
    %748 = vmatprep.subr.mxu0 0.0
    %749 = vmatpush1.msra.mxu0 %v32
    %750 = vmatprep.subr.mxu0 0.0
    %751 = vmatpush1.msra.mxu0 %v31
    %752 = vmatprep.subr.mxu0 0.0
    %753 = vmatpush1.msra.mxu0 %v30
    %754 = vmatprep.subr.mxu0 0.0
    %755 = vmatpush1.msra.mxu0 %v29
    %756 = vmatprep.subr.mxu0 0.0
    %757 = vmatpush2.msra.mxu0 %v60
    %758 = vmatprep.subr.mxu0 0.0
    %759 = vmatpush2.msra.mxu0 %v59
    %760 = vmatprep.subr.mxu0 0.0
    %761 = vmatpush2.msra.mxu0 %v58
    %762 = vmatprep.subr.mxu0 0.0
    %763 = vmatpush2.msra.mxu0 %v57
    %764 = vmatprep.subr.mxu0 0.0
    %765 = vmatpush2.msra.mxu0 %v56
    %766 = vmatprep.subr.mxu0 0.0
    %767 = vmatpush2.msra.mxu0 %v55
    %768 = vmatprep.subr.mxu0 0.0
    %769 = vmatpush2.msra.mxu0 %v54
    %770 = vmatprep.subr.mxu0 0.0
    %771 = vmatpush2.msra.mxu0 %v53
    %772 = vmatprep.subr.mxu0 0.0
    %773 = vmatpush2.msra.mxu0 %v52
    %774 = vmatprep.subr.mxu0 0.0
    %775 = vmatpush2.msra.mxu0 %v51
    %776 = vmatprep.subr.mxu0 0.0
    %777 = vmatpush2.msra.mxu0 %v50
    %778 = vmatprep.subr.mxu0 0.0
    %779 = vmatpush2.msra.mxu0 %v49
    %780 = vmatprep.subr.mxu0 0.0
    %781 = vmatpush2.msra.mxu0 %v48
    %782 = vmatprep.subr.mxu0 0.0
    %783 = vmatpush2.msra.mxu0 %v47
    %784 = vmatprep.subr.mxu0 0.0
    %785 = vmatpush2.msra.mxu0 %v46
    %786 = vmatprep.subr.mxu0 0.0
    %787 = vmatpush2.msra.mxu0 %v45
    %788 = vmatprep.mubr.f32.mxu0 %v571
    %789 = vmatmul.mubr.f32.gmra.mxu0 %v563
    %v790 = vpop.f32.mrf.mxu0
    %v791 = vadd.f32 %v546, %v790
    %v792 = vpop.f32.mrf.mxu0
    %793 = vdwg.mxu0
    %794 = vmatprep.subr.mxu0 0.0
    %795 = vmatpush1.msra.mxu0 %v76
    %796 = vmatprep.subr.mxu0 0.0
    %797 = vmatpush1.msra.mxu0 %v75
    %798 = vmatprep.subr.mxu0 0.0
    %799 = vmatpush1.msra.mxu0 %v74
    %800 = vmatprep.subr.mxu0 0.0
    %801 = vmatpush1.msra.mxu0 %v73
    %802 = vmatprep.subr.mxu0 0.0
    %803 = vmatpush1.msra.mxu0 %v72
    %804 = vmatprep.subr.mxu0 0.0
    %805 = vmatpush1.msra.mxu0 %v71
    %806 = vmatprep.subr.mxu0 0.0
    %807 = vmatpush1.msra.mxu0 %v70
    %808 = vmatprep.subr.mxu0 0.0
    %809 = vmatpush1.msra.mxu0 %v69
    %810 = vmatprep.subr.mxu0 0.0
    %811 = vmatpush1.msra.mxu0 %v68
    %812 = vmatprep.subr.mxu0 0.0
    %813 = vmatpush1.msra.mxu0 %v67
    %814 = vmatprep.subr.mxu0 0.0
    %815 = vmatpush1.msra.mxu0 %v66
    %816 = vmatprep.subr.mxu0 0.0
    %817 = vmatpush1.msra.mxu0 %v65
    %818 = vmatprep.subr.mxu0 0.0
    %819 = vmatpush1.msra.mxu0 %v64
    %820 = vmatprep.subr.mxu0 0.0
    %821 = vmatpush1.msra.mxu0 %v63
    %822 = vmatprep.subr.mxu0 0.0
    %823 = vmatpush1.msra.mxu0 %v62
    %824 = vmatprep.subr.mxu0 0.0
    %825 = vmatpush1.msra.mxu0 %v61
    %826 = vmatprep.subr.mxu0 0.0
    %827 = vmatpush2.msra.mxu0 %v92
    %828 = vmatprep.subr.mxu0 0.0
    %829 = vmatpush2.msra.mxu0 %v91
    %830 = vmatprep.subr.mxu0 0.0
    %831 = vmatpush2.msra.mxu0 %v90
    %832 = vmatprep.subr.mxu0 0.0
    %833 = vmatpush2.msra.mxu0 %v89
    %834 = vmatprep.subr.mxu0 0.0
    %835 = vmatpush2.msra.mxu0 %v88
    %836 = vmatprep.subr.mxu0 0.0
    %837 = vmatpush2.msra.mxu0 %v87
    %838 = vmatprep.subr.mxu0 0.0
    %839 = vmatpush2.msra.mxu0 %v86
    %840 = vmatprep.subr.mxu0 0.0
    %841 = vmatpush2.msra.mxu0 %v85
    %842 = vmatprep.subr.mxu0 0.0
    %843 = vmatpush2.msra.mxu0 %v84
    %844 = vmatprep.subr.mxu0 0.0
    %845 = vmatpush2.msra.mxu0 %v83
    %846 = vmatprep.subr.mxu0 0.0
    %847 = vmatpush2.msra.mxu0 %v82
    %848 = vmatprep.subr.mxu0 0.0
    %849 = vmatpush2.msra.mxu0 %v81
    %850 = vmatprep.subr.mxu0 0.0
    %851 = vmatpush2.msra.mxu0 %v80
    %852 = vmatprep.subr.mxu0 0.0
    %853 = vmatpush2.msra.mxu0 %v79
    %854 = vmatprep.subr.mxu0 0.0
    %855 = vmatpush2.msra.mxu0 %v78
    %856 = vmatprep.subr.mxu0 0.0
    %857 = vmatpush2.msra.mxu0 %v77
    %858 = vmatprep.mubr.f32.mxu0 %v572
    %859 = vmatmul.mubr.f32.gmra.mxu0 %v570
    %v860 = vpop.f32.mrf.mxu0
    %v861 = vadd.f32 %v791, %v860
    %v862 = vpop.f32.mrf.mxu0
    %863 = vdwg.mxu0
    %864 = vmatprep.subr.mxu0 0.0
    %865 = vmatpush1.msra.mxu0 %v108
    %866 = vmatprep.subr.mxu0 0.0
    %867 = vmatpush1.msra.mxu0 %v107
    %868 = vmatprep.subr.mxu0 0.0
    %869 = vmatpush1.msra.mxu0 %v106
    %870 = vmatprep.subr.mxu0 0.0
    %871 = vmatpush1.msra.mxu0 %v105
    %872 = vmatprep.subr.mxu0 0.0
    %873 = vmatpush1.msra.mxu0 %v104
    %874 = vmatprep.subr.mxu0 0.0
    %875 = vmatpush1.msra.mxu0 %v103
    %876 = vmatprep.subr.mxu0 0.0
    %877 = vmatpush1.msra.mxu0 %v102
    %878 = vmatprep.subr.mxu0 0.0
    %879 = vmatpush1.msra.mxu0 %v101
    %880 = vmatprep.subr.mxu0 0.0
    %881 = vmatpush1.msra.mxu0 %v100
    %882 = vmatprep.subr.mxu0 0.0
    %883 = vmatpush1.msra.mxu0 %v99
    %884 = vmatprep.subr.mxu0 0.0
    %885 = vmatpush1.msra.mxu0 %v98
    %886 = vmatprep.subr.mxu0 0.0
    %887 = vmatpush1.msra.mxu0 %v97
    %888 = vmatprep.subr.mxu0 0.0
    %889 = vmatpush1.msra.mxu0 %v96
    %890 = vmatprep.subr.mxu0 0.0
    %891 = vmatpush1.msra.mxu0 %v95
    %892 = vmatprep.subr.mxu0 0.0
    %893 = vmatpush1.msra.mxu0 %v94
    %894 = vmatprep.subr.mxu0 0.0
    %895 = vmatpush1.msra.mxu0 %v93
    %896 = vmatprep.subr.mxu0 0.0
    %897 = vmatpush2.msra.mxu0 %v124
    %898 = vmatprep.subr.mxu0 0.0
    %899 = vmatpush2.msra.mxu0 %v123
    %900 = vmatprep.subr.mxu0 0.0
    %901 = vmatpush2.msra.mxu0 %v122
    %902 = vmatprep.subr.mxu0 0.0
    %903 = vmatpush2.msra.mxu0 %v121
    %904 = vmatprep.subr.mxu0 0.0
    %905 = vmatpush2.msra.mxu0 %v120
    %906 = vmatprep.subr.mxu0 0.0
    %907 = vmatpush2.msra.mxu0 %v119
    %908 = vmatprep.subr.mxu0 0.0
    %909 = vmatpush2.msra.mxu0 %v118
    %910 = vmatprep.subr.mxu0 0.0
    %911 = vmatpush2.msra.mxu0 %v117
    %912 = vmatprep.subr.mxu0 0.0
    %913 = vmatpush2.msra.mxu0 %v116
    %914 = vmatprep.subr.mxu0 0.0
    %915 = vmatpush2.msra.mxu0 %v115
    %916 = vmatprep.subr.mxu0 0.0
    %917 = vmatpush2.msra.mxu0 %v114
    %918 = vmatprep.subr.mxu0 0.0
    %919 = vmatpush2.msra.mxu0 %v113
    %920 = vmatprep.subr.mxu0 0.0
    %921 = vmatpush2.msra.mxu0 %v112
    %922 = vmatprep.subr.mxu0 0.0
    %923 = vmatpush2.msra.mxu0 %v111
    %924 = vmatprep.subr.mxu0 0.0
    %925 = vmatpush2.msra.mxu0 %v110
    %926 = vmatprep.subr.mxu0 0.0
    %927 = vmatpush2.msra.mxu0 %v109
    %928 = vmatprep.mubr.f32.mxu0 %v588
    %929 = vmatmul.mubr.f32.gmra.mxu0 %v580
    %v930 = vpop.f32.mrf.mxu0
    %v931 = vadd.f32 %v861, %v930
    %v932 = vpop.f32.mrf.mxu0
    %933 = vdwg.mxu0
    %934 = vmatprep.subr.mxu0 0.0
    %935 = vmatpush1.msra.mxu0 %v140
    %936 = vmatprep.subr.mxu0 0.0
    %937 = vmatpush1.msra.mxu0 %v139
    %938 = vmatprep.subr.mxu0 0.0
    %939 = vmatpush1.msra.mxu0 %v138
    %940 = vmatprep.subr.mxu0 0.0
    %941 = vmatpush1.msra.mxu0 %v137
    %942 = vmatprep.subr.mxu0 0.0
    %943 = vmatpush1.msra.mxu0 %v136
    %944 = vmatprep.subr.mxu0 0.0
    %945 = vmatpush1.msra.mxu0 %v135
    %946 = vmatprep.subr.mxu0 0.0
    %947 = vmatpush1.msra.mxu0 %v134
    %948 = vmatprep.subr.mxu0 0.0
    %949 = vmatpush1.msra.mxu0 %v133
    %950 = vmatprep.subr.mxu0 0.0
    %951 = vmatpush1.msra.mxu0 %v132
    %952 = vmatprep.subr.mxu0 0.0
    %953 = vmatpush1.msra.mxu0 %v131
    %954 = vmatprep.subr.mxu0 0.0
    %955 = vmatpush1.msra.mxu0 %v130
    %956 = vmatprep.subr.mxu0 0.0
    %957 = vmatpush1.msra.mxu0 %v129
    %958 = vmatprep.subr.mxu0 0.0
    %959 = vmatpush1.msra.mxu0 %v128
    %960 = vmatprep.subr.mxu0 0.0
    %961 = vmatpush1.msra.mxu0 %v127
    %962 = vmatprep.subr.mxu0 0.0
    %963 = vmatpush1.msra.mxu0 %v126
    %964 = vmatprep.subr.mxu0 0.0
    %965 = vmatpush1.msra.mxu0 %v125
    %966 = vmatprep.subr.mxu0 0.0
    %967 = vmatpush2.msra.mxu0 %v156
    %968 = vmatprep.subr.mxu0 0.0
    %969 = vmatpush2.msra.mxu0 %v155
    %970 = vmatprep.subr.mxu0 0.0
    %971 = vmatpush2.msra.mxu0 %v154
    %972 = vmatprep.subr.mxu0 0.0
    %973 = vmatpush2.msra.mxu0 %v153
    %974 = vmatprep.subr.mxu0 0.0
    %975 = vmatpush2.msra.mxu0 %v152
    %976 = vmatprep.subr.mxu0 0.0
    %977 = vmatpush2.msra.mxu0 %v151
    %978 = vmatprep.subr.mxu0 0.0
    %979 = vmatpush2.msra.mxu0 %v150
    %980 = vmatprep.subr.mxu0 0.0
    %981 = vmatpush2.msra.mxu0 %v149
    %982 = vmatprep.subr.mxu0 0.0
    %983 = vmatpush2.msra.mxu0 %v148
    %984 = vmatprep.subr.mxu0 0.0
    %985 = vmatpush2.msra.mxu0 %v147
    %986 = vmatprep.subr.mxu0 0.0
    %987 = vmatpush2.msra.mxu0 %v146
    %988 = vmatprep.subr.mxu0 0.0
    %989 = vmatpush2.msra.mxu0 %v145
    %990 = vmatprep.subr.mxu0 0.0
    %991 = vmatpush2.msra.mxu0 %v144
    %992 = vmatprep.subr.mxu0 0.0
    %993 = vmatpush2.msra.mxu0 %v143
    %994 = vmatprep.subr.mxu0 0.0
    %995 = vmatpush2.msra.mxu0 %v142
    %996 = vmatprep.subr.mxu0 0.0
    %997 = vmatpush2.msra.mxu0 %v141
    %998 = vmatprep.mubr.f32.mxu0 %v589
    %999 = vmatmul.mubr.f32.gmra.mxu0 %v587
    %v1000 = vpop.f32.mrf.mxu0
    %v1001 = vadd.f32 %v931, %v1000
    %v1002 = vpop.f32.mrf.mxu0
    %1003 = vdwg.mxu0
    %1004 = vmatprep.subr.mxu0 0.0
    %1005 = vmatpush1.msra.mxu0 %v172
    %1006 = vmatprep.subr.mxu0 0.0
    %1007 = vmatpush1.msra.mxu0 %v171
    %1008 = vmatprep.subr.mxu0 0.0
    %1009 = vmatpush1.msra.mxu0 %v170
    %1010 = vmatprep.subr.mxu0 0.0
    %1011 = vmatpush1.msra.mxu0 %v169
    %1012 = vmatprep.subr.mxu0 0.0
    %1013 = vmatpush1.msra.mxu0 %v168
    %1014 = vmatprep.subr.mxu0 0.0
    %1015 = vmatpush1.msra.mxu0 %v167
    %1016 = vmatprep.subr.mxu0 0.0
    %1017 = vmatpush1.msra.mxu0 %v166
    %1018 = vmatprep.subr.mxu0 0.0
    %1019 = vmatpush1.msra.mxu0 %v165
    %1020 = vmatprep.subr.mxu0 0.0
    %1021 = vmatpush1.msra.mxu0 %v164
    %1022 = vmatprep.subr.mxu0 0.0
    %1023 = vmatpush1.msra.mxu0 %v163
    %1024 = vmatprep.subr.mxu0 0.0
    %1025 = vmatpush1.msra.mxu0 %v162
    %1026 = vmatprep.subr.mxu0 0.0
    %1027 = vmatpush1.msra.mxu0 %v161
    %1028 = vmatprep.subr.mxu0 0.0
    %1029 = vmatpush1.msra.mxu0 %v160
    %1030 = vmatprep.subr.mxu0 0.0
    %1031 = vmatpush1.msra.mxu0 %v159
    %1032 = vmatprep.subr.mxu0 0.0
    %1033 = vmatpush1.msra.mxu0 %v158
    %1034 = vmatprep.subr.mxu0 0.0
    %1035 = vmatpush1.msra.mxu0 %v157
    %1036 = vmatprep.subr.mxu0 0.0
    %1037 = vmatpush2.msra.mxu0 %v188
    %1038 = vmatprep.subr.mxu0 0.0
    %1039 = vmatpush2.msra.mxu0 %v187
    %1040 = vmatprep.subr.mxu0 0.0
    %1041 = vmatpush2.msra.mxu0 %v186
    %1042 = vmatprep.subr.mxu0 0.0
    %1043 = vmatpush2.msra.mxu0 %v185
    %1044 = vmatprep.subr.mxu0 0.0
    %1045 = vmatpush2.msra.mxu0 %v184
    %1046 = vmatprep.subr.mxu0 0.0
    %1047 = vmatpush2.msra.mxu0 %v183
    %1048 = vmatprep.subr.mxu0 0.0
    %1049 = vmatpush2.msra.mxu0 %v182
    %1050 = vmatprep.subr.mxu0 0.0
    %1051 = vmatpush2.msra.mxu0 %v181
    %1052 = vmatprep.subr.mxu0 0.0
    %1053 = vmatpush2.msra.mxu0 %v180
    %1054 = vmatprep.subr.mxu0 0.0
    %1055 = vmatpush2.msra.mxu0 %v179
    %1056 = vmatprep.subr.mxu0 0.0
    %1057 = vmatpush2.msra.mxu0 %v178
    %1058 = vmatprep.subr.mxu0 0.0
    %1059 = vmatpush2.msra.mxu0 %v177
    %1060 = vmatprep.subr.mxu0 0.0
    %1061 = vmatpush2.msra.mxu0 %v176
    %1062 = vmatprep.subr.mxu0 0.0
    %1063 = vmatpush2.msra.mxu0 %v175
    %1064 = vmatprep.subr.mxu0 0.0
    %1065 = vmatpush2.msra.mxu0 %v174
    %1066 = vmatprep.subr.mxu0 0.0
    %1067 = vmatpush2.msra.mxu0 %v173
    %1068 = vmatprep.mubr.f32.mxu0 %v605
    %1069 = vmatmul.mubr.f32.gmra.mxu0 %v597
    %v1070 = vpop.f32.mrf.mxu0
    %v1071 = vadd.f32 %v1001, %v1070
    %v1072 = vpop.f32.mrf.mxu0
    %1073 = vdwg.mxu0
    %1074 = vmatprep.subr.mxu0 0.0
    %1075 = vmatpush1.msra.mxu0 %v204
    %1076 = vmatprep.subr.mxu0 0.0
    %1077 = vmatpush1.msra.mxu0 %v203
    %1078 = vmatprep.subr.mxu0 0.0
    %1079 = vmatpush1.msra.mxu0 %v202
    %1080 = vmatprep.subr.mxu0 0.0
    %1081 = vmatpush1.msra.mxu0 %v201
    %1082 = vmatprep.subr.mxu0 0.0
    %1083 = vmatpush1.msra.mxu0 %v200
    %1084 = vmatprep.subr.mxu0 0.0
    %1085 = vmatpush1.msra.mxu0 %v199
    %1086 = vmatprep.subr.mxu0 0.0
    %1087 = vmatpush1.msra.mxu0 %v198
    %1088 = vmatprep.subr.mxu0 0.0
    %1089 = vmatpush1.msra.mxu0 %v197
    %1090 = vmatprep.subr.mxu0 0.0
    %1091 = vmatpush1.msra.mxu0 %v196
    %1092 = vmatprep.subr.mxu0 0.0
    %1093 = vmatpush1.msra.mxu0 %v195
    %1094 = vmatprep.subr.mxu0 0.0
    %1095 = vmatpush1.msra.mxu0 %v194
    %1096 = vmatprep.subr.mxu0 0.0
    %1097 = vmatpush1.msra.mxu0 %v193
    %1098 = vmatprep.subr.mxu0 0.0
    %1099 = vmatpush1.msra.mxu0 %v192
    %1100 = vmatprep.subr.mxu0 0.0
    %1101 = vmatpush1.msra.mxu0 %v191
    %1102 = vmatprep.subr.mxu0 0.0
    %1103 = vmatpush1.msra.mxu0 %v190
    %1104 = vmatprep.subr.mxu0 0.0
    %1105 = vmatpush1.msra.mxu0 %v189
    %1106 = vmatprep.subr.mxu0 0.0
    %1107 = vmatpush2.msra.mxu0 %v220
    %1108 = vmatprep.subr.mxu0 0.0
    %1109 = vmatpush2.msra.mxu0 %v219
    %1110 = vmatprep.subr.mxu0 0.0
    %1111 = vmatpush2.msra.mxu0 %v218
    %1112 = vmatprep.subr.mxu0 0.0
    %1113 = vmatpush2.msra.mxu0 %v217
    %1114 = vmatprep.subr.mxu0 0.0
    %1115 = vmatpush2.msra.mxu0 %v216
    %1116 = vmatprep.subr.mxu0 0.0
    %1117 = vmatpush2.msra.mxu0 %v215
    %1118 = vmatprep.subr.mxu0 0.0
    %1119 = vmatpush2.msra.mxu0 %v214
    %1120 = vmatprep.subr.mxu0 0.0
    %1121 = vmatpush2.msra.mxu0 %v213
    %1122 = vmatprep.subr.mxu0 0.0
    %1123 = vmatpush2.msra.mxu0 %v212
    %1124 = vmatprep.subr.mxu0 0.0
    %1125 = vmatpush2.msra.mxu0 %v211
    %1126 = vmatprep.subr.mxu0 0.0
    %1127 = vmatpush2.msra.mxu0 %v210
    %1128 = vmatprep.subr.mxu0 0.0
    %1129 = vmatpush2.msra.mxu0 %v209
    %1130 = vmatprep.subr.mxu0 0.0
    %1131 = vmatpush2.msra.mxu0 %v208
    %1132 = vmatprep.subr.mxu0 0.0
    %1133 = vmatpush2.msra.mxu0 %v207
    %1134 = vmatprep.subr.mxu0 0.0
    %1135 = vmatpush2.msra.mxu0 %v206
    %1136 = vmatprep.subr.mxu0 0.0
    %1137 = vmatpush2.msra.mxu0 %v205
    %1138 = vmatprep.mubr.f32.mxu0 %v606
    %1139 = vmatmul.mubr.f32.gmra.mxu0 %v604
    %v1140 = vpop.f32.mrf.mxu0
    %v1141 = vadd.f32 %v1071, %v1140
    %v1142 = vpop.f32.mrf.mxu0
    %1143 = vdwg.mxu0
    %1144 = vmatprep.subr.mxu0 0.0
    %1145 = vmatpush1.msra.mxu0 %v236
    %1146 = vmatprep.subr.mxu0 0.0
    %1147 = vmatpush1.msra.mxu0 %v235
    %1148 = vmatprep.subr.mxu0 0.0
    %1149 = vmatpush1.msra.mxu0 %v234
    %1150 = vmatprep.subr.mxu0 0.0
    %1151 = vmatpush1.msra.mxu0 %v233
    %1152 = vmatprep.subr.mxu0 0.0
    %1153 = vmatpush1.msra.mxu0 %v232
    %1154 = vmatprep.subr.mxu0 0.0
    %1155 = vmatpush1.msra.mxu0 %v231
    %1156 = vmatprep.subr.mxu0 0.0
    %1157 = vmatpush1.msra.mxu0 %v230
    %1158 = vmatprep.subr.mxu0 0.0
    %1159 = vmatpush1.msra.mxu0 %v229
    %1160 = vmatprep.subr.mxu0 0.0
    %1161 = vmatpush1.msra.mxu0 %v228
    %1162 = vmatprep.subr.mxu0 0.0
    %1163 = vmatpush1.msra.mxu0 %v227
    %1164 = vmatprep.subr.mxu0 0.0
    %1165 = vmatpush1.msra.mxu0 %v226
    %1166 = vmatprep.subr.mxu0 0.0
    %1167 = vmatpush1.msra.mxu0 %v225
    %1168 = vmatprep.subr.mxu0 0.0
    %1169 = vmatpush1.msra.mxu0 %v224
    %1170 = vmatprep.subr.mxu0 0.0
    %1171 = vmatpush1.msra.mxu0 %v223
    %1172 = vmatprep.subr.mxu0 0.0
    %1173 = vmatpush1.msra.mxu0 %v222
    %1174 = vmatprep.subr.mxu0 0.0
    %1175 = vmatpush1.msra.mxu0 %v221
    %1176 = vmatprep.subr.mxu0 0.0
    %1177 = vmatpush2.msra.mxu0 %v252
    %1178 = vmatprep.subr.mxu0 0.0
    %1179 = vmatpush2.msra.mxu0 %v251
    %1180 = vmatprep.subr.mxu0 0.0
    %1181 = vmatpush2.msra.mxu0 %v250
    %1182 = vmatprep.subr.mxu0 0.0
    %1183 = vmatpush2.msra.mxu0 %v249
    %1184 = vmatprep.subr.mxu0 0.0
    %1185 = vmatpush2.msra.mxu0 %v248
    %1186 = vmatprep.subr.mxu0 0.0
    %1187 = vmatpush2.msra.mxu0 %v247
    %1188 = vmatprep.subr.mxu0 0.0
    %1189 = vmatpush2.msra.mxu0 %v246
    %1190 = vmatprep.subr.mxu0 0.0
    %1191 = vmatpush2.msra.mxu0 %v245
    %1192 = vmatprep.subr.mxu0 0.0
    %1193 = vmatpush2.msra.mxu0 %v244
    %1194 = vmatprep.subr.mxu0 0.0
    %1195 = vmatpush2.msra.mxu0 %v243
    %1196 = vmatprep.subr.mxu0 0.0
    %1197 = vmatpush2.msra.mxu0 %v242
    %1198 = vmatprep.subr.mxu0 0.0
    %1199 = vmatpush2.msra.mxu0 %v241
    %1200 = vmatprep.subr.mxu0 0.0
    %1201 = vmatpush2.msra.mxu0 %v240
    %1202 = vmatprep.subr.mxu0 0.0
    %1203 = vmatpush2.msra.mxu0 %v239
    %1204 = vmatprep.subr.mxu0 0.0
    %1205 = vmatpush2.msra.mxu0 %v238
    %1206 = vmatprep.subr.mxu0 0.0
    %1207 = vmatpush2.msra.mxu0 %v237
    %1208 = vmatprep.mubr.f32.mxu0 %v622
    %1209 = vmatmul.mubr.f32.gmra.mxu0 %v614
    %v1210 = vpop.f32.mrf.mxu0
    %v1211 = vadd.f32 %v1141, %v1210
    %v1212 = vpop.f32.mrf.mxu0
    %1213 = vdwg.mxu0
    %1214 = vmatprep.subr.mxu0 0.0
    %1215 = vmatpush1.msra.mxu0 %v268
    %1216 = vmatprep.subr.mxu0 0.0
    %1217 = vmatpush1.msra.mxu0 %v267
    %1218 = vmatprep.subr.mxu0 0.0
    %1219 = vmatpush1.msra.mxu0 %v266
    %1220 = vmatprep.subr.mxu0 0.0
    %1221 = vmatpush1.msra.mxu0 %v265
    %1222 = vmatprep.subr.mxu0 0.0
    %1223 = vmatpush1.msra.mxu0 %v264
    %1224 = vmatprep.subr.mxu0 0.0
    %1225 = vmatpush1.msra.mxu0 %v263
    %1226 = vmatprep.subr.mxu0 0.0
    %1227 = vmatpush1.msra.mxu0 %v262
    %1228 = vmatprep.subr.mxu0 0.0
    %1229 = vmatpush1.msra.mxu0 %v261
    %1230 = vmatprep.subr.mxu0 0.0
    %1231 = vmatpush1.msra.mxu0 %v260
    %1232 = vmatprep.subr.mxu0 0.0
    %1233 = vmatpush1.msra.mxu0 %v259
    %1234 = vmatprep.subr.mxu0 0.0
    %1235 = vmatpush1.msra.mxu0 %v258
    %1236 = vmatprep.subr.mxu0 0.0
    %1237 = vmatpush1.msra.mxu0 %v257
    %1238 = vmatprep.subr.mxu0 0.0
    %1239 = vmatpush1.msra.mxu0 %v256
    %1240 = vmatprep.subr.mxu0 0.0
    %1241 = vmatpush1.msra.mxu0 %v255
    %1242 = vmatprep.subr.mxu0 0.0
    %1243 = vmatpush1.msra.mxu0 %v254
    %1244 = vmatprep.subr.mxu0 0.0
    %1245 = vmatpush1.msra.mxu0 %v253
    %1246 = vmatprep.subr.mxu0 0.0
    %1247 = vmatpush2.msra.mxu0 %v284
    %1248 = vmatprep.subr.mxu0 0.0
    %1249 = vmatpush2.msra.mxu0 %v283
    %1250 = vmatprep.subr.mxu0 0.0
    %1251 = vmatpush2.msra.mxu0 %v282
    %1252 = vmatprep.subr.mxu0 0.0
    %1253 = vmatpush2.msra.mxu0 %v281
    %1254 = vmatprep.subr.mxu0 0.0
    %1255 = vmatpush2.msra.mxu0 %v280
    %1256 = vmatprep.subr.mxu0 0.0
    %1257 = vmatpush2.msra.mxu0 %v279
    %1258 = vmatprep.subr.mxu0 0.0
    %1259 = vmatpush2.msra.mxu0 %v278
    %1260 = vmatprep.subr.mxu0 0.0
    %1261 = vmatpush2.msra.mxu0 %v277
    %1262 = vmatprep.subr.mxu0 0.0
    %1263 = vmatpush2.msra.mxu0 %v276
    %1264 = vmatprep.subr.mxu0 0.0
    %1265 = vmatpush2.msra.mxu0 %v275
    %1266 = vmatprep.subr.mxu0 0.0
    %1267 = vmatpush2.msra.mxu0 %v274
    %1268 = vmatprep.subr.mxu0 0.0
    %1269 = vmatpush2.msra.mxu0 %v273
    %1270 = vmatprep.subr.mxu0 0.0
    %1271 = vmatpush2.msra.mxu0 %v272
    %1272 = vmatprep.subr.mxu0 0.0
    %1273 = vmatpush2.msra.mxu0 %v271
    %1274 = vmatprep.subr.mxu0 0.0
    %1275 = vmatpush2.msra.mxu0 %v270
    %1276 = vmatprep.subr.mxu0 0.0
    %1277 = vmatpush2.msra.mxu0 %v269
    %1278 = vmatprep.mubr.f32.mxu0 %v623
    %1279 = vmatmul.mubr.f32.gmra.mxu0 %v621
    %v1280 = vpop.f32.mrf.mxu0
    %v1281 = vadd.f32 %v1211, %v1280
    %v1282 = vpop.f32.mrf.mxu0
    %1283 = vdwg.mxu0
    %1284 = vmatprep.subr.mxu0 0.0
    %1285 = vmatpush1.msra.mxu0 %v300
    %1286 = vmatprep.subr.mxu0 0.0
    %1287 = vmatpush1.msra.mxu0 %v299
    %1288 = vmatprep.subr.mxu0 0.0
    %1289 = vmatpush1.msra.mxu0 %v298
    %1290 = vmatprep.subr.mxu0 0.0
    %1291 = vmatpush1.msra.mxu0 %v297
    %1292 = vmatprep.subr.mxu0 0.0
    %1293 = vmatpush1.msra.mxu0 %v296
    %1294 = vmatprep.subr.mxu0 0.0
    %1295 = vmatpush1.msra.mxu0 %v295
    %1296 = vmatprep.subr.mxu0 0.0
    %1297 = vmatpush1.msra.mxu0 %v294
    %1298 = vmatprep.subr.mxu0 0.0
    %1299 = vmatpush1.msra.mxu0 %v293
    %1300 = vmatprep.subr.mxu0 0.0
    %1301 = vmatpush1.msra.mxu0 %v292
    %1302 = vmatprep.subr.mxu0 0.0
    %1303 = vmatpush1.msra.mxu0 %v291
    %1304 = vmatprep.subr.mxu0 0.0
    %1305 = vmatpush1.msra.mxu0 %v290
    %1306 = vmatprep.subr.mxu0 0.0
    %1307 = vmatpush1.msra.mxu0 %v289
    %1308 = vmatprep.subr.mxu0 0.0
    %1309 = vmatpush1.msra.mxu0 %v288
    %1310 = vmatprep.subr.mxu0 0.0
    %1311 = vmatpush1.msra.mxu0 %v287
    %1312 = vmatprep.subr.mxu0 0.0
    %1313 = vmatpush1.msra.mxu0 %v286
    %1314 = vmatprep.subr.mxu0 0.0
    %1315 = vmatpush1.msra.mxu0 %v285
    %1316 = vmatprep.subr.mxu0 0.0
    %1317 = vmatpush2.msra.mxu0 %v316
    %1318 = vmatprep.subr.mxu0 0.0
    %1319 = vmatpush2.msra.mxu0 %v315
    %1320 = vmatprep.subr.mxu0 0.0
    %1321 = vmatpush2.msra.mxu0 %v314
    %1322 = vmatprep.subr.mxu0 0.0
    %1323 = vmatpush2.msra.mxu0 %v313
    %1324 = vmatprep.subr.mxu0 0.0
    %1325 = vmatpush2.msra.mxu0 %v312
    %1326 = vmatprep.subr.mxu0 0.0
    %1327 = vmatpush2.msra.mxu0 %v311
    %1328 = vmatprep.subr.mxu0 0.0
    %1329 = vmatpush2.msra.mxu0 %v310
    %1330 = vmatprep.subr.mxu0 0.0
    %1331 = vmatpush2.msra.mxu0 %v309
    %1332 = vmatprep.subr.mxu0 0.0
    %1333 = vmatpush2.msra.mxu0 %v308
    %1334 = vmatprep.subr.mxu0 0.0
    %1335 = vmatpush2.msra.mxu0 %v307
    %1336 = vmatprep.subr.mxu0 0.0
    %1337 = vmatpush2.msra.mxu0 %v306
    %1338 = vmatprep.subr.mxu0 0.0
    %1339 = vmatpush2.msra.mxu0 %v305
    %1340 = vmatprep.subr.mxu0 0.0
    %1341 = vmatpush2.msra.mxu0 %v304
    %1342 = vmatprep.subr.mxu0 0.0
    %1343 = vmatpush2.msra.mxu0 %v303
    %1344 = vmatprep.subr.mxu0 0.0
    %1345 = vmatpush2.msra.mxu0 %v302
    %1346 = vmatprep.subr.mxu0 0.0
    %1347 = vmatpush2.msra.mxu0 %v301
    %1348 = vmatprep.mubr.f32.mxu0 %v639
    %1349 = vmatmul.mubr.f32.gmra.mxu0 %v631
    %v1350 = vpop.f32.mrf.mxu0
    %v1351 = vadd.f32 %v1281, %v1350
    %v1352 = vpop.f32.mrf.mxu0
    %1353 = vdwg.mxu0
    %1354 = vmatprep.subr.mxu0 0.0
    %1355 = vmatpush1.msra.mxu0 %v332
    %1356 = vmatprep.subr.mxu0 0.0
    %1357 = vmatpush1.msra.mxu0 %v331
    %1358 = vmatprep.subr.mxu0 0.0
    %1359 = vmatpush1.msra.mxu0 %v330
    %1360 = vmatprep.subr.mxu0 0.0
    %1361 = vmatpush1.msra.mxu0 %v329
    %1362 = vmatprep.subr.mxu0 0.0
    %1363 = vmatpush1.msra.mxu0 %v328
    %1364 = vmatprep.subr.mxu0 0.0
    %1365 = vmatpush1.msra.mxu0 %v327
    %1366 = vmatprep.subr.mxu0 0.0
    %1367 = vmatpush1.msra.mxu0 %v326
    %1368 = vmatprep.subr.mxu0 0.0
    %1369 = vmatpush1.msra.mxu0 %v325
    %1370 = vmatprep.subr.mxu0 0.0
    %1371 = vmatpush1.msra.mxu0 %v324
    %1372 = vmatprep.subr.mxu0 0.0
    %1373 = vmatpush1.msra.mxu0 %v323
    %1374 = vmatprep.subr.mxu0 0.0
    %1375 = vmatpush1.msra.mxu0 %v322
    %1376 = vmatprep.subr.mxu0 0.0
    %1377 = vmatpush1.msra.mxu0 %v321
    %1378 = vmatprep.subr.mxu0 0.0
    %1379 = vmatpush1.msra.mxu0 %v320
    %1380 = vmatprep.subr.mxu0 0.0
    %1381 = vmatpush1.msra.mxu0 %v319
    %1382 = vmatprep.subr.mxu0 0.0
    %1383 = vmatpush1.msra.mxu0 %v318
    %1384 = vmatprep.subr.mxu0 0.0
    %1385 = vmatpush1.msra.mxu0 %v317
    %1386 = vmatprep.subr.mxu0 0.0
    %1387 = vmatpush2.msra.mxu0 %v348
    %1388 = vmatprep.subr.mxu0 0.0
    %1389 = vmatpush2.msra.mxu0 %v347
    %1390 = vmatprep.subr.mxu0 0.0
    %1391 = vmatpush2.msra.mxu0 %v346
    %1392 = vmatprep.subr.mxu0 0.0
    %1393 = vmatpush2.msra.mxu0 %v345
    %1394 = vmatprep.subr.mxu0 0.0
    %1395 = vmatpush2.msra.mxu0 %v344
    %1396 = vmatprep.subr.mxu0 0.0
    %1397 = vmatpush2.msra.mxu0 %v343
    %1398 = vmatprep.subr.mxu0 0.0
    %1399 = vmatpush2.msra.mxu0 %v342
    %1400 = vmatprep.subr.mxu0 0.0
    %1401 = vmatpush2.msra.mxu0 %v341
    %1402 = vmatprep.subr.mxu0 0.0
    %1403 = vmatpush2.msra.mxu0 %v340
    %1404 = vmatprep.subr.mxu0 0.0
    %1405 = vmatpush2.msra.mxu0 %v339
    %1406 = vmatprep.subr.mxu0 0.0
    %1407 = vmatpush2.msra.mxu0 %v338
    %1408 = vmatprep.subr.mxu0 0.0
    %1409 = vmatpush2.msra.mxu0 %v337
    %1410 = vmatprep.subr.mxu0 0.0
    %1411 = vmatpush2.msra.mxu0 %v336
    %1412 = vmatprep.subr.mxu0 0.0
    %1413 = vmatpush2.msra.mxu0 %v335
    %1414 = vmatprep.subr.mxu0 0.0
    %1415 = vmatpush2.msra.mxu0 %v334
    %1416 = vmatprep.subr.mxu0 0.0
    %1417 = vmatpush2.msra.mxu0 %v333
    %1418 = vmatprep.mubr.f32.mxu0 %v640
    %1419 = vmatmul.mubr.f32.gmra.mxu0 %v638
    %v1420 = vpop.f32.mrf.mxu0
    %v1421 = vadd.f32 %v1351, %v1420
    %v1422 = vpop.f32.mrf.mxu0
    %1423 = vdwg.mxu0
    %1424 = vmatprep.subr.mxu0 0.0
    %1425 = vmatpush1.msra.mxu0 %v364
    %1426 = vmatprep.subr.mxu0 0.0
    %1427 = vmatpush1.msra.mxu0 %v363
    %1428 = vmatprep.subr.mxu0 0.0
    %1429 = vmatpush1.msra.mxu0 %v362
    %1430 = vmatprep.subr.mxu0 0.0
    %1431 = vmatpush1.msra.mxu0 %v361
    %1432 = vmatprep.subr.mxu0 0.0
    %1433 = vmatpush1.msra.mxu0 %v360
    %1434 = vmatprep.subr.mxu0 0.0
    %1435 = vmatpush1.msra.mxu0 %v359
    %1436 = vmatprep.subr.mxu0 0.0
    %1437 = vmatpush1.msra.mxu0 %v358
    %1438 = vmatprep.subr.mxu0 0.0
    %1439 = vmatpush1.msra.mxu0 %v357
    %1440 = vmatprep.subr.mxu0 0.0
    %1441 = vmatpush1.msra.mxu0 %v356
    %1442 = vmatprep.subr.mxu0 0.0
    %1443 = vmatpush1.msra.mxu0 %v355
    %1444 = vmatprep.subr.mxu0 0.0
    %1445 = vmatpush1.msra.mxu0 %v354
    %1446 = vmatprep.subr.mxu0 0.0
    %1447 = vmatpush1.msra.mxu0 %v353
    %1448 = vmatprep.subr.mxu0 0.0
    %1449 = vmatpush1.msra.mxu0 %v352
    %1450 = vmatprep.subr.mxu0 0.0
    %1451 = vmatpush1.msra.mxu0 %v351
    %1452 = vmatprep.subr.mxu0 0.0
    %1453 = vmatpush1.msra.mxu0 %v350
    %1454 = vmatprep.subr.mxu0 0.0
    %1455 = vmatpush1.msra.mxu0 %v349
    %1456 = vmatprep.subr.mxu0 0.0
    %1457 = vmatpush2.msra.mxu0 %v380
    %1458 = vmatprep.subr.mxu0 0.0
    %1459 = vmatpush2.msra.mxu0 %v379
    %1460 = vmatprep.subr.mxu0 0.0
    %1461 = vmatpush2.msra.mxu0 %v378
    %1462 = vmatprep.subr.mxu0 0.0
    %1463 = vmatpush2.msra.mxu0 %v377
    %1464 = vmatprep.subr.mxu0 0.0
    %1465 = vmatpush2.msra.mxu0 %v376
    %1466 = vmatprep.subr.mxu0 0.0
    %1467 = vmatpush2.msra.mxu0 %v375
    %1468 = vmatprep.subr.mxu0 0.0
    %1469 = vmatpush2.msra.mxu0 %v374
    %1470 = vmatprep.subr.mxu0 0.0
    %1471 = vmatpush2.msra.mxu0 %v373
    %1472 = vmatprep.subr.mxu0 0.0
    %1473 = vmatpush2.msra.mxu0 %v372
    %1474 = vmatprep.subr.mxu0 0.0
    %1475 = vmatpush2.msra.mxu0 %v371
    %1476 = vmatprep.subr.mxu0 0.0
    %1477 = vmatpush2.msra.mxu0 %v370
    %1478 = vmatprep.subr.mxu0 0.0
    %1479 = vmatpush2.msra.mxu0 %v369
    %1480 = vmatprep.subr.mxu0 0.0
    %1481 = vmatpush2.msra.mxu0 %v368
    %1482 = vmatprep.subr.mxu0 0.0
    %1483 = vmatpush2.msra.mxu0 %v367
    %1484 = vmatprep.subr.mxu0 0.0
    %1485 = vmatpush2.msra.mxu0 %v366
    %1486 = vmatprep.subr.mxu0 0.0
    %1487 = vmatpush2.msra.mxu0 %v365
    %1488 = vmatprep.mubr.f32.mxu0 %v656
    %1489 = vmatmul.mubr.f32.gmra.mxu0 %v648
    %v1490 = vpop.f32.mrf.mxu0
    %v1491 = vadd.f32 %v1421, %v1490
    %v1492 = vpop.f32.mrf.mxu0
    %1493 = vdwg.mxu0
    %1494 = vmatprep.subr.mxu0 0.0
    %1495 = vmatpush1.msra.mxu0 %v396
    %1496 = vmatprep.subr.mxu0 0.0
    %1497 = vmatpush1.msra.mxu0 %v395
    %1498 = vmatprep.subr.mxu0 0.0
    %1499 = vmatpush1.msra.mxu0 %v394
    %1500 = vmatprep.subr.mxu0 0.0
    %1501 = vmatpush1.msra.mxu0 %v393
    %1502 = vmatprep.subr.mxu0 0.0
    %1503 = vmatpush1.msra.mxu0 %v392
    %1504 = vmatprep.subr.mxu0 0.0
    %1505 = vmatpush1.msra.mxu0 %v391
    %1506 = vmatprep.subr.mxu0 0.0
    %1507 = vmatpush1.msra.mxu0 %v390
    %1508 = vmatprep.subr.mxu0 0.0
    %1509 = vmatpush1.msra.mxu0 %v389
    %1510 = vmatprep.subr.mxu0 0.0
    %1511 = vmatpush1.msra.mxu0 %v388
    %1512 = vmatprep.subr.mxu0 0.0
    %1513 = vmatpush1.msra.mxu0 %v387
    %1514 = vmatprep.subr.mxu0 0.0
    %1515 = vmatpush1.msra.mxu0 %v386
    %1516 = vmatprep.subr.mxu0 0.0
    %1517 = vmatpush1.msra.mxu0 %v385
    %1518 = vmatprep.subr.mxu0 0.0
    %1519 = vmatpush1.msra.mxu0 %v384
    %1520 = vmatprep.subr.mxu0 0.0
    %1521 = vmatpush1.msra.mxu0 %v383
    %1522 = vmatprep.subr.mxu0 0.0
    %1523 = vmatpush1.msra.mxu0 %v382
    %1524 = vmatprep.subr.mxu0 0.0
    %1525 = vmatpush1.msra.mxu0 %v381
    %1526 = vmatprep.subr.mxu0 0.0
    %1527 = vmatpush2.msra.mxu0 %v412
    %1528 = vmatprep.subr.mxu0 0.0
    %1529 = vmatpush2.msra.mxu0 %v411
    %1530 = vmatprep.subr.mxu0 0.0
    %1531 = vmatpush2.msra.mxu0 %v410
    %1532 = vmatprep.subr.mxu0 0.0
    %1533 = vmatpush2.msra.mxu0 %v409
    %1534 = vmatprep.subr.mxu0 0.0
    %1535 = vmatpush2.msra.mxu0 %v408
    %1536 = vmatprep.subr.mxu0 0.0
    %1537 = vmatpush2.msra.mxu0 %v407
    %1538 = vmatprep.subr.mxu0 0.0
    %1539 = vmatpush2.msra.mxu0 %v406
    %1540 = vmatprep.subr.mxu0 0.0
    %1541 = vmatpush2.msra.mxu0 %v405
    %1542 = vmatprep.subr.mxu0 0.0
    %1543 = vmatpush2.msra.mxu0 %v404
    %1544 = vmatprep.subr.mxu0 0.0
    %1545 = vmatpush2.msra.mxu0 %v403
    %1546 = vmatprep.subr.mxu0 0.0
    %1547 = vmatpush2.msra.mxu0 %v402
    %1548 = vmatprep.subr.mxu0 0.0
    %1549 = vmatpush2.msra.mxu0 %v401
    %1550 = vmatprep.subr.mxu0 0.0
    %1551 = vmatpush2.msra.mxu0 %v400
    %1552 = vmatprep.subr.mxu0 0.0
    %1553 = vmatpush2.msra.mxu0 %v399
    %1554 = vmatprep.subr.mxu0 0.0
    %1555 = vmatpush2.msra.mxu0 %v398
    %1556 = vmatprep.subr.mxu0 0.0
    %1557 = vmatpush2.msra.mxu0 %v397
    %1558 = vmatprep.mubr.f32.mxu0 %v657
    %1559 = vmatmul.mubr.f32.gmra.mxu0 %v655
    %v1560 = vpop.f32.mrf.mxu0
    %v1561 = vadd.f32 %v1491, %v1560
    %v1562 = vpop.f32.mrf.mxu0
    %1563 = vdwg.mxu0
    %1564 = vmatprep.subr.mxu0 0.0
    %1565 = vmatpush1.msra.mxu0 %v428
    %1566 = vmatprep.subr.mxu0 0.0
    %1567 = vmatpush1.msra.mxu0 %v427
    %1568 = vmatprep.subr.mxu0 0.0
    %1569 = vmatpush1.msra.mxu0 %v426
    %1570 = vmatprep.subr.mxu0 0.0
    %1571 = vmatpush1.msra.mxu0 %v425
    %1572 = vmatprep.subr.mxu0 0.0
    %1573 = vmatpush1.msra.mxu0 %v424
    %1574 = vmatprep.subr.mxu0 0.0
    %1575 = vmatpush1.msra.mxu0 %v423
    %1576 = vmatprep.subr.mxu0 0.0
    %1577 = vmatpush1.msra.mxu0 %v422
    %1578 = vmatprep.subr.mxu0 0.0
    %1579 = vmatpush1.msra.mxu0 %v421
    %1580 = vmatprep.subr.mxu0 0.0
    %1581 = vmatpush1.msra.mxu0 %v420
    %1582 = vmatprep.subr.mxu0 0.0
    %1583 = vmatpush1.msra.mxu0 %v419
    %1584 = vmatprep.subr.mxu0 0.0
    %1585 = vmatpush1.msra.mxu0 %v418
    %1586 = vmatprep.subr.mxu0 0.0
    %1587 = vmatpush1.msra.mxu0 %v417
    %1588 = vmatprep.subr.mxu0 0.0
    %1589 = vmatpush1.msra.mxu0 %v416
    %1590 = vmatprep.subr.mxu0 0.0
    %1591 = vmatpush1.msra.mxu0 %v415
    %1592 = vmatprep.subr.mxu0 0.0
    %1593 = vmatpush1.msra.mxu0 %v414
    %1594 = vmatprep.subr.mxu0 0.0
    %1595 = vmatpush1.msra.mxu0 %v413
    %1596 = vmatprep.subr.mxu0 0.0
    %1597 = vmatpush2.msra.mxu0 %v444
    %1598 = vmatprep.subr.mxu0 0.0
    %1599 = vmatpush2.msra.mxu0 %v443
    %1600 = vmatprep.subr.mxu0 0.0
    %1601 = vmatpush2.msra.mxu0 %v442
    %1602 = vmatprep.subr.mxu0 0.0
    %1603 = vmatpush2.msra.mxu0 %v441
    %1604 = vmatprep.subr.mxu0 0.0
    %1605 = vmatpush2.msra.mxu0 %v440
    %1606 = vmatprep.subr.mxu0 0.0
    %1607 = vmatpush2.msra.mxu0 %v439
    %1608 = vmatprep.subr.mxu0 0.0
    %1609 = vmatpush2.msra.mxu0 %v438
    %1610 = vmatprep.subr.mxu0 0.0
    %1611 = vmatpush2.msra.mxu0 %v437
    %1612 = vmatprep.subr.mxu0 0.0
    %1613 = vmatpush2.msra.mxu0 %v436
    %1614 = vmatprep.subr.mxu0 0.0
    %1615 = vmatpush2.msra.mxu0 %v435
    %1616 = vmatprep.subr.mxu0 0.0
    %1617 = vmatpush2.msra.mxu0 %v434
    %1618 = vmatprep.subr.mxu0 0.0
    %1619 = vmatpush2.msra.mxu0 %v433
    %1620 = vmatprep.subr.mxu0 0.0
    %1621 = vmatpush2.msra.mxu0 %v432
    %1622 = vmatprep.subr.mxu0 0.0
    %1623 = vmatpush2.msra.mxu0 %v431
    %1624 = vmatprep.subr.mxu0 0.0
    %1625 = vmatpush2.msra.mxu0 %v430
    %1626 = vmatprep.subr.mxu0 0.0
    %1627 = vmatpush2.msra.mxu0 %v429
    %1628 = vmatprep.mubr.f32.mxu0 %v673
    %1629 = vmatmul.mubr.f32.gmra.mxu0 %v665
    %v1630 = vpop.f32.mrf.mxu0
    %v1631 = vadd.f32 %v1561, %v1630
    %v1632 = vpop.f32.mrf.mxu0
    %1633 = vdwg.mxu0
    %1634 = vmatprep.subr.mxu0 0.0
    %1635 = vmatpush1.msra.mxu0 %v460
    %1636 = vmatprep.subr.mxu0 0.0
    %1637 = vmatpush1.msra.mxu0 %v459
    %1638 = vmatprep.subr.mxu0 0.0
    %1639 = vmatpush1.msra.mxu0 %v458
    %1640 = vmatprep.subr.mxu0 0.0
    %1641 = vmatpush1.msra.mxu0 %v457
    %1642 = vmatprep.subr.mxu0 0.0
    %1643 = vmatpush1.msra.mxu0 %v456
    %1644 = vmatprep.subr.mxu0 0.0
    %1645 = vmatpush1.msra.mxu0 %v455
    %1646 = vmatprep.subr.mxu0 0.0
    %1647 = vmatpush1.msra.mxu0 %v454
    %1648 = vmatprep.subr.mxu0 0.0
    %1649 = vmatpush1.msra.mxu0 %v453
    %1650 = vmatprep.subr.mxu0 0.0
    %1651 = vmatpush1.msra.mxu0 %v452
    %1652 = vmatprep.subr.mxu0 0.0
    %1653 = vmatpush1.msra.mxu0 %v451
    %1654 = vmatprep.subr.mxu0 0.0
    %1655 = vmatpush1.msra.mxu0 %v450
    %1656 = vmatprep.subr.mxu0 0.0
    %1657 = vmatpush1.msra.mxu0 %v449
    %1658 = vmatprep.subr.mxu0 0.0
    %1659 = vmatpush1.msra.mxu0 %v448
    %1660 = vmatprep.subr.mxu0 0.0
    %1661 = vmatpush1.msra.mxu0 %v447
    %1662 = vmatprep.subr.mxu0 0.0
    %1663 = vmatpush1.msra.mxu0 %v446
    %1664 = vmatprep.subr.mxu0 0.0
    %1665 = vmatpush1.msra.mxu0 %v445
    %1666 = vmatprep.subr.mxu0 0.0
    %1667 = vmatpush2.msra.mxu0 %v476
    %1668 = vmatprep.subr.mxu0 0.0
    %1669 = vmatpush2.msra.mxu0 %v475
    %1670 = vmatprep.subr.mxu0 0.0
    %1671 = vmatpush2.msra.mxu0 %v474
    %1672 = vmatprep.subr.mxu0 0.0
    %1673 = vmatpush2.msra.mxu0 %v473
    %1674 = vmatprep.subr.mxu0 0.0
    %1675 = vmatpush2.msra.mxu0 %v472
    %1676 = vmatprep.subr.mxu0 0.0
    %1677 = vmatpush2.msra.mxu0 %v471
    %1678 = vmatprep.subr.mxu0 0.0
    %1679 = vmatpush2.msra.mxu0 %v470
    %1680 = vmatprep.subr.mxu0 0.0
    %1681 = vmatpush2.msra.mxu0 %v469
    %1682 = vmatprep.subr.mxu0 0.0
    %1683 = vmatpush2.msra.mxu0 %v468
    %1684 = vmatprep.subr.mxu0 0.0
    %1685 = vmatpush2.msra.mxu0 %v467
    %1686 = vmatprep.subr.mxu0 0.0
    %1687 = vmatpush2.msra.mxu0 %v466
    %1688 = vmatprep.subr.mxu0 0.0
    %1689 = vmatpush2.msra.mxu0 %v465
    %1690 = vmatprep.subr.mxu0 0.0
    %1691 = vmatpush2.msra.mxu0 %v464
    %1692 = vmatprep.subr.mxu0 0.0
    %1693 = vmatpush2.msra.mxu0 %v463
    %1694 = vmatprep.subr.mxu0 0.0
    %1695 = vmatpush2.msra.mxu0 %v462
    %1696 = vmatprep.subr.mxu0 0.0
    %1697 = vmatpush2.msra.mxu0 %v461
    %1698 = vmatprep.mubr.f32.mxu0 %v674
    %1699 = vmatmul.mubr.f32.gmra.mxu0 %v672
    %v1700 = vpop.f32.mrf.mxu0
    %v1701 = vadd.f32 %v1631, %v1700
    %v1702 = vpop.f32.mrf.mxu0
    %1703 = vdwg.mxu0
    %1704 = vmatprep.subr.mxu0 0.0
    %1705 = vmatpush1.msra.mxu0 %v492
    %1706 = vmatprep.subr.mxu0 0.0
    %1707 = vmatpush1.msra.mxu0 %v491
    %1708 = vmatprep.subr.mxu0 0.0
    %1709 = vmatpush1.msra.mxu0 %v490
    %1710 = vmatprep.subr.mxu0 0.0
    %1711 = vmatpush1.msra.mxu0 %v489
    %1712 = vmatprep.subr.mxu0 0.0
    %1713 = vmatpush1.msra.mxu0 %v488
    %1714 = vmatprep.subr.mxu0 0.0
    %1715 = vmatpush1.msra.mxu0 %v487
    %1716 = vmatprep.subr.mxu0 0.0
    %1717 = vmatpush1.msra.mxu0 %v486
    %1718 = vmatprep.subr.mxu0 0.0
    %1719 = vmatpush1.msra.mxu0 %v485
    %1720 = vmatprep.subr.mxu0 0.0
    %1721 = vmatpush1.msra.mxu0 %v484
    %1722 = vmatprep.subr.mxu0 0.0
    %1723 = vmatpush1.msra.mxu0 %v483
    %1724 = vmatprep.subr.mxu0 0.0
    %1725 = vmatpush1.msra.mxu0 %v482
    %1726 = vmatprep.subr.mxu0 0.0
    %1727 = vmatpush1.msra.mxu0 %v481
    %1728 = vmatprep.subr.mxu0 0.0
    %1729 = vmatpush1.msra.mxu0 %v480
    %1730 = vmatprep.subr.mxu0 0.0
    %1731 = vmatpush1.msra.mxu0 %v479
    %1732 = vmatprep.subr.mxu0 0.0
    %1733 = vmatpush1.msra.mxu0 %v478
    %1734 = vmatprep.subr.mxu0 0.0
    %1735 = vmatpush1.msra.mxu0 %v477
    %1736 = vmatprep.subr.mxu0 0.0
    %1737 = vmatpush2.msra.mxu0 %v508
    %1738 = vmatprep.subr.mxu0 0.0
    %1739 = vmatpush2.msra.mxu0 %v507
    %1740 = vmatprep.subr.mxu0 0.0
    %1741 = vmatpush2.msra.mxu0 %v506
    %1742 = vmatprep.subr.mxu0 0.0
    %1743 = vmatpush2.msra.mxu0 %v505
    %1744 = vmatprep.subr.mxu0 0.0
    %1745 = vmatpush2.msra.mxu0 %v504
    %1746 = vmatprep.subr.mxu0 0.0
    %1747 = vmatpush2.msra.mxu0 %v503
    %1748 = vmatprep.subr.mxu0 0.0
    %1749 = vmatpush2.msra.mxu0 %v502
    %1750 = vmatprep.subr.mxu0 0.0
    %1751 = vmatpush2.msra.mxu0 %v501
    %1752 = vmatprep.subr.mxu0 0.0
    %1753 = vmatpush2.msra.mxu0 %v500
    %1754 = vmatprep.subr.mxu0 0.0
    %1755 = vmatpush2.msra.mxu0 %v499
    %1756 = vmatprep.subr.mxu0 0.0
    %1757 = vmatpush2.msra.mxu0 %v498
    %1758 = vmatprep.subr.mxu0 0.0
    %1759 = vmatpush2.msra.mxu0 %v497
    %1760 = vmatprep.subr.mxu0 0.0
    %1761 = vmatpush2.msra.mxu0 %v496
    %1762 = vmatprep.subr.mxu0 0.0
    %1763 = vmatpush2.msra.mxu0 %v495
    %1764 = vmatprep.subr.mxu0 0.0
    %1765 = vmatpush2.msra.mxu0 %v494
    %1766 = vmatprep.subr.mxu0 0.0
    %1767 = vmatpush2.msra.mxu0 %v493
    %1768 = vmatprep.mubr.f32.mxu0 %v690
    %1769 = vmatmul.mubr.f32.gmra.mxu0 %v682
    %v1770 = vpop.f32.mrf.mxu0
    %v1771 = vadd.f32 %v1701, %v1770
    %v1772 = vpop.f32.mrf.mxu0
    %1773 = vdwg.mxu0
    %1774 = vmatprep.subr.mxu0 0.0
    %1775 = vmatpush1.msra.mxu0 %v524
    %1776 = vmatprep.subr.mxu0 0.0
    %1777 = vmatpush1.msra.mxu0 %v523
    %1778 = vmatprep.subr.mxu0 0.0
    %1779 = vmatpush1.msra.mxu0 %v522
    %1780 = vmatprep.subr.mxu0 0.0
    %1781 = vmatpush1.msra.mxu0 %v521
    %1782 = vmatprep.subr.mxu0 0.0
    %1783 = vmatpush1.msra.mxu0 %v520
    %1784 = vmatprep.subr.mxu0 0.0
    %1785 = vmatpush1.msra.mxu0 %v519
    %1786 = vmatprep.subr.mxu0 0.0
    %1787 = vmatpush1.msra.mxu0 %v518
    %1788 = vmatprep.subr.mxu0 0.0
    %1789 = vmatpush1.msra.mxu0 %v517
    %1790 = vmatprep.subr.mxu0 0.0
    %1791 = vmatpush1.msra.mxu0 %v516
    %1792 = vmatprep.subr.mxu0 0.0
    %1793 = vmatpush1.msra.mxu0 %v515
    %1794 = vmatprep.subr.mxu0 0.0
    %1795 = vmatpush1.msra.mxu0 %v514
    %1796 = vmatprep.subr.mxu0 0.0
    %1797 = vmatpush1.msra.mxu0 %v513
    %1798 = vmatprep.subr.mxu0 0.0
    %1799 = vmatpush1.msra.mxu0 %v512
    %1800 = vmatprep.subr.mxu0 0.0
    %1801 = vmatpush1.msra.mxu0 %v511
    %1802 = vmatprep.subr.mxu0 0.0
    %1803 = vmatpush1.msra.mxu0 %v510
    %1804 = vmatprep.subr.mxu0 0.0
    %1805 = vmatpush1.msra.mxu0 %v509
    %1806 = vmatprep.subr.mxu0 0.0
    %1807 = vmatpush2.msra.mxu0 %v540
    %1808 = vmatprep.subr.mxu0 0.0
    %1809 = vmatpush2.msra.mxu0 %v539
    %1810 = vmatprep.subr.mxu0 0.0
    %1811 = vmatpush2.msra.mxu0 %v538
    %1812 = vmatprep.subr.mxu0 0.0
    %1813 = vmatpush2.msra.mxu0 %v537
    %1814 = vmatprep.subr.mxu0 0.0
    %1815 = vmatpush2.msra.mxu0 %v536
    %1816 = vmatprep.subr.mxu0 0.0
    %1817 = vmatpush2.msra.mxu0 %v535
    %1818 = vmatprep.subr.mxu0 0.0
    %1819 = vmatpush2.msra.mxu0 %v534
    %1820 = vmatprep.subr.mxu0 0.0
    %1821 = vmatpush2.msra.mxu0 %v533
    %1822 = vmatprep.subr.mxu0 0.0
    %1823 = vmatpush2.msra.mxu0 %v532
    %1824 = vmatprep.subr.mxu0 0.0
    %1825 = vmatpush2.msra.mxu0 %v531
    %1826 = vmatprep.subr.mxu0 0.0
    %1827 = vmatpush2.msra.mxu0 %v530
    %1828 = vmatprep.subr.mxu0 0.0
    %1829 = vmatpush2.msra.mxu0 %v529
    %1830 = vmatprep.subr.mxu0 0.0
    %1831 = vmatpush2.msra.mxu0 %v528
    %1832 = vmatprep.subr.mxu0 0.0
    %1833 = vmatpush2.msra.mxu0 %v527
    %1834 = vmatprep.subr.mxu0 0.0
    %1835 = vmatpush2.msra.mxu0 %v526
    %1836 = vmatprep.subr.mxu0 0.0
    %1837 = vmatpush2.msra.mxu0 %v525
    %1838 = vmatprep.mubr.f32.mxu0 %v691
    %1839 = vmatmul.mubr.f32.gmra.mxu0 %v689
    %v1840 = vpop.f32.mrf.mxu0
    %v1841 = vadd.f32 %v1771, %v1840
    %v1842 = vpop.f32.mrf.mxu0
    %1843 = vdwg.mxu0
    %v1844 = vmax.f32 %v1841, 0.0
    %v1845 = vld [vmem:[%s3] sm:$0xff]
    %v1846 = vld [vmem:[%s3 + $0x8] sm:$0xff]
    %v1847 = vld [vmem:[%s3 + $0x10] sm:$0xff]
    %v1848 = vld [vmem:[%s3 + $0x18] sm:$0xff]
    %v1849 = vld [vmem:[%s3 + $0x20] sm:$0xff]
    %v1850 = vld [vmem:[%s3 + $0x28] sm:$0xff]
    %v1851 = vld [vmem:[%s3 + $0x30] sm:$0xff]
    %v1852 = vld [vmem:[%s3 + $0x38] sm:$0xff]
    %v1853 = vld [vmem:[%s3 + $0x40] sm:$0xff]
    %v1854 = vld [vmem:[%s3 + $0x48] sm:$0xff]
    %v1855 = vld [vmem:[%s3 + $0x50] sm:$0xff]
    %v1856 = vld [vmem:[%s3 + $0x58] sm:$0xff]
    %v1857 = vld [vmem:[%s3 + $0x60] sm:$0xff]
    %v1858 = vld [vmem:[%s3 + $0x68] sm:$0xff]
    %v1859 = vld [vmem:[%s3 + $0x70] sm:$0xff]
    %v1860 = vld [vmem:[%s3 + $0x78] sm:$0xff]
    %v1861 = vld [vmem:[%s4] sm:$0x1]
    %v1863 = vlaneseq
    %v1864 = vshrl.u32 %v1863, 7
    %v1865 = vsub.s32 0, %v1864
    %v1866 = vrot.slane %v1861, %v1865
    %1868 = vmatprep.subr.mxu0 0.0
    %1869 = vmatpush1.msra.mxu0 %v1860
    %1870 = vmatprep.subr.mxu0 0.0
    %1871 = vmatpush1.msra.mxu0 %v1859
    %1872 = vmatprep.subr.mxu0 0.0
    %1873 = vmatpush1.msra.mxu0 %v1858
    %1874 = vmatprep.subr.mxu0 0.0
    %1875 = vmatpush1.msra.mxu0 %v1857
    %1876 = vmatprep.subr.mxu0 0.0
    %1877 = vmatpush1.msra.mxu0 %v1856
    %1878 = vmatprep.subr.mxu0 0.0
    %1879 = vmatpush1.msra.mxu0 %v1855
    %1880 = vmatprep.subr.mxu0 0.0
    %1881 = vmatpush1.msra.mxu0 %v1854
    %1882 = vmatprep.subr.mxu0 0.0
    %1883 = vmatpush1.msra.mxu0 %v1853
    %1884 = vmatprep.subr.mxu0 0.0
    %1885 = vmatpush1.msra.mxu0 %v1852
    %1886 = vmatprep.subr.mxu0 0.0
    %1887 = vmatpush1.msra.mxu0 %v1851
    %1888 = vmatprep.subr.mxu0 0.0
    %1889 = vmatpush1.msra.mxu0 %v1850
    %1890 = vmatprep.subr.mxu0 0.0
    %1891 = vmatpush1.msra.mxu0 %v1849
    %1892 = vmatprep.subr.mxu0 0.0
    %1893 = vmatpush1.msra.mxu0 %v1848
    %1894 = vmatprep.subr.mxu0 0.0
    %1895 = vmatpush1.msra.mxu0 %v1847
    %1896 = vmatprep.subr.mxu0 0.0
    %1897 = vmatpush1.msra.mxu0 %v1846
    %1898 = vmatprep.subr.mxu0 0.0
    %1899 = vmatpush1.msra.mxu0 %v1845
    %1900 = vmatprep.subr.mxu0 0.0
    %1901 = vmatpush2.msra.mxu0 0.0
    %1902 = vmatprep.subr.mxu0 0.0
    %1903 = vmatpush2.msra.mxu0 0.0
    %1904 = vmatprep.subr.mxu0 0.0
    %1905 = vmatpush2.msra.mxu0 0.0
    %1906 = vmatprep.subr.mxu0 0.0
    %1907 = vmatpush2.msra.mxu0 0.0
    %1908 = vmatprep.subr.mxu0 0.0
    %1909 = vmatpush2.msra.mxu0 0.0
    %1910 = vmatprep.subr.mxu0 0.0
    %1911 = vmatpush2.msra.mxu0 0.0
    %1912 = vmatprep.subr.mxu0 0.0
    %1913 = vmatpush2.msra.mxu0 0.0
    %1914 = vmatprep.subr.mxu0 0.0
    %1915 = vmatpush2.msra.mxu0 0.0
    %1916 = vmatprep.subr.mxu0 0.0
    %1917 = vmatpush2.msra.mxu0 0.0
    %1918 = vmatprep.subr.mxu0 0.0
    %1919 = vmatpush2.msra.mxu0 0.0
    %1920 = vmatprep.subr.mxu0 0.0
    %1921 = vmatpush2.msra.mxu0 0.0
    %1922 = vmatprep.subr.mxu0 0.0
    %1923 = vmatpush2.msra.mxu0 0.0
    %1924 = vmatprep.subr.mxu0 0.0
    %1925 = vmatpush2.msra.mxu0 0.0
    %1926 = vmatprep.subr.mxu0 0.0
    %1927 = vmatpush2.msra.mxu0 0.0
    %1928 = vmatprep.subr.mxu0 0.0
    %1929 = vmatpush2.msra.mxu0 0.0
    %1930 = vmatprep.subr.mxu0 0.0
    %1931 = vmatpush2.msra.mxu0 0.0
    %1932 = vmatprep.mubr.f32.mxu0 0.0
    %1933 = vmatmul.mubr.f32.gmra.mxu0 %v1844
    %v1934 = vpop.f32.mrf.mxu0
    %v1935 = vadd.f32 %v1866, %v1934
    %v1936 = vpop.f32.mrf.mxu0
    %1937 = vdwg.mxu0
    %vm1938 = vcmask 9216
    %1939 = vst.msk [vmem:[#allocation2] sm:$0x3] %vm1938, %v1935
    // Predicated region
    $region22: #{solarnet_forward.7} parent=1 // pred_check
      _
    $region23: #{solarnet_forward.7} parent=1 // pred_check_branch
      %1941 = sbr.rel (0) target = $region25
    $region24: #{solarnet_forward.7} parent=1 // pred_region
      %s1943 = ssub.s32 32, 32
      %1944 = vsyncadd [#allocation3], %s1943
      %s1946 = sshll.u32 [#allocation2], 4
      %s1947 = int_to_ptr.vmem [resolvable:$true] %s1946
      %1949 = dma.vmem_to_hbm [thread:$0]  %s1947, 32, %s5, [#allocation3]
    $region25: #{solarnet_forward.7} parent=1 // pred_fallthru
      _
    // Predicated region
    $region26: #{solarnet_forward.7} parent=1 // pred_check
      _
    $region27: #{solarnet_forward.7} parent=1 // pred_check_branch
      %1951 = sbr.rel (0) target = $region29
    $region28: #{solarnet_forward.7} parent=1 // pred_region
      %1952 = dma.done [#allocation3], 32
    $region29: #{solarnet_forward.7} parent=1 // pred_fallthru
      _
    %1953 = vsyncpa [#allocation3], 1

</llo_original>
